<compile_context>
chip_gen: v7x
topology: tpu7x:2x2x1
jax: 0.10.0
libtpu: 0.0.40
codegen_flags: <defaults>
</compile_context>

<pallas_src>
import functools
import math

import numpy as np

import jax
import jax.numpy as jnp
from jax.experimental import pallas as pl
from jax.experimental.pallas import tpu as pltpu

R = 5             # number of relations, fixed by the module: RGCNConv(..., 5)
_LANE = 128       # feature dims padded to multiples of this
_TM_MSG = 512     # row tile of the messages kernel
_TM_HEAD = 512    # row tile of the MLP head kernel
_NEG_BIG = -1e30  # pad bias for the unused logit lanes


def _round_up(x, m):
    return (x + m - 1) // m * m


def _pad_to(arr, shape):
    pads = [(0, t - s) for s, t in zip(arr.shape, shape)]
    if all(p == (0, 0) for p in pads):
        return arr
    return jnp.pad(arr, pads)


@functools.lru_cache(maxsize=None)
def _tpu_vmem_bytes():
    try:
        return int(pltpu.get_tpu_info().vmem_capacity_bytes)
    except Exception:   # conservative fallback (v7x-sized)
        return 64 * 1024 * 1024


def _vmem_limit_bytes():
    return int(min(_tpu_vmem_bytes() * 3 // 4, 100 * 1024 * 1024))


@functools.lru_cache(maxsize=None)
def _select_tiles():
    """(TM, TJ) for the aggregation kernel, sized to the chip's VMEM."""
    if _tpu_vmem_bytes() >= (100 << 20):   # v5e / v6e: 128 MiB VMEM
        return 1024, 512
    return 512, 512                        # v7x: 64 MiB VMEM, 2 TCs


# ---------------------------------------------------------------------------
# Host-side, per-graph preprocessing (hoisted out of the jitted forward)
# ---------------------------------------------------------------------------
def preprocess_graph(edge_index, edge_type, num_nodes, *, tm, tj):
    """Dense mean-normalized adjacency (bf16) + compacted nonzero-tile lists.

    A[r, i, j] = 1/deg_r(i) for each edge j -> i of relation r (duplicate edges
    accumulate before normalization, matching a scatter-add + row-mean).
    """
    row_align = tm * tj // math.gcd(tm, tj)
    npad = _round_up(num_nodes, row_align)

    src = np.asarray(edge_index[0]).astype(np.int64)
    dst = np.asarray(edge_index[1]).astype(np.int64)
    et = np.asarray(edge_type).astype(np.int64)

    a = np.zeros((R, npad, npad), np.float32)
    np.add.at(a, (et, dst, src), 1.0)
    deg = a.sum(axis=-1, keepdims=True)
    a = a / np.maximum(deg, 1.0)

    ni, nj = npad // tm, npad // tj
    occ = a.reshape(R, ni, tm, nj, tj).sum(axis=(2, 4)) > 0.0   # [R, ni, nj]
    occ = np.transpose(occ, (1, 0, 2))                          # [ni, R, nj]

    counts = occ.reshape(ni, -1).sum(axis=-1).astype(np.int32)
    max_nnz = max(int(counts.max()), 1)
    rc = np.zeros((ni, max_nnz), np.int32)
    jc = np.zeros((ni, max_nnz), np.int32)
    for i in range(ni):
        rs, js = np.nonzero(occ[i])
        n = int(rs.size)
        if n:
            rc[i, :n] = rs
            jc[i, :n] = js
            rc[i, n:] = rs[-1]   # pad with last valid coord: block index repeats
            jc[i, n:] = js[-1]   # across steps, so the (useless) DMA is skipped

    # NOTE: bf16 1/deg carries ~3 significant digits; within test tolerance.
    adj_b = jnp.asarray(a, dtype=jnp.bfloat16)
    return adj_b, jnp.asarray(counts), jnp.asarray(rc), jnp.asarray(jc)


# ---------------------------------------------------------------------------
# Kernel 1: per-relation message transform  H_all[r] = X @ W_all[r]
#           (W_all = [W_0..W_4, W_root]  ->  relation R carries the root term)
# ---------------------------------------------------------------------------
def _msg_kernel(x_ref, w_ref, h_ref):
    h_ref[...] = jnp.dot(
        x_ref[...], w_ref[...], preferred_element_type=jnp.float32
    ).astype(h_ref.dtype)


def rgcn_messages(x_b, w_all_b, *, tm=_TM_MSG):
    """x_b: [Np, Fin] bf16, w_all_b: [R+1, Fin, Fout] bf16 -> [R+1, Np, Fout] bf16."""
    npad, fin = x_b.shape
    nrel, _, fout = w_all_b.shape
    return pl.pallas_call(
        _msg_kernel,
        out_shape=jax.ShapeDtypeStruct((nrel, npad, fout), jnp.bfloat16),
        grid_spec=pltpu.PrefetchScalarGridSpec(
            num_scalar_prefetch=0,
            grid=(nrel, npad // tm),
            in_specs=[
                pl.BlockSpec((tm, fin), lambda r, i: (i, 0)),             # X row tile
                pl.BlockSpec((None, fin, fout), lambda r, i: (r, 0, 0)),  # W_r (resident per r)
            ],
            out_specs=pl.BlockSpec((None, tm, fout), lambda r, i: (r, i, 0)),
        ),
        compiler_params=pltpu.CompilerParams(
            dimension_semantics=("parallel", "parallel"),
            vmem_limit_bytes=_vmem_limit_bytes(),
        ),
    )(x_b, w_all_b)


# ---------------------------------------------------------------------------
# Kernel 2: aggregation
#   out = relu(root + b + sum over nonzero tiles A[r, i-tile, j-tile] @ H[r, j-tile])
# Grid: (row_tile i, compacted nonzero-tile step s).  Empty adjacency tiles are
# never DMA'd: the A/H index_maps follow the scalar-prefetched coordinate lists.
# ---------------------------------------------------------------------------
def _agg_kernel(cnt_ref, rc_ref, jc_ref, root_ref, b_ref, a_ref, h_ref, o_ref,
                acc_ref):
    i = pl.program_id(0)
    s = pl.program_id(1)
    ns = pl.num_programs(1)

    @pl.when(s == 0)
    def _init():
        acc_ref[...] = root_ref[...].astype(jnp.float32) + b_ref[...]

    @pl.when(s < cnt_ref[i])
    def _accumulate():
        acc_ref[...] += jnp.dot(
            a_ref[...], h_ref[...], preferred_element_type=jnp.float32
        )

    @pl.when(s == ns - 1)
    def _finalize():
        o_ref[...] = jnp.maximum(acc_ref[...], 0.0).astype(o_ref.dtype)


def rgcn_aggregate(counts, rcoord, jcoord, h_all, bias_p, adj_b, *, tm, tj):
    npad = adj_b.shape[1]
    fout = h_all.shape[2]
    ni = npad // tm
    max_nnz = rcoord.shape[1]
    return pl.pallas_call(
        _agg_kernel,
        out_shape=jax.ShapeDtypeStruct((npad, fout), jnp.bfloat16),
        grid_spec=pltpu.PrefetchScalarGridSpec(
            num_scalar_prefetch=3,
            grid=(ni, max_nnz),
            in_specs=[
                # root term X @ W_root, stored as relation R of H_all (per-i resident)
                pl.BlockSpec((None, tm, fout), lambda i, s, cnt, rc, jc: (R, i, 0)),
                # bias
                pl.BlockSpec((1, fout), lambda i, s, cnt, rc, jc: (0, 0)),
                # A tile at the s-th nonzero (relation, col-tile) of row tile i
                pl.BlockSpec((None, tm, tj),
                             lambda i, s, cnt, rc, jc: (rc[i, s], i, jc[i, s])),
                # matching H tile
                pl.BlockSpec((None, tj, fout),
                             lambda i, s, cnt, rc, jc: (rc[i, s], jc[i, s], 0)),
            ],
            out_specs=pl.BlockSpec((tm, fout), lambda i, s, cnt, rc, jc: (i, 0)),
            scratch_shapes=[pltpu.VMEM((tm, fout), jnp.float32)],
        ),
        compiler_params=pltpu.CompilerParams(
            dimension_semantics=("parallel", "arbitrary"),
            vmem_limit_bytes=_vmem_limit_bytes(),
        ),
    )(counts, rcoord, jcoord, h_all, bias_p, adj_b, h_all)


def rgcn_layer(graph, x_b, w_rel, w_root, bias, fout_pad, *, tm, tj):
    """One padded RGCN layer + ReLU.  x_b: [Np, Fin_p] bf16 -> [Np, Fout_p] bf16."""
    adj_b, counts, rc, jc = graph
    fin_pad = x_b.shape[1]
    w_all = jnp.concatenate([w_rel, w_root[None]], axis=0)          # [R+1, Fin, Fout]
    w_all_b = _pad_to(w_all, (R + 1, fin_pad, fout_pad)).astype(jnp.bfloat16)
    bias_p = _pad_to(bias, (1, fout_pad)).astype(jnp.float32)
    h_all = rgcn_messages(x_b, w_all_b)                             # [R+1, Np, Fout] bf16
    return rgcn_aggregate(counts, rc, jc, h_all, bias_p, adj_b, tm=tm, tj=tj)


# ---------------------------------------------------------------------------
# Kernel 3: MLP head  lin1 -> relu (emb) -> lin2 -> log_softmax
# ---------------------------------------------------------------------------
def _head_kernel(x_ref, w1_ref, b1_ref, w2_ref, b2_ref, logp_ref, emb_ref):
    h = jnp.dot(x_ref[...], w1_ref[...], preferred_element_type=jnp.float32) + b1_ref[...]
    h = jnp.maximum(h, 0.0)
    emb_ref[...] = h
    logits = (
        jnp.dot(h.astype(w2_ref.dtype), w2_ref[...], preferred_element_type=jnp.float32)
        + b2_ref[...]
    )
    m = jnp.max(logits, axis=-1, keepdims=True)
    s = logits - m
    lse = jnp.log(jnp.sum(jnp.exp(s), axis=-1, keepdims=True))
    logp_ref[...] = s - lse


def mlp_head(x_b, w1_b, b1_p, w2_b, b2_p, *, tm=_TM_HEAD):
    npad, d2p = x_b.shape
    d3p = w1_b.shape[1]
    ncp = w2_b.shape[1]
    return pl.pallas_call(
        _head_kernel,
        out_shape=(
            jax.ShapeDtypeStruct((npad, ncp), jnp.float32),   # log_softmax (padded lanes)
            jax.ShapeDtypeStruct((npad, d3p), jnp.float32),   # emb (padded cols)
        ),
        grid_spec=pltpu.PrefetchScalarGridSpec(
            num_scalar_prefetch=0,
            grid=(npad // tm,),
            in_specs=[
                pl.BlockSpec((tm, d2p), lambda i: (i, 0)),
                pl.BlockSpec((d2p, d3p), lambda i: (0, 0)),
                pl.BlockSpec((1, d3p), lambda i: (0, 0)),
                pl.BlockSpec((d3p, ncp), lambda i: (0, 0)),
                pl.BlockSpec((1, ncp), lambda i: (0, 0)),
            ],
            out_specs=[
                pl.BlockSpec((tm, ncp), lambda i: (i, 0)),
                pl.BlockSpec((tm, d3p), lambda i: (i, 0)),
            ],
        ),
        compiler_params=pltpu.CompilerParams(
            dimension_semantics=("parallel",),
            vmem_limit_bytes=_vmem_limit_bytes(),
        ),
    )(x_b, w1_b, b1_p, w2_b, b2_p)


# ---------------------------------------------------------------------------
# Parameters & full forward
# ---------------------------------------------------------------------------
def init_params(key, n_gene, f_in, dim1, dim2, dim3, n_cls=2):
    ks = jax.random.split(key, 11)

    def rnd(k, shape, scale):
        return scale * jax.random.normal(k, shape, jnp.float32)

    return dict(
        gene_emb=jax.random.normal(ks[0], (n_gene, f_in), jnp.float32),
        conv1_w_rel=rnd(ks[1], (R, f_in, dim1), 1.0 / jnp.sqrt(f_in)),
        conv1_w_root=rnd(ks[2], (f_in, dim1), 1.0 / jnp.sqrt(f_in)),
        conv1_b=rnd(ks[3], (1, dim1), 0.01),
        conv2_w_rel=rnd(ks[4], (R, dim1, dim2), 1.0 / jnp.sqrt(dim1)),
        conv2_w_root=rnd(ks[5], (dim1, dim2), 1.0 / jnp.sqrt(dim1)),
        conv2_b=rnd(ks[6], (1, dim2), 0.01),
        lin1_w=rnd(ks[7], (dim2, dim3), 1.0 / jnp.sqrt(dim2)),
        lin1_b=rnd(ks[8], (1, dim3), 0.01),
        lin2_w=rnd(ks[9], (dim3, n_cls), 1.0 / jnp.sqrt(dim3)),
        lin2_b=rnd(ks[10], (1, n_cls), 0.01),
    )


def net_forward(params, x, graph):
    adj_b = graph[0]
    npad = adj_b.shape[1]
    tm, tj = _select_tiles()

    # x = torch.cat((x, self.gene_emb), dim=0)
    xs = jnp.concatenate([x, params["gene_emb"]], axis=0)
    n_real, fin = xs.shape

    d1 = params["conv1_w_root"].shape[1]
    d2 = params["conv2_w_root"].shape[1]
    d3 = params["lin1_w"].shape[1]
    n_cls = params["lin2_w"].shape[1]

    fin_p = _round_up(fin, _LANE)
    d1_p, d2_p, d3_p = (_round_up(d, _LANE) for d in (d1, d2, d3))
    nc_p = _round_up(n_cls, _LANE)

    x_b = _pad_to(xs, (npad, fin_p)).astype(jnp.bfloat16)

    # x = relu(conv1(x, ...)); dropout -> identity (eval)
    h = rgcn_layer(graph, x_b, params["conv1_w_rel"], params["conv1_w_root"],
                   params["conv1_b"], d1_p, tm=tm, tj=tj)
    # x = relu(conv2(x, ...)); dropout -> identity (eval)
    h = rgcn_layer(graph, h, params["conv2_w_rel"], params["conv2_w_root"],
                   params["conv2_b"], d2_p, tm=tm, tj=tj)

    # relu(lin1) -> emb; lin2 -> log_softmax (2-class logits padded to 128 lanes)
    w1_b = _pad_to(params["lin1_w"], (d2_p, d3_p)).astype(jnp.bfloat16)
    b1_p = _pad_to(params["lin1_b"], (1, d3_p)).astype(jnp.float32)
    w2_b = _pad_to(params["lin2_w"], (d3_p, nc_p)).astype(jnp.bfloat16)
    b2_p = jnp.full((1, nc_p), _NEG_BIG, jnp.float32).at[:, :n_cls].set(
        params["lin2_b"].astype(jnp.float32))
    logp_pad, emb_pad = mlp_head(h, w1_b, b1_p, w2_b, b2_p)

    return logp_pad[:n_real, :n_cls], emb_pad[:n_real, :d3]


def reference_forward(params, x, adj_b):
    """Pure-JAX reference with the same bf16-input / f32-accumulate precision."""
    xs = jnp.concatenate([x, params["gene_emb"]], axis=0)
    n = xs.shape[0]
    a = adj_b[:, :n, :n]

    def rgcn(x_b, wr, wroot, b):
        h = jnp.einsum("nf,rfo->rno", x_b, wr.astype(jnp.bfloat16),
                       preferred_element_type=jnp.float32).astype(jnp.bfloat16)
        root = jnp.dot(x_b, wroot.astype(jnp.bfloat16),
                       preferred_element_type=jnp.float32).astype(jnp.bfloat16)
        out = (root.astype(jnp.float32) + b
               + jnp.einsum("rij,rjf->if", a, h, preferred_element_type=jnp.float32))
        return jnp.maximum(out, 0.0).astype(jnp.bfloat16)

    h = rgcn(xs.astype(jnp.bfloat16),
             params["conv1_w_rel"], params["conv1_w_root"], params["conv1_b"])
    h = rgcn(h, params["conv2_w_rel"], params["conv2_w_root"], params["conv2_b"])
    emb = jnp.maximum(
        jnp.dot(h, params["lin1_w"].astype(jnp.bfloat16),
                preferred_element_type=jnp.float32) + params["lin1_b"], 0.0)
    logits = jnp.dot(emb.astype(jnp.bfloat16), params["lin2_w"].astype(jnp.bfloat16),
                     preferred_element_type=jnp.float32) + params["lin2_b"]
    return jax.nn.log_softmax(logits, axis=-1), emb


# ---------------------------------------------------------------------------
if __name__ == "__main__":
    key = jax.random.PRNGKey(0)
    # Small stand-ins for (input nodes, 4264 gene nodes, 1613 feats,
    # dim1=1340, dim2=920, dim3=740).  Deliberately non-128-aligned dims to
    # exercise the wrapper's lane-padding path.
    N0, NG, F_IN = 8, 24, 96
    DIM1, DIM2, DIM3 = 120, 112, 80
    E = 64

    k_x, k_ei, k_et, k_p = jax.random.split(key, 4)
    x = jax.random.normal(k_x, (N0, F_IN), jnp.float32)
    n_total = N0 + NG
    edge_index = jax.random.randint(k_ei, (2, E), 0, n_total, dtype=jnp.int32)
    edge_type = jax.random.randint(k_et, (E,), 0, R, dtype=jnp.int32)

    params = init_params(k_p, NG, F_IN, DIM1, DIM2, DIM3)

    # Per-graph preprocessing done once (outside the jitted forward) and cached.
    tm, tj = _select_tiles()
    graph = preprocess_graph(edge_index, edge_type, n_total, tm=tm, tj=tj)

    fwd = jax.jit(functools.partial(net_forward, params))
    logp, emb = fwd(x, graph)
    jax.block_until_ready((logp, emb))

    # sanity: compare against the precision-matched pure-JAX reference
    logp_ref, emb_ref = reference_forward(params, x, graph[0])
    assert logp.shape == (n_total, 2) and emb.shape == (n_total, DIM3)
    assert jnp.allclose(logp, logp_ref, atol=3e-2, rtol=3e-2), \
        float(jnp.max(jnp.abs(logp - logp_ref)))
    assert jnp.allclose(emb, emb_ref, atol=5e-2, rtol=5e-2), \
        float(jnp.max(jnp.abs(emb - emb_ref)))

    print("KERNEL_OK")
</pallas_src>

<mosaic_0001>
module attributes {stable_mosaic.version = 11 : i64} {
  func.func @_msg_kernel(%arg0: i32, %arg1: i32, %arg2: memref<512x128xbf16, #tpu.memory_space<vmem>>, %arg3: memref<1x128x128xbf16, #tpu.memory_space<vmem>>, %arg4: memref<1x512x128xbf16, #tpu.memory_space<vmem>>) attributes {dimension_semantics = [#tpu.dimension_semantics<parallel>, #tpu.dimension_semantics<parallel>], iteration_bounds = array<i64: 6, 1>, scalar_prefetch = 0 : i64, scratch_operands = 0 : i64, tpu.core_type = #tpu.core_type<tc>, window_params = [{transform_indices = @transform_0, window_bounds = array<i64: 512, 128>}, {transform_indices = @transform_1, window_bounds = array<i64: 1, 128, 128>}, {transform_indices = @transform_2, window_bounds = array<i64: 1, 512, 128>}]} {
    %c0 = arith.constant 0 : index
    %c0_0 = arith.constant 0 : index
    %0 = vector.load %arg2[%c0, %c0_0] : memref<512x128xbf16, #tpu.memory_space<vmem>>, vector<512x128xbf16>
    %c0_1 = arith.constant 0 : index
    %c0_2 = arith.constant 0 : index
    %c0_3 = arith.constant 0 : index
    %1 = vector.load %arg3[%c0_1, %c0_2, %c0_3] : memref<1x128x128xbf16, #tpu.memory_space<vmem>>, vector<1x128x128xbf16>
    %2 = vector.shape_cast %1 : vector<1x128x128xbf16> to vector<128x128xbf16>
    %cst = arith.constant dense<0.000000e+00> : vector<512x128xf32>
    %3 = tpu.matmul %0, %2, %cst {dimension_numbers = #tpu.dot_dimension_numbers<[1], [0], [0], [1], [0, 0, 1, 1], [], []>} : vector<512x128xbf16>, vector<128x128xbf16>, vector<512x128xf32> -> vector<512x128xf32>
    %4 = arith.truncf %3 : vector<512x128xf32> to vector<512x128xbf16>
    %c0_4 = arith.constant 0 : index
    %c0_5 = arith.constant 0 : index
    %c0_6 = arith.constant 0 : index
    %5 = vector.load %arg4[%c0_4, %c0_5, %c0_6] : memref<1x512x128xbf16, #tpu.memory_space<vmem>>, vector<1x512x128xbf16>
    %6 = vector.shape_cast %5 : vector<1x512x128xbf16> to vector<512x128xbf16>
    %7 = vector.shape_cast %4 : vector<512x128xbf16> to vector<1x512x128xbf16>
    tpu.vector_store %arg4[%c0_4, %c0_5, %c0_6], %7 {strides = array<i32>} : memref<1x512x128xbf16, #tpu.memory_space<vmem>>, vector<1x512x128xbf16>,
    return
  }
  func.func @transform_0(%arg0: i32, %arg1: i32) -> (i32, i32) {
    %c0_i32 = arith.constant 0 : i32
    %c0_i32_0 = arith.constant 0 : i32
    return %arg1, %c0_i32 : i32, i32
  }
  func.func @transform_1(%arg0: i32, %arg1: i32) -> (i32, i32, i32) {
    %c0_i32 = arith.constant 0 : i32
    %c0_i32_0 = arith.constant 0 : i32
    %c0_i32_1 = arith.constant 0 : i32
    return %arg0, %c0_i32, %c0_i32_0 : i32, i32, i32
  }
  func.func @transform_2(%arg0: i32, %arg1: i32) -> (i32, i32, i32) {
    %c0_i32 = arith.constant 0 : i32
    %c0_i32_0 = arith.constant 0 : i32
    return %arg0, %arg1, %c0_i32 : i32, i32, i32
  }
}

module attributes {stable_mosaic.version = 11 : i64} {
  func.func @_agg_kernel(%arg0: i32, %arg1: i32, %arg2: memref<1xi32, #tpu.memory_space<smem>>, %arg3: memref<1x5xi32, #tpu.memory_space<smem>>, %arg4: memref<1x5xi32, #tpu.memory_space<smem>>, %arg5: memref<1x512x128xbf16, #tpu.memory_space<vmem>>, %arg6: memref<1x128xf32, #tpu.memory_space<vmem>>, %arg7: memref<1x512x512xbf16, #tpu.memory_space<vmem>>, %arg8: memref<1x512x128xbf16, #tpu.memory_space<vmem>>, %arg9: memref<512x128xbf16, #tpu.memory_space<vmem>>, %arg10: memref<512x128xf32, #tpu.memory_space<vmem>>) attributes {dimension_semantics = [#tpu.dimension_semantics<parallel>, #tpu.dimension_semantics<arbitrary>], iteration_bounds = array<i64: 1, 5>, scalar_prefetch = 3 : i64, scratch_operands = 1 : i64, tpu.core_type = #tpu.core_type<tc>, window_params = [{transform_indices = @transform_0, window_bounds = array<i64: 1, 512, 128>}, {pipeline_mode = #tpu.pipeline_mode<synchronous>, transform_indices = @transform_1, window_bounds = array<i64: 1, 128>}, {transform_indices = @transform_2, window_bounds = array<i64: 1, 512, 512>}, {transform_indices = @transform_3, window_bounds = array<i64: 1, 512, 128>}, {transform_indices = @transform_4, window_bounds = array<i64: 512, 128>}]} {
    %c0_i32 = arith.constant 0 : i32
    %0 = arith.cmpi eq, %arg1, %c0_i32 : i32
    %1 = arith.extui %0 : i1 to i32
    %c0_i32_0 = arith.constant 0 : i32
    %2 = arith.cmpi ne, %1, %c0_i32_0 : i32
    scf.if %2 {
      %c0 = arith.constant 0 : index
      %c0_3 = arith.constant 0 : index
      %c0_4 = arith.constant 0 : index
      %11 = vector.load %arg5[%c0, %c0_3, %c0_4] : memref<1x512x128xbf16, #tpu.memory_space<vmem>>, vector<1x512x128xbf16>
      %12 = vector.shape_cast %11 : vector<1x512x128xbf16> to vector<512x128xbf16>
      %13 = arith.extf %12 : vector<512x128xbf16> to vector<512x128xf32>
      %c0_5 = arith.constant 0 : index
      %c0_6 = arith.constant 0 : index
      %14 = vector.load %arg6[%c0_5, %c0_6] : memref<1x128xf32, #tpu.memory_space<vmem>>, vector<1x128xf32>
      %15 = vector.broadcast %14 : vector<1x128xf32> to vector<512x128xf32>
      %16 = arith.addf %13, %15 : vector<512x128xf32>
      %c0_7 = arith.constant 0 : index
      %c0_8 = arith.constant 0 : index
      %17 = vector.load %arg10[%c0_7, %c0_8] : memref<512x128xf32, #tpu.memory_space<vmem>>, vector<512x128xf32>
      tpu.vector_store %arg10[%c0_7, %c0_8], %16 {strides = array<i32>} : memref<512x128xf32, #tpu.memory_space<vmem>>, vector<512x128xf32>,
    } else {
    }
    %3 = arith.index_cast %arg0 : i32 to index
    %4 = memref.load %arg2[%3] : memref<1xi32, #tpu.memory_space<smem>>
    %5 = arith.cmpi slt, %arg1, %4 : i32
    %6 = arith.extui %5 : i1 to i32
    %c0_i32_1 = arith.constant 0 : i32
    %7 = arith.cmpi ne, %6, %c0_i32_1 : i32
    scf.if %7 {
      %c0 = arith.constant 0 : index
      %c0_3 = arith.constant 0 : index
      %11 = vector.load %arg10[%c0, %c0_3] : memref<512x128xf32, #tpu.memory_space<vmem>>, vector<512x128xf32>
      %c0_4 = arith.constant 0 : index
      %c0_5 = arith.constant 0 : index
      %c0_6 = arith.constant 0 : index
      %12 = vector.load %arg7[%c0_4, %c0_5, %c0_6] : memref<1x512x512xbf16, #tpu.memory_space<vmem>>, vector<1x512x512xbf16>
      %13 = vector.shape_cast %12 : vector<1x512x512xbf16> to vector<512x512xbf16>
      %c0_7 = arith.constant 0 : index
      %c0_8 = arith.constant 0 : index
      %c0_9 = arith.constant 0 : index
      %14 = vector.load %arg8[%c0_7, %c0_8, %c0_9] : memref<1x512x128xbf16, #tpu.memory_space<vmem>>, vector<1x512x128xbf16>
      %15 = vector.shape_cast %14 : vector<1x512x128xbf16> to vector<512x128xbf16>
      %cst = arith.constant dense<0.000000e+00> : vector<512x128xf32>
      %16 = tpu.matmul %13, %15, %cst {dimension_numbers = #tpu.dot_dimension_numbers<[1], [0], [0], [1], [0, 0, 1, 1], [], []>} : vector<512x512xbf16>, vector<512x128xbf16>, vector<512x128xf32> -> vector<512x128xf32>
      %17 = arith.addf %11, %16 : vector<512x128xf32>
      %c0_10 = arith.constant 0 : index
      %c0_11 = arith.constant 0 : index
      %18 = vector.load %arg10[%c0_10, %c0_11] : memref<512x128xf32, #tpu.memory_space<vmem>>, vector<512x128xf32>
      tpu.vector_store %arg10[%c0_10, %c0_11], %17 {strides = array<i32>} : memref<512x128xf32, #tpu.memory_space<vmem>>, vector<512x128xf32>,
    } else {
    }
    %c4_i32 = arith.constant 4 : i32
    %8 = arith.cmpi eq, %arg1, %c4_i32 : i32
    %9 = arith.extui %8 : i1 to i32
    %c0_i32_2 = arith.constant 0 : i32
    %10 = arith.cmpi ne, %9, %c0_i32_2 : i32
    scf.if %10 {
      %c0 = arith.constant 0 : index
      %c0_3 = arith.constant 0 : index
      %11 = vector.load %arg10[%c0, %c0_3] : memref<512x128xf32, #tpu.memory_space<vmem>>, vector<512x128xf32>
      %cst = arith.constant 0.000000e+00 : f32
      %12 = vector.broadcast %cst : f32 to vector<512x128xf32>
      %13 = arith.maximumf %11, %12 : vector<512x128xf32>
      %14 = arith.truncf %13 : vector<512x128xf32> to vector<512x128xbf16>
      %c0_4 = arith.constant 0 : index
      %c0_5 = arith.constant 0 : index
      %15 = vector.load %arg9[%c0_4, %c0_5] : memref<512x128xbf16, #tpu.memory_space<vmem>>, vector<512x128xbf16>
      tpu.vector_store %arg9[%c0_4, %c0_5], %14 {strides = array<i32>} : memref<512x128xbf16, #tpu.memory_space<vmem>>, vector<512x128xbf16>,
    } else {
    }
    return
  }
  func.func @transform_0(%arg0: i32, %arg1: i32, %arg2: memref<1xi32, #tpu.memory_space<smem>>, %arg3: memref<1x5xi32, #tpu.memory_space<smem>>, %arg4: memref<1x5xi32, #tpu.memory_space<smem>>) -> (i32, i32, i32) {
    %c5_i32 = arith.constant 5 : i32
    %c0_i32 = arith.constant 0 : i32
    %c0_i32_0 = arith.constant 0 : i32
    return %c5_i32, %arg0, %c0_i32 : i32, i32, i32
  }
  func.func @transform_1(%arg0: i32, %arg1: i32, %arg2: memref<1xi32, #tpu.memory_space<smem>>, %arg3: memref<1x5xi32, #tpu.memory_space<smem>>, %arg4: memref<1x5xi32, #tpu.memory_space<smem>>) -> (i32, i32) {
    %c0_i32 = arith.constant 0 : i32
    %c0_i32_0 = arith.constant 0 : i32
    %c0_i32_1 = arith.constant 0 : i32
    return %c0_i32, %c0_i32_0 : i32, i32
  }
  func.func @transform_2(%arg0: i32, %arg1: i32, %arg2: memref<1xi32, #tpu.memory_space<smem>>, %arg3: memref<1x5xi32, #tpu.memory_space<smem>>, %arg4: memref<1x5xi32, #tpu.memory_space<smem>>) -> (i32, i32, i32) {
    %0 = arith.index_cast %arg0 : i32 to index
    %1 = arith.index_cast %arg1 : i32 to index
    %2 = memref.load %arg3[%0, %1] : memref<1x5xi32, #tpu.memory_space<smem>>
    %3 = arith.index_cast %arg0 : i32 to index
    %4 = arith.index_cast %arg1 : i32 to index
    %5 = memref.load %arg4[%3, %4] : memref<1x5xi32, #tpu.memory_space<smem>>
    %c0_i32 = arith.constant 0 : i32
    return %2, %arg0, %5 : i32, i32, i32
  }
  func.func @transform_3(%arg0: i32, %arg1: i32, %arg2: memref<1xi32, #tpu.memory_space<smem>>, %arg3: memref<1x5xi32, #tpu.memory_space<smem>>, %arg4: memref<1x5xi32, #tpu.memory_space<smem>>) -> (i32, i32, i32) {
    %0 = arith.index_cast %arg0 : i32 to index
    %1 = arith.index_cast %arg1 : i32 to index
    %2 = memref.load %arg3[%0, %1] : memref<1x5xi32, #tpu.memory_space<smem>>
    %3 = arith.index_cast %arg0 : i32 to index
    %4 = arith.index_cast %arg1 : i32 to index
    %5 = memref.load %arg4[%3, %4] : memref<1x5xi32, #tpu.memory_space<smem>>
    %c0_i32 = arith.constant 0 : i32
    %c0_i32_0 = arith.constant 0 : i32
    return %2, %5, %c0_i32 : i32, i32, i32
  }
  func.func @transform_4(%arg0: i32, %arg1: i32, %arg2: memref<1xi32, #tpu.memory_space<smem>>, %arg3: memref<1x5xi32, #tpu.memory_space<smem>>, %arg4: memref<1x5xi32, #tpu.memory_space<smem>>) -> (i32, i32) {
    %c0_i32 = arith.constant 0 : i32
    %c0_i32_0 = arith.constant 0 : i32
    return %arg0, %c0_i32 : i32, i32
  }
}

module attributes {stable_mosaic.version = 11 : i64} {
  func.func @_msg_kernel(%arg0: i32, %arg1: i32, %arg2: memref<512x128xbf16, #tpu.memory_space<vmem>>, %arg3: memref<1x128x128xbf16, #tpu.memory_space<vmem>>, %arg4: memref<1x512x128xbf16, #tpu.memory_space<vmem>>) attributes {dimension_semantics = [#tpu.dimension_semantics<parallel>, #tpu.dimension_semantics<parallel>], iteration_bounds = array<i64: 6, 1>, scalar_prefetch = 0 : i64, scratch_operands = 0 : i64, tpu.core_type = #tpu.core_type<tc>, window_params = [{transform_indices = @transform_0, window_bounds = array<i64: 512, 128>}, {transform_indices = @transform_1, window_bounds = array<i64: 1, 128, 128>}, {transform_indices = @transform_2, window_bounds = array<i64: 1, 512, 128>}]} {
    %c0 = arith.constant 0 : index
    %c0_0 = arith.constant 0 : index
    %0 = vector.load %arg2[%c0, %c0_0] : memref<512x128xbf16, #tpu.memory_space<vmem>>, vector<512x128xbf16>
    %c0_1 = arith.constant 0 : index
    %c0_2 = arith.constant 0 : index
    %c0_3 = arith.constant 0 : index
    %1 = vector.load %arg3[%c0_1, %c0_2, %c0_3] : memref<1x128x128xbf16, #tpu.memory_space<vmem>>, vector<1x128x128xbf16>
    %2 = vector.shape_cast %1 : vector<1x128x128xbf16> to vector<128x128xbf16>
    %cst = arith.constant dense<0.000000e+00> : vector<512x128xf32>
    %3 = tpu.matmul %0, %2, %cst {dimension_numbers = #tpu.dot_dimension_numbers<[1], [0], [0], [1], [0, 0, 1, 1], [], []>} : vector<512x128xbf16>, vector<128x128xbf16>, vector<512x128xf32> -> vector<512x128xf32>
    %4 = arith.truncf %3 : vector<512x128xf32> to vector<512x128xbf16>
    %c0_4 = arith.constant 0 : index
    %c0_5 = arith.constant 0 : index
    %c0_6 = arith.constant 0 : index
    %5 = vector.load %arg4[%c0_4, %c0_5, %c0_6] : memref<1x512x128xbf16, #tpu.memory_space<vmem>>, vector<1x512x128xbf16>
    %6 = vector.shape_cast %5 : vector<1x512x128xbf16> to vector<512x128xbf16>
    %7 = vector.shape_cast %4 : vector<512x128xbf16> to vector<1x512x128xbf16>
    tpu.vector_store %arg4[%c0_4, %c0_5, %c0_6], %7 {strides = array<i32>} : memref<1x512x128xbf16, #tpu.memory_space<vmem>>, vector<1x512x128xbf16>,
    return
  }
  func.func @transform_0(%arg0: i32, %arg1: i32) -> (i32, i32) {
    %c0_i32 = arith.constant 0 : i32
    %c0_i32_0 = arith.constant 0 : i32
    return %arg1, %c0_i32 : i32, i32
  }
  func.func @transform_1(%arg0: i32, %arg1: i32) -> (i32, i32, i32) {
    %c0_i32 = arith.constant 0 : i32
    %c0_i32_0 = arith.constant 0 : i32
    %c0_i32_1 = arith.constant 0 : i32
    return %arg0, %c0_i32, %c0_i32_0 : i32, i32, i32
  }
  func.func @transform_2(%arg0: i32, %arg1: i32) -> (i32, i32, i32) {
    %c0_i32 = arith.constant 0 : i32
    %c0_i32_0 = arith.constant 0 : i32
    return %arg0, %arg1, %c0_i32 : i32, i32, i32
  }
}

module attributes {stable_mosaic.version = 11 : i64} {
  func.func @_agg_kernel(%arg0: i32, %arg1: i32, %arg2: memref<1xi32, #tpu.memory_space<smem>>, %arg3: memref<1x5xi32, #tpu.memory_space<smem>>, %arg4: memref<1x5xi32, #tpu.memory_space<smem>>, %arg5: memref<1x512x128xbf16, #tpu.memory_space<vmem>>, %arg6: memref<1x128xf32, #tpu.memory_space<vmem>>, %arg7: memref<1x512x512xbf16, #tpu.memory_space<vmem>>, %arg8: memref<1x512x128xbf16, #tpu.memory_space<vmem>>, %arg9: memref<512x128xbf16, #tpu.memory_space<vmem>>, %arg10: memref<512x128xf32, #tpu.memory_space<vmem>>) attributes {dimension_semantics = [#tpu.dimension_semantics<parallel>, #tpu.dimension_semantics<arbitrary>], iteration_bounds = array<i64: 1, 5>, scalar_prefetch = 3 : i64, scratch_operands = 1 : i64, tpu.core_type = #tpu.core_type<tc>, window_params = [{transform_indices = @transform_0, window_bounds = array<i64: 1, 512, 128>}, {pipeline_mode = #tpu.pipeline_mode<synchronous>, transform_indices = @transform_1, window_bounds = array<i64: 1, 128>}, {transform_indices = @transform_2, window_bounds = array<i64: 1, 512, 512>}, {transform_indices = @transform_3, window_bounds = array<i64: 1, 512, 128>}, {transform_indices = @transform_4, window_bounds = array<i64: 512, 128>}]} {
    %c0_i32 = arith.constant 0 : i32
    %0 = arith.cmpi eq, %arg1, %c0_i32 : i32
    %1 = arith.extui %0 : i1 to i32
    %c0_i32_0 = arith.constant 0 : i32
    %2 = arith.cmpi ne, %1, %c0_i32_0 : i32
    scf.if %2 {
      %c0 = arith.constant 0 : index
      %c0_3 = arith.constant 0 : index
      %c0_4 = arith.constant 0 : index
      %11 = vector.load %arg5[%c0, %c0_3, %c0_4] : memref<1x512x128xbf16, #tpu.memory_space<vmem>>, vector<1x512x128xbf16>
      %12 = vector.shape_cast %11 : vector<1x512x128xbf16> to vector<512x128xbf16>
      %13 = arith.extf %12 : vector<512x128xbf16> to vector<512x128xf32>
      %c0_5 = arith.constant 0 : index
      %c0_6 = arith.constant 0 : index
      %14 = vector.load %arg6[%c0_5, %c0_6] : memref<1x128xf32, #tpu.memory_space<vmem>>, vector<1x128xf32>
      %15 = vector.broadcast %14 : vector<1x128xf32> to vector<512x128xf32>
      %16 = arith.addf %13, %15 : vector<512x128xf32>
      %c0_7 = arith.constant 0 : index
      %c0_8 = arith.constant 0 : index
      %17 = vector.load %arg10[%c0_7, %c0_8] : memref<512x128xf32, #tpu.memory_space<vmem>>, vector<512x128xf32>
      tpu.vector_store %arg10[%c0_7, %c0_8], %16 {strides = array<i32>} : memref<512x128xf32, #tpu.memory_space<vmem>>, vector<512x128xf32>,
    } else {
    }
    %3 = arith.index_cast %arg0 : i32 to index
    %4 = memref.load %arg2[%3] : memref<1xi32, #tpu.memory_space<smem>>
    %5 = arith.cmpi slt, %arg1, %4 : i32
    %6 = arith.extui %5 : i1 to i32
    %c0_i32_1 = arith.constant 0 : i32
    %7 = arith.cmpi ne, %6, %c0_i32_1 : i32
    scf.if %7 {
      %c0 = arith.constant 0 : index
      %c0_3 = arith.constant 0 : index
      %11 = vector.load %arg10[%c0, %c0_3] : memref<512x128xf32, #tpu.memory_space<vmem>>, vector<512x128xf32>
      %c0_4 = arith.constant 0 : index
      %c0_5 = arith.constant 0 : index
      %c0_6 = arith.constant 0 : index
      %12 = vector.load %arg7[%c0_4, %c0_5, %c0_6] : memref<1x512x512xbf16, #tpu.memory_space<vmem>>, vector<1x512x512xbf16>
      %13 = vector.shape_cast %12 : vector<1x512x512xbf16> to vector<512x512xbf16>
      %c0_7 = arith.constant 0 : index
      %c0_8 = arith.constant 0 : index
      %c0_9 = arith.constant 0 : index
      %14 = vector.load %arg8[%c0_7, %c0_8, %c0_9] : memref<1x512x128xbf16, #tpu.memory_space<vmem>>, vector<1x512x128xbf16>
      %15 = vector.shape_cast %14 : vector<1x512x128xbf16> to vector<512x128xbf16>
      %cst = arith.constant dense<0.000000e+00> : vector<512x128xf32>
      %16 = tpu.matmul %13, %15, %cst {dimension_numbers = #tpu.dot_dimension_numbers<[1], [0], [0], [1], [0, 0, 1, 1], [], []>} : vector<512x512xbf16>, vector<512x128xbf16>, vector<512x128xf32> -> vector<512x128xf32>
      %17 = arith.addf %11, %16 : vector<512x128xf32>
      %c0_10 = arith.constant 0 : index
      %c0_11 = arith.constant 0 : index
      %18 = vector.load %arg10[%c0_10, %c0_11] : memref<512x128xf32, #tpu.memory_space<vmem>>, vector<512x128xf32>
      tpu.vector_store %arg10[%c0_10, %c0_11], %17 {strides = array<i32>} : memref<512x128xf32, #tpu.memory_space<vmem>>, vector<512x128xf32>,
    } else {
    }
    %c4_i32 = arith.constant 4 : i32
    %8 = arith.cmpi eq, %arg1, %c4_i32 : i32
    %9 = arith.extui %8 : i1 to i32
    %c0_i32_2 = arith.constant 0 : i32
    %10 = arith.cmpi ne, %9, %c0_i32_2 : i32
    scf.if %10 {
      %c0 = arith.constant 0 : index
      %c0_3 = arith.constant 0 : index
      %11 = vector.load %arg10[%c0, %c0_3] : memref<512x128xf32, #tpu.memory_space<vmem>>, vector<512x128xf32>
      %cst = arith.constant 0.000000e+00 : f32
      %12 = vector.broadcast %cst : f32 to vector<512x128xf32>
      %13 = arith.maximumf %11, %12 : vector<512x128xf32>
      %14 = arith.truncf %13 : vector<512x128xf32> to vector<512x128xbf16>
      %c0_4 = arith.constant 0 : index
      %c0_5 = arith.constant 0 : index
      %15 = vector.load %arg9[%c0_4, %c0_5] : memref<512x128xbf16, #tpu.memory_space<vmem>>, vector<512x128xbf16>
      tpu.vector_store %arg9[%c0_4, %c0_5], %14 {strides = array<i32>} : memref<512x128xbf16, #tpu.memory_space<vmem>>, vector<512x128xbf16>,
    } else {
    }
    return
  }
  func.func @transform_0(%arg0: i32, %arg1: i32, %arg2: memref<1xi32, #tpu.memory_space<smem>>, %arg3: memref<1x5xi32, #tpu.memory_space<smem>>, %arg4: memref<1x5xi32, #tpu.memory_space<smem>>) -> (i32, i32, i32) {
    %c5_i32 = arith.constant 5 : i32
    %c0_i32 = arith.constant 0 : i32
    %c0_i32_0 = arith.constant 0 : i32
    return %c5_i32, %arg0, %c0_i32 : i32, i32, i32
  }
  func.func @transform_1(%arg0: i32, %arg1: i32, %arg2: memref<1xi32, #tpu.memory_space<smem>>, %arg3: memref<1x5xi32, #tpu.memory_space<smem>>, %arg4: memref<1x5xi32, #tpu.memory_space<smem>>) -> (i32, i32) {
    %c0_i32 = arith.constant 0 : i32
    %c0_i32_0 = arith.constant 0 : i32
    %c0_i32_1 = arith.constant 0 : i32
    return %c0_i32, %c0_i32_0 : i32, i32
  }
  func.func @transform_2(%arg0: i32, %arg1: i32, %arg2: memref<1xi32, #tpu.memory_space<smem>>, %arg3: memref<1x5xi32, #tpu.memory_space<smem>>, %arg4: memref<1x5xi32, #tpu.memory_space<smem>>) -> (i32, i32, i32) {
    %0 = arith.index_cast %arg0 : i32 to index
    %1 = arith.index_cast %arg1 : i32 to index
    %2 = memref.load %arg3[%0, %1] : memref<1x5xi32, #tpu.memory_space<smem>>
    %3 = arith.index_cast %arg0 : i32 to index
    %4 = arith.index_cast %arg1 : i32 to index
    %5 = memref.load %arg4[%3, %4] : memref<1x5xi32, #tpu.memory_space<smem>>
    %c0_i32 = arith.constant 0 : i32
    return %2, %arg0, %5 : i32, i32, i32
  }
  func.func @transform_3(%arg0: i32, %arg1: i32, %arg2: memref<1xi32, #tpu.memory_space<smem>>, %arg3: memref<1x5xi32, #tpu.memory_space<smem>>, %arg4: memref<1x5xi32, #tpu.memory_space<smem>>) -> (i32, i32, i32) {
    %0 = arith.index_cast %arg0 : i32 to index
    %1 = arith.index_cast %arg1 : i32 to index
    %2 = memref.load %arg3[%0, %1] : memref<1x5xi32, #tpu.memory_space<smem>>
    %3 = arith.index_cast %arg0 : i32 to index
    %4 = arith.index_cast %arg1 : i32 to index
    %5 = memref.load %arg4[%3, %4] : memref<1x5xi32, #tpu.memory_space<smem>>
    %c0_i32 = arith.constant 0 : i32
    %c0_i32_0 = arith.constant 0 : i32
    return %2, %5, %c0_i32 : i32, i32, i32
  }
  func.func @transform_4(%arg0: i32, %arg1: i32, %arg2: memref<1xi32, #tpu.memory_space<smem>>, %arg3: memref<1x5xi32, #tpu.memory_space<smem>>, %arg4: memref<1x5xi32, #tpu.memory_space<smem>>) -> (i32, i32) {
    %c0_i32 = arith.constant 0 : i32
    %c0_i32_0 = arith.constant 0 : i32
    return %arg0, %c0_i32 : i32, i32
  }
}

module attributes {stable_mosaic.version = 11 : i64} {
  func.func @_head_kernel(%arg0: i32, %arg1: memref<512x128xbf16, #tpu.memory_space<vmem>>, %arg2: memref<128x128xbf16, #tpu.memory_space<vmem>>, %arg3: memref<1x128xf32, #tpu.memory_space<vmem>>, %arg4: memref<128x128xbf16, #tpu.memory_space<vmem>>, %arg5: memref<1x128xf32, #tpu.memory_space<vmem>>, %arg6: memref<512x128xf32, #tpu.memory_space<vmem>>, %arg7: memref<512x128xf32, #tpu.memory_space<vmem>>) attributes {dimension_semantics = [#tpu.dimension_semantics<parallel>], iteration_bounds = array<i64: 1>, scalar_prefetch = 0 : i64, scratch_operands = 0 : i64, tpu.core_type = #tpu.core_type<tc>, window_params = [{transform_indices = @transform_0, window_bounds = array<i64: 512, 128>}, {pipeline_mode = #tpu.pipeline_mode<synchronous>, transform_indices = @transform_1, window_bounds = array<i64: 128, 128>}, {pipeline_mode = #tpu.pipeline_mode<synchronous>, transform_indices = @transform_2, window_bounds = array<i64: 1, 128>}, {pipeline_mode = #tpu.pipeline_mode<synchronous>, transform_indices = @transform_3, window_bounds = array<i64: 128, 128>}, {pipeline_mode = #tpu.pipeline_mode<synchronous>, transform_indices = @transform_4, window_bounds = array<i64: 1, 128>}, {transform_indices = @transform_5, window_bounds = array<i64: 512, 128>}, {transform_indices = @transform_6, window_bounds = array<i64: 512, 128>}]} {
    %c0 = arith.constant 0 : index
    %c0_0 = arith.constant 0 : index
    %0 = vector.load %arg1[%c0, %c0_0] : memref<512x128xbf16, #tpu.memory_space<vmem>>, vector<512x128xbf16>
    %c0_1 = arith.constant 0 : index
    %c0_2 = arith.constant 0 : index
    %1 = vector.load %arg2[%c0_1, %c0_2] : memref<128x128xbf16, #tpu.memory_space<vmem>>, vector<128x128xbf16>
    %cst = arith.constant dense<0.000000e+00> : vector<512x128xf32>
    %2 = tpu.matmul %0, %1, %cst {dimension_numbers = #tpu.dot_dimension_numbers<[1], [0], [0], [1], [0, 0, 1, 1], [], []>} : vector<512x128xbf16>, vector<128x128xbf16>, vector<512x128xf32> -> vector<512x128xf32>
    %c0_3 = arith.constant 0 : index
    %c0_4 = arith.constant 0 : index
    %3 = vector.load %arg3[%c0_3, %c0_4] : memref<1x128xf32, #tpu.memory_space<vmem>>, vector<1x128xf32>
    %4 = vector.broadcast %3 : vector<1x128xf32> to vector<512x128xf32>
    %5 = arith.addf %2, %4 : vector<512x128xf32>
    %cst_5 = arith.constant 0.000000e+00 : f32
    %6 = vector.broadcast %cst_5 : f32 to vector<512x128xf32>
    %7 = arith.maximumf %5, %6 : vector<512x128xf32>
    %c0_6 = arith.constant 0 : index
    %c0_7 = arith.constant 0 : index
    %8 = vector.load %arg7[%c0_6, %c0_7] : memref<512x128xf32, #tpu.memory_space<vmem>>, vector<512x128xf32>
    tpu.vector_store %arg7[%c0_6, %c0_7], %7 {strides = array<i32>} : memref<512x128xf32, #tpu.memory_space<vmem>>, vector<512x128xf32>,
    %9 = arith.truncf %7 : vector<512x128xf32> to vector<512x128xbf16>
    %c0_8 = arith.constant 0 : index
    %c0_9 = arith.constant 0 : index
    %10 = vector.load %arg4[%c0_8, %c0_9] : memref<128x128xbf16, #tpu.memory_space<vmem>>, vector<128x128xbf16>
    %cst_10 = arith.constant dense<0.000000e+00> : vector<512x128xf32>
    %11 = tpu.matmul %9, %10, %cst_10 {dimension_numbers = #tpu.dot_dimension_numbers<[1], [0], [0], [1], [0, 0, 1, 1], [], []>} : vector<512x128xbf16>, vector<128x128xbf16>, vector<512x128xf32> -> vector<512x128xf32>
    %c0_11 = arith.constant 0 : index
    %c0_12 = arith.constant 0 : index
    %12 = vector.load %arg5[%c0_11, %c0_12] : memref<1x128xf32, #tpu.memory_space<vmem>>, vector<1x128xf32>
    %13 = vector.broadcast %12 : vector<1x128xf32> to vector<512x128xf32>
    %14 = arith.addf %11, %13 : vector<512x128xf32>
    %cst_13 = arith.constant dense<0xFF800000> : vector<512xf32>
    %15 = vector.multi_reduction <maximumf>, %14, %cst_13 [1] : vector<512x128xf32> to vector<512xf32>
    %16 = vector.shape_cast %15 : vector<512xf32> to vector<512x1xf32>
    %17 = vector.broadcast %16 : vector<512x1xf32> to vector<512x128xf32>
    %18 = arith.subf %14, %17 : vector<512x128xf32>
    %19 = math.exp %18 : vector<512x128xf32>
    %cst_14 = arith.constant dense<0.000000e+00> : vector<512xf32>
    %20 = vector.multi_reduction <add>, %19, %cst_14 [1] : vector<512x128xf32> to vector<512xf32>
    %21 = vector.shape_cast %20 : vector<512xf32> to vector<512x1xf32>
    %22 = math.log %21 : vector<512x1xf32>
    %23 = vector.broadcast %22 : vector<512x1xf32> to vector<512x128xf32>
    %24 = arith.subf %18, %23 : vector<512x128xf32>
    %c0_15 = arith.constant 0 : index
    %c0_16 = arith.constant 0 : index
    %25 = vector.load %arg6[%c0_15, %c0_16] : memref<512x128xf32, #tpu.memory_space<vmem>>, vector<512x128xf32>
    tpu.vector_store %arg6[%c0_15, %c0_16], %24 {strides = array<i32>} : memref<512x128xf32, #tpu.memory_space<vmem>>, vector<512x128xf32>,
    return
  }
  func.func @transform_0(%arg0: i32) -> (i32, i32) {
    %c0_i32 = arith.constant 0 : i32
    %c0_i32_0 = arith.constant 0 : i32
    return %arg0, %c0_i32 : i32, i32
  }
  func.func @transform_1(%arg0: i32) -> (i32, i32) {
    %c0_i32 = arith.constant 0 : i32
    %c0_i32_0 = arith.constant 0 : i32
    %c0_i32_1 = arith.constant 0 : i32
    return %c0_i32, %c0_i32_0 : i32, i32
  }
  func.func @transform_2(%arg0: i32) -> (i32, i32) {
    %c0_i32 = arith.constant 0 : i32
    %c0_i32_0 = arith.constant 0 : i32
    %c0_i32_1 = arith.constant 0 : i32
    return %c0_i32, %c0_i32_0 : i32, i32
  }
  func.func @transform_3(%arg0: i32) -> (i32, i32) {
    %c0_i32 = arith.constant 0 : i32
    %c0_i32_0 = arith.constant 0 : i32
    %c0_i32_1 = arith.constant 0 : i32
    return %c0_i32, %c0_i32_0 : i32, i32
  }
  func.func @transform_4(%arg0: i32) -> (i32, i32) {
    %c0_i32 = arith.constant 0 : i32
    %c0_i32_0 = arith.constant 0 : i32
    %c0_i32_1 = arith.constant 0 : i32
    return %c0_i32, %c0_i32_0 : i32, i32
  }
  func.func @transform_5(%arg0: i32) -> (i32, i32) {
    %c0_i32 = arith.constant 0 : i32
    %c0_i32_0 = arith.constant 0 : i32
    return %arg0, %c0_i32 : i32, i32
  }
  func.func @transform_6(%arg0: i32) -> (i32, i32) {
    %c0_i32 = arith.constant 0 : i32
    %c0_i32_0 = arith.constant 0 : i32
    return %arg0, %c0_i32 : i32, i32
  }
}

</mosaic_0001>

<llo_original>
// kernel: net_forward.5
$region0: #{net_forward.5}
  #allocation0 [shape = 'u32[]', space=smem, size = 0x4, offset = 0x4, fixed_abs, tag = 'smem constant byte address 0x4 - core index']
  #allocation1 [shape = 'u32[144,128]{1,0:T(1,128)}', space=vmem, size = 0x12000, scoped, tag = 'internal scratch']
  %s0 = inlined_call_operand.vmem [shape: bf16[512,128], index: 0, kind: input, shape index: {}]
  %s1 = inlined_call_operand.hbm [shape: bf16[6,128,128], index: 1, kind: input, shape index: {}]
  %s2 = inlined_call_operand.vmem [shape: bf16[6,512,128], index: 2, kind: output, shape index: {}]
  %s3 = sld [smem:[#allocation0]]
  $region45: #{net_forward.5} parent=0
    _
  %s5 = ssub.s32 1, %s3
  %s6 = scalar_select 0, %s5, %s3
  $region1: #{net_forward.5} parent=0
    #allocation2 [shape = 'u8[65536]{0}', space=vmem, size = 0x10000, scoped, tag = 'input window, operand 1']
    #allocation3 [shape = 's32[2]{0}', space=sflag, size = 0x8, scoped, tag = 'scoped memory for net_forward.5']
    %7 = vsyncpa [#allocation3], 0
    %s8 = scalar_lea.sflag [#allocation3], 1
    %9 = vsyncpa %s8, 0
    loop: start=0, step=1, limit=8
    $region2: #{net_forward.5} parent=1 // loop_pre_header
      _
    $region3: #{net_forward.5} parent=1 // loop_header
      %s11 = sphi 0, %s15
      %p12 = scmp.ge.s32.totalorder %s11, 8
      %s18 = sphi 0, %s30
      %s19 = sphi 0, %s26
      %s20 = sphi 0, %s18
      %s21 = sphi 0, %s19
      %s22 = sphi 0, %s20
      %s23 = sphi 0, %s21
      %s33 = sphi 0, %s35
      %s36 = sphi 0, %s33
      %s37 = sphi 0, %s36
      %s53 = sphi 0, %s37
      %s59 = sphi 0, %s61
      %s62 = sphi 0, %s59
      %s63 = sphi 0, %s62
      %s79 = sphi 0, %s63
      %s87 = sphi 0, %s89
      %s90 = sphi 0, %s87
      %s91 = sphi 0, %s90
      %s107 = sphi 0, %s91
    $region4: #{net_forward.5} parent=1 // loop_header_branch
      %14 = sbr.rel (%p12) target = $region8
    $region5: #{net_forward.5} parent=1 // loop_body
      %s16 = ssub.s32 %s11, 1
      %s17 = ssub.s32 %s11, 2
      %s24 = sadd.s32 1, %s19
      %p25 = scmp.ge.s32.totalorder %s24, 1
      %s26 = scalar_select %p25, 0, %s24
      %s27 = sadd.s32 1, %s18
      %s28 = scalar_select %p25, %s27, %s18
      %p29 = scmp.ge.s32.totalorder %s28, 6
      %s30 = scalar_select %p29, 0, %s28
      %s31 = ssub.s32 %s19, %s26
      %p32 = scmp.eq.s32.totalorder %s31, 0
      %s34 = sadd.s32 %s33, 1
      %s35 = scalar_select %p32, %s33, %s34
      %p38 = pneg %p32
      %p39 = scmp.eq.s32.totalorder %s11, 5
      %p40 = por %p38, %p39
      %p41 = scmp.ne.s32.totalorder %s33, %s36
      %p42 = scmp.eq.s32.totalorder %s11, 0
      %p43 = por %p41, %p42
      %p44 = scmp.ne.s32.totalorder %s33, %s36
      %p45 = scmp.eq.s32.totalorder %s16, 5
      %p46 = por %p44, %p45
      %p47 = scmp.ne.s32.totalorder %s36, %s37
      %p48 = scmp.eq.s32.totalorder %s16, 0
      %p49 = por %p47, %p48
      %p50 = scmp.ne.s32.totalorder %s36, %s37
      %p51 = scmp.eq.s32.totalorder %s17, 5
      %p52 = por %p50, %p51
      %p54 = scmp.ne.s32.totalorder %s37, %s53
      %p55 = scmp.eq.s32.totalorder %s17, 0
      %p56 = por %p54, %p55
      %s57 = ssub.s32 %s18, %s30
      %p58 = scmp.eq.s32.totalorder %s57, 0
      %s60 = sadd.s32 %s59, 1
      %s61 = scalar_select %p58, %s59, %s60
      %p64 = pneg %p58
      %p65 = scmp.eq.s32.totalorder %s11, 5
      %p66 = por %p64, %p65
      %p67 = scmp.ne.s32.totalorder %s59, %s62
      %p68 = scmp.eq.s32.totalorder %s11, 0
      %p69 = por %p67, %p68
      %p70 = scmp.ne.s32.totalorder %s59, %s62
      %p71 = scmp.eq.s32.totalorder %s16, 5
      %p72 = por %p70, %p71
      %p73 = scmp.ne.s32.totalorder %s62, %s63
      %p74 = scmp.eq.s32.totalorder %s16, 0
      %p75 = por %p73, %p74
      %p76 = scmp.ne.s32.totalorder %s62, %s63
      %p77 = scmp.eq.s32.totalorder %s17, 5
      %p78 = por %p76, %p77
      %p80 = scmp.ne.s32.totalorder %s63, %s79
      %p81 = scmp.eq.s32.totalorder %s17, 0
      %p82 = por %p80, %p81
      %s83 = ssub.s32 %s18, %s30
      %s84 = ssub.s32 %s19, %s26
      %s85 = sor.u32 %s83, %s84
      %p86 = scmp.eq.s32.totalorder %s85, 0
      %s88 = sadd.s32 %s87, 1
      %s89 = scalar_select %p86, %s87, %s88
      %p92 = pneg %p86
      %p93 = scmp.eq.s32.totalorder %s11, 5
      %p94 = por %p92, %p93
      %p95 = scmp.ne.s32.totalorder %s87, %s90
      %p96 = scmp.eq.s32.totalorder %s11, 0
      %p97 = por %p95, %p96
      %p98 = scmp.ne.s32.totalorder %s87, %s90
      %p99 = scmp.eq.s32.totalorder %s16, 5
      %p100 = por %p98, %p99
      %p101 = scmp.ne.s32.totalorder %s90, %s91
      %p102 = scmp.eq.s32.totalorder %s16, 0
      %p103 = por %p101, %p102
      %p104 = scmp.ne.s32.totalorder %s90, %s91
      %p105 = scmp.eq.s32.totalorder %s17, 5
      %p106 = por %p104, %p105
      %p108 = scmp.ne.s32.totalorder %s91, %s107
      %p109 = scmp.eq.s32.totalorder %s17, 0
      %p110 = por %p108, %p109
      %p111 = scmp.le.s32.totalorder 1, %s11
      %p112 = scmp.lt.s32.totalorder %s11, 7
      %p113 = pnand %p111, %p112
      %p114 = pneg %p113
      // Predicated region
      $region9: #{net_forward.5} parent=5 // pred_check
        _
      $region10: #{net_forward.5} parent=5 // pred_check_branch
        %116 = sbr.rel (%p113) target = $region12
      $region11: #{net_forward.5} parent=5 // pred_region
        %s117 = ssub.s32 %s11, 1
        // Predicated region
        $region13: #{net_forward.5} parent=11 // pred_check
          %p118 = pneg %p49
        $region14: #{net_forward.5} parent=11 // pred_check_branch
          %120 = sbr.rel (%p118) target = $region16
        $region15: #{net_forward.5} parent=11 // pred_region
          %s121 = smul.u32 64, %s21
          %p122 = scmp.lt.s32.totalorder %s121, 63
          %s123 = scalar_select %p122, %s121, 63
          %s124 = smul.addr %s123, 4
          %s125 = scalar_lea.vmem %s0, %s124
          %s126 = smul.u32 64, %s21
        $region16: #{net_forward.5} parent=11 // pred_fallthru
          _
      $region12: #{net_forward.5} parent=5 // pred_fallthru
        _
      %p127 = scmp.lt.s32.totalorder %s11, 6
      // Predicated region
      $region17: #{net_forward.5} parent=5 // pred_check
        %p128 = pneg %p127
      $region18: #{net_forward.5} parent=5 // pred_check_branch
        %130 = sbr.rel (%p128) target = $region20
      $region19: #{net_forward.5} parent=5 // pred_region
        // Predicated region
        $region21: #{net_forward.5} parent=19 // pred_check
          %p131 = pneg %p69
        $region22: #{net_forward.5} parent=19 // pred_check_branch
          %133 = sbr.rel (%p131) target = $region24
        $region23: #{net_forward.5} parent=19 // pred_region
          %s134 = sand.u32 %s59, 1
          %s135 = scalar_lea.sflag [#allocation3], %s134
          %s136 = sand.u32 %s59, 1
          %s137 = smul.addr %s136, 64
          %s138 = scalar_lea.vmem [#allocation2], %s137
          %s140 = ssub.s32 1024, 1024
          %141 = vsyncadd %s135, %s140
          %s142 = smul.addr %s18, 16
          %s143 = smul.addr %s142, 64
          %s144 = scalar_lea.hbm %s1, %s143
          %s145 = sshll.u32 %s138, 4
          %s146 = int_to_ptr.vmem [resolvable:$true] %s145
          %151 = dma.hbm_to_vmem [thread:$0]  %s144, 1024, %s146, %s135, 64, 64, 4
        $region24: #{net_forward.5} parent=19 // pred_fallthru
          _
      $region20: #{net_forward.5} parent=5 // pred_fallthru
        _
      %p152 = scmp.le.s32.totalorder 1, %s11
      %p153 = scmp.lt.s32.totalorder %s11, 7
      %p154 = pnand %p152, %p153
      %p155 = pneg %p154
      // Predicated region
      $region25: #{net_forward.5} parent=5 // pred_check
        _
      $region26: #{net_forward.5} parent=5 // pred_check_branch
        %157 = sbr.rel (%p154) target = $region28
      $region27: #{net_forward.5} parent=5 // pred_region
        %s158 = ssub.s32 %s11, 1
        %s159 = sand.u32 %s62, 1
        %s160 = scalar_lea.sflag [#allocation3], %s159
        %s161 = sand.u32 %s62, 1
        %s162 = smul.addr %s161, 64
        %s163 = scalar_lea.vmem [#allocation2], %s162
        // Predicated region
        $region29: #{net_forward.5} parent=27 // pred_check
          %p164 = pneg %p75
        $region30: #{net_forward.5} parent=27 // pred_check_branch
          %166 = sbr.rel (%p164) target = $region32
        $region31: #{net_forward.5} parent=27 // pred_region
          %167 = dma.done %s160, 1024
        $region32: #{net_forward.5} parent=27 // pred_fallthru
          _
        %s168 = smul.u32 64, %s21
        %p169 = scmp.lt.s32.totalorder %s168, 63
        %s170 = scalar_select %p169, %s168, 63
        %s171 = smul.addr %s170, 4
        %s172 = scalar_lea.vmem %s0, %s171
        %p173 = pneg %p49
        %p174 = pneg %p46
        %s175 = sand.u32 %s62, 1
        %s176 = scalar_lea.sflag [#allocation3], %s175
        %s177 = sand.u32 %s62, 1
        %s178 = smul.addr %s177, 64
        %s179 = scalar_lea.vmem [#allocation2], %s178
        %p180 = pneg %p75
        %p181 = pneg %p72
        %p182 = pneg %p103
        %p183 = pneg %p100
        %s184 = smul.u32 64, %s21
        %p185 = scmp.lt.s32.totalorder %s20, 5
        %s186 = scalar_select %p185, %s20, 5
        %p187 = scmp.lt.s32.totalorder %s184, 63
        %s188 = scalar_select %p187, %s184, 63
        %s189 = smul.addr %s186, 64
        %s190 = sadd.s32 %s188, %s189
        %s191 = smul.addr %s190, 4
        %s192 = scalar_lea.vmem %s2, %s191
        %s193 = smul.u32 64, %s21
        %p194 = scmp.lt.s32.totalorder %s193, 63
        %s195 = scalar_select %p194, %s193, 63
        %s196 = smul.addr %s195, 4
        %s197 = scalar_lea.vmem %s0, %s196
        %s198 = smul.u32 64, %s21
        %s199 = smul.u32 64, %s21
        %p200 = scmp.lt.s32.totalorder %s20, 5
        %s201 = scalar_select %p200, %s20, 5
        %p202 = scmp.lt.s32.totalorder %s199, 63
        %s203 = scalar_select %p202, %s199, 63
        %s204 = smul.addr %s201, 64
        %s205 = sadd.s32 %s203, %s204
        %s206 = smul.addr %s205, 4
        %s207 = scalar_lea.vmem %s2, %s206
        %s208 = smul.u32 64, %s21
        %v210 = vld [vmem:[%s197] sm:$0xf]
        %v211 = vld [vmem:[%s197 + $0x4] sm:$0xf]
        %v212 = vld [vmem:[%s197 + $0x8] sm:$0xf]
        %v213 = vld [vmem:[%s197 + $0xc] sm:$0xf]
        %v214 = vld [vmem:[%s197 + $0x10] sm:$0xf]
        %v215 = vld [vmem:[%s197 + $0x14] sm:$0xf]
        %v216 = vld [vmem:[%s197 + $0x18] sm:$0xf]
        %v217 = vld [vmem:[%s197 + $0x1c] sm:$0xf]
        %v218 = vld [vmem:[%s197 + $0x20] sm:$0xf]
        %v219 = vld [vmem:[%s197 + $0x24] sm:$0xf]
        %v220 = vld [vmem:[%s197 + $0x28] sm:$0xf]
        %v221 = vld [vmem:[%s197 + $0x2c] sm:$0xf]
        %v222 = vld [vmem:[%s197 + $0x30] sm:$0xf]
        %v223 = vld [vmem:[%s197 + $0x34] sm:$0xf]
        %v224 = vld [vmem:[%s197 + $0x38] sm:$0xf]
        %v225 = vld [vmem:[%s197 + $0x3c] sm:$0xf]
        %v226 = vld [vmem:[%s197 + $0x40] sm:$0xf]
        %v227 = vld [vmem:[%s197 + $0x44] sm:$0xf]
        %v228 = vld [vmem:[%s197 + $0x48] sm:$0xf]
        %v229 = vld [vmem:[%s197 + $0x4c] sm:$0xf]
        %v230 = vld [vmem:[%s197 + $0x50] sm:$0xf]
        %v231 = vld [vmem:[%s197 + $0x54] sm:$0xf]
        %v232 = vld [vmem:[%s197 + $0x58] sm:$0xf]
        %v233 = vld [vmem:[%s197 + $0x5c] sm:$0xf]
        %v234 = vld [vmem:[%s197 + $0x60] sm:$0xf]
        %v235 = vld [vmem:[%s197 + $0x64] sm:$0xf]
        %v236 = vld [vmem:[%s197 + $0x68] sm:$0xf]
        %v237 = vld [vmem:[%s197 + $0x6c] sm:$0xf]
        %v238 = vld [vmem:[%s197 + $0x70] sm:$0xf]
        %v239 = vld [vmem:[%s197 + $0x74] sm:$0xf]
        %v240 = vld [vmem:[%s197 + $0x78] sm:$0xf]
        %v241 = vld [vmem:[%s197 + $0x7c] sm:$0xf]
        %v242 = vld [vmem:[%s197 + $0x80] sm:$0xf]
        %v243 = vld [vmem:[%s197 + $0x84] sm:$0xf]
        %v244 = vld [vmem:[%s197 + $0x88] sm:$0xf]
        %v245 = vld [vmem:[%s197 + $0x8c] sm:$0xf]
        %v246 = vld [vmem:[%s197 + $0x90] sm:$0xf]
        %v247 = vld [vmem:[%s197 + $0x94] sm:$0xf]
        %v248 = vld [vmem:[%s197 + $0x98] sm:$0xf]
        %v249 = vld [vmem:[%s197 + $0x9c] sm:$0xf]
        %v250 = vld [vmem:[%s197 + $0xa0] sm:$0xf]
        %v251 = vld [vmem:[%s197 + $0xa4] sm:$0xf]
        %v252 = vld [vmem:[%s197 + $0xa8] sm:$0xf]
        %v253 = vld [vmem:[%s197 + $0xac] sm:$0xf]
        %v254 = vld [vmem:[%s197 + $0xb0] sm:$0xf]
        %v255 = vld [vmem:[%s197 + $0xb4] sm:$0xf]
        %v256 = vld [vmem:[%s197 + $0xb8] sm:$0xf]
        %v257 = vld [vmem:[%s197 + $0xbc] sm:$0xf]
        %v258 = vld [vmem:[%s197 + $0xc0] sm:$0xf]
        %v259 = vld [vmem:[%s197 + $0xc4] sm:$0xf]
        %v260 = vld [vmem:[%s197 + $0xc8] sm:$0xf]
        %v261 = vld [vmem:[%s197 + $0xcc] sm:$0xf]
        %v262 = vld [vmem:[%s197 + $0xd0] sm:$0xf]
        %v263 = vld [vmem:[%s197 + $0xd4] sm:$0xf]
        %v264 = vld [vmem:[%s197 + $0xd8] sm:$0xf]
        %v265 = vld [vmem:[%s197 + $0xdc] sm:$0xf]
        %v266 = vld [vmem:[%s197 + $0xe0] sm:$0xf]
        %v267 = vld [vmem:[%s197 + $0xe4] sm:$0xf]
        %v268 = vld [vmem:[%s197 + $0xe8] sm:$0xf]
        %v269 = vld [vmem:[%s197 + $0xec] sm:$0xf]
        %v270 = vld [vmem:[%s197 + $0xf0] sm:$0xf]
        %v271 = vld [vmem:[%s197 + $0xf4] sm:$0xf]
        %v272 = vld [vmem:[%s197 + $0xf8] sm:$0xf]
        %v273 = vld [vmem:[%s197 + $0xfc] sm:$0xf]
        %v274 = vld [vmem:[%s163] sm:$0xf]
        %v275 = vld [vmem:[%s163 + $0x4] sm:$0xf]
        %v276 = vld [vmem:[%s163 + $0x8] sm:$0xf]
        %v277 = vld [vmem:[%s163 + $0xc] sm:$0xf]
        %v278 = vld [vmem:[%s163 + $0x10] sm:$0xf]
        %v279 = vld [vmem:[%s163 + $0x14] sm:$0xf]
        %v280 = vld [vmem:[%s163 + $0x18] sm:$0xf]
        %v281 = vld [vmem:[%s163 + $0x1c] sm:$0xf]
        %v282 = vld [vmem:[%s163 + $0x20] sm:$0xf]
        %v283 = vld [vmem:[%s163 + $0x24] sm:$0xf]
        %v284 = vld [vmem:[%s163 + $0x28] sm:$0xf]
        %v285 = vld [vmem:[%s163 + $0x2c] sm:$0xf]
        %v286 = vld [vmem:[%s163 + $0x30] sm:$0xf]
        %v287 = vld [vmem:[%s163 + $0x34] sm:$0xf]
        %v288 = vld [vmem:[%s163 + $0x38] sm:$0xf]
        %v289 = vld [vmem:[%s163 + $0x3c] sm:$0xf]
        %v354 = vunpack.c.l.b16 %v210
        %v355 = vunpack.c.l.b16 %v211
        %v356 = vunpack.c.l.b16 %v212
        %v357 = vunpack.c.l.b16 %v213
        %v358 = vunpack.c.l.b16 %v214
        %v359 = vunpack.c.l.b16 %v215
        %v360 = vunpack.c.l.b16 %v216
        %v361 = vunpack.c.l.b16 %v217
        %v362 = vunpack.c.l.b16 %v218
        %v363 = vunpack.c.l.b16 %v219
        %v364 = vunpack.c.l.b16 %v220
        %v365 = vunpack.c.l.b16 %v221
        %v366 = vunpack.c.l.b16 %v222
        %v367 = vunpack.c.l.b16 %v223
        %v368 = vunpack.c.l.b16 %v224
        %v369 = vunpack.c.l.b16 %v225
        %v370 = vunpack.c.l.b16 %v226
        %v371 = vunpack.c.l.b16 %v227
        %v372 = vunpack.c.l.b16 %v228
        %v373 = vunpack.c.l.b16 %v229
        %v374 = vunpack.c.l.b16 %v230
        %v375 = vunpack.c.l.b16 %v231
        %v376 = vunpack.c.l.b16 %v232
        %v377 = vunpack.c.l.b16 %v233
        %v378 = vunpack.c.l.b16 %v234
        %v379 = vunpack.c.l.b16 %v235
        %v380 = vunpack.c.l.b16 %v236
        %v381 = vunpack.c.l.b16 %v237
        %v382 = vunpack.c.l.b16 %v238
        %v383 = vunpack.c.l.b16 %v239
        %v384 = vunpack.c.l.b16 %v240
        %v385 = vunpack.c.l.b16 %v241
        %v386 = vunpack.c.l.b16 %v242
        %v387 = vunpack.c.l.b16 %v243
        %v388 = vunpack.c.l.b16 %v244
        %v389 = vunpack.c.l.b16 %v245
        %v390 = vunpack.c.l.b16 %v246
        %v391 = vunpack.c.l.b16 %v247
        %v392 = vunpack.c.l.b16 %v248
        %v393 = vunpack.c.l.b16 %v249
        %v394 = vunpack.c.l.b16 %v250
        %v395 = vunpack.c.l.b16 %v251
        %v396 = vunpack.c.l.b16 %v252
        %v397 = vunpack.c.l.b16 %v253
        %v398 = vunpack.c.l.b16 %v254
        %v399 = vunpack.c.l.b16 %v255
        %v400 = vunpack.c.l.b16 %v256
        %v401 = vunpack.c.l.b16 %v257
        %v402 = vunpack.c.l.b16 %v258
        %v403 = vunpack.c.l.b16 %v259
        %v404 = vunpack.c.l.b16 %v260
        %v405 = vunpack.c.l.b16 %v261
        %v406 = vunpack.c.l.b16 %v262
        %v407 = vunpack.c.l.b16 %v263
        %v408 = vunpack.c.l.b16 %v264
        %v409 = vunpack.c.l.b16 %v265
        %v410 = vunpack.c.l.b16 %v266
        %v411 = vunpack.c.l.b16 %v267
        %v412 = vunpack.c.l.b16 %v268
        %v413 = vunpack.c.l.b16 %v269
        %v414 = vunpack.c.l.b16 %v270
        %v415 = vunpack.c.l.b16 %v271
        %v416 = vunpack.c.l.b16 %v272
        %v417 = vunpack.c.l.b16 %v273
        %v418 = vpack.c.b16 %v355, %v354
        %v419 = vpack.c.b16 %v357, %v356
        %v420 = vpack.c.b16 %v359, %v358
        %v421 = vpack.c.b16 %v361, %v360
        %v422 = vpack.c.b16 %v363, %v362
        %v423 = vpack.c.b16 %v365, %v364
        %v424 = vpack.c.b16 %v367, %v366
        %v425 = vpack.c.b16 %v369, %v368
        %v426 = vpack.c.b16 %v371, %v370
        %v427 = vpack.c.b16 %v373, %v372
        %v428 = vpack.c.b16 %v375, %v374
        %v429 = vpack.c.b16 %v377, %v376
        %v430 = vpack.c.b16 %v379, %v378
        %v431 = vpack.c.b16 %v381, %v380
        %v432 = vpack.c.b16 %v383, %v382
        %v433 = vpack.c.b16 %v385, %v384
        %v434 = vpack.c.b16 %v387, %v386
        %v435 = vpack.c.b16 %v389, %v388
        %v436 = vpack.c.b16 %v391, %v390
        %v437 = vpack.c.b16 %v393, %v392
        %v438 = vpack.c.b16 %v395, %v394
        %v439 = vpack.c.b16 %v397, %v396
        %v440 = vpack.c.b16 %v399, %v398
        %v441 = vpack.c.b16 %v401, %v400
        %v442 = vpack.c.b16 %v403, %v402
        %v443 = vpack.c.b16 %v405, %v404
        %v444 = vpack.c.b16 %v407, %v406
        %v445 = vpack.c.b16 %v409, %v408
        %v446 = vpack.c.b16 %v411, %v410
        %v447 = vpack.c.b16 %v413, %v412
        %v448 = vpack.c.b16 %v415, %v414
        %v449 = vpack.c.b16 %v417, %v416
        %v498 = vunpack.c.l.b16 %v274
        %v499 = vunpack.c.l.b16 %v275
        %v500 = vunpack.c.l.b16 %v276
        %v501 = vunpack.c.l.b16 %v277
        %v502 = vunpack.c.l.b16 %v278
        %v503 = vunpack.c.l.b16 %v279
        %v504 = vunpack.c.l.b16 %v280
        %v505 = vunpack.c.l.b16 %v281
        %v506 = vunpack.c.l.b16 %v282
        %v507 = vunpack.c.l.b16 %v283
        %v508 = vunpack.c.l.b16 %v284
        %v509 = vunpack.c.l.b16 %v285
        %v510 = vunpack.c.l.b16 %v286
        %v511 = vunpack.c.l.b16 %v287
        %v512 = vunpack.c.l.b16 %v288
        %v513 = vunpack.c.l.b16 %v289
        %v514 = vpack.c.b16 %v499, %v498
        %v515 = vpack.c.b16 %v501, %v500
        %v516 = vpack.c.b16 %v503, %v502
        %v517 = vpack.c.b16 %v505, %v504
        %v518 = vpack.c.b16 %v507, %v506
        %v519 = vpack.c.b16 %v509, %v508
        %v520 = vpack.c.b16 %v511, %v510
        %v521 = vpack.c.b16 %v513, %v512
        %530 = vmatprep.subr.bf16.mxu0 0
        %531 = vmatpush1.bf16.msra.mxu0 %v514
        %532 = vmatprep.subr.bf16.mxu0 0
        %533 = vmatpush1.bf16.msra.mxu0 %v515
        %534 = vmatprep.subr.bf16.mxu0 0
        %535 = vmatpush1.bf16.msra.mxu0 %v516
        %536 = vmatprep.subr.bf16.mxu0 0
        %537 = vmatpush1.bf16.msra.mxu0 %v517
        %538 = vmatprep.subr.bf16.mxu0 0
        %539 = vmatpush1.bf16.msra.mxu0 %v518
        %540 = vmatprep.subr.bf16.mxu0 0
        %541 = vmatpush1.bf16.msra.mxu0 %v519
        %542 = vmatprep.subr.bf16.mxu0 0
        %543 = vmatpush1.bf16.msra.mxu0 %v520
        %544 = vmatprep.subr.bf16.mxu0 0
        %545 = vmatpush1.bf16.msra.mxu0 %v521
        %546 = vmatprep.subr.bf16.mxu0 0
        %547 = vmatpush1.bf16.msra.mxu0 0
        %548 = vmatprep.subr.bf16.mxu0 0
        %549 = vmatpush1.bf16.msra.mxu0 0
        %550 = vmatprep.subr.bf16.mxu0 0
        %551 = vmatpush1.bf16.msra.mxu0 0
        %552 = vmatprep.subr.bf16.mxu0 0
        %553 = vmatpush1.bf16.msra.mxu0 0
        %554 = vmatprep.subr.bf16.mxu0 0
        %555 = vmatpush1.bf16.msra.mxu0 0
        %556 = vmatprep.subr.bf16.mxu0 0
        %557 = vmatpush1.bf16.msra.mxu0 0
        %558 = vmatprep.subr.bf16.mxu0 0
        %559 = vmatpush1.bf16.msra.mxu0 0
        %560 = vmatprep.subr.bf16.mxu0 0
        %561 = vmatpush1.bf16.msra.mxu0 0
        %562 = vmatprep.mubr.bf16.mxu0 0
        %563 = vmatmul.mubr.bf16.gmra.mrb[0].mxu0 %v418
        %v564 = vpop.f32.mrb[0].mxu0
        %v565 = vadd.f32 0.0, %v564
        %v566 = vpop.f32.mrb[0].mxu0
        %v567 = vpop.f32.mrb[0].mxu0
        %v568 = vadd.f32 0.0, %v567
        %v569 = vpop.f32.mrb[0].mxu0
        %570 = vmatprep.mubr.bf16.mxu0 0
        %571 = vmatmul.mubr.bf16.gmra.mrb[0].mxu0 %v419
        %v572 = vpop.f32.mrb[0].mxu0
        %v573 = vadd.f32 0.0, %v572
        %v574 = vpop.f32.mrb[0].mxu0
        %v575 = vpop.f32.mrb[0].mxu0
        %v576 = vadd.f32 0.0, %v575
        %v577 = vpop.f32.mrb[0].mxu0
        %578 = vmatprep.mubr.bf16.mxu0 0
        %579 = vmatmul.mubr.bf16.gmra.mrb[0].mxu0 %v420
        %v580 = vpop.f32.mrb[0].mxu0
        %v581 = vadd.f32 0.0, %v580
        %v582 = vpop.f32.mrb[0].mxu0
        %v583 = vpop.f32.mrb[0].mxu0
        %v584 = vadd.f32 0.0, %v583
        %v585 = vpop.f32.mrb[0].mxu0
        %586 = vmatprep.mubr.bf16.mxu0 0
        %587 = vmatmul.mubr.bf16.gmra.mrb[0].mxu0 %v421
        %v588 = vpop.f32.mrb[0].mxu0
        %v589 = vadd.f32 0.0, %v588
        %v590 = vpop.f32.mrb[0].mxu0
        %v591 = vpop.f32.mrb[0].mxu0
        %v592 = vadd.f32 0.0, %v591
        %v593 = vpop.f32.mrb[0].mxu0
        %594 = vmatprep.mubr.bf16.mxu0 0
        %595 = vmatmul.mubr.bf16.gmra.mrb[0].mxu0 %v422
        %v596 = vpop.f32.mrb[0].mxu0
        %v597 = vadd.f32 0.0, %v596
        %v598 = vpop.f32.mrb[0].mxu0
        %v599 = vpop.f32.mrb[0].mxu0
        %v600 = vadd.f32 0.0, %v599
        %v601 = vpop.f32.mrb[0].mxu0
        %602 = vmatprep.mubr.bf16.mxu0 0
        %603 = vmatmul.mubr.bf16.gmra.mrb[0].mxu0 %v423
        %v604 = vpop.f32.mrb[0].mxu0
        %v605 = vadd.f32 0.0, %v604
        %v606 = vpop.f32.mrb[0].mxu0
        %v607 = vpop.f32.mrb[0].mxu0
        %v608 = vadd.f32 0.0, %v607
        %v609 = vpop.f32.mrb[0].mxu0
        %610 = vmatprep.mubr.bf16.mxu0 0
        %611 = vmatmul.mubr.bf16.gmra.mrb[0].mxu0 %v424
        %v612 = vpop.f32.mrb[0].mxu0
        %v613 = vadd.f32 0.0, %v612
        %v614 = vpop.f32.mrb[0].mxu0
        %v615 = vpop.f32.mrb[0].mxu0
        %v616 = vadd.f32 0.0, %v615
        %v617 = vpop.f32.mrb[0].mxu0
        %618 = vmatprep.mubr.bf16.mxu0 0
        %619 = vmatmul.mubr.bf16.gmra.mrb[0].mxu0 %v425
        %v620 = vpop.f32.mrb[0].mxu0
        %v621 = vadd.f32 0.0, %v620
        %v622 = vpop.f32.mrb[0].mxu0
        %v623 = vpop.f32.mrb[0].mxu0
        %v624 = vadd.f32 0.0, %v623
        %v625 = vpop.f32.mrb[0].mxu0
        %626 = vmatprep.mubr.bf16.mxu0 0
        %627 = vmatmul.mubr.bf16.gmra.mrb[0].mxu0 %v426
        %v628 = vpop.f32.mrb[0].mxu0
        %v629 = vadd.f32 0.0, %v628
        %v630 = vpop.f32.mrb[0].mxu0
        %v631 = vpop.f32.mrb[0].mxu0
        %v632 = vadd.f32 0.0, %v631
        %v633 = vpop.f32.mrb[0].mxu0
        %634 = vmatprep.mubr.bf16.mxu0 0
        %635 = vmatmul.mubr.bf16.gmra.mrb[0].mxu0 %v427
        %v636 = vpop.f32.mrb[0].mxu0
        %v637 = vadd.f32 0.0, %v636
        %v638 = vpop.f32.mrb[0].mxu0
        %v639 = vpop.f32.mrb[0].mxu0
        %v640 = vadd.f32 0.0, %v639
        %v641 = vpop.f32.mrb[0].mxu0
        %642 = vmatprep.mubr.bf16.mxu0 0
        %643 = vmatmul.mubr.bf16.gmra.mrb[0].mxu0 %v428
        %v644 = vpop.f32.mrb[0].mxu0
        %v645 = vadd.f32 0.0, %v644
        %v646 = vpop.f32.mrb[0].mxu0
        %v647 = vpop.f32.mrb[0].mxu0
        %v648 = vadd.f32 0.0, %v647
        %v649 = vpop.f32.mrb[0].mxu0
        %650 = vmatprep.mubr.bf16.mxu0 0
        %651 = vmatmul.mubr.bf16.gmra.mrb[0].mxu0 %v429
        %v652 = vpop.f32.mrb[0].mxu0
        %v653 = vadd.f32 0.0, %v652
        %v654 = vpop.f32.mrb[0].mxu0
        %v655 = vpop.f32.mrb[0].mxu0
        %v656 = vadd.f32 0.0, %v655
        %v657 = vpop.f32.mrb[0].mxu0
        %658 = vmatprep.mubr.bf16.mxu0 0
        %659 = vmatmul.mubr.bf16.gmra.mrb[0].mxu0 %v430
        %v660 = vpop.f32.mrb[0].mxu0
        %v661 = vadd.f32 0.0, %v660
        %v662 = vpop.f32.mrb[0].mxu0
        %v663 = vpop.f32.mrb[0].mxu0
        %v664 = vadd.f32 0.0, %v663
        %v665 = vpop.f32.mrb[0].mxu0
        %666 = vmatprep.mubr.bf16.mxu0 0
        %667 = vmatmul.mubr.bf16.gmra.mrb[0].mxu0 %v431
        %v668 = vpop.f32.mrb[0].mxu0
        %v669 = vadd.f32 0.0, %v668
        %v670 = vpop.f32.mrb[0].mxu0
        %v671 = vpop.f32.mrb[0].mxu0
        %v672 = vadd.f32 0.0, %v671
        %v673 = vpop.f32.mrb[0].mxu0
        %674 = vmatprep.mubr.bf16.mxu0 0
        %675 = vmatmul.mubr.bf16.gmra.mrb[0].mxu0 %v432
        %v676 = vpop.f32.mrb[0].mxu0
        %v677 = vadd.f32 0.0, %v676
        %v678 = vpop.f32.mrb[0].mxu0
        %v679 = vpop.f32.mrb[0].mxu0
        %v680 = vadd.f32 0.0, %v679
        %v681 = vpop.f32.mrb[0].mxu0
        %682 = vmatprep.mubr.bf16.mxu0 0
        %683 = vmatmul.mubr.bf16.gmra.mrb[0].mxu0 %v433
        %v684 = vpop.f32.mrb[0].mxu0
        %v685 = vadd.f32 0.0, %v684
        %v686 = vpop.f32.mrb[0].mxu0
        %v687 = vpop.f32.mrb[0].mxu0
        %v688 = vadd.f32 0.0, %v687
        %v689 = vpop.f32.mrb[0].mxu0
        %690 = vmatprep.mubr.bf16.mxu0 0
        %691 = vmatmul.mubr.bf16.gmra.mrb[0].mxu0 %v434
        %v692 = vpop.f32.mrb[0].mxu0
        %v693 = vadd.f32 0.0, %v692
        %v694 = vpop.f32.mrb[0].mxu0
        %v695 = vpop.f32.mrb[0].mxu0
        %v696 = vadd.f32 0.0, %v695
        %v697 = vpop.f32.mrb[0].mxu0
        %698 = vmatprep.mubr.bf16.mxu0 0
        %699 = vmatmul.mubr.bf16.gmra.mrb[0].mxu0 %v435
        %v700 = vpop.f32.mrb[0].mxu0
        %v701 = vadd.f32 0.0, %v700
        %v702 = vpop.f32.mrb[0].mxu0
        %v703 = vpop.f32.mrb[0].mxu0
        %v704 = vadd.f32 0.0, %v703
        %v705 = vpop.f32.mrb[0].mxu0
        %706 = vmatprep.mubr.bf16.mxu0 0
        %707 = vmatmul.mubr.bf16.gmra.mrb[0].mxu0 %v436
        %v708 = vpop.f32.mrb[0].mxu0
        %v709 = vadd.f32 0.0, %v708
        %v710 = vpop.f32.mrb[0].mxu0
        %v711 = vpop.f32.mrb[0].mxu0
        %v712 = vadd.f32 0.0, %v711
        %v713 = vpop.f32.mrb[0].mxu0
        %714 = vmatprep.mubr.bf16.mxu0 0
        %715 = vmatmul.mubr.bf16.gmra.mrb[0].mxu0 %v437
        %v716 = vpop.f32.mrb[0].mxu0
        %v717 = vadd.f32 0.0, %v716
        %v718 = vpop.f32.mrb[0].mxu0
        %v719 = vpop.f32.mrb[0].mxu0
        %v720 = vadd.f32 0.0, %v719
        %v721 = vpop.f32.mrb[0].mxu0
        %722 = vmatprep.mubr.bf16.mxu0 0
        %723 = vmatmul.mubr.bf16.gmra.mrb[0].mxu0 %v438
        %v724 = vpop.f32.mrb[0].mxu0
        %v725 = vadd.f32 0.0, %v724
        %v726 = vpop.f32.mrb[0].mxu0
        %v727 = vpop.f32.mrb[0].mxu0
        %v728 = vadd.f32 0.0, %v727
        %v729 = vpop.f32.mrb[0].mxu0
        %730 = vmatprep.mubr.bf16.mxu0 0
        %731 = vmatmul.mubr.bf16.gmra.mrb[0].mxu0 %v439
        %v732 = vpop.f32.mrb[0].mxu0
        %v733 = vadd.f32 0.0, %v732
        %v734 = vpop.f32.mrb[0].mxu0
        %v735 = vpop.f32.mrb[0].mxu0
        %v736 = vadd.f32 0.0, %v735
        %v737 = vpop.f32.mrb[0].mxu0
        %738 = vmatprep.mubr.bf16.mxu0 0
        %739 = vmatmul.mubr.bf16.gmra.mrb[0].mxu0 %v440
        %v740 = vpop.f32.mrb[0].mxu0
        %v741 = vadd.f32 0.0, %v740
        %v742 = vpop.f32.mrb[0].mxu0
        %v743 = vpop.f32.mrb[0].mxu0
        %v744 = vadd.f32 0.0, %v743
        %v745 = vpop.f32.mrb[0].mxu0
        %746 = vmatprep.mubr.bf16.mxu0 0
        %747 = vmatmul.mubr.bf16.gmra.mrb[0].mxu0 %v441
        %v748 = vpop.f32.mrb[0].mxu0
        %v749 = vadd.f32 0.0, %v748
        %v750 = vpop.f32.mrb[0].mxu0
        %v751 = vpop.f32.mrb[0].mxu0
        %v752 = vadd.f32 0.0, %v751
        %v753 = vpop.f32.mrb[0].mxu0
        %754 = vmatprep.mubr.bf16.mxu0 0
        %755 = vmatmul.mubr.bf16.gmra.mrb[0].mxu0 %v442
        %v756 = vpop.f32.mrb[0].mxu0
        %v757 = vadd.f32 0.0, %v756
        %v758 = vpop.f32.mrb[0].mxu0
        %v759 = vpop.f32.mrb[0].mxu0
        %v760 = vadd.f32 0.0, %v759
        %v761 = vpop.f32.mrb[0].mxu0
        %762 = vmatprep.mubr.bf16.mxu0 0
        %763 = vmatmul.mubr.bf16.gmra.mrb[0].mxu0 %v443
        %v764 = vpop.f32.mrb[0].mxu0
        %v765 = vadd.f32 0.0, %v764
        %v766 = vpop.f32.mrb[0].mxu0
        %v767 = vpop.f32.mrb[0].mxu0
        %v768 = vadd.f32 0.0, %v767
        %v769 = vpop.f32.mrb[0].mxu0
        %770 = vmatprep.mubr.bf16.mxu0 0
        %771 = vmatmul.mubr.bf16.gmra.mrb[0].mxu0 %v444
        %v772 = vpop.f32.mrb[0].mxu0
        %v773 = vadd.f32 0.0, %v772
        %v774 = vpop.f32.mrb[0].mxu0
        %v775 = vpop.f32.mrb[0].mxu0
        %v776 = vadd.f32 0.0, %v775
        %v777 = vpop.f32.mrb[0].mxu0
        %778 = vmatprep.mubr.bf16.mxu0 0
        %779 = vmatmul.mubr.bf16.gmra.mrb[0].mxu0 %v445
        %v780 = vpop.f32.mrb[0].mxu0
        %v781 = vadd.f32 0.0, %v780
        %v782 = vpop.f32.mrb[0].mxu0
        %v783 = vpop.f32.mrb[0].mxu0
        %v784 = vadd.f32 0.0, %v783
        %v785 = vpop.f32.mrb[0].mxu0
        %786 = vmatprep.mubr.bf16.mxu0 0
        %787 = vmatmul.mubr.bf16.gmra.mrb[0].mxu0 %v446
        %v788 = vpop.f32.mrb[0].mxu0
        %v789 = vadd.f32 0.0, %v788
        %v790 = vpop.f32.mrb[0].mxu0
        %v791 = vpop.f32.mrb[0].mxu0
        %v792 = vadd.f32 0.0, %v791
        %v793 = vpop.f32.mrb[0].mxu0
        %794 = vmatprep.mubr.bf16.mxu0 0
        %795 = vmatmul.mubr.bf16.gmra.mrb[0].mxu0 %v447
        %v796 = vpop.f32.mrb[0].mxu0
        %v797 = vadd.f32 0.0, %v796
        %v798 = vpop.f32.mrb[0].mxu0
        %v799 = vpop.f32.mrb[0].mxu0
        %v800 = vadd.f32 0.0, %v799
        %v801 = vpop.f32.mrb[0].mxu0
        %802 = vmatprep.mubr.bf16.mxu0 0
        %803 = vmatmul.mubr.bf16.gmra.mrb[0].mxu0 %v448
        %v804 = vpop.f32.mrb[0].mxu0
        %v805 = vadd.f32 0.0, %v804
        %v806 = vpop.f32.mrb[0].mxu0
        %v807 = vpop.f32.mrb[0].mxu0
        %v808 = vadd.f32 0.0, %v807
        %v809 = vpop.f32.mrb[0].mxu0
        %810 = vmatprep.mubr.bf16.mxu0 0
        %811 = vmatmul.mubr.bf16.gmra.mrb[0].mxu0 %v449
        %v812 = vpop.f32.mrb[0].mxu0
        %v813 = vadd.f32 0.0, %v812
        %v814 = vpop.f32.mrb[0].mxu0
        %v815 = vpop.f32.mrb[0].mxu0
        %v816 = vadd.f32 0.0, %v815
        %v817 = vpop.f32.mrb[0].mxu0
        %818 = vdwg.mxu0
        %v819 = vpack.c.bf16 %v568, %v565
        %v820 = vpack.c.bf16 %v576, %v573
        %v821 = vpack.c.bf16 %v584, %v581
        %v822 = vpack.c.bf16 %v592, %v589
        %v823 = vpack.c.bf16 %v600, %v597
        %v824 = vpack.c.bf16 %v608, %v605
        %v825 = vpack.c.bf16 %v616, %v613
        %v826 = vpack.c.bf16 %v624, %v621
        %v827 = vpack.c.bf16 %v632, %v629
        %v828 = vpack.c.bf16 %v640, %v637
        %v829 = vpack.c.bf16 %v648, %v645
        %v830 = vpack.c.bf16 %v656, %v653
        %v831 = vpack.c.bf16 %v664, %v661
        %v832 = vpack.c.bf16 %v672, %v669
        %v833 = vpack.c.bf16 %v680, %v677
        %v834 = vpack.c.bf16 %v688, %v685
        %v835 = vpack.c.bf16 %v696, %v693
        %v836 = vpack.c.bf16 %v704, %v701
        %v837 = vpack.c.bf16 %v712, %v709
        %v838 = vpack.c.bf16 %v720, %v717
        %v839 = vpack.c.bf16 %v728, %v725
        %v840 = vpack.c.bf16 %v736, %v733
        %v841 = vpack.c.bf16 %v744, %v741
        %v842 = vpack.c.bf16 %v752, %v749
        %v843 = vpack.c.bf16 %v760, %v757
        %v844 = vpack.c.bf16 %v768, %v765
        %v845 = vpack.c.bf16 %v776, %v773
        %v846 = vpack.c.bf16 %v784, %v781
        %v847 = vpack.c.bf16 %v792, %v789
        %v848 = vpack.c.bf16 %v800, %v797
        %v849 = vpack.c.bf16 %v808, %v805
        %v850 = vpack.c.bf16 %v816, %v813
        %v883 = vunpack.c.l.b16 %v819
        %v884 = vunpack.c.h.b16 %v819
        %v885 = vunpack.c.l.b16 %v820
        %v886 = vunpack.c.h.b16 %v820
        %v887 = vunpack.c.l.b16 %v821
        %v888 = vunpack.c.h.b16 %v821
        %v889 = vunpack.c.l.b16 %v822
        %v890 = vunpack.c.h.b16 %v822
        %v891 = vunpack.c.l.b16 %v823
        %v892 = vunpack.c.h.b16 %v823
        %v893 = vunpack.c.l.b16 %v824
        %v894 = vunpack.c.h.b16 %v824
        %v895 = vunpack.c.l.b16 %v825
        %v896 = vunpack.c.h.b16 %v825
        %v897 = vunpack.c.l.b16 %v826
        %v898 = vunpack.c.h.b16 %v826
        %v899 = vunpack.c.l.b16 %v827
        %v900 = vunpack.c.h.b16 %v827
        %v901 = vunpack.c.l.b16 %v828
        %v902 = vunpack.c.h.b16 %v828
        %v903 = vunpack.c.l.b16 %v829
        %v904 = vunpack.c.h.b16 %v829
        %v905 = vunpack.c.l.b16 %v830
        %v906 = vunpack.c.h.b16 %v830
        %v907 = vunpack.c.l.b16 %v831
        %v908 = vunpack.c.h.b16 %v831
        %v909 = vunpack.c.l.b16 %v832
        %v910 = vunpack.c.h.b16 %v832
        %v911 = vunpack.c.l.b16 %v833
        %v912 = vunpack.c.h.b16 %v833
        %v913 = vunpack.c.l.b16 %v834
        %v914 = vunpack.c.h.b16 %v834
        %v915 = vunpack.c.l.b16 %v835
        %v916 = vunpack.c.h.b16 %v835
        %v917 = vunpack.c.l.b16 %v836
        %v918 = vunpack.c.h.b16 %v836
        %v919 = vunpack.c.l.b16 %v837
        %v920 = vunpack.c.h.b16 %v837
        %v921 = vunpack.c.l.b16 %v838
        %v922 = vunpack.c.h.b16 %v838
        %v923 = vunpack.c.l.b16 %v839
        %v924 = vunpack.c.h.b16 %v839
        %v925 = vunpack.c.l.b16 %v840
        %v926 = vunpack.c.h.b16 %v840
        %v927 = vunpack.c.l.b16 %v841
        %v928 = vunpack.c.h.b16 %v841
        %v929 = vunpack.c.l.b16 %v842
        %v930 = vunpack.c.h.b16 %v842
        %v931 = vunpack.c.l.b16 %v843
        %v932 = vunpack.c.h.b16 %v843
        %v933 = vunpack.c.l.b16 %v844
        %v934 = vunpack.c.h.b16 %v844
        %v935 = vunpack.c.l.b16 %v845
        %v936 = vunpack.c.h.b16 %v845
        %v937 = vunpack.c.l.b16 %v846
        %v938 = vunpack.c.h.b16 %v846
        %v939 = vunpack.c.l.b16 %v847
        %v940 = vunpack.c.h.b16 %v847
        %v941 = vunpack.c.l.b16 %v848
        %v942 = vunpack.c.h.b16 %v848
        %v943 = vunpack.c.l.b16 %v849
        %v944 = vunpack.c.h.b16 %v849
        %v945 = vunpack.c.l.b16 %v850
        %v946 = vunpack.c.h.b16 %v850
        %v947 = vpack.c.b16 %v883, %v883
        %v948 = vpack.c.b16 %v884, %v884
        %v949 = vpack.c.b16 %v885, %v885
        %v950 = vpack.c.b16 %v886, %v886
        %v951 = vpack.c.b16 %v887, %v887
        %v952 = vpack.c.b16 %v888, %v888
        %v953 = vpack.c.b16 %v889, %v889
        %v954 = vpack.c.b16 %v890, %v890
        %v955 = vpack.c.b16 %v891, %v891
        %v956 = vpack.c.b16 %v892, %v892
        %v957 = vpack.c.b16 %v893, %v893
        %v958 = vpack.c.b16 %v894, %v894
        %v959 = vpack.c.b16 %v895, %v895
        %v960 = vpack.c.b16 %v896, %v896
        %v961 = vpack.c.b16 %v897, %v897
        %v962 = vpack.c.b16 %v898, %v898
        %v963 = vpack.c.b16 %v899, %v899
        %v964 = vpack.c.b16 %v900, %v900
        %v965 = vpack.c.b16 %v901, %v901
        %v966 = vpack.c.b16 %v902, %v902
        %v967 = vpack.c.b16 %v903, %v903
        %v968 = vpack.c.b16 %v904, %v904
        %v969 = vpack.c.b16 %v905, %v905
        %v970 = vpack.c.b16 %v906, %v906
        %v971 = vpack.c.b16 %v907, %v907
        %v972 = vpack.c.b16 %v908, %v908
        %v973 = vpack.c.b16 %v909, %v909
        %v974 = vpack.c.b16 %v910, %v910
        %v975 = vpack.c.b16 %v911, %v911
        %v976 = vpack.c.b16 %v912, %v912
        %v977 = vpack.c.b16 %v913, %v913
        %v978 = vpack.c.b16 %v914, %v914
        %v979 = vpack.c.b16 %v915, %v915
        %v980 = vpack.c.b16 %v916, %v916
        %v981 = vpack.c.b16 %v917, %v917
        %v982 = vpack.c.b16 %v918, %v918
        %v983 = vpack.c.b16 %v919, %v919
        %v984 = vpack.c.b16 %v920, %v920
        %v985 = vpack.c.b16 %v921, %v921
        %v986 = vpack.c.b16 %v922, %v922
        %v987 = vpack.c.b16 %v923, %v923
        %v988 = vpack.c.b16 %v924, %v924
        %v989 = vpack.c.b16 %v925, %v925
        %v990 = vpack.c.b16 %v926, %v926
        %v991 = vpack.c.b16 %v927, %v927
        %v992 = vpack.c.b16 %v928, %v928
        %v993 = vpack.c.b16 %v929, %v929
        %v994 = vpack.c.b16 %v930, %v930
        %v995 = vpack.c.b16 %v931, %v931
        %v996 = vpack.c.b16 %v932, %v932
        %v997 = vpack.c.b16 %v933, %v933
        %v998 = vpack.c.b16 %v934, %v934
        %v999 = vpack.c.b16 %v935, %v935
        %v1000 = vpack.c.b16 %v936, %v936
        %v1001 = vpack.c.b16 %v937, %v937
        %v1002 = vpack.c.b16 %v938, %v938
        %v1003 = vpack.c.b16 %v939, %v939
        %v1004 = vpack.c.b16 %v940, %v940
        %v1005 = vpack.c.b16 %v941, %v941
        %v1006 = vpack.c.b16 %v942, %v942
        %v1007 = vpack.c.b16 %v943, %v943
        %v1008 = vpack.c.b16 %v944, %v944
        %v1009 = vpack.c.b16 %v945, %v945
        %v1010 = vpack.c.b16 %v946, %v946
        %1075 = vst [vmem:[%s207] sm:$0xf] %v947
        %1076 = vst [vmem:[%s207 + $0x4] sm:$0xf] %v948
        %1077 = vst [vmem:[%s207 + $0x8] sm:$0xf] %v949
        %1078 = vst [vmem:[%s207 + $0xc] sm:$0xf] %v950
        %1079 = vst [vmem:[%s207 + $0x10] sm:$0xf] %v951
        %1080 = vst [vmem:[%s207 + $0x14] sm:$0xf] %v952
        %1081 = vst [vmem:[%s207 + $0x18] sm:$0xf] %v953
        %1082 = vst [vmem:[%s207 + $0x1c] sm:$0xf] %v954
        %1083 = vst [vmem:[%s207 + $0x20] sm:$0xf] %v955
        %1084 = vst [vmem:[%s207 + $0x24] sm:$0xf] %v956
        %1085 = vst [vmem:[%s207 + $0x28] sm:$0xf] %v957
        %1086 = vst [vmem:[%s207 + $0x2c] sm:$0xf] %v958
        %1087 = vst [vmem:[%s207 + $0x30] sm:$0xf] %v959
        %1088 = vst [vmem:[%s207 + $0x34] sm:$0xf] %v960
        %1089 = vst [vmem:[%s207 + $0x38] sm:$0xf] %v961
        %1090 = vst [vmem:[%s207 + $0x3c] sm:$0xf] %v962
        %1091 = vst [vmem:[%s207 + $0x40] sm:$0xf] %v963
        %1092 = vst [vmem:[%s207 + $0x44] sm:$0xf] %v964
        %1093 = vst [vmem:[%s207 + $0x48] sm:$0xf] %v965
        %1094 = vst [vmem:[%s207 + $0x4c] sm:$0xf] %v966
        %1095 = vst [vmem:[%s207 + $0x50] sm:$0xf] %v967
        %1096 = vst [vmem:[%s207 + $0x54] sm:$0xf] %v968
        %1097 = vst [vmem:[%s207 + $0x58] sm:$0xf] %v969
        %1098 = vst [vmem:[%s207 + $0x5c] sm:$0xf] %v970
        %1099 = vst [vmem:[%s207 + $0x60] sm:$0xf] %v971
        %1100 = vst [vmem:[%s207 + $0x64] sm:$0xf] %v972
        %1101 = vst [vmem:[%s207 + $0x68] sm:$0xf] %v973
        %1102 = vst [vmem:[%s207 + $0x6c] sm:$0xf] %v974
        %1103 = vst [vmem:[%s207 + $0x70] sm:$0xf] %v975
        %1104 = vst [vmem:[%s207 + $0x74] sm:$0xf] %v976
        %1105 = vst [vmem:[%s207 + $0x78] sm:$0xf] %v977
        %1106 = vst [vmem:[%s207 + $0x7c] sm:$0xf] %v978
        %1107 = vst [vmem:[%s207 + $0x80] sm:$0xf] %v979
        %1108 = vst [vmem:[%s207 + $0x84] sm:$0xf] %v980
        %1109 = vst [vmem:[%s207 + $0x88] sm:$0xf] %v981
        %1110 = vst [vmem:[%s207 + $0x8c] sm:$0xf] %v982
        %1111 = vst [vmem:[%s207 + $0x90] sm:$0xf] %v983
        %1112 = vst [vmem:[%s207 + $0x94] sm:$0xf] %v984
        %1113 = vst [vmem:[%s207 + $0x98] sm:$0xf] %v985
        %1114 = vst [vmem:[%s207 + $0x9c] sm:$0xf] %v986
        %1115 = vst [vmem:[%s207 + $0xa0] sm:$0xf] %v987
        %1116 = vst [vmem:[%s207 + $0xa4] sm:$0xf] %v988
        %1117 = vst [vmem:[%s207 + $0xa8] sm:$0xf] %v989
        %1118 = vst [vmem:[%s207 + $0xac] sm:$0xf] %v990
        %1119 = vst [vmem:[%s207 + $0xb0] sm:$0xf] %v991
        %1120 = vst [vmem:[%s207 + $0xb4] sm:$0xf] %v992
        %1121 = vst [vmem:[%s207 + $0xb8] sm:$0xf] %v993
        %1122 = vst [vmem:[%s207 + $0xbc] sm:$0xf] %v994
        %1123 = vst [vmem:[%s207 + $0xc0] sm:$0xf] %v995
        %1124 = vst [vmem:[%s207 + $0xc4] sm:$0xf] %v996
        %1125 = vst [vmem:[%s207 + $0xc8] sm:$0xf] %v997
        %1126 = vst [vmem:[%s207 + $0xcc] sm:$0xf] %v998
        %1127 = vst [vmem:[%s207 + $0xd0] sm:$0xf] %v999
        %1128 = vst [vmem:[%s207 + $0xd4] sm:$0xf] %v1000
        %1129 = vst [vmem:[%s207 + $0xd8] sm:$0xf] %v1001
        %1130 = vst [vmem:[%s207 + $0xdc] sm:$0xf] %v1002
        %1131 = vst [vmem:[%s207 + $0xe0] sm:$0xf] %v1003
        %1132 = vst [vmem:[%s207 + $0xe4] sm:$0xf] %v1004
        %1133 = vst [vmem:[%s207 + $0xe8] sm:$0xf] %v1005
        %1134 = vst [vmem:[%s207 + $0xec] sm:$0xf] %v1006
        %1135 = vst [vmem:[%s207 + $0xf0] sm:$0xf] %v1007
        %1136 = vst [vmem:[%s207 + $0xf4] sm:$0xf] %v1008
        %1137 = vst [vmem:[%s207 + $0xf8] sm:$0xf] %v1009
        %1138 = vst [vmem:[%s207 + $0xfc] sm:$0xf] %v1010
        %s1139 = smul.u32 64, %s21
        %p1140 = scmp.lt.s32.totalorder %s20, 5
        %s1141 = scalar_select %p1140, %s20, 5
        %p1142 = scmp.lt.s32.totalorder %s1139, 63
        %s1143 = scalar_select %p1142, %s1139, 63
        %s1144 = smul.addr %s1141, 64
        %s1145 = sadd.s32 %s1143, %s1144
        %s1146 = smul.addr %s1145, 4
        %s1147 = scalar_lea.vmem %s2, %s1146
        // Predicated region
        $region33: #{net_forward.5} parent=27 // pred_check
          %p1148 = pneg %p100
        $region34: #{net_forward.5} parent=27 // pred_check_branch
          %1150 = sbr.rel (%p1148) target = $region36
        $region35: #{net_forward.5} parent=27 // pred_region
          %s1151 = smul.u32 64, %s21
        $region36: #{net_forward.5} parent=27 // pred_fallthru
          _
      $region28: #{net_forward.5} parent=5 // pred_fallthru
        _
      %p1152 = scmp.le.s32.totalorder 2, %s11
      // Predicated region
      $region37: #{net_forward.5} parent=5 // pred_check
        %p1153 = pneg %p1152
      $region38: #{net_forward.5} parent=5 // pred_check_branch
        %1155 = sbr.rel (%p1153) target = $region40
      $region39: #{net_forward.5} parent=5 // pred_region
        %s1156 = ssub.s32 %s11, 2
        // Predicated region
        $region41: #{net_forward.5} parent=39 // pred_check
          %p1157 = pneg %p106
        $region42: #{net_forward.5} parent=39 // pred_check_branch
          %1159 = sbr.rel (%p1157) target = $region44
        $region43: #{net_forward.5} parent=39 // pred_region
          %s1160 = smul.u32 64, %s23
          %p1161 = scmp.lt.s32.totalorder %s22, 5
          %s1162 = scalar_select %p1161, %s22, 5
          %p1163 = scmp.lt.s32.totalorder %s1160, 63
          %s1164 = scalar_select %p1163, %s1160, 63
          %s1165 = smul.addr %s1162, 64
          %s1166 = sadd.s32 %s1164, %s1165
          %s1167 = smul.addr %s1166, 4
          %s1168 = scalar_lea.vmem %s2, %s1167
        $region44: #{net_forward.5} parent=39 // pred_fallthru
          _
      $region40: #{net_forward.5} parent=5 // pred_fallthru
        _
    $region6: #{net_forward.5} parent=1 // loop_footer
      %s15 = sadd.s32 1, %s11
    $region7: #{net_forward.5} parent=1 // loop_footer_branch
      %10 = sbr.rel target = $region3
    $region8: #{net_forward.5} parent=1 // loop_exit
      _
    %1169 = vsyncpa [#allocation3], 1
    %s1170 = scalar_lea.sflag [#allocation3], 1
    %1171 = vsyncpa %s1170, 1

// kernel: net_forward.7
$region0: #{net_forward.7}
  #allocation0 [shape = 'u32[]', space=smem, size = 0x4, offset = 0x4, fixed_abs, tag = 'smem constant byte address 0x4 - core index']
  #allocation1 [shape = 'u32[144,128]{1,0:T(1,128)}', space=vmem, size = 0x12000, scoped, tag = 'internal scratch']
  %s0 = inlined_call_operand.vmem [shape: bf16[512,128], index: 0, kind: input, shape index: {}]
  %s1 = inlined_call_operand.vmem [shape: bf16[6,128,128], index: 1, kind: input, shape index: {}]
  %s2 = inlined_call_operand.vmem [shape: bf16[6,512,128], index: 2, kind: output, shape index: {}]
  %s3 = sld [smem:[#allocation0]]
  $region41: #{net_forward.7} parent=0
    _
  %s5 = ssub.s32 1, %s3
  %s6 = scalar_select 0, %s5, %s3
  loop: start=0, step=1, limit=8
  $region2: #{net_forward.7} parent=0 // loop_pre_header
    _
  $region3: #{net_forward.7} parent=0 // loop_header
    %s8 = sphi 0, %s12
    %p9 = scmp.ge.s32.totalorder %s8, 8
    %s15 = sphi 0, %s27
    %s16 = sphi 0, %s23
    %s17 = sphi 0, %s15
    %s18 = sphi 0, %s16
    %s19 = sphi 0, %s17
    %s20 = sphi 0, %s18
    %s30 = sphi 0, %s32
    %s33 = sphi 0, %s30
    %s34 = sphi 0, %s33
    %s50 = sphi 0, %s34
    %s56 = sphi 0, %s58
    %s59 = sphi 0, %s56
    %s60 = sphi 0, %s59
    %s76 = sphi 0, %s60
    %s84 = sphi 0, %s86
    %s87 = sphi 0, %s84
    %s88 = sphi 0, %s87
    %s104 = sphi 0, %s88
  $region4: #{net_forward.7} parent=0 // loop_header_branch
    %11 = sbr.rel (%p9) target = $region8
  $region5: #{net_forward.7} parent=0 // loop_body
    %s13 = ssub.s32 %s8, 1
    %s14 = ssub.s32 %s8, 2
    %s21 = sadd.s32 1, %s16
    %p22 = scmp.ge.s32.totalorder %s21, 1
    %s23 = scalar_select %p22, 0, %s21
    %s24 = sadd.s32 1, %s15
    %s25 = scalar_select %p22, %s24, %s15
    %p26 = scmp.ge.s32.totalorder %s25, 6
    %s27 = scalar_select %p26, 0, %s25
    %s28 = ssub.s32 %s16, %s23
    %p29 = scmp.eq.s32.totalorder %s28, 0
    %s31 = sadd.s32 %s30, 1
    %s32 = scalar_select %p29, %s30, %s31
    %p35 = pneg %p29
    %p36 = scmp.eq.s32.totalorder %s8, 5
    %p37 = por %p35, %p36
    %p38 = scmp.ne.s32.totalorder %s30, %s33
    %p39 = scmp.eq.s32.totalorder %s8, 0
    %p40 = por %p38, %p39
    %p41 = scmp.ne.s32.totalorder %s30, %s33
    %p42 = scmp.eq.s32.totalorder %s13, 5
    %p43 = por %p41, %p42
    %p44 = scmp.ne.s32.totalorder %s33, %s34
    %p45 = scmp.eq.s32.totalorder %s13, 0
    %p46 = por %p44, %p45
    %p47 = scmp.ne.s32.totalorder %s33, %s34
    %p48 = scmp.eq.s32.totalorder %s14, 5
    %p49 = por %p47, %p48
    %p51 = scmp.ne.s32.totalorder %s34, %s50
    %p52 = scmp.eq.s32.totalorder %s14, 0
    %p53 = por %p51, %p52
    %s54 = ssub.s32 %s15, %s27
    %p55 = scmp.eq.s32.totalorder %s54, 0
    %s57 = sadd.s32 %s56, 1
    %s58 = scalar_select %p55, %s56, %s57
    %p61 = pneg %p55
    %p62 = scmp.eq.s32.totalorder %s8, 5
    %p63 = por %p61, %p62
    %p64 = scmp.ne.s32.totalorder %s56, %s59
    %p65 = scmp.eq.s32.totalorder %s8, 0
    %p66 = por %p64, %p65
    %p67 = scmp.ne.s32.totalorder %s56, %s59
    %p68 = scmp.eq.s32.totalorder %s13, 5
    %p69 = por %p67, %p68
    %p70 = scmp.ne.s32.totalorder %s59, %s60
    %p71 = scmp.eq.s32.totalorder %s13, 0
    %p72 = por %p70, %p71
    %p73 = scmp.ne.s32.totalorder %s59, %s60
    %p74 = scmp.eq.s32.totalorder %s14, 5
    %p75 = por %p73, %p74
    %p77 = scmp.ne.s32.totalorder %s60, %s76
    %p78 = scmp.eq.s32.totalorder %s14, 0
    %p79 = por %p77, %p78
    %s80 = ssub.s32 %s15, %s27
    %s81 = ssub.s32 %s16, %s23
    %s82 = sor.u32 %s80, %s81
    %p83 = scmp.eq.s32.totalorder %s82, 0
    %s85 = sadd.s32 %s84, 1
    %s86 = scalar_select %p83, %s84, %s85
    %p89 = pneg %p83
    %p90 = scmp.eq.s32.totalorder %s8, 5
    %p91 = por %p89, %p90
    %p92 = scmp.ne.s32.totalorder %s84, %s87
    %p93 = scmp.eq.s32.totalorder %s8, 0
    %p94 = por %p92, %p93
    %p95 = scmp.ne.s32.totalorder %s84, %s87
    %p96 = scmp.eq.s32.totalorder %s13, 5
    %p97 = por %p95, %p96
    %p98 = scmp.ne.s32.totalorder %s87, %s88
    %p99 = scmp.eq.s32.totalorder %s13, 0
    %p100 = por %p98, %p99
    %p101 = scmp.ne.s32.totalorder %s87, %s88
    %p102 = scmp.eq.s32.totalorder %s14, 5
    %p103 = por %p101, %p102
    %p105 = scmp.ne.s32.totalorder %s88, %s104
    %p106 = scmp.eq.s32.totalorder %s14, 0
    %p107 = por %p105, %p106
    %p108 = scmp.le.s32.totalorder 1, %s8
    %p109 = scmp.lt.s32.totalorder %s8, 7
    %p110 = pnand %p108, %p109
    %p111 = pneg %p110
    // Predicated region
    $region9: #{net_forward.7} parent=5 // pred_check
      _
    $region10: #{net_forward.7} parent=5 // pred_check_branch
      %113 = sbr.rel (%p110) target = $region12
    $region11: #{net_forward.7} parent=5 // pred_region
      %s114 = ssub.s32 %s8, 1
      // Predicated region
      $region13: #{net_forward.7} parent=11 // pred_check
        %p115 = pneg %p46
      $region14: #{net_forward.7} parent=11 // pred_check_branch
        %117 = sbr.rel (%p115) target = $region16
      $region15: #{net_forward.7} parent=11 // pred_region
        %s118 = smul.u32 64, %s18
        %p119 = scmp.lt.s32.totalorder %s118, 63
        %s120 = scalar_select %p119, %s118, 63
        %s121 = smul.addr %s120, 4
        %s122 = scalar_lea.vmem %s0, %s121
        %s123 = smul.u32 64, %s18
      $region16: #{net_forward.7} parent=11 // pred_fallthru
        _
    $region12: #{net_forward.7} parent=5 // pred_fallthru
      _
    %p124 = scmp.lt.s32.totalorder %s8, 6
    // Predicated region
    $region17: #{net_forward.7} parent=5 // pred_check
      %p125 = pneg %p124
    $region18: #{net_forward.7} parent=5 // pred_check_branch
      %127 = sbr.rel (%p125) target = $region20
    $region19: #{net_forward.7} parent=5 // pred_region
      // Predicated region
      $region21: #{net_forward.7} parent=19 // pred_check
        %p128 = pneg %p66
      $region22: #{net_forward.7} parent=19 // pred_check_branch
        %130 = sbr.rel (%p128) target = $region24
      $region23: #{net_forward.7} parent=19 // pred_region
        %p131 = scmp.lt.s32.totalorder %s15, 5
        %s132 = scalar_select %p131, %s15, 5
        %s133 = smul.addr %s132, 16
        %s134 = smul.addr %s133, 4
        %s135 = scalar_lea.vmem %s1, %s134
      $region24: #{net_forward.7} parent=19 // pred_fallthru
        _
    $region20: #{net_forward.7} parent=5 // pred_fallthru
      _
    %p136 = scmp.le.s32.totalorder 1, %s8
    %p137 = scmp.lt.s32.totalorder %s8, 7
    %p138 = pnand %p136, %p137
    %p139 = pneg %p138
    // Predicated region
    $region25: #{net_forward.7} parent=5 // pred_check
      _
    $region26: #{net_forward.7} parent=5 // pred_check_branch
      %141 = sbr.rel (%p138) target = $region28
    $region27: #{net_forward.7} parent=5 // pred_region
      %s142 = ssub.s32 %s8, 1
      %s143 = smul.u32 64, %s18
      %p144 = scmp.lt.s32.totalorder %s143, 63
      %s145 = scalar_select %p144, %s143, 63
      %s146 = smul.addr %s145, 4
      %s147 = scalar_lea.vmem %s0, %s146
      %p148 = pneg %p46
      %p149 = pneg %p43
      %p150 = scmp.lt.s32.totalorder %s17, 5
      %s151 = scalar_select %p150, %s17, 5
      %s152 = smul.addr %s151, 16
      %s153 = smul.addr %s152, 4
      %s154 = scalar_lea.vmem %s1, %s153
      %p155 = pneg %p72
      %p156 = pneg %p69
      %p157 = pneg %p100
      %p158 = pneg %p97
      %s159 = smul.u32 64, %s18
      %p160 = scmp.lt.s32.totalorder %s17, 5
      %s161 = scalar_select %p160, %s17, 5
      %p162 = scmp.lt.s32.totalorder %s159, 63
      %s163 = scalar_select %p162, %s159, 63
      %s164 = smul.addr %s161, 64
      %s165 = sadd.s32 %s163, %s164
      %s166 = smul.addr %s165, 4
      %s167 = scalar_lea.vmem %s2, %s166
      %s168 = smul.u32 64, %s18
      %p169 = scmp.lt.s32.totalorder %s168, 63
      %s170 = scalar_select %p169, %s168, 63
      %s171 = smul.addr %s170, 4
      %s172 = scalar_lea.vmem %s0, %s171
      %s173 = smul.u32 64, %s18
      %p174 = scmp.lt.s32.totalorder %s17, 5
      %s175 = scalar_select %p174, %s17, 5
      %s176 = smul.addr %s175, 16
      %s177 = smul.addr %s176, 4
      %s178 = scalar_lea.vmem %s1, %s177
      %s179 = smul.u32 64, %s18
      %p180 = scmp.lt.s32.totalorder %s17, 5
      %s181 = scalar_select %p180, %s17, 5
      %p182 = scmp.lt.s32.totalorder %s179, 63
      %s183 = scalar_select %p182, %s179, 63
      %s184 = smul.addr %s181, 64
      %s185 = sadd.s32 %s183, %s184
      %s186 = smul.addr %s185, 4
      %s187 = scalar_lea.vmem %s2, %s186
      %s188 = smul.u32 64, %s18
      %v190 = vld [vmem:[%s172] sm:$0xf]
      %v191 = vld [vmem:[%s172 + $0x4] sm:$0xf]
      %v192 = vld [vmem:[%s172 + $0x8] sm:$0xf]
      %v193 = vld [vmem:[%s172 + $0xc] sm:$0xf]
      %v194 = vld [vmem:[%s172 + $0x10] sm:$0xf]
      %v195 = vld [vmem:[%s172 + $0x14] sm:$0xf]
      %v196 = vld [vmem:[%s172 + $0x18] sm:$0xf]
      %v197 = vld [vmem:[%s172 + $0x1c] sm:$0xf]
      %v198 = vld [vmem:[%s172 + $0x20] sm:$0xf]
      %v199 = vld [vmem:[%s172 + $0x24] sm:$0xf]
      %v200 = vld [vmem:[%s172 + $0x28] sm:$0xf]
      %v201 = vld [vmem:[%s172 + $0x2c] sm:$0xf]
      %v202 = vld [vmem:[%s172 + $0x30] sm:$0xf]
      %v203 = vld [vmem:[%s172 + $0x34] sm:$0xf]
      %v204 = vld [vmem:[%s172 + $0x38] sm:$0xf]
      %v205 = vld [vmem:[%s172 + $0x3c] sm:$0xf]
      %v206 = vld [vmem:[%s172 + $0x40] sm:$0xf]
      %v207 = vld [vmem:[%s172 + $0x44] sm:$0xf]
      %v208 = vld [vmem:[%s172 + $0x48] sm:$0xf]
      %v209 = vld [vmem:[%s172 + $0x4c] sm:$0xf]
      %v210 = vld [vmem:[%s172 + $0x50] sm:$0xf]
      %v211 = vld [vmem:[%s172 + $0x54] sm:$0xf]
      %v212 = vld [vmem:[%s172 + $0x58] sm:$0xf]
      %v213 = vld [vmem:[%s172 + $0x5c] sm:$0xf]
      %v214 = vld [vmem:[%s172 + $0x60] sm:$0xf]
      %v215 = vld [vmem:[%s172 + $0x64] sm:$0xf]
      %v216 = vld [vmem:[%s172 + $0x68] sm:$0xf]
      %v217 = vld [vmem:[%s172 + $0x6c] sm:$0xf]
      %v218 = vld [vmem:[%s172 + $0x70] sm:$0xf]
      %v219 = vld [vmem:[%s172 + $0x74] sm:$0xf]
      %v220 = vld [vmem:[%s172 + $0x78] sm:$0xf]
      %v221 = vld [vmem:[%s172 + $0x7c] sm:$0xf]
      %v222 = vld [vmem:[%s172 + $0x80] sm:$0xf]
      %v223 = vld [vmem:[%s172 + $0x84] sm:$0xf]
      %v224 = vld [vmem:[%s172 + $0x88] sm:$0xf]
      %v225 = vld [vmem:[%s172 + $0x8c] sm:$0xf]
      %v226 = vld [vmem:[%s172 + $0x90] sm:$0xf]
      %v227 = vld [vmem:[%s172 + $0x94] sm:$0xf]
      %v228 = vld [vmem:[%s172 + $0x98] sm:$0xf]
      %v229 = vld [vmem:[%s172 + $0x9c] sm:$0xf]
      %v230 = vld [vmem:[%s172 + $0xa0] sm:$0xf]
      %v231 = vld [vmem:[%s172 + $0xa4] sm:$0xf]
      %v232 = vld [vmem:[%s172 + $0xa8] sm:$0xf]
      %v233 = vld [vmem:[%s172 + $0xac] sm:$0xf]
      %v234 = vld [vmem:[%s172 + $0xb0] sm:$0xf]
      %v235 = vld [vmem:[%s172 + $0xb4] sm:$0xf]
      %v236 = vld [vmem:[%s172 + $0xb8] sm:$0xf]
      %v237 = vld [vmem:[%s172 + $0xbc] sm:$0xf]
      %v238 = vld [vmem:[%s172 + $0xc0] sm:$0xf]
      %v239 = vld [vmem:[%s172 + $0xc4] sm:$0xf]
      %v240 = vld [vmem:[%s172 + $0xc8] sm:$0xf]
      %v241 = vld [vmem:[%s172 + $0xcc] sm:$0xf]
      %v242 = vld [vmem:[%s172 + $0xd0] sm:$0xf]
      %v243 = vld [vmem:[%s172 + $0xd4] sm:$0xf]
      %v244 = vld [vmem:[%s172 + $0xd8] sm:$0xf]
      %v245 = vld [vmem:[%s172 + $0xdc] sm:$0xf]
      %v246 = vld [vmem:[%s172 + $0xe0] sm:$0xf]
      %v247 = vld [vmem:[%s172 + $0xe4] sm:$0xf]
      %v248 = vld [vmem:[%s172 + $0xe8] sm:$0xf]
      %v249 = vld [vmem:[%s172 + $0xec] sm:$0xf]
      %v250 = vld [vmem:[%s172 + $0xf0] sm:$0xf]
      %v251 = vld [vmem:[%s172 + $0xf4] sm:$0xf]
      %v252 = vld [vmem:[%s172 + $0xf8] sm:$0xf]
      %v253 = vld [vmem:[%s172 + $0xfc] sm:$0xf]
      %v254 = vld [vmem:[%s178] sm:$0xf]
      %v255 = vld [vmem:[%s178 + $0x4] sm:$0xf]
      %v256 = vld [vmem:[%s178 + $0x8] sm:$0xf]
      %v257 = vld [vmem:[%s178 + $0xc] sm:$0xf]
      %v258 = vld [vmem:[%s178 + $0x10] sm:$0xf]
      %v259 = vld [vmem:[%s178 + $0x14] sm:$0xf]
      %v260 = vld [vmem:[%s178 + $0x18] sm:$0xf]
      %v261 = vld [vmem:[%s178 + $0x1c] sm:$0xf]
      %v262 = vld [vmem:[%s178 + $0x20] sm:$0xf]
      %v263 = vld [vmem:[%s178 + $0x24] sm:$0xf]
      %v264 = vld [vmem:[%s178 + $0x28] sm:$0xf]
      %v265 = vld [vmem:[%s178 + $0x2c] sm:$0xf]
      %v266 = vld [vmem:[%s178 + $0x30] sm:$0xf]
      %v267 = vld [vmem:[%s178 + $0x34] sm:$0xf]
      %v268 = vld [vmem:[%s178 + $0x38] sm:$0xf]
      %v269 = vld [vmem:[%s178 + $0x3c] sm:$0xf]
      %v334 = vunpack.c.l.b16 %v190
      %v335 = vunpack.c.l.b16 %v191
      %v336 = vunpack.c.l.b16 %v192
      %v337 = vunpack.c.l.b16 %v193
      %v338 = vunpack.c.l.b16 %v194
      %v339 = vunpack.c.l.b16 %v195
      %v340 = vunpack.c.l.b16 %v196
      %v341 = vunpack.c.l.b16 %v197
      %v342 = vunpack.c.l.b16 %v198
      %v343 = vunpack.c.l.b16 %v199
      %v344 = vunpack.c.l.b16 %v200
      %v345 = vunpack.c.l.b16 %v201
      %v346 = vunpack.c.l.b16 %v202
      %v347 = vunpack.c.l.b16 %v203
      %v348 = vunpack.c.l.b16 %v204
      %v349 = vunpack.c.l.b16 %v205
      %v350 = vunpack.c.l.b16 %v206
      %v351 = vunpack.c.l.b16 %v207
      %v352 = vunpack.c.l.b16 %v208
      %v353 = vunpack.c.l.b16 %v209
      %v354 = vunpack.c.l.b16 %v210
      %v355 = vunpack.c.l.b16 %v211
      %v356 = vunpack.c.l.b16 %v212
      %v357 = vunpack.c.l.b16 %v213
      %v358 = vunpack.c.l.b16 %v214
      %v359 = vunpack.c.l.b16 %v215
      %v360 = vunpack.c.l.b16 %v216
      %v361 = vunpack.c.l.b16 %v217
      %v362 = vunpack.c.l.b16 %v218
      %v363 = vunpack.c.l.b16 %v219
      %v364 = vunpack.c.l.b16 %v220
      %v365 = vunpack.c.l.b16 %v221
      %v366 = vunpack.c.l.b16 %v222
      %v367 = vunpack.c.l.b16 %v223
      %v368 = vunpack.c.l.b16 %v224
      %v369 = vunpack.c.l.b16 %v225
      %v370 = vunpack.c.l.b16 %v226
      %v371 = vunpack.c.l.b16 %v227
      %v372 = vunpack.c.l.b16 %v228
      %v373 = vunpack.c.l.b16 %v229
      %v374 = vunpack.c.l.b16 %v230
      %v375 = vunpack.c.l.b16 %v231
      %v376 = vunpack.c.l.b16 %v232
      %v377 = vunpack.c.l.b16 %v233
      %v378 = vunpack.c.l.b16 %v234
      %v379 = vunpack.c.l.b16 %v235
      %v380 = vunpack.c.l.b16 %v236
      %v381 = vunpack.c.l.b16 %v237
      %v382 = vunpack.c.l.b16 %v238
      %v383 = vunpack.c.l.b16 %v239
      %v384 = vunpack.c.l.b16 %v240
      %v385 = vunpack.c.l.b16 %v241
      %v386 = vunpack.c.l.b16 %v242
      %v387 = vunpack.c.l.b16 %v243
      %v388 = vunpack.c.l.b16 %v244
      %v389 = vunpack.c.l.b16 %v245
      %v390 = vunpack.c.l.b16 %v246
      %v391 = vunpack.c.l.b16 %v247
      %v392 = vunpack.c.l.b16 %v248
      %v393 = vunpack.c.l.b16 %v249
      %v394 = vunpack.c.l.b16 %v250
      %v395 = vunpack.c.l.b16 %v251
      %v396 = vunpack.c.l.b16 %v252
      %v397 = vunpack.c.l.b16 %v253
      %v398 = vpack.c.b16 %v335, %v334
      %v399 = vpack.c.b16 %v337, %v336
      %v400 = vpack.c.b16 %v339, %v338
      %v401 = vpack.c.b16 %v341, %v340
      %v402 = vpack.c.b16 %v343, %v342
      %v403 = vpack.c.b16 %v345, %v344
      %v404 = vpack.c.b16 %v347, %v346
      %v405 = vpack.c.b16 %v349, %v348
      %v406 = vpack.c.b16 %v351, %v350
      %v407 = vpack.c.b16 %v353, %v352
      %v408 = vpack.c.b16 %v355, %v354
      %v409 = vpack.c.b16 %v357, %v356
      %v410 = vpack.c.b16 %v359, %v358
      %v411 = vpack.c.b16 %v361, %v360
      %v412 = vpack.c.b16 %v363, %v362
      %v413 = vpack.c.b16 %v365, %v364
      %v414 = vpack.c.b16 %v367, %v366
      %v415 = vpack.c.b16 %v369, %v368
      %v416 = vpack.c.b16 %v371, %v370
      %v417 = vpack.c.b16 %v373, %v372
      %v418 = vpack.c.b16 %v375, %v374
      %v419 = vpack.c.b16 %v377, %v376
      %v420 = vpack.c.b16 %v379, %v378
      %v421 = vpack.c.b16 %v381, %v380
      %v422 = vpack.c.b16 %v383, %v382
      %v423 = vpack.c.b16 %v385, %v384
      %v424 = vpack.c.b16 %v387, %v386
      %v425 = vpack.c.b16 %v389, %v388
      %v426 = vpack.c.b16 %v391, %v390
      %v427 = vpack.c.b16 %v393, %v392
      %v428 = vpack.c.b16 %v395, %v394
      %v429 = vpack.c.b16 %v397, %v396
      %v478 = vunpack.c.l.b16 %v254
      %v479 = vunpack.c.l.b16 %v255
      %v480 = vunpack.c.l.b16 %v256
      %v481 = vunpack.c.l.b16 %v257
      %v482 = vunpack.c.l.b16 %v258
      %v483 = vunpack.c.l.b16 %v259
      %v484 = vunpack.c.l.b16 %v260
      %v485 = vunpack.c.l.b16 %v261
      %v486 = vunpack.c.l.b16 %v262
      %v487 = vunpack.c.l.b16 %v263
      %v488 = vunpack.c.l.b16 %v264
      %v489 = vunpack.c.l.b16 %v265
      %v490 = vunpack.c.l.b16 %v266
      %v491 = vunpack.c.l.b16 %v267
      %v492 = vunpack.c.l.b16 %v268
      %v493 = vunpack.c.l.b16 %v269
      %v494 = vpack.c.b16 %v479, %v478
      %v495 = vpack.c.b16 %v481, %v480
      %v496 = vpack.c.b16 %v483, %v482
      %v497 = vpack.c.b16 %v485, %v484
      %v498 = vpack.c.b16 %v487, %v486
      %v499 = vpack.c.b16 %v489, %v488
      %v500 = vpack.c.b16 %v491, %v490
      %v501 = vpack.c.b16 %v493, %v492
      %510 = vmatprep.subr.bf16.mxu0 0
      %511 = vmatpush1.bf16.msra.mxu0 %v494
      %512 = vmatprep.subr.bf16.mxu0 0
      %513 = vmatpush1.bf16.msra.mxu0 %v495
      %514 = vmatprep.subr.bf16.mxu0 0
      %515 = vmatpush1.bf16.msra.mxu0 %v496
      %516 = vmatprep.subr.bf16.mxu0 0
      %517 = vmatpush1.bf16.msra.mxu0 %v497
      %518 = vmatprep.subr.bf16.mxu0 0
      %519 = vmatpush1.bf16.msra.mxu0 %v498
      %520 = vmatprep.subr.bf16.mxu0 0
      %521 = vmatpush1.bf16.msra.mxu0 %v499
      %522 = vmatprep.subr.bf16.mxu0 0
      %523 = vmatpush1.bf16.msra.mxu0 %v500
      %524 = vmatprep.subr.bf16.mxu0 0
      %525 = vmatpush1.bf16.msra.mxu0 %v501
      %526 = vmatprep.subr.bf16.mxu0 0
      %527 = vmatpush1.bf16.msra.mxu0 0
      %528 = vmatprep.subr.bf16.mxu0 0
      %529 = vmatpush1.bf16.msra.mxu0 0
      %530 = vmatprep.subr.bf16.mxu0 0
      %531 = vmatpush1.bf16.msra.mxu0 0
      %532 = vmatprep.subr.bf16.mxu0 0
      %533 = vmatpush1.bf16.msra.mxu0 0
      %534 = vmatprep.subr.bf16.mxu0 0
      %535 = vmatpush1.bf16.msra.mxu0 0
      %536 = vmatprep.subr.bf16.mxu0 0
      %537 = vmatpush1.bf16.msra.mxu0 0
      %538 = vmatprep.subr.bf16.mxu0 0
      %539 = vmatpush1.bf16.msra.mxu0 0
      %540 = vmatprep.subr.bf16.mxu0 0
      %541 = vmatpush1.bf16.msra.mxu0 0
      %542 = vmatprep.mubr.bf16.mxu0 0
      %543 = vmatmul.mubr.bf16.gmra.mrb[0].mxu0 %v398
      %v544 = vpop.f32.mrb[0].mxu0
      %v545 = vadd.f32 0.0, %v544
      %v546 = vpop.f32.mrb[0].mxu0
      %v547 = vpop.f32.mrb[0].mxu0
      %v548 = vadd.f32 0.0, %v547
      %v549 = vpop.f32.mrb[0].mxu0
      %550 = vmatprep.mubr.bf16.mxu0 0
      %551 = vmatmul.mubr.bf16.gmra.mrb[0].mxu0 %v399
      %v552 = vpop.f32.mrb[0].mxu0
      %v553 = vadd.f32 0.0, %v552
      %v554 = vpop.f32.mrb[0].mxu0
      %v555 = vpop.f32.mrb[0].mxu0
      %v556 = vadd.f32 0.0, %v555
      %v557 = vpop.f32.mrb[0].mxu0
      %558 = vmatprep.mubr.bf16.mxu0 0
      %559 = vmatmul.mubr.bf16.gmra.mrb[0].mxu0 %v400
      %v560 = vpop.f32.mrb[0].mxu0
      %v561 = vadd.f32 0.0, %v560
      %v562 = vpop.f32.mrb[0].mxu0
      %v563 = vpop.f32.mrb[0].mxu0
      %v564 = vadd.f32 0.0, %v563
      %v565 = vpop.f32.mrb[0].mxu0
      %566 = vmatprep.mubr.bf16.mxu0 0
      %567 = vmatmul.mubr.bf16.gmra.mrb[0].mxu0 %v401
      %v568 = vpop.f32.mrb[0].mxu0
      %v569 = vadd.f32 0.0, %v568
      %v570 = vpop.f32.mrb[0].mxu0
      %v571 = vpop.f32.mrb[0].mxu0
      %v572 = vadd.f32 0.0, %v571
      %v573 = vpop.f32.mrb[0].mxu0
      %574 = vmatprep.mubr.bf16.mxu0 0
      %575 = vmatmul.mubr.bf16.gmra.mrb[0].mxu0 %v402
      %v576 = vpop.f32.mrb[0].mxu0
      %v577 = vadd.f32 0.0, %v576
      %v578 = vpop.f32.mrb[0].mxu0
      %v579 = vpop.f32.mrb[0].mxu0
      %v580 = vadd.f32 0.0, %v579
      %v581 = vpop.f32.mrb[0].mxu0
      %582 = vmatprep.mubr.bf16.mxu0 0
      %583 = vmatmul.mubr.bf16.gmra.mrb[0].mxu0 %v403
      %v584 = vpop.f32.mrb[0].mxu0
      %v585 = vadd.f32 0.0, %v584
      %v586 = vpop.f32.mrb[0].mxu0
      %v587 = vpop.f32.mrb[0].mxu0
      %v588 = vadd.f32 0.0, %v587
      %v589 = vpop.f32.mrb[0].mxu0
      %590 = vmatprep.mubr.bf16.mxu0 0
      %591 = vmatmul.mubr.bf16.gmra.mrb[0].mxu0 %v404
      %v592 = vpop.f32.mrb[0].mxu0
      %v593 = vadd.f32 0.0, %v592
      %v594 = vpop.f32.mrb[0].mxu0
      %v595 = vpop.f32.mrb[0].mxu0
      %v596 = vadd.f32 0.0, %v595
      %v597 = vpop.f32.mrb[0].mxu0
      %598 = vmatprep.mubr.bf16.mxu0 0
      %599 = vmatmul.mubr.bf16.gmra.mrb[0].mxu0 %v405
      %v600 = vpop.f32.mrb[0].mxu0
      %v601 = vadd.f32 0.0, %v600
      %v602 = vpop.f32.mrb[0].mxu0
      %v603 = vpop.f32.mrb[0].mxu0
      %v604 = vadd.f32 0.0, %v603
      %v605 = vpop.f32.mrb[0].mxu0
      %606 = vmatprep.mubr.bf16.mxu0 0
      %607 = vmatmul.mubr.bf16.gmra.mrb[0].mxu0 %v406
      %v608 = vpop.f32.mrb[0].mxu0
      %v609 = vadd.f32 0.0, %v608
      %v610 = vpop.f32.mrb[0].mxu0
      %v611 = vpop.f32.mrb[0].mxu0
      %v612 = vadd.f32 0.0, %v611
      %v613 = vpop.f32.mrb[0].mxu0
      %614 = vmatprep.mubr.bf16.mxu0 0
      %615 = vmatmul.mubr.bf16.gmra.mrb[0].mxu0 %v407
      %v616 = vpop.f32.mrb[0].mxu0
      %v617 = vadd.f32 0.0, %v616
      %v618 = vpop.f32.mrb[0].mxu0
      %v619 = vpop.f32.mrb[0].mxu0
      %v620 = vadd.f32 0.0, %v619
      %v621 = vpop.f32.mrb[0].mxu0
      %622 = vmatprep.mubr.bf16.mxu0 0
      %623 = vmatmul.mubr.bf16.gmra.mrb[0].mxu0 %v408
      %v624 = vpop.f32.mrb[0].mxu0
      %v625 = vadd.f32 0.0, %v624
      %v626 = vpop.f32.mrb[0].mxu0
      %v627 = vpop.f32.mrb[0].mxu0
      %v628 = vadd.f32 0.0, %v627
      %v629 = vpop.f32.mrb[0].mxu0
      %630 = vmatprep.mubr.bf16.mxu0 0
      %631 = vmatmul.mubr.bf16.gmra.mrb[0].mxu0 %v409
      %v632 = vpop.f32.mrb[0].mxu0
      %v633 = vadd.f32 0.0, %v632
      %v634 = vpop.f32.mrb[0].mxu0
      %v635 = vpop.f32.mrb[0].mxu0
      %v636 = vadd.f32 0.0, %v635
      %v637 = vpop.f32.mrb[0].mxu0
      %638 = vmatprep.mubr.bf16.mxu0 0
      %639 = vmatmul.mubr.bf16.gmra.mrb[0].mxu0 %v410
      %v640 = vpop.f32.mrb[0].mxu0
      %v641 = vadd.f32 0.0, %v640
      %v642 = vpop.f32.mrb[0].mxu0
      %v643 = vpop.f32.mrb[0].mxu0
      %v644 = vadd.f32 0.0, %v643
      %v645 = vpop.f32.mrb[0].mxu0
      %646 = vmatprep.mubr.bf16.mxu0 0
      %647 = vmatmul.mubr.bf16.gmra.mrb[0].mxu0 %v411
      %v648 = vpop.f32.mrb[0].mxu0
      %v649 = vadd.f32 0.0, %v648
      %v650 = vpop.f32.mrb[0].mxu0
      %v651 = vpop.f32.mrb[0].mxu0
      %v652 = vadd.f32 0.0, %v651
      %v653 = vpop.f32.mrb[0].mxu0
      %654 = vmatprep.mubr.bf16.mxu0 0
      %655 = vmatmul.mubr.bf16.gmra.mrb[0].mxu0 %v412
      %v656 = vpop.f32.mrb[0].mxu0
      %v657 = vadd.f32 0.0, %v656
      %v658 = vpop.f32.mrb[0].mxu0
      %v659 = vpop.f32.mrb[0].mxu0
      %v660 = vadd.f32 0.0, %v659
      %v661 = vpop.f32.mrb[0].mxu0
      %662 = vmatprep.mubr.bf16.mxu0 0
      %663 = vmatmul.mubr.bf16.gmra.mrb[0].mxu0 %v413
      %v664 = vpop.f32.mrb[0].mxu0
      %v665 = vadd.f32 0.0, %v664
      %v666 = vpop.f32.mrb[0].mxu0
      %v667 = vpop.f32.mrb[0].mxu0
      %v668 = vadd.f32 0.0, %v667
      %v669 = vpop.f32.mrb[0].mxu0
      %670 = vmatprep.mubr.bf16.mxu0 0
      %671 = vmatmul.mubr.bf16.gmra.mrb[0].mxu0 %v414
      %v672 = vpop.f32.mrb[0].mxu0
      %v673 = vadd.f32 0.0, %v672
      %v674 = vpop.f32.mrb[0].mxu0
      %v675 = vpop.f32.mrb[0].mxu0
      %v676 = vadd.f32 0.0, %v675
      %v677 = vpop.f32.mrb[0].mxu0
      %678 = vmatprep.mubr.bf16.mxu0 0
      %679 = vmatmul.mubr.bf16.gmra.mrb[0].mxu0 %v415
      %v680 = vpop.f32.mrb[0].mxu0
      %v681 = vadd.f32 0.0, %v680
      %v682 = vpop.f32.mrb[0].mxu0
      %v683 = vpop.f32.mrb[0].mxu0
      %v684 = vadd.f32 0.0, %v683
      %v685 = vpop.f32.mrb[0].mxu0
      %686 = vmatprep.mubr.bf16.mxu0 0
      %687 = vmatmul.mubr.bf16.gmra.mrb[0].mxu0 %v416
      %v688 = vpop.f32.mrb[0].mxu0
      %v689 = vadd.f32 0.0, %v688
      %v690 = vpop.f32.mrb[0].mxu0
      %v691 = vpop.f32.mrb[0].mxu0
      %v692 = vadd.f32 0.0, %v691
      %v693 = vpop.f32.mrb[0].mxu0
      %694 = vmatprep.mubr.bf16.mxu0 0
      %695 = vmatmul.mubr.bf16.gmra.mrb[0].mxu0 %v417
      %v696 = vpop.f32.mrb[0].mxu0
      %v697 = vadd.f32 0.0, %v696
      %v698 = vpop.f32.mrb[0].mxu0
      %v699 = vpop.f32.mrb[0].mxu0
      %v700 = vadd.f32 0.0, %v699
      %v701 = vpop.f32.mrb[0].mxu0
      %702 = vmatprep.mubr.bf16.mxu0 0
      %703 = vmatmul.mubr.bf16.gmra.mrb[0].mxu0 %v418
      %v704 = vpop.f32.mrb[0].mxu0
      %v705 = vadd.f32 0.0, %v704
      %v706 = vpop.f32.mrb[0].mxu0
      %v707 = vpop.f32.mrb[0].mxu0
      %v708 = vadd.f32 0.0, %v707
      %v709 = vpop.f32.mrb[0].mxu0
      %710 = vmatprep.mubr.bf16.mxu0 0
      %711 = vmatmul.mubr.bf16.gmra.mrb[0].mxu0 %v419
      %v712 = vpop.f32.mrb[0].mxu0
      %v713 = vadd.f32 0.0, %v712
      %v714 = vpop.f32.mrb[0].mxu0
      %v715 = vpop.f32.mrb[0].mxu0
      %v716 = vadd.f32 0.0, %v715
      %v717 = vpop.f32.mrb[0].mxu0
      %718 = vmatprep.mubr.bf16.mxu0 0
      %719 = vmatmul.mubr.bf16.gmra.mrb[0].mxu0 %v420
      %v720 = vpop.f32.mrb[0].mxu0
      %v721 = vadd.f32 0.0, %v720
      %v722 = vpop.f32.mrb[0].mxu0
      %v723 = vpop.f32.mrb[0].mxu0
      %v724 = vadd.f32 0.0, %v723
      %v725 = vpop.f32.mrb[0].mxu0
      %726 = vmatprep.mubr.bf16.mxu0 0
      %727 = vmatmul.mubr.bf16.gmra.mrb[0].mxu0 %v421
      %v728 = vpop.f32.mrb[0].mxu0
      %v729 = vadd.f32 0.0, %v728
      %v730 = vpop.f32.mrb[0].mxu0
      %v731 = vpop.f32.mrb[0].mxu0
      %v732 = vadd.f32 0.0, %v731
      %v733 = vpop.f32.mrb[0].mxu0
      %734 = vmatprep.mubr.bf16.mxu0 0
      %735 = vmatmul.mubr.bf16.gmra.mrb[0].mxu0 %v422
      %v736 = vpop.f32.mrb[0].mxu0
      %v737 = vadd.f32 0.0, %v736
      %v738 = vpop.f32.mrb[0].mxu0
      %v739 = vpop.f32.mrb[0].mxu0
      %v740 = vadd.f32 0.0, %v739
      %v741 = vpop.f32.mrb[0].mxu0
      %742 = vmatprep.mubr.bf16.mxu0 0
      %743 = vmatmul.mubr.bf16.gmra.mrb[0].mxu0 %v423
      %v744 = vpop.f32.mrb[0].mxu0
      %v745 = vadd.f32 0.0, %v744
      %v746 = vpop.f32.mrb[0].mxu0
      %v747 = vpop.f32.mrb[0].mxu0
      %v748 = vadd.f32 0.0, %v747
      %v749 = vpop.f32.mrb[0].mxu0
      %750 = vmatprep.mubr.bf16.mxu0 0
      %751 = vmatmul.mubr.bf16.gmra.mrb[0].mxu0 %v424
      %v752 = vpop.f32.mrb[0].mxu0
      %v753 = vadd.f32 0.0, %v752
      %v754 = vpop.f32.mrb[0].mxu0
      %v755 = vpop.f32.mrb[0].mxu0
      %v756 = vadd.f32 0.0, %v755
      %v757 = vpop.f32.mrb[0].mxu0
      %758 = vmatprep.mubr.bf16.mxu0 0
      %759 = vmatmul.mubr.bf16.gmra.mrb[0].mxu0 %v425
      %v760 = vpop.f32.mrb[0].mxu0
      %v761 = vadd.f32 0.0, %v760
      %v762 = vpop.f32.mrb[0].mxu0
      %v763 = vpop.f32.mrb[0].mxu0
      %v764 = vadd.f32 0.0, %v763
      %v765 = vpop.f32.mrb[0].mxu0
      %766 = vmatprep.mubr.bf16.mxu0 0
      %767 = vmatmul.mubr.bf16.gmra.mrb[0].mxu0 %v426
      %v768 = vpop.f32.mrb[0].mxu0
      %v769 = vadd.f32 0.0, %v768
      %v770 = vpop.f32.mrb[0].mxu0
      %v771 = vpop.f32.mrb[0].mxu0
      %v772 = vadd.f32 0.0, %v771
      %v773 = vpop.f32.mrb[0].mxu0
      %774 = vmatprep.mubr.bf16.mxu0 0
      %775 = vmatmul.mubr.bf16.gmra.mrb[0].mxu0 %v427
      %v776 = vpop.f32.mrb[0].mxu0
      %v777 = vadd.f32 0.0, %v776
      %v778 = vpop.f32.mrb[0].mxu0
      %v779 = vpop.f32.mrb[0].mxu0
      %v780 = vadd.f32 0.0, %v779
      %v781 = vpop.f32.mrb[0].mxu0
      %782 = vmatprep.mubr.bf16.mxu0 0
      %783 = vmatmul.mubr.bf16.gmra.mrb[0].mxu0 %v428
      %v784 = vpop.f32.mrb[0].mxu0
      %v785 = vadd.f32 0.0, %v784
      %v786 = vpop.f32.mrb[0].mxu0
      %v787 = vpop.f32.mrb[0].mxu0
      %v788 = vadd.f32 0.0, %v787
      %v789 = vpop.f32.mrb[0].mxu0
      %790 = vmatprep.mubr.bf16.mxu0 0
      %791 = vmatmul.mubr.bf16.gmra.mrb[0].mxu0 %v429
      %v792 = vpop.f32.mrb[0].mxu0
      %v793 = vadd.f32 0.0, %v792
      %v794 = vpop.f32.mrb[0].mxu0
      %v795 = vpop.f32.mrb[0].mxu0
      %v796 = vadd.f32 0.0, %v795
      %v797 = vpop.f32.mrb[0].mxu0
      %798 = vdwg.mxu0
      %v799 = vpack.c.bf16 %v548, %v545
      %v800 = vpack.c.bf16 %v556, %v553
      %v801 = vpack.c.bf16 %v564, %v561
      %v802 = vpack.c.bf16 %v572, %v569
      %v803 = vpack.c.bf16 %v580, %v577
      %v804 = vpack.c.bf16 %v588, %v585
      %v805 = vpack.c.bf16 %v596, %v593
      %v806 = vpack.c.bf16 %v604, %v601
      %v807 = vpack.c.bf16 %v612, %v609
      %v808 = vpack.c.bf16 %v620, %v617
      %v809 = vpack.c.bf16 %v628, %v625
      %v810 = vpack.c.bf16 %v636, %v633
      %v811 = vpack.c.bf16 %v644, %v641
      %v812 = vpack.c.bf16 %v652, %v649
      %v813 = vpack.c.bf16 %v660, %v657
      %v814 = vpack.c.bf16 %v668, %v665
      %v815 = vpack.c.bf16 %v676, %v673
      %v816 = vpack.c.bf16 %v684, %v681
      %v817 = vpack.c.bf16 %v692, %v689
      %v818 = vpack.c.bf16 %v700, %v697
      %v819 = vpack.c.bf16 %v708, %v705
      %v820 = vpack.c.bf16 %v716, %v713
      %v821 = vpack.c.bf16 %v724, %v721
      %v822 = vpack.c.bf16 %v732, %v729
      %v823 = vpack.c.bf16 %v740, %v737
      %v824 = vpack.c.bf16 %v748, %v745
      %v825 = vpack.c.bf16 %v756, %v753
      %v826 = vpack.c.bf16 %v764, %v761
      %v827 = vpack.c.bf16 %v772, %v769
      %v828 = vpack.c.bf16 %v780, %v777
      %v829 = vpack.c.bf16 %v788, %v785
      %v830 = vpack.c.bf16 %v796, %v793
      %v863 = vunpack.c.l.b16 %v799
      %v864 = vunpack.c.h.b16 %v799
      %v865 = vunpack.c.l.b16 %v800
      %v866 = vunpack.c.h.b16 %v800
      %v867 = vunpack.c.l.b16 %v801
      %v868 = vunpack.c.h.b16 %v801
      %v869 = vunpack.c.l.b16 %v802
      %v870 = vunpack.c.h.b16 %v802
      %v871 = vunpack.c.l.b16 %v803
      %v872 = vunpack.c.h.b16 %v803
      %v873 = vunpack.c.l.b16 %v804
      %v874 = vunpack.c.h.b16 %v804
      %v875 = vunpack.c.l.b16 %v805
      %v876 = vunpack.c.h.b16 %v805
      %v877 = vunpack.c.l.b16 %v806
      %v878 = vunpack.c.h.b16 %v806
      %v879 = vunpack.c.l.b16 %v807
      %v880 = vunpack.c.h.b16 %v807
      %v881 = vunpack.c.l.b16 %v808
      %v882 = vunpack.c.h.b16 %v808
      %v883 = vunpack.c.l.b16 %v809
      %v884 = vunpack.c.h.b16 %v809
      %v885 = vunpack.c.l.b16 %v810
      %v886 = vunpack.c.h.b16 %v810
      %v887 = vunpack.c.l.b16 %v811
      %v888 = vunpack.c.h.b16 %v811
      %v889 = vunpack.c.l.b16 %v812
      %v890 = vunpack.c.h.b16 %v812
      %v891 = vunpack.c.l.b16 %v813
      %v892 = vunpack.c.h.b16 %v813
      %v893 = vunpack.c.l.b16 %v814
      %v894 = vunpack.c.h.b16 %v814
      %v895 = vunpack.c.l.b16 %v815
      %v896 = vunpack.c.h.b16 %v815
      %v897 = vunpack.c.l.b16 %v816
      %v898 = vunpack.c.h.b16 %v816
      %v899 = vunpack.c.l.b16 %v817
      %v900 = vunpack.c.h.b16 %v817
      %v901 = vunpack.c.l.b16 %v818
      %v902 = vunpack.c.h.b16 %v818
      %v903 = vunpack.c.l.b16 %v819
      %v904 = vunpack.c.h.b16 %v819
      %v905 = vunpack.c.l.b16 %v820
      %v906 = vunpack.c.h.b16 %v820
      %v907 = vunpack.c.l.b16 %v821
      %v908 = vunpack.c.h.b16 %v821
      %v909 = vunpack.c.l.b16 %v822
      %v910 = vunpack.c.h.b16 %v822
      %v911 = vunpack.c.l.b16 %v823
      %v912 = vunpack.c.h.b16 %v823
      %v913 = vunpack.c.l.b16 %v824
      %v914 = vunpack.c.h.b16 %v824
      %v915 = vunpack.c.l.b16 %v825
      %v916 = vunpack.c.h.b16 %v825
      %v917 = vunpack.c.l.b16 %v826
      %v918 = vunpack.c.h.b16 %v826
      %v919 = vunpack.c.l.b16 %v827
      %v920 = vunpack.c.h.b16 %v827
      %v921 = vunpack.c.l.b16 %v828
      %v922 = vunpack.c.h.b16 %v828
      %v923 = vunpack.c.l.b16 %v829
      %v924 = vunpack.c.h.b16 %v829
      %v925 = vunpack.c.l.b16 %v830
      %v926 = vunpack.c.h.b16 %v830
      %v927 = vpack.c.b16 %v863, %v863
      %v928 = vpack.c.b16 %v864, %v864
      %v929 = vpack.c.b16 %v865, %v865
      %v930 = vpack.c.b16 %v866, %v866
      %v931 = vpack.c.b16 %v867, %v867
      %v932 = vpack.c.b16 %v868, %v868
      %v933 = vpack.c.b16 %v869, %v869
      %v934 = vpack.c.b16 %v870, %v870
      %v935 = vpack.c.b16 %v871, %v871
      %v936 = vpack.c.b16 %v872, %v872
      %v937 = vpack.c.b16 %v873, %v873
      %v938 = vpack.c.b16 %v874, %v874
      %v939 = vpack.c.b16 %v875, %v875
      %v940 = vpack.c.b16 %v876, %v876
      %v941 = vpack.c.b16 %v877, %v877
      %v942 = vpack.c.b16 %v878, %v878
      %v943 = vpack.c.b16 %v879, %v879
      %v944 = vpack.c.b16 %v880, %v880
      %v945 = vpack.c.b16 %v881, %v881
      %v946 = vpack.c.b16 %v882, %v882
      %v947 = vpack.c.b16 %v883, %v883
      %v948 = vpack.c.b16 %v884, %v884
      %v949 = vpack.c.b16 %v885, %v885
      %v950 = vpack.c.b16 %v886, %v886
      %v951 = vpack.c.b16 %v887, %v887
      %v952 = vpack.c.b16 %v888, %v888
      %v953 = vpack.c.b16 %v889, %v889
      %v954 = vpack.c.b16 %v890, %v890
      %v955 = vpack.c.b16 %v891, %v891
      %v956 = vpack.c.b16 %v892, %v892
      %v957 = vpack.c.b16 %v893, %v893
      %v958 = vpack.c.b16 %v894, %v894
      %v959 = vpack.c.b16 %v895, %v895
      %v960 = vpack.c.b16 %v896, %v896
      %v961 = vpack.c.b16 %v897, %v897
      %v962 = vpack.c.b16 %v898, %v898
      %v963 = vpack.c.b16 %v899, %v899
      %v964 = vpack.c.b16 %v900, %v900
      %v965 = vpack.c.b16 %v901, %v901
      %v966 = vpack.c.b16 %v902, %v902
      %v967 = vpack.c.b16 %v903, %v903
      %v968 = vpack.c.b16 %v904, %v904
      %v969 = vpack.c.b16 %v905, %v905
      %v970 = vpack.c.b16 %v906, %v906
      %v971 = vpack.c.b16 %v907, %v907
      %v972 = vpack.c.b16 %v908, %v908
      %v973 = vpack.c.b16 %v909, %v909
      %v974 = vpack.c.b16 %v910, %v910
      %v975 = vpack.c.b16 %v911, %v911
      %v976 = vpack.c.b16 %v912, %v912
      %v977 = vpack.c.b16 %v913, %v913
      %v978 = vpack.c.b16 %v914, %v914
      %v979 = vpack.c.b16 %v915, %v915
      %v980 = vpack.c.b16 %v916, %v916
      %v981 = vpack.c.b16 %v917, %v917
      %v982 = vpack.c.b16 %v918, %v918
      %v983 = vpack.c.b16 %v919, %v919
      %v984 = vpack.c.b16 %v920, %v920
      %v985 = vpack.c.b16 %v921, %v921
      %v986 = vpack.c.b16 %v922, %v922
      %v987 = vpack.c.b16 %v923, %v923
      %v988 = vpack.c.b16 %v924, %v924
      %v989 = vpack.c.b16 %v925, %v925
      %v990 = vpack.c.b16 %v926, %v926
      %1055 = vst [vmem:[%s187] sm:$0xf] %v927
      %1056 = vst [vmem:[%s187 + $0x4] sm:$0xf] %v928
      %1057 = vst [vmem:[%s187 + $0x8] sm:$0xf] %v929
      %1058 = vst [vmem:[%s187 + $0xc] sm:$0xf] %v930
      %1059 = vst [vmem:[%s187 + $0x10] sm:$0xf] %v931
      %1060 = vst [vmem:[%s187 + $0x14] sm:$0xf] %v932
      %1061 = vst [vmem:[%s187 + $0x18] sm:$0xf] %v933
      %1062 = vst [vmem:[%s187 + $0x1c] sm:$0xf] %v934
      %1063 = vst [vmem:[%s187 + $0x20] sm:$0xf] %v935
      %1064 = vst [vmem:[%s187 + $0x24] sm:$0xf] %v936
      %1065 = vst [vmem:[%s187 + $0x28] sm:$0xf] %v937
      %1066 = vst [vmem:[%s187 + $0x2c] sm:$0xf] %v938
      %1067 = vst [vmem:[%s187 + $0x30] sm:$0xf] %v939
      %1068 = vst [vmem:[%s187 + $0x34] sm:$0xf] %v940
      %1069 = vst [vmem:[%s187 + $0x38] sm:$0xf] %v941
      %1070 = vst [vmem:[%s187 + $0x3c] sm:$0xf] %v942
      %1071 = vst [vmem:[%s187 + $0x40] sm:$0xf] %v943
      %1072 = vst [vmem:[%s187 + $0x44] sm:$0xf] %v944
      %1073 = vst [vmem:[%s187 + $0x48] sm:$0xf] %v945
      %1074 = vst [vmem:[%s187 + $0x4c] sm:$0xf] %v946
      %1075 = vst [vmem:[%s187 + $0x50] sm:$0xf] %v947
      %1076 = vst [vmem:[%s187 + $0x54] sm:$0xf] %v948
      %1077 = vst [vmem:[%s187 + $0x58] sm:$0xf] %v949
      %1078 = vst [vmem:[%s187 + $0x5c] sm:$0xf] %v950
      %1079 = vst [vmem:[%s187 + $0x60] sm:$0xf] %v951
      %1080 = vst [vmem:[%s187 + $0x64] sm:$0xf] %v952
      %1081 = vst [vmem:[%s187 + $0x68] sm:$0xf] %v953
      %1082 = vst [vmem:[%s187 + $0x6c] sm:$0xf] %v954
      %1083 = vst [vmem:[%s187 + $0x70] sm:$0xf] %v955
      %1084 = vst [vmem:[%s187 + $0x74] sm:$0xf] %v956
      %1085 = vst [vmem:[%s187 + $0x78] sm:$0xf] %v957
      %1086 = vst [vmem:[%s187 + $0x7c] sm:$0xf] %v958
      %1087 = vst [vmem:[%s187 + $0x80] sm:$0xf] %v959
      %1088 = vst [vmem:[%s187 + $0x84] sm:$0xf] %v960
      %1089 = vst [vmem:[%s187 + $0x88] sm:$0xf] %v961
      %1090 = vst [vmem:[%s187 + $0x8c] sm:$0xf] %v962
      %1091 = vst [vmem:[%s187 + $0x90] sm:$0xf] %v963
      %1092 = vst [vmem:[%s187 + $0x94] sm:$0xf] %v964
      %1093 = vst [vmem:[%s187 + $0x98] sm:$0xf] %v965
      %1094 = vst [vmem:[%s187 + $0x9c] sm:$0xf] %v966
      %1095 = vst [vmem:[%s187 + $0xa0] sm:$0xf] %v967
      %1096 = vst [vmem:[%s187 + $0xa4] sm:$0xf] %v968
      %1097 = vst [vmem:[%s187 + $0xa8] sm:$0xf] %v969
      %1098 = vst [vmem:[%s187 + $0xac] sm:$0xf] %v970
      %1099 = vst [vmem:[%s187 + $0xb0] sm:$0xf] %v971
      %1100 = vst [vmem:[%s187 + $0xb4] sm:$0xf] %v972
      %1101 = vst [vmem:[%s187 + $0xb8] sm:$0xf] %v973
      %1102 = vst [vmem:[%s187 + $0xbc] sm:$0xf] %v974
      %1103 = vst [vmem:[%s187 + $0xc0] sm:$0xf] %v975
      %1104 = vst [vmem:[%s187 + $0xc4] sm:$0xf] %v976
      %1105 = vst [vmem:[%s187 + $0xc8] sm:$0xf] %v977
      %1106 = vst [vmem:[%s187 + $0xcc] sm:$0xf] %v978
      %1107 = vst [vmem:[%s187 + $0xd0] sm:$0xf] %v979
      %1108 = vst [vmem:[%s187 + $0xd4] sm:$0xf] %v980
      %1109 = vst [vmem:[%s187 + $0xd8] sm:$0xf] %v981
      %1110 = vst [vmem:[%s187 + $0xdc] sm:$0xf] %v982
      %1111 = vst [vmem:[%s187 + $0xe0] sm:$0xf] %v983
      %1112 = vst [vmem:[%s187 + $0xe4] sm:$0xf] %v984
      %1113 = vst [vmem:[%s187 + $0xe8] sm:$0xf] %v985
      %1114 = vst [vmem:[%s187 + $0xec] sm:$0xf] %v986
      %1115 = vst [vmem:[%s187 + $0xf0] sm:$0xf] %v987
      %1116 = vst [vmem:[%s187 + $0xf4] sm:$0xf] %v988
      %1117 = vst [vmem:[%s187 + $0xf8] sm:$0xf] %v989
      %1118 = vst [vmem:[%s187 + $0xfc] sm:$0xf] %v990
      %s1119 = smul.u32 64, %s18
      %p1120 = scmp.lt.s32.totalorder %s17, 5
      %s1121 = scalar_select %p1120, %s17, 5
      %p1122 = scmp.lt.s32.totalorder %s1119, 63
      %s1123 = scalar_select %p1122, %s1119, 63
      %s1124 = smul.addr %s1121, 64
      %s1125 = sadd.s32 %s1123, %s1124
      %s1126 = smul.addr %s1125, 4
      %s1127 = scalar_lea.vmem %s2, %s1126
      // Predicated region
      $region29: #{net_forward.7} parent=27 // pred_check
        %p1128 = pneg %p97
      $region30: #{net_forward.7} parent=27 // pred_check_branch
        %1130 = sbr.rel (%p1128) target = $region32
      $region31: #{net_forward.7} parent=27 // pred_region
        %s1131 = smul.u32 64, %s18
      $region32: #{net_forward.7} parent=27 // pred_fallthru
        _
    $region28: #{net_forward.7} parent=5 // pred_fallthru
      _
    %p1132 = scmp.le.s32.totalorder 2, %s8
    // Predicated region
    $region33: #{net_forward.7} parent=5 // pred_check
      %p1133 = pneg %p1132
    $region34: #{net_forward.7} parent=5 // pred_check_branch
      %1135 = sbr.rel (%p1133) target = $region36
    $region35: #{net_forward.7} parent=5 // pred_region
      %s1136 = ssub.s32 %s8, 2
      // Predicated region
      $region37: #{net_forward.7} parent=35 // pred_check
        %p1137 = pneg %p103
      $region38: #{net_forward.7} parent=35 // pred_check_branch
        %1139 = sbr.rel (%p1137) target = $region40
      $region39: #{net_forward.7} parent=35 // pred_region
        %s1140 = smul.u32 64, %s20
        %p1141 = scmp.lt.s32.totalorder %s19, 5
        %s1142 = scalar_select %p1141, %s19, 5
        %p1143 = scmp.lt.s32.totalorder %s1140, 63
        %s1144 = scalar_select %p1143, %s1140, 63
        %s1145 = smul.addr %s1142, 64
        %s1146 = sadd.s32 %s1144, %s1145
        %s1147 = smul.addr %s1146, 4
        %s1148 = scalar_lea.vmem %s2, %s1147
      $region40: #{net_forward.7} parent=35 // pred_fallthru
        _
    $region36: #{net_forward.7} parent=5 // pred_fallthru
      _
  $region6: #{net_forward.7} parent=0 // loop_footer
    %s12 = sadd.s32 1, %s8
  $region7: #{net_forward.7} parent=0 // loop_footer_branch
    %7 = sbr.rel target = $region3
  $region8: #{net_forward.7} parent=0 // loop_exit
    _

// kernel: net_forward.6
$region0: #{net_forward.6}
  #allocation0 [shape = 'u32[]', space=smem, size = 0x4, offset = 0x4, fixed_abs, tag = 'smem constant byte address 0x4 - core index']
  #allocation1 [shape = 'u32[144,128]{1,0:T(1,128)}', space=vmem, size = 0x12000, scoped, tag = 'internal scratch']
  #allocation2 [shape = 'f32[512,128]{1,0:T(8,128)}', space=vmem, size = 0x40000, scoped, tag = 'scratch operand']
  #allocation3 [shape = 's32[1]{0}', space=sflag, size = 0x4, scoped, tag = 'scoped memory for net_forward.6']
  #allocation4 [shape = 's32[1]{0:T(128)S(6)}', space=smem, size = 0x200, scoped, tag = 'prefetched SMEM operand 0']
  #allocation5 [shape = 'u8[512]{0}', space=smem, size = 0x200, scoped, tag = 'prefetched SMEM operand 1']
  #allocation6 [shape = 'u8[512]{0}', space=smem, size = 0x200, scoped, tag = 'prefetched SMEM operand 2']
  %s0 = inlined_call_operand.<no memory space> [shape: s32[1], index: 0, kind: input, shape index: {}]
  %s1 = inlined_call_operand.hbm [shape: s32[1,5], index: 1, kind: input, shape index: {}]
  %s2 = inlined_call_operand.hbm [shape: s32[1,5], index: 2, kind: input, shape index: {}]
  %s3 = inlined_call_operand.vmem [shape: bf16[6,512,128], index: 3, kind: input, shape index: {}, may-alias: {3,6}]
  %s4 = inlined_call_operand.hbm [shape: f32[1,128], index: 4, kind: input, shape index: {}]
  %s5 = inlined_call_operand.hbm [shape: bf16[5,512,512], index: 5, kind: input, shape index: {}]
  %s6 = inlined_call_operand.vmem [shape: bf16[6,512,128], index: 6, kind: input, shape index: {}, may-alias: {3,6}]
  %s7 = inlined_call_operand.vmem [shape: bf16[512,128], index: 7, kind: output, shape index: {}]
  %s8 = sld [smem:[#allocation0]]
  $region69: #{net_forward.6} parent=0
    _
  %s10 = ssub.s32 1, %s8
  %s11 = scalar_select 0, %s10, %s8
  %12 = sst [smem:[#allocation4]] %s0
  %14 = dma.hbm_to_smem %s1, 16, [#allocation5], [#allocation3]
  %16 = dma.hbm_to_smem %s2, 16, [#allocation6], [#allocation3]
  %17 = dma.done [#allocation3], 32
  %18 = sfence
  $region1: #{net_forward.6} parent=0
    #allocation7 [shape = 'u8[512]{0}', space=vmem, size = 0x400, scoped, tag = 'input window, operand 4, single buffered']
    #allocation8 [shape = 's32[2]{0}', space=sflag, size = 0x8, scoped, tag = 'scoped memory for net_forward.6']
    #allocation9 [shape = 'u8[1048576]{0}', space=vmem, size = 0x100000, scoped, tag = 'input window, operand 5']
    #allocation10 [shape = 's32[2]{0}', space=sflag, size = 0x8, scoped, tag = 'scoped memory for net_forward.6']
    %19 = vsyncpa [#allocation8], 0
    %20 = vsyncpa [#allocation10], 0
    %s21 = scalar_lea.sflag [#allocation10], 1
    %22 = vsyncpa %s21, 0
    loop: start=0, step=1, limit=7
    $region2: #{net_forward.6} parent=1 // loop_pre_header
      _
    $region3: #{net_forward.6} parent=1 // loop_header
      %s24 = sphi 0, %s28
      %p25 = scmp.ge.s32.totalorder %s24, 7
      %s31 = sphi 0, %s43
      %s32 = sphi 0, %s39
      %s33 = sphi 0, %s31
      %s34 = sphi 0, %s32
      %s35 = sphi 0, %s33
      %s36 = sphi 0, %s34
      %s46 = sphi 0, %s48
      %s49 = sphi 0, %s46
      %s50 = sphi 0, %s49
      %s66 = sphi 0, %s50
      %s70 = sphi 0, %s70
      %s72 = sphi 0, %s70
      %s73 = sphi 0, %s72
      %s87 = sphi 0, %s73
      %s115 = sphi 0, %s117
      %s118 = sphi 0, %s115
      %s119 = sphi 0, %s118
      %s135 = sphi 0, %s119
      %s161 = sphi 0, %s163
      %s164 = sphi 0, %s161
      %s165 = sphi 0, %s164
      %s181 = sphi 0, %s165
      %s187 = sphi 0, %s189
      %s190 = sphi 0, %s187
      %s191 = sphi 0, %s190
      %s207 = sphi 0, %s191
    $region4: #{net_forward.6} parent=1 // loop_header_branch
      %27 = sbr.rel (%p25) target = $region8
    $region5: #{net_forward.6} parent=1 // loop_body
      %s29 = ssub.s32 %s24, 1
      %s30 = ssub.s32 %s24, 2
      %s37 = sadd.s32 1, %s32
      %p38 = scmp.ge.s32.totalorder %s37, 5
      %s39 = scalar_select %p38, 0, %s37
      %s40 = sadd.s32 1, %s31
      %s41 = scalar_select %p38, %s40, %s31
      %p42 = scmp.ge.s32.totalorder %s41, 1
      %s43 = scalar_select %p42, 0, %s41
      %s44 = ssub.s32 %s31, %s43
      %p45 = scmp.eq.s32.totalorder %s44, 0
      %s47 = sadd.s32 %s46, 1
      %s48 = scalar_select %p45, %s46, %s47
      %p51 = pneg %p45
      %p52 = scmp.eq.s32.totalorder %s24, 4
      %p53 = por %p51, %p52
      %p54 = scmp.ne.s32.totalorder %s46, %s49
      %p55 = scmp.eq.s32.totalorder %s24, 0
      %p56 = por %p54, %p55
      %p57 = scmp.ne.s32.totalorder %s46, %s49
      %p58 = scmp.eq.s32.totalorder %s29, 4
      %p59 = por %p57, %p58
      %p60 = scmp.ne.s32.totalorder %s49, %s50
      %p61 = scmp.eq.s32.totalorder %s29, 0
      %p62 = por %p60, %p61
      %p63 = scmp.ne.s32.totalorder %s49, %s50
      %p64 = scmp.eq.s32.totalorder %s30, 4
      %p65 = por %p63, %p64
      %p67 = scmp.ne.s32.totalorder %s50, %s66
      %p68 = scmp.eq.s32.totalorder %s30, 0
      %p69 = por %p67, %p68
      %s71 = sadd.s32 %s70, 1
      %p74 = scmp.eq.s32.totalorder %s24, 4
      %p75 = scmp.ne.s32.totalorder %s70, %s72
      %p76 = scmp.eq.s32.totalorder %s24, 0
      %p77 = por %p75, %p76
      %p78 = scmp.ne.s32.totalorder %s70, %s72
      %p79 = scmp.eq.s32.totalorder %s29, 4
      %p80 = por %p78, %p79
      %p81 = scmp.ne.s32.totalorder %s72, %s73
      %p82 = scmp.eq.s32.totalorder %s29, 0
      %p83 = por %p81, %p82
      %p84 = scmp.ne.s32.totalorder %s72, %s73
      %p85 = scmp.eq.s32.totalorder %s30, 4
      %p86 = por %p84, %p85
      %p88 = scmp.ne.s32.totalorder %s73, %s87
      %p89 = scmp.eq.s32.totalorder %s30, 0
      %p90 = por %p88, %p89
      %s91 = sshra.s32 %s32, 7
      %s92 = sand.u32 %s32, 127
      %s93 = sadd.s32 %s91, %s31
      %s94 = smul.u32 %s93, 128
      %s95 = sshra.s32 %s32, 7
      %s96 = sand.u32 %s32, 127
      %s97 = sadd.s32 %s94, %s96
      %s98 = sld [smem:[#allocation5 + %s97]]
      %s99 = sld [smem:[#allocation6 + %s97]]
      %s100 = sshra.s32 %s39, 7
      %s101 = sand.u32 %s39, 127
      %s102 = sadd.s32 %s100, %s43
      %s103 = smul.u32 %s102, 128
      %s104 = sshra.s32 %s39, 7
      %s105 = sand.u32 %s39, 127
      %s106 = sadd.s32 %s103, %s105
      %s107 = sld [smem:[#allocation5 + %s106]]
      %s108 = sld [smem:[#allocation6 + %s106]]
      %s109 = ssub.s32 %s98, %s107
      %s110 = ssub.s32 %s31, %s43
      %s111 = sor.u32 %s109, %s110
      %s112 = ssub.s32 %s99, %s108
      %s113 = sor.u32 %s111, %s112
      %p114 = scmp.eq.s32.totalorder %s113, 0
      %s116 = sadd.s32 %s115, 1
      %s117 = scalar_select %p114, %s115, %s116
      %p120 = pneg %p114
      %p121 = scmp.eq.s32.totalorder %s24, 4
      %p122 = por %p120, %p121
      %p123 = scmp.ne.s32.totalorder %s115, %s118
      %p124 = scmp.eq.s32.totalorder %s24, 0
      %p125 = por %p123, %p124
      %p126 = scmp.ne.s32.totalorder %s115, %s118
      %p127 = scmp.eq.s32.totalorder %s29, 4
      %p128 = por %p126, %p127
      %p129 = scmp.ne.s32.totalorder %s118, %s119
      %p130 = scmp.eq.s32.totalorder %s29, 0
      %p131 = por %p129, %p130
      %p132 = scmp.ne.s32.totalorder %s118, %s119
      %p133 = scmp.eq.s32.totalorder %s30, 4
      %p134 = por %p132, %p133
      %p136 = scmp.ne.s32.totalorder %s119, %s135
      %p137 = scmp.eq.s32.totalorder %s30, 0
      %p138 = por %p136, %p137
      %s139 = sshra.s32 %s32, 7
      %s140 = sand.u32 %s32, 127
      %s141 = sadd.s32 %s139, %s31
      %s142 = smul.u32 %s141, 128
      %s143 = sshra.s32 %s32, 7
      %s144 = sand.u32 %s32, 127
      %s145 = sadd.s32 %s142, %s144
      %s146 = sld [smem:[#allocation5 + %s145]]
      %s147 = sld [smem:[#allocation6 + %s145]]
      %s148 = sshra.s32 %s39, 7
      %s149 = sand.u32 %s39, 127
      %s150 = sadd.s32 %s148, %s43
      %s151 = smul.u32 %s150, 128
      %s152 = sshra.s32 %s39, 7
      %s153 = sand.u32 %s39, 127
      %s154 = sadd.s32 %s151, %s153
      %s155 = sld [smem:[#allocation5 + %s154]]
      %s156 = sld [smem:[#allocation6 + %s154]]
      %s157 = ssub.s32 %s146, %s155
      %s158 = ssub.s32 %s147, %s156
      %s159 = sor.u32 %s157, %s158
      %p160 = scmp.eq.s32.totalorder %s159, 0
      %s162 = sadd.s32 %s161, 1
      %s163 = scalar_select %p160, %s161, %s162
      %p166 = pneg %p160
      %p167 = scmp.eq.s32.totalorder %s24, 4
      %p168 = por %p166, %p167
      %p169 = scmp.ne.s32.totalorder %s161, %s164
      %p170 = scmp.eq.s32.totalorder %s24, 0
      %p171 = por %p169, %p170
      %p172 = scmp.ne.s32.totalorder %s161, %s164
      %p173 = scmp.eq.s32.totalorder %s29, 4
      %p174 = por %p172, %p173
      %p175 = scmp.ne.s32.totalorder %s164, %s165
      %p176 = scmp.eq.s32.totalorder %s29, 0
      %p177 = por %p175, %p176
      %p178 = scmp.ne.s32.totalorder %s164, %s165
      %p179 = scmp.eq.s32.totalorder %s30, 4
      %p180 = por %p178, %p179
      %p182 = scmp.ne.s32.totalorder %s165, %s181
      %p183 = scmp.eq.s32.totalorder %s30, 0
      %p184 = por %p182, %p183
      %s185 = ssub.s32 %s31, %s43
      %p186 = scmp.eq.s32.totalorder %s185, 0
      %s188 = sadd.s32 %s187, 1
      %s189 = scalar_select %p186, %s187, %s188
      %p192 = pneg %p186
      %p193 = scmp.eq.s32.totalorder %s24, 4
      %p194 = por %p192, %p193
      %p195 = scmp.ne.s32.totalorder %s187, %s190
      %p196 = scmp.eq.s32.totalorder %s24, 0
      %p197 = por %p195, %p196
      %p198 = scmp.ne.s32.totalorder %s187, %s190
      %p199 = scmp.eq.s32.totalorder %s29, 4
      %p200 = por %p198, %p199
      %p201 = scmp.ne.s32.totalorder %s190, %s191
      %p202 = scmp.eq.s32.totalorder %s29, 0
      %p203 = por %p201, %p202
      %p204 = scmp.ne.s32.totalorder %s190, %s191
      %p205 = scmp.eq.s32.totalorder %s30, 4
      %p206 = por %p204, %p205
      %p208 = scmp.ne.s32.totalorder %s191, %s207
      %p209 = scmp.eq.s32.totalorder %s30, 0
      %p210 = por %p208, %p209
      %p211 = scmp.le.s32.totalorder 1, %s24
      %p212 = scmp.lt.s32.totalorder %s24, 6
      %p213 = pnand %p211, %p212
      %p214 = pneg %p213
      // Predicated region
      $region9: #{net_forward.6} parent=5 // pred_check
        _
      $region10: #{net_forward.6} parent=5 // pred_check_branch
        %216 = sbr.rel (%p213) target = $region12
      $region11: #{net_forward.6} parent=5 // pred_region
        %s217 = ssub.s32 %s24, 1
        // Predicated region
        $region13: #{net_forward.6} parent=11 // pred_check
          %p218 = pneg %p62
        $region14: #{net_forward.6} parent=11 // pred_check_branch
          %220 = sbr.rel (%p218) target = $region16
        $region15: #{net_forward.6} parent=11 // pred_region
          %s221 = smul.u32 64, %s33
          %p222 = scmp.lt.s32.totalorder %s221, 63
          %s223 = scalar_select %p222, %s221, 63
          %s224 = sadd.s32 %s223, 320
          %s225 = smul.addr %s224, 4
          %s226 = scalar_lea.vmem %s3, %s225
          %s227 = smul.u32 64, %s33
        $region16: #{net_forward.6} parent=11 // pred_fallthru
          _
        // Predicated region
        $region17: #{net_forward.6} parent=11 // pred_check
          %p228 = pneg %p83
        $region18: #{net_forward.6} parent=11 // pred_check_branch
          %230 = sbr.rel (%p228) target = $region20
        $region19: #{net_forward.6} parent=11 // pred_region
          %s232 = ssub.s32 16, 16
          %233 = vsyncadd [#allocation8], %s232
          %s235 = sshll.u32 [#allocation7], 4
          %s236 = int_to_ptr.vmem [resolvable:$true] %s235
          %238 = dma.hbm_to_vmem [thread:$0]  %s4, 16, %s236, [#allocation8]
        $region20: #{net_forward.6} parent=11 // pred_fallthru
          _
      $region12: #{net_forward.6} parent=5 // pred_fallthru
        _
      %p239 = scmp.lt.s32.totalorder %s24, 5
      // Predicated region
      $region21: #{net_forward.6} parent=5 // pred_check
        %p240 = pneg %p239
      $region22: #{net_forward.6} parent=5 // pred_check_branch
        %242 = sbr.rel (%p240) target = $region24
      $region23: #{net_forward.6} parent=5 // pred_region
        // Predicated region
        $region25: #{net_forward.6} parent=23 // pred_check
          %p243 = pneg %p125
        $region26: #{net_forward.6} parent=23 // pred_check_branch
          %245 = sbr.rel (%p243) target = $region28
        $region27: #{net_forward.6} parent=23 // pred_region
          %s246 = sand.u32 %s115, 1
          %s247 = scalar_lea.sflag [#allocation10], %s246
          %s248 = sand.u32 %s115, 1
          %s249 = smul.addr %s248, 1024
          %s250 = scalar_lea.vmem [#allocation9], %s249
          %s251 = sshra.s32 %s32, 7
          %s252 = sand.u32 %s32, 127
          %s253 = sadd.s32 %s251, %s31
          %s254 = smul.u32 %s253, 128
          %s255 = sshra.s32 %s32, 7
          %s256 = sand.u32 %s32, 127
          %s257 = sadd.s32 %s254, %s256
          %s258 = sld [smem:[#allocation5 + %s257]]
          %s259 = sld [smem:[#allocation6 + %s257]]
          %s260 = smul.u32 64, %s31
          %s261 = smul.u32 4, %s259
          %s263 = ssub.s32 16384, 16384
          %264 = vsyncadd %s247, %s263
          %s265 = smul.addr %s260, 4
          %s266 = sadd.s32 %s261, %s265
          %s267 = smul.addr %s258, 256
          %s268 = sadd.s32 %s266, %s267
          %s269 = smul.addr %s268, 64
          %s270 = scalar_lea.hbm %s5, %s269
          %s271 = sshll.u32 %s250, 4
          %s272 = int_to_ptr.vmem [resolvable:$true] %s271
          %277 = dma.hbm_to_vmem [thread:$0]  %s270, 16384, %s272, %s247, 256, 256, 16
        $region28: #{net_forward.6} parent=23 // pred_fallthru
          _
        // Predicated region
        $region29: #{net_forward.6} parent=23 // pred_check
          %p278 = pneg %p171
        $region30: #{net_forward.6} parent=23 // pred_check_branch
          %280 = sbr.rel (%p278) target = $region32
        $region31: #{net_forward.6} parent=23 // pred_region
          %s281 = sshra.s32 %s32, 7
          %s282 = sand.u32 %s32, 127
          %s283 = sadd.s32 %s281, %s31
          %s284 = smul.u32 %s283, 128
          %s285 = sshra.s32 %s32, 7
          %s286 = sand.u32 %s32, 127
          %s287 = sadd.s32 %s284, %s286
          %s288 = sld [smem:[#allocation5 + %s287]]
          %s289 = sld [smem:[#allocation6 + %s287]]
          %s290 = smul.u32 64, %s289
          %p291 = scmp.lt.s32.totalorder %s288, 5
          %s292 = scalar_select %p291, %s288, 5
          %p293 = scmp.lt.s32.totalorder %s290, 63
          %s294 = scalar_select %p293, %s290, 63
          %s295 = smul.addr %s292, 64
          %s296 = sadd.s32 %s294, %s295
          %s297 = smul.addr %s296, 4
          %s298 = scalar_lea.vmem %s6, %s297
          %s299 = sshra.s32 %s32, 7
          %s300 = sand.u32 %s32, 127
          %s301 = sadd.s32 %s299, %s31
          %s302 = smul.u32 %s301, 128
          %s303 = sshra.s32 %s32, 7
          %s304 = sand.u32 %s32, 127
          %s305 = sadd.s32 %s302, %s304
          %s306 = sld [smem:[#allocation5 + %s305]]
          %s307 = sld [smem:[#allocation6 + %s305]]
          %s308 = smul.u32 64, %s307
        $region32: #{net_forward.6} parent=23 // pred_fallthru
          _
      $region24: #{net_forward.6} parent=5 // pred_fallthru
        _
      %p309 = scmp.le.s32.totalorder 1, %s24
      %p310 = scmp.lt.s32.totalorder %s24, 6
      %p311 = pnand %p309, %p310
      %p312 = pneg %p311
      // Predicated region
      $region33: #{net_forward.6} parent=5 // pred_check
        _
      $region34: #{net_forward.6} parent=5 // pred_check_branch
        %314 = sbr.rel (%p311) target = $region36
      $region35: #{net_forward.6} parent=5 // pred_region
        %s315 = ssub.s32 %s24, 1
        // Predicated region
        $region37: #{net_forward.6} parent=35 // pred_check
          %p316 = pneg %p83
        $region38: #{net_forward.6} parent=35 // pred_check_branch
          %318 = sbr.rel (%p316) target = $region40
        $region39: #{net_forward.6} parent=35 // pred_region
          %319 = dma.done [#allocation8], 16
        $region40: #{net_forward.6} parent=35 // pred_fallthru
          _
        %s320 = sand.u32 %s118, 1
        %s321 = scalar_lea.sflag [#allocation10], %s320
        %s322 = sand.u32 %s118, 1
        %s323 = smul.addr %s322, 1024
        %s324 = scalar_lea.vmem [#allocation9], %s323
        // Predicated region
        $region41: #{net_forward.6} parent=35 // pred_check
          %p325 = pneg %p131
        $region42: #{net_forward.6} parent=35 // pred_check_branch
          %327 = sbr.rel (%p325) target = $region44
        $region43: #{net_forward.6} parent=35 // pred_region
          %328 = dma.done %s321, 16384
        $region44: #{net_forward.6} parent=35 // pred_fallthru
          _
        %s329 = smul.u32 64, %s33
        %p330 = scmp.lt.s32.totalorder %s329, 63
        %s331 = scalar_select %p330, %s329, 63
        %s332 = sadd.s32 %s331, 320
        %s333 = smul.addr %s332, 4
        %s334 = scalar_lea.vmem %s3, %s333
        %p335 = pneg %p62
        %p336 = pneg %p59
        %p337 = pneg %p83
        %p338 = pneg %p80
        %s339 = sand.u32 %s118, 1
        %s340 = scalar_lea.sflag [#allocation10], %s339
        %s341 = sand.u32 %s118, 1
        %s342 = smul.addr %s341, 1024
        %s343 = scalar_lea.vmem [#allocation9], %s342
        %p344 = pneg %p131
        %p345 = pneg %p128
        %s346 = sshra.s32 %s34, 7
        %s347 = sand.u32 %s34, 127
        %s348 = sadd.s32 %s346, %s33
        %s349 = smul.u32 %s348, 128
        %s350 = sshra.s32 %s34, 7
        %s351 = sand.u32 %s34, 127
        %s352 = sadd.s32 %s349, %s351
        %s353 = sld [smem:[#allocation5 + %s352]]
        %s354 = sld [smem:[#allocation6 + %s352]]
        %s355 = smul.u32 64, %s354
        %p356 = scmp.lt.s32.totalorder %s353, 5
        %s357 = scalar_select %p356, %s353, 5
        %p358 = scmp.lt.s32.totalorder %s355, 63
        %s359 = scalar_select %p358, %s355, 63
        %s360 = smul.addr %s357, 64
        %s361 = sadd.s32 %s359, %s360
        %s362 = smul.addr %s361, 4
        %s363 = scalar_lea.vmem %s6, %s362
        %p364 = pneg %p177
        %p365 = pneg %p174
        %p366 = pneg %p203
        %p367 = pneg %p200
        %s368 = smul.u32 64, %s33
        %p369 = scmp.lt.s32.totalorder %s368, 63
        %s370 = scalar_select %p369, %s368, 63
        %s371 = smul.addr %s370, 4
        %s372 = scalar_lea.vmem %s7, %s371
        %s373 = smul.u32 64, %s33
        %p374 = scmp.lt.s32.totalorder %s373, 63
        %s375 = scalar_select %p374, %s373, 63
        %s376 = sadd.s32 %s375, 320
        %s377 = smul.addr %s376, 4
        %s378 = scalar_lea.vmem %s3, %s377
        %s379 = smul.u32 64, %s33
        %s380 = sshra.s32 %s34, 7
        %s381 = sand.u32 %s34, 127
        %s382 = sadd.s32 %s380, %s33
        %s383 = smul.u32 %s382, 128
        %s384 = sshra.s32 %s34, 7
        %s385 = sand.u32 %s34, 127
        %s386 = sadd.s32 %s383, %s385
        %s387 = sld [smem:[#allocation5 + %s386]]
        %s388 = sld [smem:[#allocation6 + %s386]]
        %s389 = smul.u32 64, %s33
        %s390 = smul.u32 4, %s388
        %s391 = sshra.s32 %s34, 7
        %s392 = sand.u32 %s34, 127
        %s393 = sadd.s32 %s391, %s33
        %s394 = smul.u32 %s393, 128
        %s395 = sshra.s32 %s34, 7
        %s396 = sand.u32 %s34, 127
        %s397 = sadd.s32 %s394, %s396
        %s398 = sld [smem:[#allocation5 + %s397]]
        %s399 = sld [smem:[#allocation6 + %s397]]
        %s400 = smul.u32 64, %s399
        %p401 = scmp.lt.s32.totalorder %s398, 5
        %s402 = scalar_select %p401, %s398, 5
        %p403 = scmp.lt.s32.totalorder %s400, 63
        %s404 = scalar_select %p403, %s400, 63
        %s405 = smul.addr %s402, 64
        %s406 = sadd.s32 %s404, %s405
        %s407 = smul.addr %s406, 4
        %s408 = scalar_lea.vmem %s6, %s407
        %s409 = sshra.s32 %s34, 7
        %s410 = sand.u32 %s34, 127
        %s411 = sadd.s32 %s409, %s33
        %s412 = smul.u32 %s411, 128
        %s413 = sshra.s32 %s34, 7
        %s414 = sand.u32 %s34, 127
        %s415 = sadd.s32 %s412, %s414
        %s416 = sld [smem:[#allocation5 + %s415]]
        %s417 = sld [smem:[#allocation6 + %s415]]
        %s418 = smul.u32 64, %s417
        %s419 = smul.u32 64, %s33
        %p420 = scmp.lt.s32.totalorder %s419, 63
        %s421 = scalar_select %p420, %s419, 63
        %s422 = smul.addr %s421, 4
        %s423 = scalar_lea.vmem %s7, %s422
        %s424 = smul.u32 64, %s33
        %p426 = scmp.eq.s32.totalorder %s34, 0
        // Predicated region
        $region45: #{net_forward.6} parent=35 // pred_check
          %p427 = pneg %p426
        $region46: #{net_forward.6} parent=35 // pred_check_branch
          %429 = sbr.rel (%p427) target = $region48
        $region47: #{net_forward.6} parent=35 // pred_region
          %v430 = vld [vmem:[%s378] sm:$0xf]
          %v431 = vld [vmem:[%s378 + $0x4] sm:$0xf]
          %v432 = vld [vmem:[%s378 + $0x8] sm:$0xf]
          %v433 = vld [vmem:[%s378 + $0xc] sm:$0xf]
          %v434 = vld [vmem:[%s378 + $0x10] sm:$0xf]
          %v435 = vld [vmem:[%s378 + $0x14] sm:$0xf]
          %v436 = vld [vmem:[%s378 + $0x18] sm:$0xf]
          %v437 = vld [vmem:[%s378 + $0x1c] sm:$0xf]
          %v438 = vld [vmem:[%s378 + $0x20] sm:$0xf]
          %v439 = vld [vmem:[%s378 + $0x24] sm:$0xf]
          %v440 = vld [vmem:[%s378 + $0x28] sm:$0xf]
          %v441 = vld [vmem:[%s378 + $0x2c] sm:$0xf]
          %v442 = vld [vmem:[%s378 + $0x30] sm:$0xf]
          %v443 = vld [vmem:[%s378 + $0x34] sm:$0xf]
          %v444 = vld [vmem:[%s378 + $0x38] sm:$0xf]
          %v445 = vld [vmem:[%s378 + $0x3c] sm:$0xf]
          %v446 = vld [vmem:[%s378 + $0x40] sm:$0xf]
          %v447 = vld [vmem:[%s378 + $0x44] sm:$0xf]
          %v448 = vld [vmem:[%s378 + $0x48] sm:$0xf]
          %v449 = vld [vmem:[%s378 + $0x4c] sm:$0xf]
          %v450 = vld [vmem:[%s378 + $0x50] sm:$0xf]
          %v451 = vld [vmem:[%s378 + $0x54] sm:$0xf]
          %v452 = vld [vmem:[%s378 + $0x58] sm:$0xf]
          %v453 = vld [vmem:[%s378 + $0x5c] sm:$0xf]
          %v454 = vld [vmem:[%s378 + $0x60] sm:$0xf]
          %v455 = vld [vmem:[%s378 + $0x64] sm:$0xf]
          %v456 = vld [vmem:[%s378 + $0x68] sm:$0xf]
          %v457 = vld [vmem:[%s378 + $0x6c] sm:$0xf]
          %v458 = vld [vmem:[%s378 + $0x70] sm:$0xf]
          %v459 = vld [vmem:[%s378 + $0x74] sm:$0xf]
          %v460 = vld [vmem:[%s378 + $0x78] sm:$0xf]
          %v461 = vld [vmem:[%s378 + $0x7c] sm:$0xf]
          %v462 = vld [vmem:[%s378 + $0x80] sm:$0xf]
          %v463 = vld [vmem:[%s378 + $0x84] sm:$0xf]
          %v464 = vld [vmem:[%s378 + $0x88] sm:$0xf]
          %v465 = vld [vmem:[%s378 + $0x8c] sm:$0xf]
          %v466 = vld [vmem:[%s378 + $0x90] sm:$0xf]
          %v467 = vld [vmem:[%s378 + $0x94] sm:$0xf]
          %v468 = vld [vmem:[%s378 + $0x98] sm:$0xf]
          %v469 = vld [vmem:[%s378 + $0x9c] sm:$0xf]
          %v470 = vld [vmem:[%s378 + $0xa0] sm:$0xf]
          %v471 = vld [vmem:[%s378 + $0xa4] sm:$0xf]
          %v472 = vld [vmem:[%s378 + $0xa8] sm:$0xf]
          %v473 = vld [vmem:[%s378 + $0xac] sm:$0xf]
          %v474 = vld [vmem:[%s378 + $0xb0] sm:$0xf]
          %v475 = vld [vmem:[%s378 + $0xb4] sm:$0xf]
          %v476 = vld [vmem:[%s378 + $0xb8] sm:$0xf]
          %v477 = vld [vmem:[%s378 + $0xbc] sm:$0xf]
          %v478 = vld [vmem:[%s378 + $0xc0] sm:$0xf]
          %v479 = vld [vmem:[%s378 + $0xc4] sm:$0xf]
          %v480 = vld [vmem:[%s378 + $0xc8] sm:$0xf]
          %v481 = vld [vmem:[%s378 + $0xcc] sm:$0xf]
          %v482 = vld [vmem:[%s378 + $0xd0] sm:$0xf]
          %v483 = vld [vmem:[%s378 + $0xd4] sm:$0xf]
          %v484 = vld [vmem:[%s378 + $0xd8] sm:$0xf]
          %v485 = vld [vmem:[%s378 + $0xdc] sm:$0xf]
          %v486 = vld [vmem:[%s378 + $0xe0] sm:$0xf]
          %v487 = vld [vmem:[%s378 + $0xe4] sm:$0xf]
          %v488 = vld [vmem:[%s378 + $0xe8] sm:$0xf]
          %v489 = vld [vmem:[%s378 + $0xec] sm:$0xf]
          %v490 = vld [vmem:[%s378 + $0xf0] sm:$0xf]
          %v491 = vld [vmem:[%s378 + $0xf4] sm:$0xf]
          %v492 = vld [vmem:[%s378 + $0xf8] sm:$0xf]
          %v493 = vld [vmem:[%s378 + $0xfc] sm:$0xf]
          %v494 = vunpack.c.l.bf16 %v430
          %v495 = vunpack.c.l.bf16 %v431
          %v496 = vunpack.c.l.bf16 %v432
          %v497 = vunpack.c.l.bf16 %v433
          %v498 = vunpack.c.l.bf16 %v434
          %v499 = vunpack.c.l.bf16 %v435
          %v500 = vunpack.c.l.bf16 %v436
          %v501 = vunpack.c.l.bf16 %v437
          %v502 = vunpack.c.l.bf16 %v438
          %v503 = vunpack.c.l.bf16 %v439
          %v504 = vunpack.c.l.bf16 %v440
          %v505 = vunpack.c.l.bf16 %v441
          %v506 = vunpack.c.l.bf16 %v442
          %v507 = vunpack.c.l.bf16 %v443
          %v508 = vunpack.c.l.bf16 %v444
          %v509 = vunpack.c.l.bf16 %v445
          %v510 = vunpack.c.l.bf16 %v446
          %v511 = vunpack.c.l.bf16 %v447
          %v512 = vunpack.c.l.bf16 %v448
          %v513 = vunpack.c.l.bf16 %v449
          %v514 = vunpack.c.l.bf16 %v450
          %v515 = vunpack.c.l.bf16 %v451
          %v516 = vunpack.c.l.bf16 %v452
          %v517 = vunpack.c.l.bf16 %v453
          %v518 = vunpack.c.l.bf16 %v454
          %v519 = vunpack.c.l.bf16 %v455
          %v520 = vunpack.c.l.bf16 %v456
          %v521 = vunpack.c.l.bf16 %v457
          %v522 = vunpack.c.l.bf16 %v458
          %v523 = vunpack.c.l.bf16 %v459
          %v524 = vunpack.c.l.bf16 %v460
          %v525 = vunpack.c.l.bf16 %v461
          %v526 = vunpack.c.l.bf16 %v462
          %v527 = vunpack.c.l.bf16 %v463
          %v528 = vunpack.c.l.bf16 %v464
          %v529 = vunpack.c.l.bf16 %v465
          %v530 = vunpack.c.l.bf16 %v466
          %v531 = vunpack.c.l.bf16 %v467
          %v532 = vunpack.c.l.bf16 %v468
          %v533 = vunpack.c.l.bf16 %v469
          %v534 = vunpack.c.l.bf16 %v470
          %v535 = vunpack.c.l.bf16 %v471
          %v536 = vunpack.c.l.bf16 %v472
          %v537 = vunpack.c.l.bf16 %v473
          %v538 = vunpack.c.l.bf16 %v474
          %v539 = vunpack.c.l.bf16 %v475
          %v540 = vunpack.c.l.bf16 %v476
          %v541 = vunpack.c.l.bf16 %v477
          %v542 = vunpack.c.l.bf16 %v478
          %v543 = vunpack.c.l.bf16 %v479
          %v544 = vunpack.c.l.bf16 %v480
          %v545 = vunpack.c.l.bf16 %v481
          %v546 = vunpack.c.l.bf16 %v482
          %v547 = vunpack.c.l.bf16 %v483
          %v548 = vunpack.c.l.bf16 %v484
          %v549 = vunpack.c.l.bf16 %v485
          %v550 = vunpack.c.l.bf16 %v486
          %v551 = vunpack.c.l.bf16 %v487
          %v552 = vunpack.c.l.bf16 %v488
          %v553 = vunpack.c.l.bf16 %v489
          %v554 = vunpack.c.l.bf16 %v490
          %v555 = vunpack.c.l.bf16 %v491
          %v556 = vunpack.c.l.bf16 %v492
          %v557 = vunpack.c.l.bf16 %v493
          %v558 = vld [vmem:[#allocation7] sm:$0x1]
          %v560 = vlaneseq
          %v561 = vshrl.u32 %v560, 7
          %v562 = vsub.s32 0, %v561
          %v563 = vrot.slane %v558, %v562
          %v565 = vadd.f32 %v494, %v563
          %v566 = vadd.f32 %v495, %v563
          %v567 = vadd.f32 %v496, %v563
          %v568 = vadd.f32 %v497, %v563
          %v569 = vadd.f32 %v498, %v563
          %v570 = vadd.f32 %v499, %v563
          %v571 = vadd.f32 %v500, %v563
          %v572 = vadd.f32 %v501, %v563
          %v573 = vadd.f32 %v502, %v563
          %v574 = vadd.f32 %v503, %v563
          %v575 = vadd.f32 %v504, %v563
          %v576 = vadd.f32 %v505, %v563
          %v577 = vadd.f32 %v506, %v563
          %v578 = vadd.f32 %v507, %v563
          %v579 = vadd.f32 %v508, %v563
          %v580 = vadd.f32 %v509, %v563
          %v581 = vadd.f32 %v510, %v563
          %v582 = vadd.f32 %v511, %v563
          %v583 = vadd.f32 %v512, %v563
          %v584 = vadd.f32 %v513, %v563
          %v585 = vadd.f32 %v514, %v563
          %v586 = vadd.f32 %v515, %v563
          %v587 = vadd.f32 %v516, %v563
          %v588 = vadd.f32 %v517, %v563
          %v589 = vadd.f32 %v518, %v563
          %v590 = vadd.f32 %v519, %v563
          %v591 = vadd.f32 %v520, %v563
          %v592 = vadd.f32 %v521, %v563
          %v593 = vadd.f32 %v522, %v563
          %v594 = vadd.f32 %v523, %v563
          %v595 = vadd.f32 %v524, %v563
          %v596 = vadd.f32 %v525, %v563
          %v597 = vadd.f32 %v526, %v563
          %v598 = vadd.f32 %v527, %v563
          %v599 = vadd.f32 %v528, %v563
          %v600 = vadd.f32 %v529, %v563
          %v601 = vadd.f32 %v530, %v563
          %v602 = vadd.f32 %v531, %v563
          %v603 = vadd.f32 %v532, %v563
          %v604 = vadd.f32 %v533, %v563
          %v605 = vadd.f32 %v534, %v563
          %v606 = vadd.f32 %v535, %v563
          %v607 = vadd.f32 %v536, %v563
          %v608 = vadd.f32 %v537, %v563
          %v609 = vadd.f32 %v538, %v563
          %v610 = vadd.f32 %v539, %v563
          %v611 = vadd.f32 %v540, %v563
          %v612 = vadd.f32 %v541, %v563
          %v613 = vadd.f32 %v542, %v563
          %v614 = vadd.f32 %v543, %v563
          %v615 = vadd.f32 %v544, %v563
          %v616 = vadd.f32 %v545, %v563
          %v617 = vadd.f32 %v546, %v563
          %v618 = vadd.f32 %v547, %v563
          %v619 = vadd.f32 %v548, %v563
          %v620 = vadd.f32 %v549, %v563
          %v621 = vadd.f32 %v550, %v563
          %v622 = vadd.f32 %v551, %v563
          %v623 = vadd.f32 %v552, %v563
          %v624 = vadd.f32 %v553, %v563
          %v625 = vadd.f32 %v554, %v563
          %v626 = vadd.f32 %v555, %v563
          %v627 = vadd.f32 %v556, %v563
          %v628 = vadd.f32 %v557, %v563
          %629 = vst [vmem:[#allocation2] sm:$0xff] %v565
          %630 = vst [vmem:[#allocation2 + $0x8] sm:$0xff] %v566
          %631 = vst [vmem:[#allocation2 + $0x10] sm:$0xff] %v567
          %632 = vst [vmem:[#allocation2 + $0x18] sm:$0xff] %v568
          %633 = vst [vmem:[#allocation2 + $0x20] sm:$0xff] %v569
          %634 = vst [vmem:[#allocation2 + $0x28] sm:$0xff] %v570
          %635 = vst [vmem:[#allocation2 + $0x30] sm:$0xff] %v571
          %636 = vst [vmem:[#allocation2 + $0x38] sm:$0xff] %v572
          %637 = vst [vmem:[#allocation2 + $0x40] sm:$0xff] %v573
          %638 = vst [vmem:[#allocation2 + $0x48] sm:$0xff] %v574
          %639 = vst [vmem:[#allocation2 + $0x50] sm:$0xff] %v575
          %640 = vst [vmem:[#allocation2 + $0x58] sm:$0xff] %v576
          %641 = vst [vmem:[#allocation2 + $0x60] sm:$0xff] %v577
          %642 = vst [vmem:[#allocation2 + $0x68] sm:$0xff] %v578
          %643 = vst [vmem:[#allocation2 + $0x70] sm:$0xff] %v579
          %644 = vst [vmem:[#allocation2 + $0x78] sm:$0xff] %v580
          %645 = vst [vmem:[#allocation2 + $0x80] sm:$0xff] %v581
          %646 = vst [vmem:[#allocation2 + $0x88] sm:$0xff] %v582
          %647 = vst [vmem:[#allocation2 + $0x90] sm:$0xff] %v583
          %648 = vst [vmem:[#allocation2 + $0x98] sm:$0xff] %v584
          %649 = vst [vmem:[#allocation2 + $0xa0] sm:$0xff] %v585
          %650 = vst [vmem:[#allocation2 + $0xa8] sm:$0xff] %v586
          %651 = vst [vmem:[#allocation2 + $0xb0] sm:$0xff] %v587
          %652 = vst [vmem:[#allocation2 + $0xb8] sm:$0xff] %v588
          %653 = vst [vmem:[#allocation2 + $0xc0] sm:$0xff] %v589
          %654 = vst [vmem:[#allocation2 + $0xc8] sm:$0xff] %v590
          %655 = vst [vmem:[#allocation2 + $0xd0] sm:$0xff] %v591
          %656 = vst [vmem:[#allocation2 + $0xd8] sm:$0xff] %v592
          %657 = vst [vmem:[#allocation2 + $0xe0] sm:$0xff] %v593
          %658 = vst [vmem:[#allocation2 + $0xe8] sm:$0xff] %v594
          %659 = vst [vmem:[#allocation2 + $0xf0] sm:$0xff] %v595
          %660 = vst [vmem:[#allocation2 + $0xf8] sm:$0xff] %v596
          %661 = vst [vmem:[#allocation2 + $0x100] sm:$0xff] %v597
          %662 = vst [vmem:[#allocation2 + $0x108] sm:$0xff] %v598
          %663 = vst [vmem:[#allocation2 + $0x110] sm:$0xff] %v599
          %664 = vst [vmem:[#allocation2 + $0x118] sm:$0xff] %v600
          %665 = vst [vmem:[#allocation2 + $0x120] sm:$0xff] %v601
          %666 = vst [vmem:[#allocation2 + $0x128] sm:$0xff] %v602
          %667 = vst [vmem:[#allocation2 + $0x130] sm:$0xff] %v603
          %668 = vst [vmem:[#allocation2 + $0x138] sm:$0xff] %v604
          %669 = vst [vmem:[#allocation2 + $0x140] sm:$0xff] %v605
          %670 = vst [vmem:[#allocation2 + $0x148] sm:$0xff] %v606
          %671 = vst [vmem:[#allocation2 + $0x150] sm:$0xff] %v607
          %672 = vst [vmem:[#allocation2 + $0x158] sm:$0xff] %v608
          %673 = vst [vmem:[#allocation2 + $0x160] sm:$0xff] %v609
          %674 = vst [vmem:[#allocation2 + $0x168] sm:$0xff] %v610
          %675 = vst [vmem:[#allocation2 + $0x170] sm:$0xff] %v611
          %676 = vst [vmem:[#allocation2 + $0x178] sm:$0xff] %v612
          %677 = vst [vmem:[#allocation2 + $0x180] sm:$0xff] %v613
          %678 = vst [vmem:[#allocation2 + $0x188] sm:$0xff] %v614
          %679 = vst [vmem:[#allocation2 + $0x190] sm:$0xff] %v615
          %680 = vst [vmem:[#allocation2 + $0x198] sm:$0xff] %v616
          %681 = vst [vmem:[#allocation2 + $0x1a0] sm:$0xff] %v617
          %682 = vst [vmem:[#allocation2 + $0x1a8] sm:$0xff] %v618
          %683 = vst [vmem:[#allocation2 + $0x1b0] sm:$0xff] %v619
          %684 = vst [vmem:[#allocation2 + $0x1b8] sm:$0xff] %v620
          %685 = vst [vmem:[#allocation2 + $0x1c0] sm:$0xff] %v621
          %686 = vst [vmem:[#allocation2 + $0x1c8] sm:$0xff] %v622
          %687 = vst [vmem:[#allocation2 + $0x1d0] sm:$0xff] %v623
          %688 = vst [vmem:[#allocation2 + $0x1d8] sm:$0xff] %v624
          %689 = vst [vmem:[#allocation2 + $0x1e0] sm:$0xff] %v625
          %690 = vst [vmem:[#allocation2 + $0x1e8] sm:$0xff] %v626
          %691 = vst [vmem:[#allocation2 + $0x1f0] sm:$0xff] %v627
          %692 = vst [vmem:[#allocation2 + $0x1f8] sm:$0xff] %v628
        $region48: #{net_forward.6} parent=35 // pred_fallthru
          _
        %s693 = sld [smem:[#allocation4 + %s33]]
        %p694 = scmp.lt.s32.totalorder %s34, %s693
        // Predicated region
        $region49: #{net_forward.6} parent=35 // pred_check
          %p695 = pneg %p694
        $region50: #{net_forward.6} parent=35 // pred_check_branch
          %697 = sbr.rel (%p695) target = $region52
        $region51: #{net_forward.6} parent=35 // pred_region
          %v698 = vld [vmem:[#allocation2] sm:$0xff]
          %v699 = vld [vmem:[#allocation2 + $0x8] sm:$0xff]
          %v700 = vld [vmem:[#allocation2 + $0x10] sm:$0xff]
          %v701 = vld [vmem:[#allocation2 + $0x18] sm:$0xff]
          %v702 = vld [vmem:[#allocation2 + $0x20] sm:$0xff]
          %v703 = vld [vmem:[#allocation2 + $0x28] sm:$0xff]
          %v704 = vld [vmem:[#allocation2 + $0x30] sm:$0xff]
          %v705 = vld [vmem:[#allocation2 + $0x38] sm:$0xff]
          %v706 = vld [vmem:[#allocation2 + $0x40] sm:$0xff]
          %v707 = vld [vmem:[#allocation2 + $0x48] sm:$0xff]
          %v708 = vld [vmem:[#allocation2 + $0x50] sm:$0xff]
          %v709 = vld [vmem:[#allocation2 + $0x58] sm:$0xff]
          %v710 = vld [vmem:[#allocation2 + $0x60] sm:$0xff]
          %v711 = vld [vmem:[#allocation2 + $0x68] sm:$0xff]
          %v712 = vld [vmem:[#allocation2 + $0x70] sm:$0xff]
          %v713 = vld [vmem:[#allocation2 + $0x78] sm:$0xff]
          %v714 = vld [vmem:[#allocation2 + $0x80] sm:$0xff]
          %v715 = vld [vmem:[#allocation2 + $0x88] sm:$0xff]
          %v716 = vld [vmem:[#allocation2 + $0x90] sm:$0xff]
          %v717 = vld [vmem:[#allocation2 + $0x98] sm:$0xff]
          %v718 = vld [vmem:[#allocation2 + $0xa0] sm:$0xff]
          %v719 = vld [vmem:[#allocation2 + $0xa8] sm:$0xff]
          %v720 = vld [vmem:[#allocation2 + $0xb0] sm:$0xff]
          %v721 = vld [vmem:[#allocation2 + $0xb8] sm:$0xff]
          %v722 = vld [vmem:[#allocation2 + $0xc0] sm:$0xff]
          %v723 = vld [vmem:[#allocation2 + $0xc8] sm:$0xff]
          %v724 = vld [vmem:[#allocation2 + $0xd0] sm:$0xff]
          %v725 = vld [vmem:[#allocation2 + $0xd8] sm:$0xff]
          %v726 = vld [vmem:[#allocation2 + $0xe0] sm:$0xff]
          %v727 = vld [vmem:[#allocation2 + $0xe8] sm:$0xff]
          %v728 = vld [vmem:[#allocation2 + $0xf0] sm:$0xff]
          %v729 = vld [vmem:[#allocation2 + $0xf8] sm:$0xff]
          %v730 = vld [vmem:[#allocation2 + $0x100] sm:$0xff]
          %v731 = vld [vmem:[#allocation2 + $0x108] sm:$0xff]
          %v732 = vld [vmem:[#allocation2 + $0x110] sm:$0xff]
          %v733 = vld [vmem:[#allocation2 + $0x118] sm:$0xff]
          %v734 = vld [vmem:[#allocation2 + $0x120] sm:$0xff]
          %v735 = vld [vmem:[#allocation2 + $0x128] sm:$0xff]
          %v736 = vld [vmem:[#allocation2 + $0x130] sm:$0xff]
          %v737 = vld [vmem:[#allocation2 + $0x138] sm:$0xff]
          %v738 = vld [vmem:[#allocation2 + $0x140] sm:$0xff]
          %v739 = vld [vmem:[#allocation2 + $0x148] sm:$0xff]
          %v740 = vld [vmem:[#allocation2 + $0x150] sm:$0xff]
          %v741 = vld [vmem:[#allocation2 + $0x158] sm:$0xff]
          %v742 = vld [vmem:[#allocation2 + $0x160] sm:$0xff]
          %v743 = vld [vmem:[#allocation2 + $0x168] sm:$0xff]
          %v744 = vld [vmem:[#allocation2 + $0x170] sm:$0xff]
          %v745 = vld [vmem:[#allocation2 + $0x178] sm:$0xff]
          %v746 = vld [vmem:[#allocation2 + $0x180] sm:$0xff]
          %v747 = vld [vmem:[#allocation2 + $0x188] sm:$0xff]
          %v748 = vld [vmem:[#allocation2 + $0x190] sm:$0xff]
          %v749 = vld [vmem:[#allocation2 + $0x198] sm:$0xff]
          %v750 = vld [vmem:[#allocation2 + $0x1a0] sm:$0xff]
          %v751 = vld [vmem:[#allocation2 + $0x1a8] sm:$0xff]
          %v752 = vld [vmem:[#allocation2 + $0x1b0] sm:$0xff]
          %v753 = vld [vmem:[#allocation2 + $0x1b8] sm:$0xff]
          %v754 = vld [vmem:[#allocation2 + $0x1c0] sm:$0xff]
          %v755 = vld [vmem:[#allocation2 + $0x1c8] sm:$0xff]
          %v756 = vld [vmem:[#allocation2 + $0x1d0] sm:$0xff]
          %v757 = vld [vmem:[#allocation2 + $0x1d8] sm:$0xff]
          %v758 = vld [vmem:[#allocation2 + $0x1e0] sm:$0xff]
          %v759 = vld [vmem:[#allocation2 + $0x1e8] sm:$0xff]
          %v760 = vld [vmem:[#allocation2 + $0x1f0] sm:$0xff]
          %v761 = vld [vmem:[#allocation2 + $0x1f8] sm:$0xff]
          %v762 = vld [vmem:[%s324] sm:$0xff]
          %v763 = vld [vmem:[%s324 + $0x8] sm:$0xff]
          %v764 = vld [vmem:[%s324 + $0x10] sm:$0xff]
          %v765 = vld [vmem:[%s324 + $0x18] sm:$0xff]
          %v766 = vld [vmem:[%s324 + $0x20] sm:$0xff]
          %v767 = vld [vmem:[%s324 + $0x28] sm:$0xff]
          %v768 = vld [vmem:[%s324 + $0x30] sm:$0xff]
          %v769 = vld [vmem:[%s324 + $0x38] sm:$0xff]
          %v770 = vld [vmem:[%s324 + $0x40] sm:$0xff]
          %v771 = vld [vmem:[%s324 + $0x48] sm:$0xff]
          %v772 = vld [vmem:[%s324 + $0x50] sm:$0xff]
          %v773 = vld [vmem:[%s324 + $0x58] sm:$0xff]
          %v774 = vld [vmem:[%s324 + $0x60] sm:$0xff]
          %v775 = vld [vmem:[%s324 + $0x68] sm:$0xff]
          %v776 = vld [vmem:[%s324 + $0x70] sm:$0xff]
          %v777 = vld [vmem:[%s324 + $0x78] sm:$0xff]
          %v778 = vld [vmem:[%s324 + $0x80] sm:$0xff]
          %v779 = vld [vmem:[%s324 + $0x88] sm:$0xff]
          %v780 = vld [vmem:[%s324 + $0x90] sm:$0xff]
          %v781 = vld [vmem:[%s324 + $0x98] sm:$0xff]
          %v782 = vld [vmem:[%s324 + $0xa0] sm:$0xff]
          %v783 = vld [vmem:[%s324 + $0xa8] sm:$0xff]
          %v784 = vld [vmem:[%s324 + $0xb0] sm:$0xff]
          %v785 = vld [vmem:[%s324 + $0xb8] sm:$0xff]
          %v786 = vld [vmem:[%s324 + $0xc0] sm:$0xff]
          %v787 = vld [vmem:[%s324 + $0xc8] sm:$0xff]
          %v788 = vld [vmem:[%s324 + $0xd0] sm:$0xff]
          %v789 = vld [vmem:[%s324 + $0xd8] sm:$0xff]
          %v790 = vld [vmem:[%s324 + $0xe0] sm:$0xff]
          %v791 = vld [vmem:[%s324 + $0xe8] sm:$0xff]
          %v792 = vld [vmem:[%s324 + $0xf0] sm:$0xff]
          %v793 = vld [vmem:[%s324 + $0xf8] sm:$0xff]
          %v794 = vld [vmem:[%s324 + $0x100] sm:$0xff]
          %v795 = vld [vmem:[%s324 + $0x108] sm:$0xff]
          %v796 = vld [vmem:[%s324 + $0x110] sm:$0xff]
          %v797 = vld [vmem:[%s324 + $0x118] sm:$0xff]
          %v798 = vld [vmem:[%s324 + $0x120] sm:$0xff]
          %v799 = vld [vmem:[%s324 + $0x128] sm:$0xff]
          %v800 = vld [vmem:[%s324 + $0x130] sm:$0xff]
          %v801 = vld [vmem:[%s324 + $0x138] sm:$0xff]
          %v802 = vld [vmem:[%s324 + $0x140] sm:$0xff]
          %v803 = vld [vmem:[%s324 + $0x148] sm:$0xff]
          %v804 = vld [vmem:[%s324 + $0x150] sm:$0xff]
          %v805 = vld [vmem:[%s324 + $0x158] sm:$0xff]
          %v806 = vld [vmem:[%s324 + $0x160] sm:$0xff]
          %v807 = vld [vmem:[%s324 + $0x168] sm:$0xff]
          %v808 = vld [vmem:[%s324 + $0x170] sm:$0xff]
          %v809 = vld [vmem:[%s324 + $0x178] sm:$0xff]
          %v810 = vld [vmem:[%s324 + $0x180] sm:$0xff]
          %v811 = vld [vmem:[%s324 + $0x188] sm:$0xff]
          %v812 = vld [vmem:[%s324 + $0x190] sm:$0xff]
          %v813 = vld [vmem:[%s324 + $0x198] sm:$0xff]
          %v814 = vld [vmem:[%s324 + $0x1a0] sm:$0xff]
          %v815 = vld [vmem:[%s324 + $0x1a8] sm:$0xff]
          %v816 = vld [vmem:[%s324 + $0x1b0] sm:$0xff]
          %v817 = vld [vmem:[%s324 + $0x1b8] sm:$0xff]
          %v818 = vld [vmem:[%s324 + $0x1c0] sm:$0xff]
          %v819 = vld [vmem:[%s324 + $0x1c8] sm:$0xff]
          %v820 = vld [vmem:[%s324 + $0x1d0] sm:$0xff]
          %v821 = vld [vmem:[%s324 + $0x1d8] sm:$0xff]
          %v822 = vld [vmem:[%s324 + $0x1e0] sm:$0xff]
          %v823 = vld [vmem:[%s324 + $0x1e8] sm:$0xff]
          %v824 = vld [vmem:[%s324 + $0x1f0] sm:$0xff]
          %v825 = vld [vmem:[%s324 + $0x1f8] sm:$0xff]
          %v826 = vld [vmem:[%s324 + $0x200] sm:$0xff]
          %v827 = vld [vmem:[%s324 + $0x208] sm:$0xff]
          %v828 = vld [vmem:[%s324 + $0x210] sm:$0xff]
          %v829 = vld [vmem:[%s324 + $0x218] sm:$0xff]
          %v830 = vld [vmem:[%s324 + $0x220] sm:$0xff]
          %v831 = vld [vmem:[%s324 + $0x228] sm:$0xff]
          %v832 = vld [vmem:[%s324 + $0x230] sm:$0xff]
          %v833 = vld [vmem:[%s324 + $0x238] sm:$0xff]
          %v834 = vld [vmem:[%s324 + $0x240] sm:$0xff]
          %v835 = vld [vmem:[%s324 + $0x248] sm:$0xff]
          %v836 = vld [vmem:[%s324 + $0x250] sm:$0xff]
          %v837 = vld [vmem:[%s324 + $0x258] sm:$0xff]
          %v838 = vld [vmem:[%s324 + $0x260] sm:$0xff]
          %v839 = vld [vmem:[%s324 + $0x268] sm:$0xff]
          %v840 = vld [vmem:[%s324 + $0x270] sm:$0xff]
          %v841 = vld [vmem:[%s324 + $0x278] sm:$0xff]
          %v842 = vld [vmem:[%s324 + $0x280] sm:$0xff]
          %v843 = vld [vmem:[%s324 + $0x288] sm:$0xff]
          %v844 = vld [vmem:[%s324 + $0x290] sm:$0xff]
          %v845 = vld [vmem:[%s324 + $0x298] sm:$0xff]
          %v846 = vld [vmem:[%s324 + $0x2a0] sm:$0xff]
          %v847 = vld [vmem:[%s324 + $0x2a8] sm:$0xff]
          %v848 = vld [vmem:[%s324 + $0x2b0] sm:$0xff]
          %v849 = vld [vmem:[%s324 + $0x2b8] sm:$0xff]
          %v850 = vld [vmem:[%s324 + $0x2c0] sm:$0xff]
          %v851 = vld [vmem:[%s324 + $0x2c8] sm:$0xff]
          %v852 = vld [vmem:[%s324 + $0x2d0] sm:$0xff]
          %v853 = vld [vmem:[%s324 + $0x2d8] sm:$0xff]
          %v854 = vld [vmem:[%s324 + $0x2e0] sm:$0xff]
          %v855 = vld [vmem:[%s324 + $0x2e8] sm:$0xff]
          %v856 = vld [vmem:[%s324 + $0x2f0] sm:$0xff]
          %v857 = vld [vmem:[%s324 + $0x2f8] sm:$0xff]
          %v858 = vld [vmem:[%s324 + $0x300] sm:$0xff]
          %v859 = vld [vmem:[%s324 + $0x308] sm:$0xff]
          %v860 = vld [vmem:[%s324 + $0x310] sm:$0xff]
          %v861 = vld [vmem:[%s324 + $0x318] sm:$0xff]
          %v862 = vld [vmem:[%s324 + $0x320] sm:$0xff]
          %v863 = vld [vmem:[%s324 + $0x328] sm:$0xff]
          %v864 = vld [vmem:[%s324 + $0x330] sm:$0xff]
          %v865 = vld [vmem:[%s324 + $0x338] sm:$0xff]
          %v866 = vld [vmem:[%s324 + $0x340] sm:$0xff]
          %v867 = vld [vmem:[%s324 + $0x348] sm:$0xff]
          %v868 = vld [vmem:[%s324 + $0x350] sm:$0xff]
          %v869 = vld [vmem:[%s324 + $0x358] sm:$0xff]
          %v870 = vld [vmem:[%s324 + $0x360] sm:$0xff]
          %v871 = vld [vmem:[%s324 + $0x368] sm:$0xff]
          %v872 = vld [vmem:[%s324 + $0x370] sm:$0xff]
          %v873 = vld [vmem:[%s324 + $0x378] sm:$0xff]
          %v874 = vld [vmem:[%s324 + $0x380] sm:$0xff]
          %v875 = vld [vmem:[%s324 + $0x388] sm:$0xff]
          %v876 = vld [vmem:[%s324 + $0x390] sm:$0xff]
          %v877 = vld [vmem:[%s324 + $0x398] sm:$0xff]
          %v878 = vld [vmem:[%s324 + $0x3a0] sm:$0xff]
          %v879 = vld [vmem:[%s324 + $0x3a8] sm:$0xff]
          %v880 = vld [vmem:[%s324 + $0x3b0] sm:$0xff]
          %v881 = vld [vmem:[%s324 + $0x3b8] sm:$0xff]
          %v882 = vld [vmem:[%s324 + $0x3c0] sm:$0xff]
          %v883 = vld [vmem:[%s324 + $0x3c8] sm:$0xff]
          %v884 = vld [vmem:[%s324 + $0x3d0] sm:$0xff]
          %v885 = vld [vmem:[%s324 + $0x3d8] sm:$0xff]
          %v886 = vld [vmem:[%s324 + $0x3e0] sm:$0xff]
          %v887 = vld [vmem:[%s324 + $0x3e8] sm:$0xff]
          %v888 = vld [vmem:[%s324 + $0x3f0] sm:$0xff]
          %v889 = vld [vmem:[%s324 + $0x3f8] sm:$0xff]
          %v890 = vld [vmem:[%s408] sm:$0xf]
          %v891 = vld [vmem:[%s408 + $0x4] sm:$0xf]
          %v892 = vld [vmem:[%s408 + $0x8] sm:$0xf]
          %v893 = vld [vmem:[%s408 + $0xc] sm:$0xf]
          %v894 = vld [vmem:[%s408 + $0x10] sm:$0xf]
          %v895 = vld [vmem:[%s408 + $0x14] sm:$0xf]
          %v896 = vld [vmem:[%s408 + $0x18] sm:$0xf]
          %v897 = vld [vmem:[%s408 + $0x1c] sm:$0xf]
          %v898 = vld [vmem:[%s408 + $0x20] sm:$0xf]
          %v899 = vld [vmem:[%s408 + $0x24] sm:$0xf]
          %v900 = vld [vmem:[%s408 + $0x28] sm:$0xf]
          %v901 = vld [vmem:[%s408 + $0x2c] sm:$0xf]
          %v902 = vld [vmem:[%s408 + $0x30] sm:$0xf]
          %v903 = vld [vmem:[%s408 + $0x34] sm:$0xf]
          %v904 = vld [vmem:[%s408 + $0x38] sm:$0xf]
          %v905 = vld [vmem:[%s408 + $0x3c] sm:$0xf]
          %v906 = vld [vmem:[%s408 + $0x40] sm:$0xf]
          %v907 = vld [vmem:[%s408 + $0x44] sm:$0xf]
          %v908 = vld [vmem:[%s408 + $0x48] sm:$0xf]
          %v909 = vld [vmem:[%s408 + $0x4c] sm:$0xf]
          %v910 = vld [vmem:[%s408 + $0x50] sm:$0xf]
          %v911 = vld [vmem:[%s408 + $0x54] sm:$0xf]
          %v912 = vld [vmem:[%s408 + $0x58] sm:$0xf]
          %v913 = vld [vmem:[%s408 + $0x5c] sm:$0xf]
          %v914 = vld [vmem:[%s408 + $0x60] sm:$0xf]
          %v915 = vld [vmem:[%s408 + $0x64] sm:$0xf]
          %v916 = vld [vmem:[%s408 + $0x68] sm:$0xf]
          %v917 = vld [vmem:[%s408 + $0x6c] sm:$0xf]
          %v918 = vld [vmem:[%s408 + $0x70] sm:$0xf]
          %v919 = vld [vmem:[%s408 + $0x74] sm:$0xf]
          %v920 = vld [vmem:[%s408 + $0x78] sm:$0xf]
          %v921 = vld [vmem:[%s408 + $0x7c] sm:$0xf]
          %v922 = vld [vmem:[%s408 + $0x80] sm:$0xf]
          %v923 = vld [vmem:[%s408 + $0x84] sm:$0xf]
          %v924 = vld [vmem:[%s408 + $0x88] sm:$0xf]
          %v925 = vld [vmem:[%s408 + $0x8c] sm:$0xf]
          %v926 = vld [vmem:[%s408 + $0x90] sm:$0xf]
          %v927 = vld [vmem:[%s408 + $0x94] sm:$0xf]
          %v928 = vld [vmem:[%s408 + $0x98] sm:$0xf]
          %v929 = vld [vmem:[%s408 + $0x9c] sm:$0xf]
          %v930 = vld [vmem:[%s408 + $0xa0] sm:$0xf]
          %v931 = vld [vmem:[%s408 + $0xa4] sm:$0xf]
          %v932 = vld [vmem:[%s408 + $0xa8] sm:$0xf]
          %v933 = vld [vmem:[%s408 + $0xac] sm:$0xf]
          %v934 = vld [vmem:[%s408 + $0xb0] sm:$0xf]
          %v935 = vld [vmem:[%s408 + $0xb4] sm:$0xf]
          %v936 = vld [vmem:[%s408 + $0xb8] sm:$0xf]
          %v937 = vld [vmem:[%s408 + $0xbc] sm:$0xf]
          %v938 = vld [vmem:[%s408 + $0xc0] sm:$0xf]
          %v939 = vld [vmem:[%s408 + $0xc4] sm:$0xf]
          %v940 = vld [vmem:[%s408 + $0xc8] sm:$0xf]
          %v941 = vld [vmem:[%s408 + $0xcc] sm:$0xf]
          %v942 = vld [vmem:[%s408 + $0xd0] sm:$0xf]
          %v943 = vld [vmem:[%s408 + $0xd4] sm:$0xf]
          %v944 = vld [vmem:[%s408 + $0xd8] sm:$0xf]
          %v945 = vld [vmem:[%s408 + $0xdc] sm:$0xf]
          %v946 = vld [vmem:[%s408 + $0xe0] sm:$0xf]
          %v947 = vld [vmem:[%s408 + $0xe4] sm:$0xf]
          %v948 = vld [vmem:[%s408 + $0xe8] sm:$0xf]
          %v949 = vld [vmem:[%s408 + $0xec] sm:$0xf]
          %v950 = vld [vmem:[%s408 + $0xf0] sm:$0xf]
          %v951 = vld [vmem:[%s408 + $0xf4] sm:$0xf]
          %v952 = vld [vmem:[%s408 + $0xf8] sm:$0xf]
          %v953 = vld [vmem:[%s408 + $0xfc] sm:$0xf]
          %v1082 = vunpack.c.l.b16 %v762
          %v1083 = vunpack.c.h.b16 %v762
          %v1084 = vunpack.c.l.b16 %v763
          %v1085 = vunpack.c.h.b16 %v763
          %v1086 = vunpack.c.l.b16 %v764
          %v1087 = vunpack.c.h.b16 %v764
          %v1088 = vunpack.c.l.b16 %v765
          %v1089 = vunpack.c.h.b16 %v765
          %v1090 = vunpack.c.l.b16 %v766
          %v1091 = vunpack.c.h.b16 %v766
          %v1092 = vunpack.c.l.b16 %v767
          %v1093 = vunpack.c.h.b16 %v767
          %v1094 = vunpack.c.l.b16 %v768
          %v1095 = vunpack.c.h.b16 %v768
          %v1096 = vunpack.c.l.b16 %v769
          %v1097 = vunpack.c.h.b16 %v769
          %v1098 = vunpack.c.l.b16 %v770
          %v1099 = vunpack.c.h.b16 %v770
          %v1100 = vunpack.c.l.b16 %v771
          %v1101 = vunpack.c.h.b16 %v771
          %v1102 = vunpack.c.l.b16 %v772
          %v1103 = vunpack.c.h.b16 %v772
          %v1104 = vunpack.c.l.b16 %v773
          %v1105 = vunpack.c.h.b16 %v773
          %v1106 = vunpack.c.l.b16 %v774
          %v1107 = vunpack.c.h.b16 %v774
          %v1108 = vunpack.c.l.b16 %v775
          %v1109 = vunpack.c.h.b16 %v775
          %v1110 = vunpack.c.l.b16 %v776
          %v1111 = vunpack.c.h.b16 %v776
          %v1112 = vunpack.c.l.b16 %v777
          %v1113 = vunpack.c.h.b16 %v777
          %v1114 = vunpack.c.l.b16 %v778
          %v1115 = vunpack.c.h.b16 %v778
          %v1116 = vunpack.c.l.b16 %v779
          %v1117 = vunpack.c.h.b16 %v779
          %v1118 = vunpack.c.l.b16 %v780
          %v1119 = vunpack.c.h.b16 %v780
          %v1120 = vunpack.c.l.b16 %v781
          %v1121 = vunpack.c.h.b16 %v781
          %v1122 = vunpack.c.l.b16 %v782
          %v1123 = vunpack.c.h.b16 %v782
          %v1124 = vunpack.c.l.b16 %v783
          %v1125 = vunpack.c.h.b16 %v783
          %v1126 = vunpack.c.l.b16 %v784
          %v1127 = vunpack.c.h.b16 %v784
          %v1128 = vunpack.c.l.b16 %v785
          %v1129 = vunpack.c.h.b16 %v785
          %v1130 = vunpack.c.l.b16 %v786
          %v1131 = vunpack.c.h.b16 %v786
          %v1132 = vunpack.c.l.b16 %v787
          %v1133 = vunpack.c.h.b16 %v787
          %v1134 = vunpack.c.l.b16 %v788
          %v1135 = vunpack.c.h.b16 %v788
          %v1136 = vunpack.c.l.b16 %v789
          %v1137 = vunpack.c.h.b16 %v789
          %v1138 = vunpack.c.l.b16 %v790
          %v1139 = vunpack.c.h.b16 %v790
          %v1140 = vunpack.c.l.b16 %v791
          %v1141 = vunpack.c.h.b16 %v791
          %v1142 = vunpack.c.l.b16 %v792
          %v1143 = vunpack.c.h.b16 %v792
          %v1144 = vunpack.c.l.b16 %v793
          %v1145 = vunpack.c.h.b16 %v793
          %v1146 = vunpack.c.l.b16 %v794
          %v1147 = vunpack.c.h.b16 %v794
          %v1148 = vunpack.c.l.b16 %v795
          %v1149 = vunpack.c.h.b16 %v795
          %v1150 = vunpack.c.l.b16 %v796
          %v1151 = vunpack.c.h.b16 %v796
          %v1152 = vunpack.c.l.b16 %v797
          %v1153 = vunpack.c.h.b16 %v797
          %v1154 = vunpack.c.l.b16 %v798
          %v1155 = vunpack.c.h.b16 %v798
          %v1156 = vunpack.c.l.b16 %v799
          %v1157 = vunpack.c.h.b16 %v799
          %v1158 = vunpack.c.l.b16 %v800
          %v1159 = vunpack.c.h.b16 %v800
          %v1160 = vunpack.c.l.b16 %v801
          %v1161 = vunpack.c.h.b16 %v801
          %v1162 = vunpack.c.l.b16 %v802
          %v1163 = vunpack.c.h.b16 %v802
          %v1164 = vunpack.c.l.b16 %v803
          %v1165 = vunpack.c.h.b16 %v803
          %v1166 = vunpack.c.l.b16 %v804
          %v1167 = vunpack.c.h.b16 %v804
          %v1168 = vunpack.c.l.b16 %v805
          %v1169 = vunpack.c.h.b16 %v805
          %v1170 = vunpack.c.l.b16 %v806
          %v1171 = vunpack.c.h.b16 %v806
          %v1172 = vunpack.c.l.b16 %v807
          %v1173 = vunpack.c.h.b16 %v807
          %v1174 = vunpack.c.l.b16 %v808
          %v1175 = vunpack.c.h.b16 %v808
          %v1176 = vunpack.c.l.b16 %v809
          %v1177 = vunpack.c.h.b16 %v809
          %v1178 = vunpack.c.l.b16 %v810
          %v1179 = vunpack.c.h.b16 %v810
          %v1180 = vunpack.c.l.b16 %v811
          %v1181 = vunpack.c.h.b16 %v811
          %v1182 = vunpack.c.l.b16 %v812
          %v1183 = vunpack.c.h.b16 %v812
          %v1184 = vunpack.c.l.b16 %v813
          %v1185 = vunpack.c.h.b16 %v813
          %v1186 = vunpack.c.l.b16 %v814
          %v1187 = vunpack.c.h.b16 %v814
          %v1188 = vunpack.c.l.b16 %v815
          %v1189 = vunpack.c.h.b16 %v815
          %v1190 = vunpack.c.l.b16 %v816
          %v1191 = vunpack.c.h.b16 %v816
          %v1192 = vunpack.c.l.b16 %v817
          %v1193 = vunpack.c.h.b16 %v817
          %v1194 = vunpack.c.l.b16 %v818
          %v1195 = vunpack.c.h.b16 %v818
          %v1196 = vunpack.c.l.b16 %v819
          %v1197 = vunpack.c.h.b16 %v819
          %v1198 = vunpack.c.l.b16 %v820
          %v1199 = vunpack.c.h.b16 %v820
          %v1200 = vunpack.c.l.b16 %v821
          %v1201 = vunpack.c.h.b16 %v821
          %v1202 = vunpack.c.l.b16 %v822
          %v1203 = vunpack.c.h.b16 %v822
          %v1204 = vunpack.c.l.b16 %v823
          %v1205 = vunpack.c.h.b16 %v823
          %v1206 = vunpack.c.l.b16 %v824
          %v1207 = vunpack.c.h.b16 %v824
          %v1208 = vunpack.c.l.b16 %v825
          %v1209 = vunpack.c.h.b16 %v825
          %v1210 = vunpack.c.l.b16 %v826
          %v1211 = vunpack.c.h.b16 %v826
          %v1212 = vunpack.c.l.b16 %v827
          %v1213 = vunpack.c.h.b16 %v827
          %v1214 = vunpack.c.l.b16 %v828
          %v1215 = vunpack.c.h.b16 %v828
          %v1216 = vunpack.c.l.b16 %v829
          %v1217 = vunpack.c.h.b16 %v829
          %v1218 = vunpack.c.l.b16 %v830
          %v1219 = vunpack.c.h.b16 %v830
          %v1220 = vunpack.c.l.b16 %v831
          %v1221 = vunpack.c.h.b16 %v831
          %v1222 = vunpack.c.l.b16 %v832
          %v1223 = vunpack.c.h.b16 %v832
          %v1224 = vunpack.c.l.b16 %v833
          %v1225 = vunpack.c.h.b16 %v833
          %v1226 = vunpack.c.l.b16 %v834
          %v1227 = vunpack.c.h.b16 %v834
          %v1228 = vunpack.c.l.b16 %v835
          %v1229 = vunpack.c.h.b16 %v835
          %v1230 = vunpack.c.l.b16 %v836
          %v1231 = vunpack.c.h.b16 %v836
          %v1232 = vunpack.c.l.b16 %v837
          %v1233 = vunpack.c.h.b16 %v837
          %v1234 = vunpack.c.l.b16 %v838
          %v1235 = vunpack.c.h.b16 %v838
          %v1236 = vunpack.c.l.b16 %v839
          %v1237 = vunpack.c.h.b16 %v839
          %v1238 = vunpack.c.l.b16 %v840
          %v1239 = vunpack.c.h.b16 %v840
          %v1240 = vunpack.c.l.b16 %v841
          %v1241 = vunpack.c.h.b16 %v841
          %v1242 = vunpack.c.l.b16 %v842
          %v1243 = vunpack.c.h.b16 %v842
          %v1244 = vunpack.c.l.b16 %v843
          %v1245 = vunpack.c.h.b16 %v843
          %v1246 = vunpack.c.l.b16 %v844
          %v1247 = vunpack.c.h.b16 %v844
          %v1248 = vunpack.c.l.b16 %v845
          %v1249 = vunpack.c.h.b16 %v845
          %v1250 = vunpack.c.l.b16 %v846
          %v1251 = vunpack.c.h.b16 %v846
          %v1252 = vunpack.c.l.b16 %v847
          %v1253 = vunpack.c.h.b16 %v847
          %v1254 = vunpack.c.l.b16 %v848
          %v1255 = vunpack.c.h.b16 %v848
          %v1256 = vunpack.c.l.b16 %v849
          %v1257 = vunpack.c.h.b16 %v849
          %v1258 = vunpack.c.l.b16 %v850
          %v1259 = vunpack.c.h.b16 %v850
          %v1260 = vunpack.c.l.b16 %v851
          %v1261 = vunpack.c.h.b16 %v851
          %v1262 = vunpack.c.l.b16 %v852
          %v1263 = vunpack.c.h.b16 %v852
          %v1264 = vunpack.c.l.b16 %v853
          %v1265 = vunpack.c.h.b16 %v853
          %v1266 = vunpack.c.l.b16 %v854
          %v1267 = vunpack.c.h.b16 %v854
          %v1268 = vunpack.c.l.b16 %v855
          %v1269 = vunpack.c.h.b16 %v855
          %v1270 = vunpack.c.l.b16 %v856
          %v1271 = vunpack.c.h.b16 %v856
          %v1272 = vunpack.c.l.b16 %v857
          %v1273 = vunpack.c.h.b16 %v857
          %v1274 = vunpack.c.l.b16 %v858
          %v1275 = vunpack.c.h.b16 %v858
          %v1276 = vunpack.c.l.b16 %v859
          %v1277 = vunpack.c.h.b16 %v859
          %v1278 = vunpack.c.l.b16 %v860
          %v1279 = vunpack.c.h.b16 %v860
          %v1280 = vunpack.c.l.b16 %v861
          %v1281 = vunpack.c.h.b16 %v861
          %v1282 = vunpack.c.l.b16 %v862
          %v1283 = vunpack.c.h.b16 %v862
          %v1284 = vunpack.c.l.b16 %v863
          %v1285 = vunpack.c.h.b16 %v863
          %v1286 = vunpack.c.l.b16 %v864
          %v1287 = vunpack.c.h.b16 %v864
          %v1288 = vunpack.c.l.b16 %v865
          %v1289 = vunpack.c.h.b16 %v865
          %v1290 = vunpack.c.l.b16 %v866
          %v1291 = vunpack.c.h.b16 %v866
          %v1292 = vunpack.c.l.b16 %v867
          %v1293 = vunpack.c.h.b16 %v867
          %v1294 = vunpack.c.l.b16 %v868
          %v1295 = vunpack.c.h.b16 %v868
          %v1296 = vunpack.c.l.b16 %v869
          %v1297 = vunpack.c.h.b16 %v869
          %v1298 = vunpack.c.l.b16 %v870
          %v1299 = vunpack.c.h.b16 %v870
          %v1300 = vunpack.c.l.b16 %v871
          %v1301 = vunpack.c.h.b16 %v871
          %v1302 = vunpack.c.l.b16 %v872
          %v1303 = vunpack.c.h.b16 %v872
          %v1304 = vunpack.c.l.b16 %v873
          %v1305 = vunpack.c.h.b16 %v873
          %v1306 = vunpack.c.l.b16 %v874
          %v1307 = vunpack.c.h.b16 %v874
          %v1308 = vunpack.c.l.b16 %v875
          %v1309 = vunpack.c.h.b16 %v875
          %v1310 = vunpack.c.l.b16 %v876
          %v1311 = vunpack.c.h.b16 %v876
          %v1312 = vunpack.c.l.b16 %v877
          %v1313 = vunpack.c.h.b16 %v877
          %v1314 = vunpack.c.l.b16 %v878
          %v1315 = vunpack.c.h.b16 %v878
          %v1316 = vunpack.c.l.b16 %v879
          %v1317 = vunpack.c.h.b16 %v879
          %v1318 = vunpack.c.l.b16 %v880
          %v1319 = vunpack.c.h.b16 %v880
          %v1320 = vunpack.c.l.b16 %v881
          %v1321 = vunpack.c.h.b16 %v881
          %v1322 = vunpack.c.l.b16 %v882
          %v1323 = vunpack.c.h.b16 %v882
          %v1324 = vunpack.c.l.b16 %v883
          %v1325 = vunpack.c.h.b16 %v883
          %v1326 = vunpack.c.l.b16 %v884
          %v1327 = vunpack.c.h.b16 %v884
          %v1328 = vunpack.c.l.b16 %v885
          %v1329 = vunpack.c.h.b16 %v885
          %v1330 = vunpack.c.l.b16 %v886
          %v1331 = vunpack.c.h.b16 %v886
          %v1332 = vunpack.c.l.b16 %v887
          %v1333 = vunpack.c.h.b16 %v887
          %v1334 = vunpack.c.l.b16 %v888
          %v1335 = vunpack.c.h.b16 %v888
          %v1336 = vunpack.c.l.b16 %v889
          %v1337 = vunpack.c.h.b16 %v889
          %v1338 = vpack.c.b16 %v1086, %v1082
          %v1339 = vpack.c.b16 %v1087, %v1083
          %v1340 = vpack.c.b16 %v1088, %v1084
          %v1341 = vpack.c.b16 %v1089, %v1085
          %v1342 = vpack.c.b16 %v1094, %v1090
          %v1343 = vpack.c.b16 %v1095, %v1091
          %v1344 = vpack.c.b16 %v1096, %v1092
          %v1345 = vpack.c.b16 %v1097, %v1093
          %v1346 = vpack.c.b16 %v1102, %v1098
          %v1347 = vpack.c.b16 %v1103, %v1099
          %v1348 = vpack.c.b16 %v1104, %v1100
          %v1349 = vpack.c.b16 %v1105, %v1101
          %v1350 = vpack.c.b16 %v1110, %v1106
          %v1351 = vpack.c.b16 %v1111, %v1107
          %v1352 = vpack.c.b16 %v1112, %v1108
          %v1353 = vpack.c.b16 %v1113, %v1109
          %v1354 = vpack.c.b16 %v1118, %v1114
          %v1355 = vpack.c.b16 %v1119, %v1115
          %v1356 = vpack.c.b16 %v1120, %v1116
          %v1357 = vpack.c.b16 %v1121, %v1117
          %v1358 = vpack.c.b16 %v1126, %v1122
          %v1359 = vpack.c.b16 %v1127, %v1123
          %v1360 = vpack.c.b16 %v1128, %v1124
          %v1361 = vpack.c.b16 %v1129, %v1125
          %v1362 = vpack.c.b16 %v1134, %v1130
          %v1363 = vpack.c.b16 %v1135, %v1131
          %v1364 = vpack.c.b16 %v1136, %v1132
          %v1365 = vpack.c.b16 %v1137, %v1133
          %v1366 = vpack.c.b16 %v1142, %v1138
          %v1367 = vpack.c.b16 %v1143, %v1139
          %v1368 = vpack.c.b16 %v1144, %v1140
          %v1369 = vpack.c.b16 %v1145, %v1141
          %v1370 = vpack.c.b16 %v1150, %v1146
          %v1371 = vpack.c.b16 %v1151, %v1147
          %v1372 = vpack.c.b16 %v1152, %v1148
          %v1373 = vpack.c.b16 %v1153, %v1149
          %v1374 = vpack.c.b16 %v1158, %v1154
          %v1375 = vpack.c.b16 %v1159, %v1155
          %v1376 = vpack.c.b16 %v1160, %v1156
          %v1377 = vpack.c.b16 %v1161, %v1157
          %v1378 = vpack.c.b16 %v1166, %v1162
          %v1379 = vpack.c.b16 %v1167, %v1163
          %v1380 = vpack.c.b16 %v1168, %v1164
          %v1381 = vpack.c.b16 %v1169, %v1165
          %v1382 = vpack.c.b16 %v1174, %v1170
          %v1383 = vpack.c.b16 %v1175, %v1171
          %v1384 = vpack.c.b16 %v1176, %v1172
          %v1385 = vpack.c.b16 %v1177, %v1173
          %v1386 = vpack.c.b16 %v1182, %v1178
          %v1387 = vpack.c.b16 %v1183, %v1179
          %v1388 = vpack.c.b16 %v1184, %v1180
          %v1389 = vpack.c.b16 %v1185, %v1181
          %v1390 = vpack.c.b16 %v1190, %v1186
          %v1391 = vpack.c.b16 %v1191, %v1187
          %v1392 = vpack.c.b16 %v1192, %v1188
          %v1393 = vpack.c.b16 %v1193, %v1189
          %v1394 = vpack.c.b16 %v1198, %v1194
          %v1395 = vpack.c.b16 %v1199, %v1195
          %v1396 = vpack.c.b16 %v1200, %v1196
          %v1397 = vpack.c.b16 %v1201, %v1197
          %v1398 = vpack.c.b16 %v1206, %v1202
          %v1399 = vpack.c.b16 %v1207, %v1203
          %v1400 = vpack.c.b16 %v1208, %v1204
          %v1401 = vpack.c.b16 %v1209, %v1205
          %v1402 = vpack.c.b16 %v1214, %v1210
          %v1403 = vpack.c.b16 %v1215, %v1211
          %v1404 = vpack.c.b16 %v1216, %v1212
          %v1405 = vpack.c.b16 %v1217, %v1213
          %v1406 = vpack.c.b16 %v1222, %v1218
          %v1407 = vpack.c.b16 %v1223, %v1219
          %v1408 = vpack.c.b16 %v1224, %v1220
          %v1409 = vpack.c.b16 %v1225, %v1221
          %v1410 = vpack.c.b16 %v1230, %v1226
          %v1411 = vpack.c.b16 %v1231, %v1227
          %v1412 = vpack.c.b16 %v1232, %v1228
          %v1413 = vpack.c.b16 %v1233, %v1229
          %v1414 = vpack.c.b16 %v1238, %v1234
          %v1415 = vpack.c.b16 %v1239, %v1235
          %v1416 = vpack.c.b16 %v1240, %v1236
          %v1417 = vpack.c.b16 %v1241, %v1237
          %v1418 = vpack.c.b16 %v1246, %v1242
          %v1419 = vpack.c.b16 %v1247, %v1243
          %v1420 = vpack.c.b16 %v1248, %v1244
          %v1421 = vpack.c.b16 %v1249, %v1245
          %v1422 = vpack.c.b16 %v1254, %v1250
          %v1423 = vpack.c.b16 %v1255, %v1251
          %v1424 = vpack.c.b16 %v1256, %v1252
          %v1425 = vpack.c.b16 %v1257, %v1253
          %v1426 = vpack.c.b16 %v1262, %v1258
          %v1427 = vpack.c.b16 %v1263, %v1259
          %v1428 = vpack.c.b16 %v1264, %v1260
          %v1429 = vpack.c.b16 %v1265, %v1261
          %v1430 = vpack.c.b16 %v1270, %v1266
          %v1431 = vpack.c.b16 %v1271, %v1267
          %v1432 = vpack.c.b16 %v1272, %v1268
          %v1433 = vpack.c.b16 %v1273, %v1269
          %v1434 = vpack.c.b16 %v1278, %v1274
          %v1435 = vpack.c.b16 %v1279, %v1275
          %v1436 = vpack.c.b16 %v1280, %v1276
          %v1437 = vpack.c.b16 %v1281, %v1277
          %v1438 = vpack.c.b16 %v1286, %v1282
          %v1439 = vpack.c.b16 %v1287, %v1283
          %v1440 = vpack.c.b16 %v1288, %v1284
          %v1441 = vpack.c.b16 %v1289, %v1285
          %v1442 = vpack.c.b16 %v1294, %v1290
          %v1443 = vpack.c.b16 %v1295, %v1291
          %v1444 = vpack.c.b16 %v1296, %v1292
          %v1445 = vpack.c.b16 %v1297, %v1293
          %v1446 = vpack.c.b16 %v1302, %v1298
          %v1447 = vpack.c.b16 %v1303, %v1299
          %v1448 = vpack.c.b16 %v1304, %v1300
          %v1449 = vpack.c.b16 %v1305, %v1301
          %v1450 = vpack.c.b16 %v1310, %v1306
          %v1451 = vpack.c.b16 %v1311, %v1307
          %v1452 = vpack.c.b16 %v1312, %v1308
          %v1453 = vpack.c.b16 %v1313, %v1309
          %v1454 = vpack.c.b16 %v1318, %v1314
          %v1455 = vpack.c.b16 %v1319, %v1315
          %v1456 = vpack.c.b16 %v1320, %v1316
          %v1457 = vpack.c.b16 %v1321, %v1317
          %v1458 = vpack.c.b16 %v1326, %v1322
          %v1459 = vpack.c.b16 %v1327, %v1323
          %v1460 = vpack.c.b16 %v1328, %v1324
          %v1461 = vpack.c.b16 %v1329, %v1325
          %v1462 = vpack.c.b16 %v1334, %v1330
          %v1463 = vpack.c.b16 %v1335, %v1331
          %v1464 = vpack.c.b16 %v1336, %v1332
          %v1465 = vpack.c.b16 %v1337, %v1333
          %v1658 = vunpack.c.l.b16 %v890
          %v1659 = vunpack.c.l.b16 %v891
          %v1660 = vunpack.c.l.b16 %v892
          %v1661 = vunpack.c.l.b16 %v893
          %v1662 = vunpack.c.l.b16 %v894
          %v1663 = vunpack.c.l.b16 %v895
          %v1664 = vunpack.c.l.b16 %v896
          %v1665 = vunpack.c.l.b16 %v897
          %v1666 = vunpack.c.l.b16 %v898
          %v1667 = vunpack.c.l.b16 %v899
          %v1668 = vunpack.c.l.b16 %v900
          %v1669 = vunpack.c.l.b16 %v901
          %v1670 = vunpack.c.l.b16 %v902
          %v1671 = vunpack.c.l.b16 %v903
          %v1672 = vunpack.c.l.b16 %v904
          %v1673 = vunpack.c.l.b16 %v905
          %v1674 = vunpack.c.l.b16 %v906
          %v1675 = vunpack.c.l.b16 %v907
          %v1676 = vunpack.c.l.b16 %v908
          %v1677 = vunpack.c.l.b16 %v909
          %v1678 = vunpack.c.l.b16 %v910
          %v1679 = vunpack.c.l.b16 %v911
          %v1680 = vunpack.c.l.b16 %v912
          %v1681 = vunpack.c.l.b16 %v913
          %v1682 = vunpack.c.l.b16 %v914
          %v1683 = vunpack.c.l.b16 %v915
          %v1684 = vunpack.c.l.b16 %v916
          %v1685 = vunpack.c.l.b16 %v917
          %v1686 = vunpack.c.l.b16 %v918
          %v1687 = vunpack.c.l.b16 %v919
          %v1688 = vunpack.c.l.b16 %v920
          %v1689 = vunpack.c.l.b16 %v921
          %v1690 = vunpack.c.l.b16 %v922
          %v1691 = vunpack.c.l.b16 %v923
          %v1692 = vunpack.c.l.b16 %v924
          %v1693 = vunpack.c.l.b16 %v925
          %v1694 = vunpack.c.l.b16 %v926
          %v1695 = vunpack.c.l.b16 %v927
          %v1696 = vunpack.c.l.b16 %v928
          %v1697 = vunpack.c.l.b16 %v929
          %v1698 = vunpack.c.l.b16 %v930
          %v1699 = vunpack.c.l.b16 %v931
          %v1700 = vunpack.c.l.b16 %v932
          %v1701 = vunpack.c.l.b16 %v933
          %v1702 = vunpack.c.l.b16 %v934
          %v1703 = vunpack.c.l.b16 %v935
          %v1704 = vunpack.c.l.b16 %v936
          %v1705 = vunpack.c.l.b16 %v937
          %v1706 = vunpack.c.l.b16 %v938
          %v1707 = vunpack.c.l.b16 %v939
          %v1708 = vunpack.c.l.b16 %v940
          %v1709 = vunpack.c.l.b16 %v941
          %v1710 = vunpack.c.l.b16 %v942
          %v1711 = vunpack.c.l.b16 %v943
          %v1712 = vunpack.c.l.b16 %v944
          %v1713 = vunpack.c.l.b16 %v945
          %v1714 = vunpack.c.l.b16 %v946
          %v1715 = vunpack.c.l.b16 %v947
          %v1716 = vunpack.c.l.b16 %v948
          %v1717 = vunpack.c.l.b16 %v949
          %v1718 = vunpack.c.l.b16 %v950
          %v1719 = vunpack.c.l.b16 %v951
          %v1720 = vunpack.c.l.b16 %v952
          %v1721 = vunpack.c.l.b16 %v953
          %v1722 = vpack.c.b16 %v1659, %v1658
          %v1723 = vpack.c.b16 %v1661, %v1660
          %v1724 = vpack.c.b16 %v1663, %v1662
          %v1725 = vpack.c.b16 %v1665, %v1664
          %v1726 = vpack.c.b16 %v1667, %v1666
          %v1727 = vpack.c.b16 %v1669, %v1668
          %v1728 = vpack.c.b16 %v1671, %v1670
          %v1729 = vpack.c.b16 %v1673, %v1672
          %v1730 = vpack.c.b16 %v1675, %v1674
          %v1731 = vpack.c.b16 %v1677, %v1676
          %v1732 = vpack.c.b16 %v1679, %v1678
          %v1733 = vpack.c.b16 %v1681, %v1680
          %v1734 = vpack.c.b16 %v1683, %v1682
          %v1735 = vpack.c.b16 %v1685, %v1684
          %v1736 = vpack.c.b16 %v1687, %v1686
          %v1737 = vpack.c.b16 %v1689, %v1688
          %v1738 = vpack.c.b16 %v1691, %v1690
          %v1739 = vpack.c.b16 %v1693, %v1692
          %v1740 = vpack.c.b16 %v1695, %v1694
          %v1741 = vpack.c.b16 %v1697, %v1696
          %v1742 = vpack.c.b16 %v1699, %v1698
          %v1743 = vpack.c.b16 %v1701, %v1700
          %v1744 = vpack.c.b16 %v1703, %v1702
          %v1745 = vpack.c.b16 %v1705, %v1704
          %v1746 = vpack.c.b16 %v1707, %v1706
          %v1747 = vpack.c.b16 %v1709, %v1708
          %v1748 = vpack.c.b16 %v1711, %v1710
          %v1749 = vpack.c.b16 %v1713, %v1712
          %v1750 = vpack.c.b16 %v1715, %v1714
          %v1751 = vpack.c.b16 %v1717, %v1716
          %v1752 = vpack.c.b16 %v1719, %v1718
          %v1753 = vpack.c.b16 %v1721, %v1720
          %1786 = vmatprep.subr.bf16.mxu0 0
          %1787 = vmatpush1.bf16.msra.mxu0 %v1722
          %1788 = vmatprep.subr.bf16.mxu0 0
          %1789 = vmatpush1.bf16.msra.mxu0 %v1723
          %1790 = vmatprep.subr.bf16.mxu0 0
          %1791 = vmatpush1.bf16.msra.mxu0 %v1724
          %1792 = vmatprep.subr.bf16.mxu0 0
          %1793 = vmatpush1.bf16.msra.mxu0 %v1725
          %1794 = vmatprep.subr.bf16.mxu0 0
          %1795 = vmatpush1.bf16.msra.mxu0 %v1726
          %1796 = vmatprep.subr.bf16.mxu0 0
          %1797 = vmatpush1.bf16.msra.mxu0 %v1727
          %1798 = vmatprep.subr.bf16.mxu0 0
          %1799 = vmatpush1.bf16.msra.mxu0 %v1728
          %1800 = vmatprep.subr.bf16.mxu0 0
          %1801 = vmatpush1.bf16.msra.mxu0 %v1729
          %1802 = vmatprep.subr.bf16.mxu0 0
          %1803 = vmatpush1.bf16.msra.mxu0 %v1730
          %1804 = vmatprep.subr.bf16.mxu0 0
          %1805 = vmatpush1.bf16.msra.mxu0 %v1731
          %1806 = vmatprep.subr.bf16.mxu0 0
          %1807 = vmatpush1.bf16.msra.mxu0 %v1732
          %1808 = vmatprep.subr.bf16.mxu0 0
          %1809 = vmatpush1.bf16.msra.mxu0 %v1733
          %1810 = vmatprep.subr.bf16.mxu0 0
          %1811 = vmatpush1.bf16.msra.mxu0 %v1734
          %1812 = vmatprep.subr.bf16.mxu0 0
          %1813 = vmatpush1.bf16.msra.mxu0 %v1735
          %1814 = vmatprep.subr.bf16.mxu0 0
          %1815 = vmatpush1.bf16.msra.mxu0 %v1736
          %1816 = vmatprep.subr.bf16.mxu0 0
          %1817 = vmatpush1.bf16.msra.mxu0 %v1737
          %1818 = vmatprep.mubr.bf16.mxu0 %v1339
          %1819 = vmatmul.mubr.bf16.gmra.mrb[0].mxu0 %v1338
          %v1820 = vpop.f32.mrb[0].mxu0
          %v1821 = vadd.f32 0.0, %v1820
          %v1822 = vpop.f32.mrb[0].mxu0
          %v1823 = vpop.f32.mrb[0].mxu0
          %v1824 = vadd.f32 0.0, %v1823
          %v1825 = vpop.f32.mrb[0].mxu0
          %1826 = vmatprep.mubr.bf16.mxu0 %v1343
          %1827 = vmatmul.mubr.bf16.gmra.mrb[0].mxu0 %v1342
          %v1828 = vpop.f32.mrb[0].mxu0
          %v1829 = vadd.f32 0.0, %v1828
          %v1830 = vpop.f32.mrb[0].mxu0
          %v1831 = vpop.f32.mrb[0].mxu0
          %v1832 = vadd.f32 0.0, %v1831
          %v1833 = vpop.f32.mrb[0].mxu0
          %1834 = vmatprep.mubr.bf16.mxu0 %v1347
          %1835 = vmatmul.mubr.bf16.gmra.mrb[0].mxu0 %v1346
          %v1836 = vpop.f32.mrb[0].mxu0
          %v1837 = vadd.f32 0.0, %v1836
          %v1838 = vpop.f32.mrb[0].mxu0
          %v1839 = vpop.f32.mrb[0].mxu0
          %v1840 = vadd.f32 0.0, %v1839
          %v1841 = vpop.f32.mrb[0].mxu0
          %1842 = vmatprep.mubr.bf16.mxu0 %v1351
          %1843 = vmatmul.mubr.bf16.gmra.mrb[0].mxu0 %v1350
          %v1844 = vpop.f32.mrb[0].mxu0
          %v1845 = vadd.f32 0.0, %v1844
          %v1846 = vpop.f32.mrb[0].mxu0
          %v1847 = vpop.f32.mrb[0].mxu0
          %v1848 = vadd.f32 0.0, %v1847
          %v1849 = vpop.f32.mrb[0].mxu0
          %1850 = vmatprep.mubr.bf16.mxu0 %v1355
          %1851 = vmatmul.mubr.bf16.gmra.mrb[0].mxu0 %v1354
          %v1852 = vpop.f32.mrb[0].mxu0
          %v1853 = vadd.f32 0.0, %v1852
          %v1854 = vpop.f32.mrb[0].mxu0
          %v1855 = vpop.f32.mrb[0].mxu0
          %v1856 = vadd.f32 0.0, %v1855
          %v1857 = vpop.f32.mrb[0].mxu0
          %1858 = vmatprep.mubr.bf16.mxu0 %v1359
          %1859 = vmatmul.mubr.bf16.gmra.mrb[0].mxu0 %v1358
          %v1860 = vpop.f32.mrb[0].mxu0
          %v1861 = vadd.f32 0.0, %v1860
          %v1862 = vpop.f32.mrb[0].mxu0
          %v1863 = vpop.f32.mrb[0].mxu0
          %v1864 = vadd.f32 0.0, %v1863
          %v1865 = vpop.f32.mrb[0].mxu0
          %1866 = vmatprep.mubr.bf16.mxu0 %v1363
          %1867 = vmatmul.mubr.bf16.gmra.mrb[0].mxu0 %v1362
          %v1868 = vpop.f32.mrb[0].mxu0
          %v1869 = vadd.f32 0.0, %v1868
          %v1870 = vpop.f32.mrb[0].mxu0
          %v1871 = vpop.f32.mrb[0].mxu0
          %v1872 = vadd.f32 0.0, %v1871
          %v1873 = vpop.f32.mrb[0].mxu0
          %1874 = vmatprep.mubr.bf16.mxu0 %v1367
          %1875 = vmatmul.mubr.bf16.gmra.mrb[0].mxu0 %v1366
          %v1876 = vpop.f32.mrb[0].mxu0
          %v1877 = vadd.f32 0.0, %v1876
          %v1878 = vpop.f32.mrb[0].mxu0
          %v1879 = vpop.f32.mrb[0].mxu0
          %v1880 = vadd.f32 0.0, %v1879
          %v1881 = vpop.f32.mrb[0].mxu0
          %1882 = vmatprep.mubr.bf16.mxu0 %v1371
          %1883 = vmatmul.mubr.bf16.gmra.mrb[0].mxu0 %v1370
          %v1884 = vpop.f32.mrb[0].mxu0
          %v1885 = vadd.f32 0.0, %v1884
          %v1886 = vpop.f32.mrb[0].mxu0
          %v1887 = vpop.f32.mrb[0].mxu0
          %v1888 = vadd.f32 0.0, %v1887
          %v1889 = vpop.f32.mrb[0].mxu0
          %1890 = vmatprep.mubr.bf16.mxu0 %v1375
          %1891 = vmatmul.mubr.bf16.gmra.mrb[0].mxu0 %v1374
          %v1892 = vpop.f32.mrb[0].mxu0
          %v1893 = vadd.f32 0.0, %v1892
          %v1894 = vpop.f32.mrb[0].mxu0
          %v1895 = vpop.f32.mrb[0].mxu0
          %v1896 = vadd.f32 0.0, %v1895
          %v1897 = vpop.f32.mrb[0].mxu0
          %1898 = vmatprep.mubr.bf16.mxu0 %v1379
          %1899 = vmatmul.mubr.bf16.gmra.mrb[0].mxu0 %v1378
          %v1900 = vpop.f32.mrb[0].mxu0
          %v1901 = vadd.f32 0.0, %v1900
          %v1902 = vpop.f32.mrb[0].mxu0
          %v1903 = vpop.f32.mrb[0].mxu0
          %v1904 = vadd.f32 0.0, %v1903
          %v1905 = vpop.f32.mrb[0].mxu0
          %1906 = vmatprep.mubr.bf16.mxu0 %v1383
          %1907 = vmatmul.mubr.bf16.gmra.mrb[0].mxu0 %v1382
          %v1908 = vpop.f32.mrb[0].mxu0
          %v1909 = vadd.f32 0.0, %v1908
          %v1910 = vpop.f32.mrb[0].mxu0
          %v1911 = vpop.f32.mrb[0].mxu0
          %v1912 = vadd.f32 0.0, %v1911
          %v1913 = vpop.f32.mrb[0].mxu0
          %1914 = vmatprep.mubr.bf16.mxu0 %v1387
          %1915 = vmatmul.mubr.bf16.gmra.mrb[0].mxu0 %v1386
          %v1916 = vpop.f32.mrb[0].mxu0
          %v1917 = vadd.f32 0.0, %v1916
          %v1918 = vpop.f32.mrb[0].mxu0
          %v1919 = vpop.f32.mrb[0].mxu0
          %v1920 = vadd.f32 0.0, %v1919
          %v1921 = vpop.f32.mrb[0].mxu0
          %1922 = vmatprep.mubr.bf16.mxu0 %v1391
          %1923 = vmatmul.mubr.bf16.gmra.mrb[0].mxu0 %v1390
          %v1924 = vpop.f32.mrb[0].mxu0
          %v1925 = vadd.f32 0.0, %v1924
          %v1926 = vpop.f32.mrb[0].mxu0
          %v1927 = vpop.f32.mrb[0].mxu0
          %v1928 = vadd.f32 0.0, %v1927
          %v1929 = vpop.f32.mrb[0].mxu0
          %1930 = vmatprep.mubr.bf16.mxu0 %v1395
          %1931 = vmatmul.mubr.bf16.gmra.mrb[0].mxu0 %v1394
          %v1932 = vpop.f32.mrb[0].mxu0
          %v1933 = vadd.f32 0.0, %v1932
          %v1934 = vpop.f32.mrb[0].mxu0
          %v1935 = vpop.f32.mrb[0].mxu0
          %v1936 = vadd.f32 0.0, %v1935
          %v1937 = vpop.f32.mrb[0].mxu0
          %1938 = vmatprep.mubr.bf16.mxu0 %v1399
          %1939 = vmatmul.mubr.bf16.gmra.mrb[0].mxu0 %v1398
          %v1940 = vpop.f32.mrb[0].mxu0
          %v1941 = vadd.f32 0.0, %v1940
          %v1942 = vpop.f32.mrb[0].mxu0
          %v1943 = vpop.f32.mrb[0].mxu0
          %v1944 = vadd.f32 0.0, %v1943
          %v1945 = vpop.f32.mrb[0].mxu0
          %1946 = vmatprep.mubr.bf16.mxu0 %v1403
          %1947 = vmatmul.mubr.bf16.gmra.mrb[0].mxu0 %v1402
          %v1948 = vpop.f32.mrb[0].mxu0
          %v1949 = vadd.f32 0.0, %v1948
          %v1950 = vpop.f32.mrb[0].mxu0
          %v1951 = vpop.f32.mrb[0].mxu0
          %v1952 = vadd.f32 0.0, %v1951
          %v1953 = vpop.f32.mrb[0].mxu0
          %1954 = vmatprep.mubr.bf16.mxu0 %v1407
          %1955 = vmatmul.mubr.bf16.gmra.mrb[0].mxu0 %v1406
          %v1956 = vpop.f32.mrb[0].mxu0
          %v1957 = vadd.f32 0.0, %v1956
          %v1958 = vpop.f32.mrb[0].mxu0
          %v1959 = vpop.f32.mrb[0].mxu0
          %v1960 = vadd.f32 0.0, %v1959
          %v1961 = vpop.f32.mrb[0].mxu0
          %1962 = vmatprep.mubr.bf16.mxu0 %v1411
          %1963 = vmatmul.mubr.bf16.gmra.mrb[0].mxu0 %v1410
          %v1964 = vpop.f32.mrb[0].mxu0
          %v1965 = vadd.f32 0.0, %v1964
          %v1966 = vpop.f32.mrb[0].mxu0
          %v1967 = vpop.f32.mrb[0].mxu0
          %v1968 = vadd.f32 0.0, %v1967
          %v1969 = vpop.f32.mrb[0].mxu0
          %1970 = vmatprep.mubr.bf16.mxu0 %v1415
          %1971 = vmatmul.mubr.bf16.gmra.mrb[0].mxu0 %v1414
          %v1972 = vpop.f32.mrb[0].mxu0
          %v1973 = vadd.f32 0.0, %v1972
          %v1974 = vpop.f32.mrb[0].mxu0
          %v1975 = vpop.f32.mrb[0].mxu0
          %v1976 = vadd.f32 0.0, %v1975
          %v1977 = vpop.f32.mrb[0].mxu0
          %1978 = vmatprep.mubr.bf16.mxu0 %v1419
          %1979 = vmatmul.mubr.bf16.gmra.mrb[0].mxu0 %v1418
          %v1980 = vpop.f32.mrb[0].mxu0
          %v1981 = vadd.f32 0.0, %v1980
          %v1982 = vpop.f32.mrb[0].mxu0
          %v1983 = vpop.f32.mrb[0].mxu0
          %v1984 = vadd.f32 0.0, %v1983
          %v1985 = vpop.f32.mrb[0].mxu0
          %1986 = vmatprep.mubr.bf16.mxu0 %v1423
          %1987 = vmatmul.mubr.bf16.gmra.mrb[0].mxu0 %v1422
          %v1988 = vpop.f32.mrb[0].mxu0
          %v1989 = vadd.f32 0.0, %v1988
          %v1990 = vpop.f32.mrb[0].mxu0
          %v1991 = vpop.f32.mrb[0].mxu0
          %v1992 = vadd.f32 0.0, %v1991
          %v1993 = vpop.f32.mrb[0].mxu0
          %1994 = vmatprep.mubr.bf16.mxu0 %v1427
          %1995 = vmatmul.mubr.bf16.gmra.mrb[0].mxu0 %v1426
          %v1996 = vpop.f32.mrb[0].mxu0
          %v1997 = vadd.f32 0.0, %v1996
          %v1998 = vpop.f32.mrb[0].mxu0
          %v1999 = vpop.f32.mrb[0].mxu0
          %v2000 = vadd.f32 0.0, %v1999
          %v2001 = vpop.f32.mrb[0].mxu0
          %2002 = vmatprep.mubr.bf16.mxu0 %v1431
          %2003 = vmatmul.mubr.bf16.gmra.mrb[0].mxu0 %v1430
          %v2004 = vpop.f32.mrb[0].mxu0
          %v2005 = vadd.f32 0.0, %v2004
          %v2006 = vpop.f32.mrb[0].mxu0
          %v2007 = vpop.f32.mrb[0].mxu0
          %v2008 = vadd.f32 0.0, %v2007
          %v2009 = vpop.f32.mrb[0].mxu0
          %2010 = vmatprep.mubr.bf16.mxu0 %v1435
          %2011 = vmatmul.mubr.bf16.gmra.mrb[0].mxu0 %v1434
          %v2012 = vpop.f32.mrb[0].mxu0
          %v2013 = vadd.f32 0.0, %v2012
          %v2014 = vpop.f32.mrb[0].mxu0
          %v2015 = vpop.f32.mrb[0].mxu0
          %v2016 = vadd.f32 0.0, %v2015
          %v2017 = vpop.f32.mrb[0].mxu0
          %2018 = vmatprep.mubr.bf16.mxu0 %v1439
          %2019 = vmatmul.mubr.bf16.gmra.mrb[0].mxu0 %v1438
          %v2020 = vpop.f32.mrb[0].mxu0
          %v2021 = vadd.f32 0.0, %v2020
          %v2022 = vpop.f32.mrb[0].mxu0
          %v2023 = vpop.f32.mrb[0].mxu0
          %v2024 = vadd.f32 0.0, %v2023
          %v2025 = vpop.f32.mrb[0].mxu0
          %2026 = vmatprep.mubr.bf16.mxu0 %v1443
          %2027 = vmatmul.mubr.bf16.gmra.mrb[0].mxu0 %v1442
          %v2028 = vpop.f32.mrb[0].mxu0
          %v2029 = vadd.f32 0.0, %v2028
          %v2030 = vpop.f32.mrb[0].mxu0
          %v2031 = vpop.f32.mrb[0].mxu0
          %v2032 = vadd.f32 0.0, %v2031
          %v2033 = vpop.f32.mrb[0].mxu0
          %2034 = vmatprep.mubr.bf16.mxu0 %v1447
          %2035 = vmatmul.mubr.bf16.gmra.mrb[0].mxu0 %v1446
          %v2036 = vpop.f32.mrb[0].mxu0
          %v2037 = vadd.f32 0.0, %v2036
          %v2038 = vpop.f32.mrb[0].mxu0
          %v2039 = vpop.f32.mrb[0].mxu0
          %v2040 = vadd.f32 0.0, %v2039
          %v2041 = vpop.f32.mrb[0].mxu0
          %2042 = vmatprep.mubr.bf16.mxu0 %v1451
          %2043 = vmatmul.mubr.bf16.gmra.mrb[0].mxu0 %v1450
          %v2044 = vpop.f32.mrb[0].mxu0
          %v2045 = vadd.f32 0.0, %v2044
          %v2046 = vpop.f32.mrb[0].mxu0
          %v2047 = vpop.f32.mrb[0].mxu0
          %v2048 = vadd.f32 0.0, %v2047
          %v2049 = vpop.f32.mrb[0].mxu0
          %2050 = vmatprep.mubr.bf16.mxu0 %v1455
          %2051 = vmatmul.mubr.bf16.gmra.mrb[0].mxu0 %v1454
          %v2052 = vpop.f32.mrb[0].mxu0
          %v2053 = vadd.f32 0.0, %v2052
          %v2054 = vpop.f32.mrb[0].mxu0
          %v2055 = vpop.f32.mrb[0].mxu0
          %v2056 = vadd.f32 0.0, %v2055
          %v2057 = vpop.f32.mrb[0].mxu0
          %2058 = vmatprep.mubr.bf16.mxu0 %v1459
          %2059 = vmatmul.mubr.bf16.gmra.mrb[0].mxu0 %v1458
          %v2060 = vpop.f32.mrb[0].mxu0
          %v2061 = vadd.f32 0.0, %v2060
          %v2062 = vpop.f32.mrb[0].mxu0
          %v2063 = vpop.f32.mrb[0].mxu0
          %v2064 = vadd.f32 0.0, %v2063
          %v2065 = vpop.f32.mrb[0].mxu0
          %2066 = vmatprep.mubr.bf16.mxu0 %v1463
          %2067 = vmatmul.mubr.bf16.gmra.mrb[0].mxu0 %v1462
          %v2068 = vpop.f32.mrb[0].mxu0
          %v2069 = vadd.f32 0.0, %v2068
          %v2070 = vpop.f32.mrb[0].mxu0
          %v2071 = vpop.f32.mrb[0].mxu0
          %v2072 = vadd.f32 0.0, %v2071
          %v2073 = vpop.f32.mrb[0].mxu0
          %2074 = vdwg.mxu0
          %2075 = vmatprep.subr.bf16.mxu0 0
          %2076 = vmatpush1.bf16.msra.mxu0 %v1738
          %2077 = vmatprep.subr.bf16.mxu0 0
          %2078 = vmatpush1.bf16.msra.mxu0 %v1739
          %2079 = vmatprep.subr.bf16.mxu0 0
          %2080 = vmatpush1.bf16.msra.mxu0 %v1740
          %2081 = vmatprep.subr.bf16.mxu0 0
          %2082 = vmatpush1.bf16.msra.mxu0 %v1741
          %2083 = vmatprep.subr.bf16.mxu0 0
          %2084 = vmatpush1.bf16.msra.mxu0 %v1742
          %2085 = vmatprep.subr.bf16.mxu0 0
          %2086 = vmatpush1.bf16.msra.mxu0 %v1743
          %2087 = vmatprep.subr.bf16.mxu0 0
          %2088 = vmatpush1.bf16.msra.mxu0 %v1744
          %2089 = vmatprep.subr.bf16.mxu0 0
          %2090 = vmatpush1.bf16.msra.mxu0 %v1745
          %2091 = vmatprep.subr.bf16.mxu0 0
          %2092 = vmatpush1.bf16.msra.mxu0 %v1746
          %2093 = vmatprep.subr.bf16.mxu0 0
          %2094 = vmatpush1.bf16.msra.mxu0 %v1747
          %2095 = vmatprep.subr.bf16.mxu0 0
          %2096 = vmatpush1.bf16.msra.mxu0 %v1748
          %2097 = vmatprep.subr.bf16.mxu0 0
          %2098 = vmatpush1.bf16.msra.mxu0 %v1749
          %2099 = vmatprep.subr.bf16.mxu0 0
          %2100 = vmatpush1.bf16.msra.mxu0 %v1750
          %2101 = vmatprep.subr.bf16.mxu0 0
          %2102 = vmatpush1.bf16.msra.mxu0 %v1751
          %2103 = vmatprep.subr.bf16.mxu0 0
          %2104 = vmatpush1.bf16.msra.mxu0 %v1752
          %2105 = vmatprep.subr.bf16.mxu0 0
          %2106 = vmatpush1.bf16.msra.mxu0 %v1753
          %2107 = vmatprep.mubr.bf16.mxu0 %v1341
          %2108 = vmatmul.mubr.bf16.gmra.mrb[0].mxu0 %v1340
          %v2109 = vpop.f32.mrb[0].mxu0
          %v2110 = vadd.f32 %v1821, %v2109
          %v2111 = vpop.f32.mrb[0].mxu0
          %v2112 = vpop.f32.mrb[0].mxu0
          %v2113 = vadd.f32 %v1824, %v2112
          %v2114 = vpop.f32.mrb[0].mxu0
          %2115 = vmatprep.mubr.bf16.mxu0 %v1345
          %2116 = vmatmul.mubr.bf16.gmra.mrb[0].mxu0 %v1344
          %v2117 = vpop.f32.mrb[0].mxu0
          %v2118 = vadd.f32 %v1829, %v2117
          %v2119 = vpop.f32.mrb[0].mxu0
          %v2120 = vpop.f32.mrb[0].mxu0
          %v2121 = vadd.f32 %v1832, %v2120
          %v2122 = vpop.f32.mrb[0].mxu0
          %2123 = vmatprep.mubr.bf16.mxu0 %v1349
          %2124 = vmatmul.mubr.bf16.gmra.mrb[0].mxu0 %v1348
          %v2125 = vpop.f32.mrb[0].mxu0
          %v2126 = vadd.f32 %v1837, %v2125
          %v2127 = vpop.f32.mrb[0].mxu0
          %v2128 = vpop.f32.mrb[0].mxu0
          %v2129 = vadd.f32 %v1840, %v2128
          %v2130 = vpop.f32.mrb[0].mxu0
          %2131 = vmatprep.mubr.bf16.mxu0 %v1353
          %2132 = vmatmul.mubr.bf16.gmra.mrb[0].mxu0 %v1352
          %v2133 = vpop.f32.mrb[0].mxu0
          %v2134 = vadd.f32 %v1845, %v2133
          %v2135 = vpop.f32.mrb[0].mxu0
          %v2136 = vpop.f32.mrb[0].mxu0
          %v2137 = vadd.f32 %v1848, %v2136
          %v2138 = vpop.f32.mrb[0].mxu0
          %2139 = vmatprep.mubr.bf16.mxu0 %v1357
          %2140 = vmatmul.mubr.bf16.gmra.mrb[0].mxu0 %v1356
          %v2141 = vpop.f32.mrb[0].mxu0
          %v2142 = vadd.f32 %v1853, %v2141
          %v2143 = vpop.f32.mrb[0].mxu0
          %v2144 = vpop.f32.mrb[0].mxu0
          %v2145 = vadd.f32 %v1856, %v2144
          %v2146 = vpop.f32.mrb[0].mxu0
          %2147 = vmatprep.mubr.bf16.mxu0 %v1361
          %2148 = vmatmul.mubr.bf16.gmra.mrb[0].mxu0 %v1360
          %v2149 = vpop.f32.mrb[0].mxu0
          %v2150 = vadd.f32 %v1861, %v2149
          %v2151 = vpop.f32.mrb[0].mxu0
          %v2152 = vpop.f32.mrb[0].mxu0
          %v2153 = vadd.f32 %v1864, %v2152
          %v2154 = vpop.f32.mrb[0].mxu0
          %2155 = vmatprep.mubr.bf16.mxu0 %v1365
          %2156 = vmatmul.mubr.bf16.gmra.mrb[0].mxu0 %v1364
          %v2157 = vpop.f32.mrb[0].mxu0
          %v2158 = vadd.f32 %v1869, %v2157
          %v2159 = vpop.f32.mrb[0].mxu0
          %v2160 = vpop.f32.mrb[0].mxu0
          %v2161 = vadd.f32 %v1872, %v2160
          %v2162 = vpop.f32.mrb[0].mxu0
          %2163 = vmatprep.mubr.bf16.mxu0 %v1369
          %2164 = vmatmul.mubr.bf16.gmra.mrb[0].mxu0 %v1368
          %v2165 = vpop.f32.mrb[0].mxu0
          %v2166 = vadd.f32 %v1877, %v2165
          %v2167 = vpop.f32.mrb[0].mxu0
          %v2168 = vpop.f32.mrb[0].mxu0
          %v2169 = vadd.f32 %v1880, %v2168
          %v2170 = vpop.f32.mrb[0].mxu0
          %2171 = vmatprep.mubr.bf16.mxu0 %v1373
          %2172 = vmatmul.mubr.bf16.gmra.mrb[0].mxu0 %v1372
          %v2173 = vpop.f32.mrb[0].mxu0
          %v2174 = vadd.f32 %v1885, %v2173
          %v2175 = vpop.f32.mrb[0].mxu0
          %v2176 = vpop.f32.mrb[0].mxu0
          %v2177 = vadd.f32 %v1888, %v2176
          %v2178 = vpop.f32.mrb[0].mxu0
          %2179 = vmatprep.mubr.bf16.mxu0 %v1377
          %2180 = vmatmul.mubr.bf16.gmra.mrb[0].mxu0 %v1376
          %v2181 = vpop.f32.mrb[0].mxu0
          %v2182 = vadd.f32 %v1893, %v2181
          %v2183 = vpop.f32.mrb[0].mxu0
          %v2184 = vpop.f32.mrb[0].mxu0
          %v2185 = vadd.f32 %v1896, %v2184
          %v2186 = vpop.f32.mrb[0].mxu0
          %2187 = vmatprep.mubr.bf16.mxu0 %v1381
          %2188 = vmatmul.mubr.bf16.gmra.mrb[0].mxu0 %v1380
          %v2189 = vpop.f32.mrb[0].mxu0
          %v2190 = vadd.f32 %v1901, %v2189
          %v2191 = vpop.f32.mrb[0].mxu0
          %v2192 = vpop.f32.mrb[0].mxu0
          %v2193 = vadd.f32 %v1904, %v2192
          %v2194 = vpop.f32.mrb[0].mxu0
          %2195 = vmatprep.mubr.bf16.mxu0 %v1385
          %2196 = vmatmul.mubr.bf16.gmra.mrb[0].mxu0 %v1384
          %v2197 = vpop.f32.mrb[0].mxu0
          %v2198 = vadd.f32 %v1909, %v2197
          %v2199 = vpop.f32.mrb[0].mxu0
          %v2200 = vpop.f32.mrb[0].mxu0
          %v2201 = vadd.f32 %v1912, %v2200
          %v2202 = vpop.f32.mrb[0].mxu0
          %2203 = vmatprep.mubr.bf16.mxu0 %v1389
          %2204 = vmatmul.mubr.bf16.gmra.mrb[0].mxu0 %v1388
          %v2205 = vpop.f32.mrb[0].mxu0
          %v2206 = vadd.f32 %v1917, %v2205
          %v2207 = vpop.f32.mrb[0].mxu0
          %v2208 = vpop.f32.mrb[0].mxu0
          %v2209 = vadd.f32 %v1920, %v2208
          %v2210 = vpop.f32.mrb[0].mxu0
          %2211 = vmatprep.mubr.bf16.mxu0 %v1393
          %2212 = vmatmul.mubr.bf16.gmra.mrb[0].mxu0 %v1392
          %v2213 = vpop.f32.mrb[0].mxu0
          %v2214 = vadd.f32 %v1925, %v2213
          %v2215 = vpop.f32.mrb[0].mxu0
          %v2216 = vpop.f32.mrb[0].mxu0
          %v2217 = vadd.f32 %v1928, %v2216
          %v2218 = vpop.f32.mrb[0].mxu0
          %2219 = vmatprep.mubr.bf16.mxu0 %v1397
          %2220 = vmatmul.mubr.bf16.gmra.mrb[0].mxu0 %v1396
          %v2221 = vpop.f32.mrb[0].mxu0
          %v2222 = vadd.f32 %v1933, %v2221
          %v2223 = vpop.f32.mrb[0].mxu0
          %v2224 = vpop.f32.mrb[0].mxu0
          %v2225 = vadd.f32 %v1936, %v2224
          %v2226 = vpop.f32.mrb[0].mxu0
          %2227 = vmatprep.mubr.bf16.mxu0 %v1401
          %2228 = vmatmul.mubr.bf16.gmra.mrb[0].mxu0 %v1400
          %v2229 = vpop.f32.mrb[0].mxu0
          %v2230 = vadd.f32 %v1941, %v2229
          %v2231 = vpop.f32.mrb[0].mxu0
          %v2232 = vpop.f32.mrb[0].mxu0
          %v2233 = vadd.f32 %v1944, %v2232
          %v2234 = vpop.f32.mrb[0].mxu0
          %2235 = vmatprep.mubr.bf16.mxu0 %v1405
          %2236 = vmatmul.mubr.bf16.gmra.mrb[0].mxu0 %v1404
          %v2237 = vpop.f32.mrb[0].mxu0
          %v2238 = vadd.f32 %v1949, %v2237
          %v2239 = vpop.f32.mrb[0].mxu0
          %v2240 = vpop.f32.mrb[0].mxu0
          %v2241 = vadd.f32 %v1952, %v2240
          %v2242 = vpop.f32.mrb[0].mxu0
          %2243 = vmatprep.mubr.bf16.mxu0 %v1409
          %2244 = vmatmul.mubr.bf16.gmra.mrb[0].mxu0 %v1408
          %v2245 = vpop.f32.mrb[0].mxu0
          %v2246 = vadd.f32 %v1957, %v2245
          %v2247 = vpop.f32.mrb[0].mxu0
          %v2248 = vpop.f32.mrb[0].mxu0
          %v2249 = vadd.f32 %v1960, %v2248
          %v2250 = vpop.f32.mrb[0].mxu0
          %2251 = vmatprep.mubr.bf16.mxu0 %v1413
          %2252 = vmatmul.mubr.bf16.gmra.mrb[0].mxu0 %v1412
          %v2253 = vpop.f32.mrb[0].mxu0
          %v2254 = vadd.f32 %v1965, %v2253
          %v2255 = vpop.f32.mrb[0].mxu0
          %v2256 = vpop.f32.mrb[0].mxu0
          %v2257 = vadd.f32 %v1968, %v2256
          %v2258 = vpop.f32.mrb[0].mxu0
          %2259 = vmatprep.mubr.bf16.mxu0 %v1417
          %2260 = vmatmul.mubr.bf16.gmra.mrb[0].mxu0 %v1416
          %v2261 = vpop.f32.mrb[0].mxu0
          %v2262 = vadd.f32 %v1973, %v2261
          %v2263 = vpop.f32.mrb[0].mxu0
          %v2264 = vpop.f32.mrb[0].mxu0
          %v2265 = vadd.f32 %v1976, %v2264
          %v2266 = vpop.f32.mrb[0].mxu0
          %2267 = vmatprep.mubr.bf16.mxu0 %v1421
          %2268 = vmatmul.mubr.bf16.gmra.mrb[0].mxu0 %v1420
          %v2269 = vpop.f32.mrb[0].mxu0
          %v2270 = vadd.f32 %v1981, %v2269
          %v2271 = vpop.f32.mrb[0].mxu0
          %v2272 = vpop.f32.mrb[0].mxu0
          %v2273 = vadd.f32 %v1984, %v2272
          %v2274 = vpop.f32.mrb[0].mxu0
          %2275 = vmatprep.mubr.bf16.mxu0 %v1425
          %2276 = vmatmul.mubr.bf16.gmra.mrb[0].mxu0 %v1424
          %v2277 = vpop.f32.mrb[0].mxu0
          %v2278 = vadd.f32 %v1989, %v2277
          %v2279 = vpop.f32.mrb[0].mxu0
          %v2280 = vpop.f32.mrb[0].mxu0
          %v2281 = vadd.f32 %v1992, %v2280
          %v2282 = vpop.f32.mrb[0].mxu0
          %2283 = vmatprep.mubr.bf16.mxu0 %v1429
          %2284 = vmatmul.mubr.bf16.gmra.mrb[0].mxu0 %v1428
          %v2285 = vpop.f32.mrb[0].mxu0
          %v2286 = vadd.f32 %v1997, %v2285
          %v2287 = vpop.f32.mrb[0].mxu0
          %v2288 = vpop.f32.mrb[0].mxu0
          %v2289 = vadd.f32 %v2000, %v2288
          %v2290 = vpop.f32.mrb[0].mxu0
          %2291 = vmatprep.mubr.bf16.mxu0 %v1433
          %2292 = vmatmul.mubr.bf16.gmra.mrb[0].mxu0 %v1432
          %v2293 = vpop.f32.mrb[0].mxu0
          %v2294 = vadd.f32 %v2005, %v2293
          %v2295 = vpop.f32.mrb[0].mxu0
          %v2296 = vpop.f32.mrb[0].mxu0
          %v2297 = vadd.f32 %v2008, %v2296
          %v2298 = vpop.f32.mrb[0].mxu0
          %2299 = vmatprep.mubr.bf16.mxu0 %v1437
          %2300 = vmatmul.mubr.bf16.gmra.mrb[0].mxu0 %v1436
          %v2301 = vpop.f32.mrb[0].mxu0
          %v2302 = vadd.f32 %v2013, %v2301
          %v2303 = vpop.f32.mrb[0].mxu0
          %v2304 = vpop.f32.mrb[0].mxu0
          %v2305 = vadd.f32 %v2016, %v2304
          %v2306 = vpop.f32.mrb[0].mxu0
          %2307 = vmatprep.mubr.bf16.mxu0 %v1441
          %2308 = vmatmul.mubr.bf16.gmra.mrb[0].mxu0 %v1440
          %v2309 = vpop.f32.mrb[0].mxu0
          %v2310 = vadd.f32 %v2021, %v2309
          %v2311 = vpop.f32.mrb[0].mxu0
          %v2312 = vpop.f32.mrb[0].mxu0
          %v2313 = vadd.f32 %v2024, %v2312
          %v2314 = vpop.f32.mrb[0].mxu0
          %2315 = vmatprep.mubr.bf16.mxu0 %v1445
          %2316 = vmatmul.mubr.bf16.gmra.mrb[0].mxu0 %v1444
          %v2317 = vpop.f32.mrb[0].mxu0
          %v2318 = vadd.f32 %v2029, %v2317
          %v2319 = vpop.f32.mrb[0].mxu0
          %v2320 = vpop.f32.mrb[0].mxu0
          %v2321 = vadd.f32 %v2032, %v2320
          %v2322 = vpop.f32.mrb[0].mxu0
          %2323 = vmatprep.mubr.bf16.mxu0 %v1449
          %2324 = vmatmul.mubr.bf16.gmra.mrb[0].mxu0 %v1448
          %v2325 = vpop.f32.mrb[0].mxu0
          %v2326 = vadd.f32 %v2037, %v2325
          %v2327 = vpop.f32.mrb[0].mxu0
          %v2328 = vpop.f32.mrb[0].mxu0
          %v2329 = vadd.f32 %v2040, %v2328
          %v2330 = vpop.f32.mrb[0].mxu0
          %2331 = vmatprep.mubr.bf16.mxu0 %v1453
          %2332 = vmatmul.mubr.bf16.gmra.mrb[0].mxu0 %v1452
          %v2333 = vpop.f32.mrb[0].mxu0
          %v2334 = vadd.f32 %v2045, %v2333
          %v2335 = vpop.f32.mrb[0].mxu0
          %v2336 = vpop.f32.mrb[0].mxu0
          %v2337 = vadd.f32 %v2048, %v2336
          %v2338 = vpop.f32.mrb[0].mxu0
          %2339 = vmatprep.mubr.bf16.mxu0 %v1457
          %2340 = vmatmul.mubr.bf16.gmra.mrb[0].mxu0 %v1456
          %v2341 = vpop.f32.mrb[0].mxu0
          %v2342 = vadd.f32 %v2053, %v2341
          %v2343 = vpop.f32.mrb[0].mxu0
          %v2344 = vpop.f32.mrb[0].mxu0
          %v2345 = vadd.f32 %v2056, %v2344
          %v2346 = vpop.f32.mrb[0].mxu0
          %2347 = vmatprep.mubr.bf16.mxu0 %v1461
          %2348 = vmatmul.mubr.bf16.gmra.mrb[0].mxu0 %v1460
          %v2349 = vpop.f32.mrb[0].mxu0
          %v2350 = vadd.f32 %v2061, %v2349
          %v2351 = vpop.f32.mrb[0].mxu0
          %v2352 = vpop.f32.mrb[0].mxu0
          %v2353 = vadd.f32 %v2064, %v2352
          %v2354 = vpop.f32.mrb[0].mxu0
          %2355 = vmatprep.mubr.bf16.mxu0 %v1465
          %2356 = vmatmul.mubr.bf16.gmra.mrb[0].mxu0 %v1464
          %v2357 = vpop.f32.mrb[0].mxu0
          %v2358 = vadd.f32 %v2069, %v2357
          %v2359 = vpop.f32.mrb[0].mxu0
          %v2360 = vpop.f32.mrb[0].mxu0
          %v2361 = vadd.f32 %v2072, %v2360
          %v2362 = vpop.f32.mrb[0].mxu0
          %2363 = vdwg.mxu0
          %v2364 = vadd.f32 %v698, %v2110
          %v2365 = vadd.f32 %v699, %v2113
          %v2366 = vadd.f32 %v700, %v2118
          %v2367 = vadd.f32 %v701, %v2121
          %v2368 = vadd.f32 %v702, %v2126
          %v2369 = vadd.f32 %v703, %v2129
          %v2370 = vadd.f32 %v704, %v2134
          %v2371 = vadd.f32 %v705, %v2137
          %v2372 = vadd.f32 %v706, %v2142
          %v2373 = vadd.f32 %v707, %v2145
          %v2374 = vadd.f32 %v708, %v2150
          %v2375 = vadd.f32 %v709, %v2153
          %v2376 = vadd.f32 %v710, %v2158
          %v2377 = vadd.f32 %v711, %v2161
          %v2378 = vadd.f32 %v712, %v2166
          %v2379 = vadd.f32 %v713, %v2169
          %v2380 = vadd.f32 %v714, %v2174
          %v2381 = vadd.f32 %v715, %v2177
          %v2382 = vadd.f32 %v716, %v2182
          %v2383 = vadd.f32 %v717, %v2185
          %v2384 = vadd.f32 %v718, %v2190
          %v2385 = vadd.f32 %v719, %v2193
          %v2386 = vadd.f32 %v720, %v2198
          %v2387 = vadd.f32 %v721, %v2201
          %v2388 = vadd.f32 %v722, %v2206
          %v2389 = vadd.f32 %v723, %v2209
          %v2390 = vadd.f32 %v724, %v2214
          %v2391 = vadd.f32 %v725, %v2217
          %v2392 = vadd.f32 %v726, %v2222
          %v2393 = vadd.f32 %v727, %v2225
          %v2394 = vadd.f32 %v728, %v2230
          %v2395 = vadd.f32 %v729, %v2233
          %v2396 = vadd.f32 %v730, %v2238
          %v2397 = vadd.f32 %v731, %v2241
          %v2398 = vadd.f32 %v732, %v2246
          %v2399 = vadd.f32 %v733, %v2249
          %v2400 = vadd.f32 %v734, %v2254
          %v2401 = vadd.f32 %v735, %v2257
          %v2402 = vadd.f32 %v736, %v2262
          %v2403 = vadd.f32 %v737, %v2265
          %v2404 = vadd.f32 %v738, %v2270
          %v2405 = vadd.f32 %v739, %v2273
          %v2406 = vadd.f32 %v740, %v2278
          %v2407 = vadd.f32 %v741, %v2281
          %v2408 = vadd.f32 %v742, %v2286
          %v2409 = vadd.f32 %v743, %v2289
          %v2410 = vadd.f32 %v744, %v2294
          %v2411 = vadd.f32 %v745, %v2297
          %v2412 = vadd.f32 %v746, %v2302
          %v2413 = vadd.f32 %v747, %v2305
          %v2414 = vadd.f32 %v748, %v2310
          %v2415 = vadd.f32 %v749, %v2313
          %v2416 = vadd.f32 %v750, %v2318
          %v2417 = vadd.f32 %v751, %v2321
          %v2418 = vadd.f32 %v752, %v2326
          %v2419 = vadd.f32 %v753, %v2329
          %v2420 = vadd.f32 %v754, %v2334
          %v2421 = vadd.f32 %v755, %v2337
          %v2422 = vadd.f32 %v756, %v2342
          %v2423 = vadd.f32 %v757, %v2345
          %v2424 = vadd.f32 %v758, %v2350
          %v2425 = vadd.f32 %v759, %v2353
          %v2426 = vadd.f32 %v760, %v2358
          %v2427 = vadd.f32 %v761, %v2361
          %2428 = vst [vmem:[#allocation2] sm:$0xff] %v2364
          %2429 = vst [vmem:[#allocation2 + $0x8] sm:$0xff] %v2365
          %2430 = vst [vmem:[#allocation2 + $0x10] sm:$0xff] %v2366
          %2431 = vst [vmem:[#allocation2 + $0x18] sm:$0xff] %v2367
          %2432 = vst [vmem:[#allocation2 + $0x20] sm:$0xff] %v2368
          %2433 = vst [vmem:[#allocation2 + $0x28] sm:$0xff] %v2369
          %2434 = vst [vmem:[#allocation2 + $0x30] sm:$0xff] %v2370
          %2435 = vst [vmem:[#allocation2 + $0x38] sm:$0xff] %v2371
          %2436 = vst [vmem:[#allocation2 + $0x40] sm:$0xff] %v2372
          %2437 = vst [vmem:[#allocation2 + $0x48] sm:$0xff] %v2373
          %2438 = vst [vmem:[#allocation2 + $0x50] sm:$0xff] %v2374
          %2439 = vst [vmem:[#allocation2 + $0x58] sm:$0xff] %v2375
          %2440 = vst [vmem:[#allocation2 + $0x60] sm:$0xff] %v2376
          %2441 = vst [vmem:[#allocation2 + $0x68] sm:$0xff] %v2377
          %2442 = vst [vmem:[#allocation2 + $0x70] sm:$0xff] %v2378
          %2443 = vst [vmem:[#allocation2 + $0x78] sm:$0xff] %v2379
          %2444 = vst [vmem:[#allocation2 + $0x80] sm:$0xff] %v2380
          %2445 = vst [vmem:[#allocation2 + $0x88] sm:$0xff] %v2381
          %2446 = vst [vmem:[#allocation2 + $0x90] sm:$0xff] %v2382
          %2447 = vst [vmem:[#allocation2 + $0x98] sm:$0xff] %v2383
          %2448 = vst [vmem:[#allocation2 + $0xa0] sm:$0xff] %v2384
          %2449 = vst [vmem:[#allocation2 + $0xa8] sm:$0xff] %v2385
          %2450 = vst [vmem:[#allocation2 + $0xb0] sm:$0xff] %v2386
          %2451 = vst [vmem:[#allocation2 + $0xb8] sm:$0xff] %v2387
          %2452 = vst [vmem:[#allocation2 + $0xc0] sm:$0xff] %v2388
          %2453 = vst [vmem:[#allocation2 + $0xc8] sm:$0xff] %v2389
          %2454 = vst [vmem:[#allocation2 + $0xd0] sm:$0xff] %v2390
          %2455 = vst [vmem:[#allocation2 + $0xd8] sm:$0xff] %v2391
          %2456 = vst [vmem:[#allocation2 + $0xe0] sm:$0xff] %v2392
          %2457 = vst [vmem:[#allocation2 + $0xe8] sm:$0xff] %v2393
          %2458 = vst [vmem:[#allocation2 + $0xf0] sm:$0xff] %v2394
          %2459 = vst [vmem:[#allocation2 + $0xf8] sm:$0xff] %v2395
          %2460 = vst [vmem:[#allocation2 + $0x100] sm:$0xff] %v2396
          %2461 = vst [vmem:[#allocation2 + $0x108] sm:$0xff] %v2397
          %2462 = vst [vmem:[#allocation2 + $0x110] sm:$0xff] %v2398
          %2463 = vst [vmem:[#allocation2 + $0x118] sm:$0xff] %v2399
          %2464 = vst [vmem:[#allocation2 + $0x120] sm:$0xff] %v2400
          %2465 = vst [vmem:[#allocation2 + $0x128] sm:$0xff] %v2401
          %2466 = vst [vmem:[#allocation2 + $0x130] sm:$0xff] %v2402
          %2467 = vst [vmem:[#allocation2 + $0x138] sm:$0xff] %v2403
          %2468 = vst [vmem:[#allocation2 + $0x140] sm:$0xff] %v2404
          %2469 = vst [vmem:[#allocation2 + $0x148] sm:$0xff] %v2405
          %2470 = vst [vmem:[#allocation2 + $0x150] sm:$0xff] %v2406
          %2471 = vst [vmem:[#allocation2 + $0x158] sm:$0xff] %v2407
          %2472 = vst [vmem:[#allocation2 + $0x160] sm:$0xff] %v2408
          %2473 = vst [vmem:[#allocation2 + $0x168] sm:$0xff] %v2409
          %2474 = vst [vmem:[#allocation2 + $0x170] sm:$0xff] %v2410
          %2475 = vst [vmem:[#allocation2 + $0x178] sm:$0xff] %v2411
          %2476 = vst [vmem:[#allocation2 + $0x180] sm:$0xff] %v2412
          %2477 = vst [vmem:[#allocation2 + $0x188] sm:$0xff] %v2413
          %2478 = vst [vmem:[#allocation2 + $0x190] sm:$0xff] %v2414
          %2479 = vst [vmem:[#allocation2 + $0x198] sm:$0xff] %v2415
          %2480 = vst [vmem:[#allocation2 + $0x1a0] sm:$0xff] %v2416
          %2481 = vst [vmem:[#allocation2 + $0x1a8] sm:$0xff] %v2417
          %2482 = vst [vmem:[#allocation2 + $0x1b0] sm:$0xff] %v2418
          %2483 = vst [vmem:[#allocation2 + $0x1b8] sm:$0xff] %v2419
          %2484 = vst [vmem:[#allocation2 + $0x1c0] sm:$0xff] %v2420
          %2485 = vst [vmem:[#allocation2 + $0x1c8] sm:$0xff] %v2421
          %2486 = vst [vmem:[#allocation2 + $0x1d0] sm:$0xff] %v2422
          %2487 = vst [vmem:[#allocation2 + $0x1d8] sm:$0xff] %v2423
          %2488 = vst [vmem:[#allocation2 + $0x1e0] sm:$0xff] %v2424
          %2489 = vst [vmem:[#allocation2 + $0x1e8] sm:$0xff] %v2425
          %2490 = vst [vmem:[#allocation2 + $0x1f0] sm:$0xff] %v2426
          %2491 = vst [vmem:[#allocation2 + $0x1f8] sm:$0xff] %v2427
        $region52: #{net_forward.6} parent=35 // pred_fallthru
          _
        %p2492 = scmp.eq.s32.totalorder %s34, 4
        // Predicated region
        $region53: #{net_forward.6} parent=35 // pred_check
          %p2493 = pneg %p2492
        $region54: #{net_forward.6} parent=35 // pred_check_branch
          %2495 = sbr.rel (%p2493) target = $region56
        $region55: #{net_forward.6} parent=35 // pred_region
          %v2496 = vld [vmem:[#allocation2] sm:$0xff]
          %v2497 = vld [vmem:[#allocation2 + $0x8] sm:$0xff]
          %v2498 = vld [vmem:[#allocation2 + $0x10] sm:$0xff]
          %v2499 = vld [vmem:[#allocation2 + $0x18] sm:$0xff]
          %v2500 = vld [vmem:[#allocation2 + $0x20] sm:$0xff]
          %v2501 = vld [vmem:[#allocation2 + $0x28] sm:$0xff]
          %v2502 = vld [vmem:[#allocation2 + $0x30] sm:$0xff]
          %v2503 = vld [vmem:[#allocation2 + $0x38] sm:$0xff]
          %v2504 = vld [vmem:[#allocation2 + $0x40] sm:$0xff]
          %v2505 = vld [vmem:[#allocation2 + $0x48] sm:$0xff]
          %v2506 = vld [vmem:[#allocation2 + $0x50] sm:$0xff]
          %v2507 = vld [vmem:[#allocation2 + $0x58] sm:$0xff]
          %v2508 = vld [vmem:[#allocation2 + $0x60] sm:$0xff]
          %v2509 = vld [vmem:[#allocation2 + $0x68] sm:$0xff]
          %v2510 = vld [vmem:[#allocation2 + $0x70] sm:$0xff]
          %v2511 = vld [vmem:[#allocation2 + $0x78] sm:$0xff]
          %v2512 = vld [vmem:[#allocation2 + $0x80] sm:$0xff]
          %v2513 = vld [vmem:[#allocation2 + $0x88] sm:$0xff]
          %v2514 = vld [vmem:[#allocation2 + $0x90] sm:$0xff]
          %v2515 = vld [vmem:[#allocation2 + $0x98] sm:$0xff]
          %v2516 = vld [vmem:[#allocation2 + $0xa0] sm:$0xff]
          %v2517 = vld [vmem:[#allocation2 + $0xa8] sm:$0xff]
          %v2518 = vld [vmem:[#allocation2 + $0xb0] sm:$0xff]
          %v2519 = vld [vmem:[#allocation2 + $0xb8] sm:$0xff]
          %v2520 = vld [vmem:[#allocation2 + $0xc0] sm:$0xff]
          %v2521 = vld [vmem:[#allocation2 + $0xc8] sm:$0xff]
          %v2522 = vld [vmem:[#allocation2 + $0xd0] sm:$0xff]
          %v2523 = vld [vmem:[#allocation2 + $0xd8] sm:$0xff]
          %v2524 = vld [vmem:[#allocation2 + $0xe0] sm:$0xff]
          %v2525 = vld [vmem:[#allocation2 + $0xe8] sm:$0xff]
          %v2526 = vld [vmem:[#allocation2 + $0xf0] sm:$0xff]
          %v2527 = vld [vmem:[#allocation2 + $0xf8] sm:$0xff]
          %v2528 = vld [vmem:[#allocation2 + $0x100] sm:$0xff]
          %v2529 = vld [vmem:[#allocation2 + $0x108] sm:$0xff]
          %v2530 = vld [vmem:[#allocation2 + $0x110] sm:$0xff]
          %v2531 = vld [vmem:[#allocation2 + $0x118] sm:$0xff]
          %v2532 = vld [vmem:[#allocation2 + $0x120] sm:$0xff]
          %v2533 = vld [vmem:[#allocation2 + $0x128] sm:$0xff]
          %v2534 = vld [vmem:[#allocation2 + $0x130] sm:$0xff]
          %v2535 = vld [vmem:[#allocation2 + $0x138] sm:$0xff]
          %v2536 = vld [vmem:[#allocation2 + $0x140] sm:$0xff]
          %v2537 = vld [vmem:[#allocation2 + $0x148] sm:$0xff]
          %v2538 = vld [vmem:[#allocation2 + $0x150] sm:$0xff]
          %v2539 = vld [vmem:[#allocation2 + $0x158] sm:$0xff]
          %v2540 = vld [vmem:[#allocation2 + $0x160] sm:$0xff]
          %v2541 = vld [vmem:[#allocation2 + $0x168] sm:$0xff]
          %v2542 = vld [vmem:[#allocation2 + $0x170] sm:$0xff]
          %v2543 = vld [vmem:[#allocation2 + $0x178] sm:$0xff]
          %v2544 = vld [vmem:[#allocation2 + $0x180] sm:$0xff]
          %v2545 = vld [vmem:[#allocation2 + $0x188] sm:$0xff]
          %v2546 = vld [vmem:[#allocation2 + $0x190] sm:$0xff]
          %v2547 = vld [vmem:[#allocation2 + $0x198] sm:$0xff]
          %v2548 = vld [vmem:[#allocation2 + $0x1a0] sm:$0xff]
          %v2549 = vld [vmem:[#allocation2 + $0x1a8] sm:$0xff]
          %v2550 = vld [vmem:[#allocation2 + $0x1b0] sm:$0xff]
          %v2551 = vld [vmem:[#allocation2 + $0x1b8] sm:$0xff]
          %v2552 = vld [vmem:[#allocation2 + $0x1c0] sm:$0xff]
          %v2553 = vld [vmem:[#allocation2 + $0x1c8] sm:$0xff]
          %v2554 = vld [vmem:[#allocation2 + $0x1d0] sm:$0xff]
          %v2555 = vld [vmem:[#allocation2 + $0x1d8] sm:$0xff]
          %v2556 = vld [vmem:[#allocation2 + $0x1e0] sm:$0xff]
          %v2557 = vld [vmem:[#allocation2 + $0x1e8] sm:$0xff]
          %v2558 = vld [vmem:[#allocation2 + $0x1f0] sm:$0xff]
          %v2559 = vld [vmem:[#allocation2 + $0x1f8] sm:$0xff]
          %v2560 = vmax.f32 %v2496, 0.0
          %v2561 = vmax.f32 %v2497, 0.0
          %v2562 = vmax.f32 %v2498, 0.0
          %v2563 = vmax.f32 %v2499, 0.0
          %v2564 = vmax.f32 %v2500, 0.0
          %v2565 = vmax.f32 %v2501, 0.0
          %v2566 = vmax.f32 %v2502, 0.0
          %v2567 = vmax.f32 %v2503, 0.0
          %v2568 = vmax.f32 %v2504, 0.0
          %v2569 = vmax.f32 %v2505, 0.0
          %v2570 = vmax.f32 %v2506, 0.0
          %v2571 = vmax.f32 %v2507, 0.0
          %v2572 = vmax.f32 %v2508, 0.0
          %v2573 = vmax.f32 %v2509, 0.0
          %v2574 = vmax.f32 %v2510, 0.0
          %v2575 = vmax.f32 %v2511, 0.0
          %v2576 = vmax.f32 %v2512, 0.0
          %v2577 = vmax.f32 %v2513, 0.0
          %v2578 = vmax.f32 %v2514, 0.0
          %v2579 = vmax.f32 %v2515, 0.0
          %v2580 = vmax.f32 %v2516, 0.0
          %v2581 = vmax.f32 %v2517, 0.0
          %v2582 = vmax.f32 %v2518, 0.0
          %v2583 = vmax.f32 %v2519, 0.0
          %v2584 = vmax.f32 %v2520, 0.0
          %v2585 = vmax.f32 %v2521, 0.0
          %v2586 = vmax.f32 %v2522, 0.0
          %v2587 = vmax.f32 %v2523, 0.0
          %v2588 = vmax.f32 %v2524, 0.0
          %v2589 = vmax.f32 %v2525, 0.0
          %v2590 = vmax.f32 %v2526, 0.0
          %v2591 = vmax.f32 %v2527, 0.0
          %v2592 = vmax.f32 %v2528, 0.0
          %v2593 = vmax.f32 %v2529, 0.0
          %v2594 = vmax.f32 %v2530, 0.0
          %v2595 = vmax.f32 %v2531, 0.0
          %v2596 = vmax.f32 %v2532, 0.0
          %v2597 = vmax.f32 %v2533, 0.0
          %v2598 = vmax.f32 %v2534, 0.0
          %v2599 = vmax.f32 %v2535, 0.0
          %v2600 = vmax.f32 %v2536, 0.0
          %v2601 = vmax.f32 %v2537, 0.0
          %v2602 = vmax.f32 %v2538, 0.0
          %v2603 = vmax.f32 %v2539, 0.0
          %v2604 = vmax.f32 %v2540, 0.0
          %v2605 = vmax.f32 %v2541, 0.0
          %v2606 = vmax.f32 %v2542, 0.0
          %v2607 = vmax.f32 %v2543, 0.0
          %v2608 = vmax.f32 %v2544, 0.0
          %v2609 = vmax.f32 %v2545, 0.0
          %v2610 = vmax.f32 %v2546, 0.0
          %v2611 = vmax.f32 %v2547, 0.0
          %v2612 = vmax.f32 %v2548, 0.0
          %v2613 = vmax.f32 %v2549, 0.0
          %v2614 = vmax.f32 %v2550, 0.0
          %v2615 = vmax.f32 %v2551, 0.0
          %v2616 = vmax.f32 %v2552, 0.0
          %v2617 = vmax.f32 %v2553, 0.0
          %v2618 = vmax.f32 %v2554, 0.0
          %v2619 = vmax.f32 %v2555, 0.0
          %v2620 = vmax.f32 %v2556, 0.0
          %v2621 = vmax.f32 %v2557, 0.0
          %v2622 = vmax.f32 %v2558, 0.0
          %v2623 = vmax.f32 %v2559, 0.0
          %v2624 = vpack.c.bf16 %v2561, %v2560
          %v2625 = vpack.c.bf16 %v2563, %v2562
          %v2626 = vpack.c.bf16 %v2565, %v2564
          %v2627 = vpack.c.bf16 %v2567, %v2566
          %v2628 = vpack.c.bf16 %v2569, %v2568
          %v2629 = vpack.c.bf16 %v2571, %v2570
          %v2630 = vpack.c.bf16 %v2573, %v2572
          %v2631 = vpack.c.bf16 %v2575, %v2574
          %v2632 = vpack.c.bf16 %v2577, %v2576
          %v2633 = vpack.c.bf16 %v2579, %v2578
          %v2634 = vpack.c.bf16 %v2581, %v2580
          %v2635 = vpack.c.bf16 %v2583, %v2582
          %v2636 = vpack.c.bf16 %v2585, %v2584
          %v2637 = vpack.c.bf16 %v2587, %v2586
          %v2638 = vpack.c.bf16 %v2589, %v2588
          %v2639 = vpack.c.bf16 %v2591, %v2590
          %v2640 = vpack.c.bf16 %v2593, %v2592
          %v2641 = vpack.c.bf16 %v2595, %v2594
          %v2642 = vpack.c.bf16 %v2597, %v2596
          %v2643 = vpack.c.bf16 %v2599, %v2598
          %v2644 = vpack.c.bf16 %v2601, %v2600
          %v2645 = vpack.c.bf16 %v2603, %v2602
          %v2646 = vpack.c.bf16 %v2605, %v2604
          %v2647 = vpack.c.bf16 %v2607, %v2606
          %v2648 = vpack.c.bf16 %v2609, %v2608
          %v2649 = vpack.c.bf16 %v2611, %v2610
          %v2650 = vpack.c.bf16 %v2613, %v2612
          %v2651 = vpack.c.bf16 %v2615, %v2614
          %v2652 = vpack.c.bf16 %v2617, %v2616
          %v2653 = vpack.c.bf16 %v2619, %v2618
          %v2654 = vpack.c.bf16 %v2621, %v2620
          %v2655 = vpack.c.bf16 %v2623, %v2622
          %v2688 = vunpack.c.l.b16 %v2624
          %v2689 = vunpack.c.h.b16 %v2624
          %v2690 = vunpack.c.l.b16 %v2625
          %v2691 = vunpack.c.h.b16 %v2625
          %v2692 = vunpack.c.l.b16 %v2626
          %v2693 = vunpack.c.h.b16 %v2626
          %v2694 = vunpack.c.l.b16 %v2627
          %v2695 = vunpack.c.h.b16 %v2627
          %v2696 = vunpack.c.l.b16 %v2628
          %v2697 = vunpack.c.h.b16 %v2628
          %v2698 = vunpack.c.l.b16 %v2629
          %v2699 = vunpack.c.h.b16 %v2629
          %v2700 = vunpack.c.l.b16 %v2630
          %v2701 = vunpack.c.h.b16 %v2630
          %v2702 = vunpack.c.l.b16 %v2631
          %v2703 = vunpack.c.h.b16 %v2631
          %v2704 = vunpack.c.l.b16 %v2632
          %v2705 = vunpack.c.h.b16 %v2632
          %v2706 = vunpack.c.l.b16 %v2633
          %v2707 = vunpack.c.h.b16 %v2633
          %v2708 = vunpack.c.l.b16 %v2634
          %v2709 = vunpack.c.h.b16 %v2634
          %v2710 = vunpack.c.l.b16 %v2635
          %v2711 = vunpack.c.h.b16 %v2635
          %v2712 = vunpack.c.l.b16 %v2636
          %v2713 = vunpack.c.h.b16 %v2636
          %v2714 = vunpack.c.l.b16 %v2637
          %v2715 = vunpack.c.h.b16 %v2637
          %v2716 = vunpack.c.l.b16 %v2638
          %v2717 = vunpack.c.h.b16 %v2638
          %v2718 = vunpack.c.l.b16 %v2639
          %v2719 = vunpack.c.h.b16 %v2639
          %v2720 = vunpack.c.l.b16 %v2640
          %v2721 = vunpack.c.h.b16 %v2640
          %v2722 = vunpack.c.l.b16 %v2641
          %v2723 = vunpack.c.h.b16 %v2641
          %v2724 = vunpack.c.l.b16 %v2642
          %v2725 = vunpack.c.h.b16 %v2642
          %v2726 = vunpack.c.l.b16 %v2643
          %v2727 = vunpack.c.h.b16 %v2643
          %v2728 = vunpack.c.l.b16 %v2644
          %v2729 = vunpack.c.h.b16 %v2644
          %v2730 = vunpack.c.l.b16 %v2645
          %v2731 = vunpack.c.h.b16 %v2645
          %v2732 = vunpack.c.l.b16 %v2646
          %v2733 = vunpack.c.h.b16 %v2646
          %v2734 = vunpack.c.l.b16 %v2647
          %v2735 = vunpack.c.h.b16 %v2647
          %v2736 = vunpack.c.l.b16 %v2648
          %v2737 = vunpack.c.h.b16 %v2648
          %v2738 = vunpack.c.l.b16 %v2649
          %v2739 = vunpack.c.h.b16 %v2649
          %v2740 = vunpack.c.l.b16 %v2650
          %v2741 = vunpack.c.h.b16 %v2650
          %v2742 = vunpack.c.l.b16 %v2651
          %v2743 = vunpack.c.h.b16 %v2651
          %v2744 = vunpack.c.l.b16 %v2652
          %v2745 = vunpack.c.h.b16 %v2652
          %v2746 = vunpack.c.l.b16 %v2653
          %v2747 = vunpack.c.h.b16 %v2653
          %v2748 = vunpack.c.l.b16 %v2654
          %v2749 = vunpack.c.h.b16 %v2654
          %v2750 = vunpack.c.l.b16 %v2655
          %v2751 = vunpack.c.h.b16 %v2655
          %v2752 = vpack.c.b16 %v2688, %v2688
          %v2753 = vpack.c.b16 %v2689, %v2689
          %v2754 = vpack.c.b16 %v2690, %v2690
          %v2755 = vpack.c.b16 %v2691, %v2691
          %v2756 = vpack.c.b16 %v2692, %v2692
          %v2757 = vpack.c.b16 %v2693, %v2693
          %v2758 = vpack.c.b16 %v2694, %v2694
          %v2759 = vpack.c.b16 %v2695, %v2695
          %v2760 = vpack.c.b16 %v2696, %v2696
          %v2761 = vpack.c.b16 %v2697, %v2697
          %v2762 = vpack.c.b16 %v2698, %v2698
          %v2763 = vpack.c.b16 %v2699, %v2699
          %v2764 = vpack.c.b16 %v2700, %v2700
          %v2765 = vpack.c.b16 %v2701, %v2701
          %v2766 = vpack.c.b16 %v2702, %v2702
          %v2767 = vpack.c.b16 %v2703, %v2703
          %v2768 = vpack.c.b16 %v2704, %v2704
          %v2769 = vpack.c.b16 %v2705, %v2705
          %v2770 = vpack.c.b16 %v2706, %v2706
          %v2771 = vpack.c.b16 %v2707, %v2707
          %v2772 = vpack.c.b16 %v2708, %v2708
          %v2773 = vpack.c.b16 %v2709, %v2709
          %v2774 = vpack.c.b16 %v2710, %v2710
          %v2775 = vpack.c.b16 %v2711, %v2711
          %v2776 = vpack.c.b16 %v2712, %v2712
          %v2777 = vpack.c.b16 %v2713, %v2713
          %v2778 = vpack.c.b16 %v2714, %v2714
          %v2779 = vpack.c.b16 %v2715, %v2715
          %v2780 = vpack.c.b16 %v2716, %v2716
          %v2781 = vpack.c.b16 %v2717, %v2717
          %v2782 = vpack.c.b16 %v2718, %v2718
          %v2783 = vpack.c.b16 %v2719, %v2719
          %v2784 = vpack.c.b16 %v2720, %v2720
          %v2785 = vpack.c.b16 %v2721, %v2721
          %v2786 = vpack.c.b16 %v2722, %v2722
          %v2787 = vpack.c.b16 %v2723, %v2723
          %v2788 = vpack.c.b16 %v2724, %v2724
          %v2789 = vpack.c.b16 %v2725, %v2725
          %v2790 = vpack.c.b16 %v2726, %v2726
          %v2791 = vpack.c.b16 %v2727, %v2727
          %v2792 = vpack.c.b16 %v2728, %v2728
          %v2793 = vpack.c.b16 %v2729, %v2729
          %v2794 = vpack.c.b16 %v2730, %v2730
          %v2795 = vpack.c.b16 %v2731, %v2731
          %v2796 = vpack.c.b16 %v2732, %v2732
          %v2797 = vpack.c.b16 %v2733, %v2733
          %v2798 = vpack.c.b16 %v2734, %v2734
          %v2799 = vpack.c.b16 %v2735, %v2735
          %v2800 = vpack.c.b16 %v2736, %v2736
          %v2801 = vpack.c.b16 %v2737, %v2737
          %v2802 = vpack.c.b16 %v2738, %v2738
          %v2803 = vpack.c.b16 %v2739, %v2739
          %v2804 = vpack.c.b16 %v2740, %v2740
          %v2805 = vpack.c.b16 %v2741, %v2741
          %v2806 = vpack.c.b16 %v2742, %v2742
          %v2807 = vpack.c.b16 %v2743, %v2743
          %v2808 = vpack.c.b16 %v2744, %v2744
          %v2809 = vpack.c.b16 %v2745, %v2745
          %v2810 = vpack.c.b16 %v2746, %v2746
          %v2811 = vpack.c.b16 %v2747, %v2747
          %v2812 = vpack.c.b16 %v2748, %v2748
          %v2813 = vpack.c.b16 %v2749, %v2749
          %v2814 = vpack.c.b16 %v2750, %v2750
          %v2815 = vpack.c.b16 %v2751, %v2751
          %2880 = vst [vmem:[%s423] sm:$0xf] %v2752
          %2881 = vst [vmem:[%s423 + $0x4] sm:$0xf] %v2753
          %2882 = vst [vmem:[%s423 + $0x8] sm:$0xf] %v2754
          %2883 = vst [vmem:[%s423 + $0xc] sm:$0xf] %v2755
          %2884 = vst [vmem:[%s423 + $0x10] sm:$0xf] %v2756
          %2885 = vst [vmem:[%s423 + $0x14] sm:$0xf] %v2757
          %2886 = vst [vmem:[%s423 + $0x18] sm:$0xf] %v2758
          %2887 = vst [vmem:[%s423 + $0x1c] sm:$0xf] %v2759
          %2888 = vst [vmem:[%s423 + $0x20] sm:$0xf] %v2760
          %2889 = vst [vmem:[%s423 + $0x24] sm:$0xf] %v2761
          %2890 = vst [vmem:[%s423 + $0x28] sm:$0xf] %v2762
          %2891 = vst [vmem:[%s423 + $0x2c] sm:$0xf] %v2763
          %2892 = vst [vmem:[%s423 + $0x30] sm:$0xf] %v2764
          %2893 = vst [vmem:[%s423 + $0x34] sm:$0xf] %v2765
          %2894 = vst [vmem:[%s423 + $0x38] sm:$0xf] %v2766
          %2895 = vst [vmem:[%s423 + $0x3c] sm:$0xf] %v2767
          %2896 = vst [vmem:[%s423 + $0x40] sm:$0xf] %v2768
          %2897 = vst [vmem:[%s423 + $0x44] sm:$0xf] %v2769
          %2898 = vst [vmem:[%s423 + $0x48] sm:$0xf] %v2770
          %2899 = vst [vmem:[%s423 + $0x4c] sm:$0xf] %v2771
          %2900 = vst [vmem:[%s423 + $0x50] sm:$0xf] %v2772
          %2901 = vst [vmem:[%s423 + $0x54] sm:$0xf] %v2773
          %2902 = vst [vmem:[%s423 + $0x58] sm:$0xf] %v2774
          %2903 = vst [vmem:[%s423 + $0x5c] sm:$0xf] %v2775
          %2904 = vst [vmem:[%s423 + $0x60] sm:$0xf] %v2776
          %2905 = vst [vmem:[%s423 + $0x64] sm:$0xf] %v2777
          %2906 = vst [vmem:[%s423 + $0x68] sm:$0xf] %v2778
          %2907 = vst [vmem:[%s423 + $0x6c] sm:$0xf] %v2779
          %2908 = vst [vmem:[%s423 + $0x70] sm:$0xf] %v2780
          %2909 = vst [vmem:[%s423 + $0x74] sm:$0xf] %v2781
          %2910 = vst [vmem:[%s423 + $0x78] sm:$0xf] %v2782
          %2911 = vst [vmem:[%s423 + $0x7c] sm:$0xf] %v2783
          %2912 = vst [vmem:[%s423 + $0x80] sm:$0xf] %v2784
          %2913 = vst [vmem:[%s423 + $0x84] sm:$0xf] %v2785
          %2914 = vst [vmem:[%s423 + $0x88] sm:$0xf] %v2786
          %2915 = vst [vmem:[%s423 + $0x8c] sm:$0xf] %v2787
          %2916 = vst [vmem:[%s423 + $0x90] sm:$0xf] %v2788
          %2917 = vst [vmem:[%s423 + $0x94] sm:$0xf] %v2789
          %2918 = vst [vmem:[%s423 + $0x98] sm:$0xf] %v2790
          %2919 = vst [vmem:[%s423 + $0x9c] sm:$0xf] %v2791
          %2920 = vst [vmem:[%s423 + $0xa0] sm:$0xf] %v2792
          %2921 = vst [vmem:[%s423 + $0xa4] sm:$0xf] %v2793
          %2922 = vst [vmem:[%s423 + $0xa8] sm:$0xf] %v2794
          %2923 = vst [vmem:[%s423 + $0xac] sm:$0xf] %v2795
          %2924 = vst [vmem:[%s423 + $0xb0] sm:$0xf] %v2796
          %2925 = vst [vmem:[%s423 + $0xb4] sm:$0xf] %v2797
          %2926 = vst [vmem:[%s423 + $0xb8] sm:$0xf] %v2798
          %2927 = vst [vmem:[%s423 + $0xbc] sm:$0xf] %v2799
          %2928 = vst [vmem:[%s423 + $0xc0] sm:$0xf] %v2800
          %2929 = vst [vmem:[%s423 + $0xc4] sm:$0xf] %v2801
          %2930 = vst [vmem:[%s423 + $0xc8] sm:$0xf] %v2802
          %2931 = vst [vmem:[%s423 + $0xcc] sm:$0xf] %v2803
          %2932 = vst [vmem:[%s423 + $0xd0] sm:$0xf] %v2804
          %2933 = vst [vmem:[%s423 + $0xd4] sm:$0xf] %v2805
          %2934 = vst [vmem:[%s423 + $0xd8] sm:$0xf] %v2806
          %2935 = vst [vmem:[%s423 + $0xdc] sm:$0xf] %v2807
          %2936 = vst [vmem:[%s423 + $0xe0] sm:$0xf] %v2808
          %2937 = vst [vmem:[%s423 + $0xe4] sm:$0xf] %v2809
          %2938 = vst [vmem:[%s423 + $0xe8] sm:$0xf] %v2810
          %2939 = vst [vmem:[%s423 + $0xec] sm:$0xf] %v2811
          %2940 = vst [vmem:[%s423 + $0xf0] sm:$0xf] %v2812
          %2941 = vst [vmem:[%s423 + $0xf4] sm:$0xf] %v2813
          %2942 = vst [vmem:[%s423 + $0xf8] sm:$0xf] %v2814
          %2943 = vst [vmem:[%s423 + $0xfc] sm:$0xf] %v2815
        $region56: #{net_forward.6} parent=35 // pred_fallthru
          _
        %s2944 = smul.u32 64, %s33
        %p2945 = scmp.lt.s32.totalorder %s2944, 63
        %s2946 = scalar_select %p2945, %s2944, 63
        %s2947 = smul.addr %s2946, 4
        %s2948 = scalar_lea.vmem %s7, %s2947
        // Predicated region
        $region57: #{net_forward.6} parent=35 // pred_check
          %p2949 = pneg %p200
        $region58: #{net_forward.6} parent=35 // pred_check_branch
          %2951 = sbr.rel (%p2949) target = $region60
        $region59: #{net_forward.6} parent=35 // pred_region
          %s2952 = smul.u32 64, %s33
        $region60: #{net_forward.6} parent=35 // pred_fallthru
          _
        // Predicated region
        $region61: #{net_forward.6} parent=35 // pred_check
          %p2953 = pneg %p200
        $region62: #{net_forward.6} parent=35 // pred_check_branch
          %2955 = sbr.rel (%p2953) target = $region64
        $region63: #{net_forward.6} parent=35 // pred_region
          %s2956 = smul.u32 64, %s33
          %p2957 = scmp.lt.s32.totalorder %s2956, 63
          %s2958 = scalar_select %p2957, %s2956, 63
          %s2959 = smul.addr %s2958, 4
          %s2960 = scalar_lea.vmem %s7, %s2959
        $region64: #{net_forward.6} parent=35 // pred_fallthru
          _
      $region36: #{net_forward.6} parent=5 // pred_fallthru
        _
      %p2961 = scmp.le.s32.totalorder 2, %s24
      // Predicated region
      $region65: #{net_forward.6} parent=5 // pred_check
        %p2962 = pneg %p2961
      $region66: #{net_forward.6} parent=5 // pred_check_branch
        %2964 = sbr.rel (%p2962) target = $region68
      $region67: #{net_forward.6} parent=5 // pred_region
        %s2965 = ssub.s32 %s24, 2
      $region68: #{net_forward.6} parent=5 // pred_fallthru
        _
    $region6: #{net_forward.6} parent=1 // loop_footer
      %s28 = sadd.s32 1, %s24
    $region7: #{net_forward.6} parent=1 // loop_footer_branch
      %23 = sbr.rel target = $region3
    $region8: #{net_forward.6} parent=1 // loop_exit
      _
    %2966 = vsyncpa [#allocation8], 1
    %s2967 = scalar_lea.sflag [#allocation8], 1
    %2968 = vsyncpa %s2967, 1
    %2969 = vsyncpa [#allocation10], 1
    %s2970 = scalar_lea.sflag [#allocation10], 1
    %2971 = vsyncpa %s2970, 1

// kernel: net_forward.8
$region0: #{net_forward.8}
  #allocation0 [shape = 'u32[]', space=smem, size = 0x4, offset = 0x4, fixed_abs, tag = 'smem constant byte address 0x4 - core index']
  #allocation1 [shape = 'u32[144,128]{1,0:T(1,128)}', space=vmem, size = 0x12000, scoped, tag = 'internal scratch']
  #allocation2 [shape = 'f32[512,128]{1,0:T(8,128)}', space=vmem, size = 0x40000, scoped, tag = 'scratch operand']
  #allocation3 [shape = 's32[1]{0}', space=sflag, size = 0x4, scoped, tag = 'scoped memory for net_forward.8']
  #allocation4 [shape = 's32[1]{0:T(128)S(6)}', space=smem, size = 0x200, scoped, tag = 'prefetched SMEM operand 0']
  #allocation5 [shape = 'u8[512]{0}', space=smem, size = 0x200, scoped, tag = 'prefetched SMEM operand 1']
  #allocation6 [shape = 'u8[512]{0}', space=smem, size = 0x200, scoped, tag = 'prefetched SMEM operand 2']
  %s0 = inlined_call_operand.<no memory space> [shape: s32[1], index: 0, kind: input, shape index: {}]
  %s1 = inlined_call_operand.vmem [shape: s32[1,5], index: 1, kind: input, shape index: {}]
  %s2 = inlined_call_operand.vmem [shape: s32[1,5], index: 2, kind: input, shape index: {}]
  %s3 = inlined_call_operand.vmem [shape: bf16[6,512,128], index: 3, kind: input, shape index: {}, may-alias: {3,6}]
  %s4 = inlined_call_operand.vmem [shape: f32[1,128], index: 4, kind: input, shape index: {}]
  %s5 = inlined_call_operand.vmem [shape: bf16[5,512,512], index: 5, kind: input, shape index: {}]
  %s6 = inlined_call_operand.vmem [shape: bf16[6,512,128], index: 6, kind: input, shape index: {}, may-alias: {3,6}]
  %s7 = inlined_call_operand.vmem [shape: bf16[512,128], index: 7, kind: output, shape index: {}]
  %s8 = sld [smem:[#allocation0]]
  $region61: #{net_forward.8} parent=0
    _
  %s10 = ssub.s32 1, %s8
  %s11 = scalar_select 0, %s10, %s8
  %12 = sst [smem:[#allocation4]] %s0
  %s13 = sshll.u32 %s1, 4
  %s14 = int_to_ptr.vmem [resolvable:$true] %s13
  %16 = dma.vmem_to_smem %s14, 16, [#allocation5], [#allocation3]
  %s17 = sshll.u32 %s2, 4
  %s18 = int_to_ptr.vmem [resolvable:$true] %s17
  %20 = dma.vmem_to_smem %s18, 16, [#allocation6], [#allocation3]
  %21 = dma.done [#allocation3], 32
  %22 = sfence
  loop: start=0, step=1, limit=7
  $region2: #{net_forward.8} parent=0 // loop_pre_header
    _
  $region3: #{net_forward.8} parent=0 // loop_header
    %s24 = sphi 0, %s28
    %p25 = scmp.ge.s32.totalorder %s24, 7
    %s31 = sphi 0, %s43
    %s32 = sphi 0, %s39
    %s33 = sphi 0, %s31
    %s34 = sphi 0, %s32
    %s35 = sphi 0, %s33
    %s36 = sphi 0, %s34
    %s46 = sphi 0, %s48
    %s49 = sphi 0, %s46
    %s50 = sphi 0, %s49
    %s66 = sphi 0, %s50
    %s70 = sphi 0, %s70
    %s72 = sphi 0, %s70
    %s73 = sphi 0, %s72
    %s87 = sphi 0, %s73
    %s115 = sphi 0, %s117
    %s118 = sphi 0, %s115
    %s119 = sphi 0, %s118
    %s135 = sphi 0, %s119
    %s161 = sphi 0, %s163
    %s164 = sphi 0, %s161
    %s165 = sphi 0, %s164
    %s181 = sphi 0, %s165
    %s187 = sphi 0, %s189
    %s190 = sphi 0, %s187
    %s191 = sphi 0, %s190
    %s207 = sphi 0, %s191
  $region4: #{net_forward.8} parent=0 // loop_header_branch
    %27 = sbr.rel (%p25) target = $region8
  $region5: #{net_forward.8} parent=0 // loop_body
    %s29 = ssub.s32 %s24, 1
    %s30 = ssub.s32 %s24, 2
    %s37 = sadd.s32 1, %s32
    %p38 = scmp.ge.s32.totalorder %s37, 5
    %s39 = scalar_select %p38, 0, %s37
    %s40 = sadd.s32 1, %s31
    %s41 = scalar_select %p38, %s40, %s31
    %p42 = scmp.ge.s32.totalorder %s41, 1
    %s43 = scalar_select %p42, 0, %s41
    %s44 = ssub.s32 %s31, %s43
    %p45 = scmp.eq.s32.totalorder %s44, 0
    %s47 = sadd.s32 %s46, 1
    %s48 = scalar_select %p45, %s46, %s47
    %p51 = pneg %p45
    %p52 = scmp.eq.s32.totalorder %s24, 4
    %p53 = por %p51, %p52
    %p54 = scmp.ne.s32.totalorder %s46, %s49
    %p55 = scmp.eq.s32.totalorder %s24, 0
    %p56 = por %p54, %p55
    %p57 = scmp.ne.s32.totalorder %s46, %s49
    %p58 = scmp.eq.s32.totalorder %s29, 4
    %p59 = por %p57, %p58
    %p60 = scmp.ne.s32.totalorder %s49, %s50
    %p61 = scmp.eq.s32.totalorder %s29, 0
    %p62 = por %p60, %p61
    %p63 = scmp.ne.s32.totalorder %s49, %s50
    %p64 = scmp.eq.s32.totalorder %s30, 4
    %p65 = por %p63, %p64
    %p67 = scmp.ne.s32.totalorder %s50, %s66
    %p68 = scmp.eq.s32.totalorder %s30, 0
    %p69 = por %p67, %p68
    %s71 = sadd.s32 %s70, 1
    %p74 = scmp.eq.s32.totalorder %s24, 4
    %p75 = scmp.ne.s32.totalorder %s70, %s72
    %p76 = scmp.eq.s32.totalorder %s24, 0
    %p77 = por %p75, %p76
    %p78 = scmp.ne.s32.totalorder %s70, %s72
    %p79 = scmp.eq.s32.totalorder %s29, 4
    %p80 = por %p78, %p79
    %p81 = scmp.ne.s32.totalorder %s72, %s73
    %p82 = scmp.eq.s32.totalorder %s29, 0
    %p83 = por %p81, %p82
    %p84 = scmp.ne.s32.totalorder %s72, %s73
    %p85 = scmp.eq.s32.totalorder %s30, 4
    %p86 = por %p84, %p85
    %p88 = scmp.ne.s32.totalorder %s73, %s87
    %p89 = scmp.eq.s32.totalorder %s30, 0
    %p90 = por %p88, %p89
    %s91 = sshra.s32 %s32, 7
    %s92 = sand.u32 %s32, 127
    %s93 = sadd.s32 %s91, %s31
    %s94 = smul.u32 %s93, 128
    %s95 = sshra.s32 %s32, 7
    %s96 = sand.u32 %s32, 127
    %s97 = sadd.s32 %s94, %s96
    %s98 = sld [smem:[#allocation5 + %s97]]
    %s99 = sld [smem:[#allocation6 + %s97]]
    %s100 = sshra.s32 %s39, 7
    %s101 = sand.u32 %s39, 127
    %s102 = sadd.s32 %s100, %s43
    %s103 = smul.u32 %s102, 128
    %s104 = sshra.s32 %s39, 7
    %s105 = sand.u32 %s39, 127
    %s106 = sadd.s32 %s103, %s105
    %s107 = sld [smem:[#allocation5 + %s106]]
    %s108 = sld [smem:[#allocation6 + %s106]]
    %s109 = ssub.s32 %s98, %s107
    %s110 = ssub.s32 %s31, %s43
    %s111 = sor.u32 %s109, %s110
    %s112 = ssub.s32 %s99, %s108
    %s113 = sor.u32 %s111, %s112
    %p114 = scmp.eq.s32.totalorder %s113, 0
    %s116 = sadd.s32 %s115, 1
    %s117 = scalar_select %p114, %s115, %s116
    %p120 = pneg %p114
    %p121 = scmp.eq.s32.totalorder %s24, 4
    %p122 = por %p120, %p121
    %p123 = scmp.ne.s32.totalorder %s115, %s118
    %p124 = scmp.eq.s32.totalorder %s24, 0
    %p125 = por %p123, %p124
    %p126 = scmp.ne.s32.totalorder %s115, %s118
    %p127 = scmp.eq.s32.totalorder %s29, 4
    %p128 = por %p126, %p127
    %p129 = scmp.ne.s32.totalorder %s118, %s119
    %p130 = scmp.eq.s32.totalorder %s29, 0
    %p131 = por %p129, %p130
    %p132 = scmp.ne.s32.totalorder %s118, %s119
    %p133 = scmp.eq.s32.totalorder %s30, 4
    %p134 = por %p132, %p133
    %p136 = scmp.ne.s32.totalorder %s119, %s135
    %p137 = scmp.eq.s32.totalorder %s30, 0
    %p138 = por %p136, %p137
    %s139 = sshra.s32 %s32, 7
    %s140 = sand.u32 %s32, 127
    %s141 = sadd.s32 %s139, %s31
    %s142 = smul.u32 %s141, 128
    %s143 = sshra.s32 %s32, 7
    %s144 = sand.u32 %s32, 127
    %s145 = sadd.s32 %s142, %s144
    %s146 = sld [smem:[#allocation5 + %s145]]
    %s147 = sld [smem:[#allocation6 + %s145]]
    %s148 = sshra.s32 %s39, 7
    %s149 = sand.u32 %s39, 127
    %s150 = sadd.s32 %s148, %s43
    %s151 = smul.u32 %s150, 128
    %s152 = sshra.s32 %s39, 7
    %s153 = sand.u32 %s39, 127
    %s154 = sadd.s32 %s151, %s153
    %s155 = sld [smem:[#allocation5 + %s154]]
    %s156 = sld [smem:[#allocation6 + %s154]]
    %s157 = ssub.s32 %s146, %s155
    %s158 = ssub.s32 %s147, %s156
    %s159 = sor.u32 %s157, %s158
    %p160 = scmp.eq.s32.totalorder %s159, 0
    %s162 = sadd.s32 %s161, 1
    %s163 = scalar_select %p160, %s161, %s162
    %p166 = pneg %p160
    %p167 = scmp.eq.s32.totalorder %s24, 4
    %p168 = por %p166, %p167
    %p169 = scmp.ne.s32.totalorder %s161, %s164
    %p170 = scmp.eq.s32.totalorder %s24, 0
    %p171 = por %p169, %p170
    %p172 = scmp.ne.s32.totalorder %s161, %s164
    %p173 = scmp.eq.s32.totalorder %s29, 4
    %p174 = por %p172, %p173
    %p175 = scmp.ne.s32.totalorder %s164, %s165
    %p176 = scmp.eq.s32.totalorder %s29, 0
    %p177 = por %p175, %p176
    %p178 = scmp.ne.s32.totalorder %s164, %s165
    %p179 = scmp.eq.s32.totalorder %s30, 4
    %p180 = por %p178, %p179
    %p182 = scmp.ne.s32.totalorder %s165, %s181
    %p183 = scmp.eq.s32.totalorder %s30, 0
    %p184 = por %p182, %p183
    %s185 = ssub.s32 %s31, %s43
    %p186 = scmp.eq.s32.totalorder %s185, 0
    %s188 = sadd.s32 %s187, 1
    %s189 = scalar_select %p186, %s187, %s188
    %p192 = pneg %p186
    %p193 = scmp.eq.s32.totalorder %s24, 4
    %p194 = por %p192, %p193
    %p195 = scmp.ne.s32.totalorder %s187, %s190
    %p196 = scmp.eq.s32.totalorder %s24, 0
    %p197 = por %p195, %p196
    %p198 = scmp.ne.s32.totalorder %s187, %s190
    %p199 = scmp.eq.s32.totalorder %s29, 4
    %p200 = por %p198, %p199
    %p201 = scmp.ne.s32.totalorder %s190, %s191
    %p202 = scmp.eq.s32.totalorder %s29, 0
    %p203 = por %p201, %p202
    %p204 = scmp.ne.s32.totalorder %s190, %s191
    %p205 = scmp.eq.s32.totalorder %s30, 4
    %p206 = por %p204, %p205
    %p208 = scmp.ne.s32.totalorder %s191, %s207
    %p209 = scmp.eq.s32.totalorder %s30, 0
    %p210 = por %p208, %p209
    %p211 = scmp.le.s32.totalorder 1, %s24
    %p212 = scmp.lt.s32.totalorder %s24, 6
    %p213 = pnand %p211, %p212
    %p214 = pneg %p213
    // Predicated region
    $region9: #{net_forward.8} parent=5 // pred_check
      _
    $region10: #{net_forward.8} parent=5 // pred_check_branch
      %216 = sbr.rel (%p213) target = $region12
    $region11: #{net_forward.8} parent=5 // pred_region
      %s217 = ssub.s32 %s24, 1
      // Predicated region
      $region13: #{net_forward.8} parent=11 // pred_check
        %p218 = pneg %p62
      $region14: #{net_forward.8} parent=11 // pred_check_branch
        %220 = sbr.rel (%p218) target = $region16
      $region15: #{net_forward.8} parent=11 // pred_region
        %s221 = smul.u32 64, %s33
        %p222 = scmp.lt.s32.totalorder %s221, 63
        %s223 = scalar_select %p222, %s221, 63
        %s224 = sadd.s32 %s223, 320
        %s225 = smul.addr %s224, 4
        %s226 = scalar_lea.vmem %s3, %s225
        %s227 = smul.u32 64, %s33
      $region16: #{net_forward.8} parent=11 // pred_fallthru
        _
      // Predicated region
      $region17: #{net_forward.8} parent=11 // pred_check
        %p228 = pneg %p83
      $region18: #{net_forward.8} parent=11 // pred_check_branch
        %230 = sbr.rel (%p228) target = $region20
      $region19: #{net_forward.8} parent=11 // pred_region
        _
      $region20: #{net_forward.8} parent=11 // pred_fallthru
        _
    $region12: #{net_forward.8} parent=5 // pred_fallthru
      _
    %p231 = scmp.lt.s32.totalorder %s24, 5
    // Predicated region
    $region21: #{net_forward.8} parent=5 // pred_check
      %p232 = pneg %p231
    $region22: #{net_forward.8} parent=5 // pred_check_branch
      %234 = sbr.rel (%p232) target = $region24
    $region23: #{net_forward.8} parent=5 // pred_region
      // Predicated region
      $region25: #{net_forward.8} parent=23 // pred_check
        %p235 = pneg %p125
      $region26: #{net_forward.8} parent=23 // pred_check_branch
        %237 = sbr.rel (%p235) target = $region28
      $region27: #{net_forward.8} parent=23 // pred_region
        %s238 = sshra.s32 %s32, 7
        %s239 = sand.u32 %s32, 127
        %s240 = sadd.s32 %s238, %s31
        %s241 = smul.u32 %s240, 128
        %s242 = sshra.s32 %s32, 7
        %s243 = sand.u32 %s32, 127
        %s244 = sadd.s32 %s241, %s243
        %s245 = sld [smem:[#allocation5 + %s244]]
        %s246 = sld [smem:[#allocation6 + %s244]]
        %s247 = smul.u32 64, %s31
        %s248 = smul.u32 4, %s246
        %p249 = scmp.lt.s32.totalorder %s245, 4
        %s250 = scalar_select %p249, %s245, 4
        %p251 = scmp.lt.s32.totalorder %s247, 63
        %s252 = scalar_select %p251, %s247, 63
        %p253 = scmp.lt.s32.totalorder %s248, 3
        %s254 = scalar_select %p253, %s248, 3
        %s255 = smul.addr %s252, 4
        %s256 = sadd.s32 %s254, %s255
        %s257 = smul.addr %s250, 256
        %s258 = sadd.s32 %s256, %s257
        %s259 = smul.addr %s258, 4
        %s260 = scalar_lea.vmem %s5, %s259
        %s261 = sshra.s32 %s32, 7
        %s262 = sand.u32 %s32, 127
        %s263 = sadd.s32 %s261, %s31
        %s264 = smul.u32 %s263, 128
        %s265 = sshra.s32 %s32, 7
        %s266 = sand.u32 %s32, 127
        %s267 = sadd.s32 %s264, %s266
        %s268 = sld [smem:[#allocation5 + %s267]]
        %s269 = sld [smem:[#allocation6 + %s267]]
        %s270 = smul.u32 64, %s31
        %s271 = smul.u32 4, %s269
      $region28: #{net_forward.8} parent=23 // pred_fallthru
        _
      // Predicated region
      $region29: #{net_forward.8} parent=23 // pred_check
        %p272 = pneg %p171
      $region30: #{net_forward.8} parent=23 // pred_check_branch
        %274 = sbr.rel (%p272) target = $region32
      $region31: #{net_forward.8} parent=23 // pred_region
        %s275 = sshra.s32 %s32, 7
        %s276 = sand.u32 %s32, 127
        %s277 = sadd.s32 %s275, %s31
        %s278 = smul.u32 %s277, 128
        %s279 = sshra.s32 %s32, 7
        %s280 = sand.u32 %s32, 127
        %s281 = sadd.s32 %s278, %s280
        %s282 = sld [smem:[#allocation5 + %s281]]
        %s283 = sld [smem:[#allocation6 + %s281]]
        %s284 = smul.u32 64, %s283
        %p285 = scmp.lt.s32.totalorder %s282, 5
        %s286 = scalar_select %p285, %s282, 5
        %p287 = scmp.lt.s32.totalorder %s284, 63
        %s288 = scalar_select %p287, %s284, 63
        %s289 = smul.addr %s286, 64
        %s290 = sadd.s32 %s288, %s289
        %s291 = smul.addr %s290, 4
        %s292 = scalar_lea.vmem %s6, %s291
        %s293 = sshra.s32 %s32, 7
        %s294 = sand.u32 %s32, 127
        %s295 = sadd.s32 %s293, %s31
        %s296 = smul.u32 %s295, 128
        %s297 = sshra.s32 %s32, 7
        %s298 = sand.u32 %s32, 127
        %s299 = sadd.s32 %s296, %s298
        %s300 = sld [smem:[#allocation5 + %s299]]
        %s301 = sld [smem:[#allocation6 + %s299]]
        %s302 = smul.u32 64, %s301
      $region32: #{net_forward.8} parent=23 // pred_fallthru
        _
    $region24: #{net_forward.8} parent=5 // pred_fallthru
      _
    %p303 = scmp.le.s32.totalorder 1, %s24
    %p304 = scmp.lt.s32.totalorder %s24, 6
    %p305 = pnand %p303, %p304
    %p306 = pneg %p305
    // Predicated region
    $region33: #{net_forward.8} parent=5 // pred_check
      _
    $region34: #{net_forward.8} parent=5 // pred_check_branch
      %308 = sbr.rel (%p305) target = $region36
    $region35: #{net_forward.8} parent=5 // pred_region
      %s309 = ssub.s32 %s24, 1
      %s310 = smul.u32 64, %s33
      %p311 = scmp.lt.s32.totalorder %s310, 63
      %s312 = scalar_select %p311, %s310, 63
      %s313 = sadd.s32 %s312, 320
      %s314 = smul.addr %s313, 4
      %s315 = scalar_lea.vmem %s3, %s314
      %p316 = pneg %p62
      %p317 = pneg %p59
      %p318 = pneg %p83
      %p319 = pneg %p80
      %s320 = sshra.s32 %s34, 7
      %s321 = sand.u32 %s34, 127
      %s322 = sadd.s32 %s320, %s33
      %s323 = smul.u32 %s322, 128
      %s324 = sshra.s32 %s34, 7
      %s325 = sand.u32 %s34, 127
      %s326 = sadd.s32 %s323, %s325
      %s327 = sld [smem:[#allocation5 + %s326]]
      %s328 = sld [smem:[#allocation6 + %s326]]
      %s329 = smul.u32 64, %s33
      %s330 = smul.u32 4, %s328
      %p331 = scmp.lt.s32.totalorder %s327, 4
      %s332 = scalar_select %p331, %s327, 4
      %p333 = scmp.lt.s32.totalorder %s329, 63
      %s334 = scalar_select %p333, %s329, 63
      %p335 = scmp.lt.s32.totalorder %s330, 3
      %s336 = scalar_select %p335, %s330, 3
      %s337 = smul.addr %s334, 4
      %s338 = sadd.s32 %s336, %s337
      %s339 = smul.addr %s332, 256
      %s340 = sadd.s32 %s338, %s339
      %s341 = smul.addr %s340, 4
      %s342 = scalar_lea.vmem %s5, %s341
      %p343 = pneg %p131
      %p344 = pneg %p128
      %s345 = sshra.s32 %s34, 7
      %s346 = sand.u32 %s34, 127
      %s347 = sadd.s32 %s345, %s33
      %s348 = smul.u32 %s347, 128
      %s349 = sshra.s32 %s34, 7
      %s350 = sand.u32 %s34, 127
      %s351 = sadd.s32 %s348, %s350
      %s352 = sld [smem:[#allocation5 + %s351]]
      %s353 = sld [smem:[#allocation6 + %s351]]
      %s354 = smul.u32 64, %s353
      %p355 = scmp.lt.s32.totalorder %s352, 5
      %s356 = scalar_select %p355, %s352, 5
      %p357 = scmp.lt.s32.totalorder %s354, 63
      %s358 = scalar_select %p357, %s354, 63
      %s359 = smul.addr %s356, 64
      %s360 = sadd.s32 %s358, %s359
      %s361 = smul.addr %s360, 4
      %s362 = scalar_lea.vmem %s6, %s361
      %p363 = pneg %p177
      %p364 = pneg %p174
      %p365 = pneg %p203
      %p366 = pneg %p200
      %s367 = smul.u32 64, %s33
      %p368 = scmp.lt.s32.totalorder %s367, 63
      %s369 = scalar_select %p368, %s367, 63
      %s370 = smul.addr %s369, 4
      %s371 = scalar_lea.vmem %s7, %s370
      %s372 = smul.u32 64, %s33
      %p373 = scmp.lt.s32.totalorder %s372, 63
      %s374 = scalar_select %p373, %s372, 63
      %s375 = sadd.s32 %s374, 320
      %s376 = smul.addr %s375, 4
      %s377 = scalar_lea.vmem %s3, %s376
      %s378 = smul.u32 64, %s33
      %s379 = sshra.s32 %s34, 7
      %s380 = sand.u32 %s34, 127
      %s381 = sadd.s32 %s379, %s33
      %s382 = smul.u32 %s381, 128
      %s383 = sshra.s32 %s34, 7
      %s384 = sand.u32 %s34, 127
      %s385 = sadd.s32 %s382, %s384
      %s386 = sld [smem:[#allocation5 + %s385]]
      %s387 = sld [smem:[#allocation6 + %s385]]
      %s388 = smul.u32 64, %s33
      %s389 = smul.u32 4, %s387
      %p390 = scmp.lt.s32.totalorder %s386, 4
      %s391 = scalar_select %p390, %s386, 4
      %p392 = scmp.lt.s32.totalorder %s388, 63
      %s393 = scalar_select %p392, %s388, 63
      %p394 = scmp.lt.s32.totalorder %s389, 3
      %s395 = scalar_select %p394, %s389, 3
      %s396 = smul.addr %s393, 4
      %s397 = sadd.s32 %s395, %s396
      %s398 = smul.addr %s391, 256
      %s399 = sadd.s32 %s397, %s398
      %s400 = smul.addr %s399, 4
      %s401 = scalar_lea.vmem %s5, %s400
      %s402 = sshra.s32 %s34, 7
      %s403 = sand.u32 %s34, 127
      %s404 = sadd.s32 %s402, %s33
      %s405 = smul.u32 %s404, 128
      %s406 = sshra.s32 %s34, 7
      %s407 = sand.u32 %s34, 127
      %s408 = sadd.s32 %s405, %s407
      %s409 = sld [smem:[#allocation5 + %s408]]
      %s410 = sld [smem:[#allocation6 + %s408]]
      %s411 = smul.u32 64, %s33
      %s412 = smul.u32 4, %s410
      %s413 = sshra.s32 %s34, 7
      %s414 = sand.u32 %s34, 127
      %s415 = sadd.s32 %s413, %s33
      %s416 = smul.u32 %s415, 128
      %s417 = sshra.s32 %s34, 7
      %s418 = sand.u32 %s34, 127
      %s419 = sadd.s32 %s416, %s418
      %s420 = sld [smem:[#allocation5 + %s419]]
      %s421 = sld [smem:[#allocation6 + %s419]]
      %s422 = smul.u32 64, %s421
      %p423 = scmp.lt.s32.totalorder %s420, 5
      %s424 = scalar_select %p423, %s420, 5
      %p425 = scmp.lt.s32.totalorder %s422, 63
      %s426 = scalar_select %p425, %s422, 63
      %s427 = smul.addr %s424, 64
      %s428 = sadd.s32 %s426, %s427
      %s429 = smul.addr %s428, 4
      %s430 = scalar_lea.vmem %s6, %s429
      %s431 = sshra.s32 %s34, 7
      %s432 = sand.u32 %s34, 127
      %s433 = sadd.s32 %s431, %s33
      %s434 = smul.u32 %s433, 128
      %s435 = sshra.s32 %s34, 7
      %s436 = sand.u32 %s34, 127
      %s437 = sadd.s32 %s434, %s436
      %s438 = sld [smem:[#allocation5 + %s437]]
      %s439 = sld [smem:[#allocation6 + %s437]]
      %s440 = smul.u32 64, %s439
      %s441 = smul.u32 64, %s33
      %p442 = scmp.lt.s32.totalorder %s441, 63
      %s443 = scalar_select %p442, %s441, 63
      %s444 = smul.addr %s443, 4
      %s445 = scalar_lea.vmem %s7, %s444
      %s446 = smul.u32 64, %s33
      %p448 = scmp.eq.s32.totalorder %s34, 0
      // Predicated region
      $region37: #{net_forward.8} parent=35 // pred_check
        %p449 = pneg %p448
      $region38: #{net_forward.8} parent=35 // pred_check_branch
        %451 = sbr.rel (%p449) target = $region40
      $region39: #{net_forward.8} parent=35 // pred_region
        %v452 = vld [vmem:[%s377] sm:$0xf]
        %v453 = vld [vmem:[%s377 + $0x4] sm:$0xf]
        %v454 = vld [vmem:[%s377 + $0x8] sm:$0xf]
        %v455 = vld [vmem:[%s377 + $0xc] sm:$0xf]
        %v456 = vld [vmem:[%s377 + $0x10] sm:$0xf]
        %v457 = vld [vmem:[%s377 + $0x14] sm:$0xf]
        %v458 = vld [vmem:[%s377 + $0x18] sm:$0xf]
        %v459 = vld [vmem:[%s377 + $0x1c] sm:$0xf]
        %v460 = vld [vmem:[%s377 + $0x20] sm:$0xf]
        %v461 = vld [vmem:[%s377 + $0x24] sm:$0xf]
        %v462 = vld [vmem:[%s377 + $0x28] sm:$0xf]
        %v463 = vld [vmem:[%s377 + $0x2c] sm:$0xf]
        %v464 = vld [vmem:[%s377 + $0x30] sm:$0xf]
        %v465 = vld [vmem:[%s377 + $0x34] sm:$0xf]
        %v466 = vld [vmem:[%s377 + $0x38] sm:$0xf]
        %v467 = vld [vmem:[%s377 + $0x3c] sm:$0xf]
        %v468 = vld [vmem:[%s377 + $0x40] sm:$0xf]
        %v469 = vld [vmem:[%s377 + $0x44] sm:$0xf]
        %v470 = vld [vmem:[%s377 + $0x48] sm:$0xf]
        %v471 = vld [vmem:[%s377 + $0x4c] sm:$0xf]
        %v472 = vld [vmem:[%s377 + $0x50] sm:$0xf]
        %v473 = vld [vmem:[%s377 + $0x54] sm:$0xf]
        %v474 = vld [vmem:[%s377 + $0x58] sm:$0xf]
        %v475 = vld [vmem:[%s377 + $0x5c] sm:$0xf]
        %v476 = vld [vmem:[%s377 + $0x60] sm:$0xf]
        %v477 = vld [vmem:[%s377 + $0x64] sm:$0xf]
        %v478 = vld [vmem:[%s377 + $0x68] sm:$0xf]
        %v479 = vld [vmem:[%s377 + $0x6c] sm:$0xf]
        %v480 = vld [vmem:[%s377 + $0x70] sm:$0xf]
        %v481 = vld [vmem:[%s377 + $0x74] sm:$0xf]
        %v482 = vld [vmem:[%s377 + $0x78] sm:$0xf]
        %v483 = vld [vmem:[%s377 + $0x7c] sm:$0xf]
        %v484 = vld [vmem:[%s377 + $0x80] sm:$0xf]
        %v485 = vld [vmem:[%s377 + $0x84] sm:$0xf]
        %v486 = vld [vmem:[%s377 + $0x88] sm:$0xf]
        %v487 = vld [vmem:[%s377 + $0x8c] sm:$0xf]
        %v488 = vld [vmem:[%s377 + $0x90] sm:$0xf]
        %v489 = vld [vmem:[%s377 + $0x94] sm:$0xf]
        %v490 = vld [vmem:[%s377 + $0x98] sm:$0xf]
        %v491 = vld [vmem:[%s377 + $0x9c] sm:$0xf]
        %v492 = vld [vmem:[%s377 + $0xa0] sm:$0xf]
        %v493 = vld [vmem:[%s377 + $0xa4] sm:$0xf]
        %v494 = vld [vmem:[%s377 + $0xa8] sm:$0xf]
        %v495 = vld [vmem:[%s377 + $0xac] sm:$0xf]
        %v496 = vld [vmem:[%s377 + $0xb0] sm:$0xf]
        %v497 = vld [vmem:[%s377 + $0xb4] sm:$0xf]
        %v498 = vld [vmem:[%s377 + $0xb8] sm:$0xf]
        %v499 = vld [vmem:[%s377 + $0xbc] sm:$0xf]
        %v500 = vld [vmem:[%s377 + $0xc0] sm:$0xf]
        %v501 = vld [vmem:[%s377 + $0xc4] sm:$0xf]
        %v502 = vld [vmem:[%s377 + $0xc8] sm:$0xf]
        %v503 = vld [vmem:[%s377 + $0xcc] sm:$0xf]
        %v504 = vld [vmem:[%s377 + $0xd0] sm:$0xf]
        %v505 = vld [vmem:[%s377 + $0xd4] sm:$0xf]
        %v506 = vld [vmem:[%s377 + $0xd8] sm:$0xf]
        %v507 = vld [vmem:[%s377 + $0xdc] sm:$0xf]
        %v508 = vld [vmem:[%s377 + $0xe0] sm:$0xf]
        %v509 = vld [vmem:[%s377 + $0xe4] sm:$0xf]
        %v510 = vld [vmem:[%s377 + $0xe8] sm:$0xf]
        %v511 = vld [vmem:[%s377 + $0xec] sm:$0xf]
        %v512 = vld [vmem:[%s377 + $0xf0] sm:$0xf]
        %v513 = vld [vmem:[%s377 + $0xf4] sm:$0xf]
        %v514 = vld [vmem:[%s377 + $0xf8] sm:$0xf]
        %v515 = vld [vmem:[%s377 + $0xfc] sm:$0xf]
        %v516 = vunpack.c.l.bf16 %v452
        %v517 = vunpack.c.l.bf16 %v453
        %v518 = vunpack.c.l.bf16 %v454
        %v519 = vunpack.c.l.bf16 %v455
        %v520 = vunpack.c.l.bf16 %v456
        %v521 = vunpack.c.l.bf16 %v457
        %v522 = vunpack.c.l.bf16 %v458
        %v523 = vunpack.c.l.bf16 %v459
        %v524 = vunpack.c.l.bf16 %v460
        %v525 = vunpack.c.l.bf16 %v461
        %v526 = vunpack.c.l.bf16 %v462
        %v527 = vunpack.c.l.bf16 %v463
        %v528 = vunpack.c.l.bf16 %v464
        %v529 = vunpack.c.l.bf16 %v465
        %v530 = vunpack.c.l.bf16 %v466
        %v531 = vunpack.c.l.bf16 %v467
        %v532 = vunpack.c.l.bf16 %v468
        %v533 = vunpack.c.l.bf16 %v469
        %v534 = vunpack.c.l.bf16 %v470
        %v535 = vunpack.c.l.bf16 %v471
        %v536 = vunpack.c.l.bf16 %v472
        %v537 = vunpack.c.l.bf16 %v473
        %v538 = vunpack.c.l.bf16 %v474
        %v539 = vunpack.c.l.bf16 %v475
        %v540 = vunpack.c.l.bf16 %v476
        %v541 = vunpack.c.l.bf16 %v477
        %v542 = vunpack.c.l.bf16 %v478
        %v543 = vunpack.c.l.bf16 %v479
        %v544 = vunpack.c.l.bf16 %v480
        %v545 = vunpack.c.l.bf16 %v481
        %v546 = vunpack.c.l.bf16 %v482
        %v547 = vunpack.c.l.bf16 %v483
        %v548 = vunpack.c.l.bf16 %v484
        %v549 = vunpack.c.l.bf16 %v485
        %v550 = vunpack.c.l.bf16 %v486
        %v551 = vunpack.c.l.bf16 %v487
        %v552 = vunpack.c.l.bf16 %v488
        %v553 = vunpack.c.l.bf16 %v489
        %v554 = vunpack.c.l.bf16 %v490
        %v555 = vunpack.c.l.bf16 %v491
        %v556 = vunpack.c.l.bf16 %v492
        %v557 = vunpack.c.l.bf16 %v493
        %v558 = vunpack.c.l.bf16 %v494
        %v559 = vunpack.c.l.bf16 %v495
        %v560 = vunpack.c.l.bf16 %v496
        %v561 = vunpack.c.l.bf16 %v497
        %v562 = vunpack.c.l.bf16 %v498
        %v563 = vunpack.c.l.bf16 %v499
        %v564 = vunpack.c.l.bf16 %v500
        %v565 = vunpack.c.l.bf16 %v501
        %v566 = vunpack.c.l.bf16 %v502
        %v567 = vunpack.c.l.bf16 %v503
        %v568 = vunpack.c.l.bf16 %v504
        %v569 = vunpack.c.l.bf16 %v505
        %v570 = vunpack.c.l.bf16 %v506
        %v571 = vunpack.c.l.bf16 %v507
        %v572 = vunpack.c.l.bf16 %v508
        %v573 = vunpack.c.l.bf16 %v509
        %v574 = vunpack.c.l.bf16 %v510
        %v575 = vunpack.c.l.bf16 %v511
        %v576 = vunpack.c.l.bf16 %v512
        %v577 = vunpack.c.l.bf16 %v513
        %v578 = vunpack.c.l.bf16 %v514
        %v579 = vunpack.c.l.bf16 %v515
        %v580 = vld [vmem:[%s4] sm:$0x1]
        %v582 = vlaneseq
        %v583 = vshrl.u32 %v582, 7
        %v584 = vsub.s32 0, %v583
        %v585 = vrot.slane %v580, %v584
        %v587 = vadd.f32 %v516, %v585
        %v588 = vadd.f32 %v517, %v585
        %v589 = vadd.f32 %v518, %v585
        %v590 = vadd.f32 %v519, %v585
        %v591 = vadd.f32 %v520, %v585
        %v592 = vadd.f32 %v521, %v585
        %v593 = vadd.f32 %v522, %v585
        %v594 = vadd.f32 %v523, %v585
        %v595 = vadd.f32 %v524, %v585
        %v596 = vadd.f32 %v525, %v585
        %v597 = vadd.f32 %v526, %v585
        %v598 = vadd.f32 %v527, %v585
        %v599 = vadd.f32 %v528, %v585
        %v600 = vadd.f32 %v529, %v585
        %v601 = vadd.f32 %v530, %v585
        %v602 = vadd.f32 %v531, %v585
        %v603 = vadd.f32 %v532, %v585
        %v604 = vadd.f32 %v533, %v585
        %v605 = vadd.f32 %v534, %v585
        %v606 = vadd.f32 %v535, %v585
        %v607 = vadd.f32 %v536, %v585
        %v608 = vadd.f32 %v537, %v585
        %v609 = vadd.f32 %v538, %v585
        %v610 = vadd.f32 %v539, %v585
        %v611 = vadd.f32 %v540, %v585
        %v612 = vadd.f32 %v541, %v585
        %v613 = vadd.f32 %v542, %v585
        %v614 = vadd.f32 %v543, %v585
        %v615 = vadd.f32 %v544, %v585
        %v616 = vadd.f32 %v545, %v585
        %v617 = vadd.f32 %v546, %v585
        %v618 = vadd.f32 %v547, %v585
        %v619 = vadd.f32 %v548, %v585
        %v620 = vadd.f32 %v549, %v585
        %v621 = vadd.f32 %v550, %v585
        %v622 = vadd.f32 %v551, %v585
        %v623 = vadd.f32 %v552, %v585
        %v624 = vadd.f32 %v553, %v585
        %v625 = vadd.f32 %v554, %v585
        %v626 = vadd.f32 %v555, %v585
        %v627 = vadd.f32 %v556, %v585
        %v628 = vadd.f32 %v557, %v585
        %v629 = vadd.f32 %v558, %v585
        %v630 = vadd.f32 %v559, %v585
        %v631 = vadd.f32 %v560, %v585
        %v632 = vadd.f32 %v561, %v585
        %v633 = vadd.f32 %v562, %v585
        %v634 = vadd.f32 %v563, %v585
        %v635 = vadd.f32 %v564, %v585
        %v636 = vadd.f32 %v565, %v585
        %v637 = vadd.f32 %v566, %v585
        %v638 = vadd.f32 %v567, %v585
        %v639 = vadd.f32 %v568, %v585
        %v640 = vadd.f32 %v569, %v585
        %v641 = vadd.f32 %v570, %v585
        %v642 = vadd.f32 %v571, %v585
        %v643 = vadd.f32 %v572, %v585
        %v644 = vadd.f32 %v573, %v585
        %v645 = vadd.f32 %v574, %v585
        %v646 = vadd.f32 %v575, %v585
        %v647 = vadd.f32 %v576, %v585
        %v648 = vadd.f32 %v577, %v585
        %v649 = vadd.f32 %v578, %v585
        %v650 = vadd.f32 %v579, %v585
        %651 = vst [vmem:[#allocation2] sm:$0xff] %v587
        %652 = vst [vmem:[#allocation2 + $0x8] sm:$0xff] %v588
        %653 = vst [vmem:[#allocation2 + $0x10] sm:$0xff] %v589
        %654 = vst [vmem:[#allocation2 + $0x18] sm:$0xff] %v590
        %655 = vst [vmem:[#allocation2 + $0x20] sm:$0xff] %v591
        %656 = vst [vmem:[#allocation2 + $0x28] sm:$0xff] %v592
        %657 = vst [vmem:[#allocation2 + $0x30] sm:$0xff] %v593
        %658 = vst [vmem:[#allocation2 + $0x38] sm:$0xff] %v594
        %659 = vst [vmem:[#allocation2 + $0x40] sm:$0xff] %v595
        %660 = vst [vmem:[#allocation2 + $0x48] sm:$0xff] %v596
        %661 = vst [vmem:[#allocation2 + $0x50] sm:$0xff] %v597
        %662 = vst [vmem:[#allocation2 + $0x58] sm:$0xff] %v598
        %663 = vst [vmem:[#allocation2 + $0x60] sm:$0xff] %v599
        %664 = vst [vmem:[#allocation2 + $0x68] sm:$0xff] %v600
        %665 = vst [vmem:[#allocation2 + $0x70] sm:$0xff] %v601
        %666 = vst [vmem:[#allocation2 + $0x78] sm:$0xff] %v602
        %667 = vst [vmem:[#allocation2 + $0x80] sm:$0xff] %v603
        %668 = vst [vmem:[#allocation2 + $0x88] sm:$0xff] %v604
        %669 = vst [vmem:[#allocation2 + $0x90] sm:$0xff] %v605
        %670 = vst [vmem:[#allocation2 + $0x98] sm:$0xff] %v606
        %671 = vst [vmem:[#allocation2 + $0xa0] sm:$0xff] %v607
        %672 = vst [vmem:[#allocation2 + $0xa8] sm:$0xff] %v608
        %673 = vst [vmem:[#allocation2 + $0xb0] sm:$0xff] %v609
        %674 = vst [vmem:[#allocation2 + $0xb8] sm:$0xff] %v610
        %675 = vst [vmem:[#allocation2 + $0xc0] sm:$0xff] %v611
        %676 = vst [vmem:[#allocation2 + $0xc8] sm:$0xff] %v612
        %677 = vst [vmem:[#allocation2 + $0xd0] sm:$0xff] %v613
        %678 = vst [vmem:[#allocation2 + $0xd8] sm:$0xff] %v614
        %679 = vst [vmem:[#allocation2 + $0xe0] sm:$0xff] %v615
        %680 = vst [vmem:[#allocation2 + $0xe8] sm:$0xff] %v616
        %681 = vst [vmem:[#allocation2 + $0xf0] sm:$0xff] %v617
        %682 = vst [vmem:[#allocation2 + $0xf8] sm:$0xff] %v618
        %683 = vst [vmem:[#allocation2 + $0x100] sm:$0xff] %v619
        %684 = vst [vmem:[#allocation2 + $0x108] sm:$0xff] %v620
        %685 = vst [vmem:[#allocation2 + $0x110] sm:$0xff] %v621
        %686 = vst [vmem:[#allocation2 + $0x118] sm:$0xff] %v622
        %687 = vst [vmem:[#allocation2 + $0x120] sm:$0xff] %v623
        %688 = vst [vmem:[#allocation2 + $0x128] sm:$0xff] %v624
        %689 = vst [vmem:[#allocation2 + $0x130] sm:$0xff] %v625
        %690 = vst [vmem:[#allocation2 + $0x138] sm:$0xff] %v626
        %691 = vst [vmem:[#allocation2 + $0x140] sm:$0xff] %v627
        %692 = vst [vmem:[#allocation2 + $0x148] sm:$0xff] %v628
        %693 = vst [vmem:[#allocation2 + $0x150] sm:$0xff] %v629
        %694 = vst [vmem:[#allocation2 + $0x158] sm:$0xff] %v630
        %695 = vst [vmem:[#allocation2 + $0x160] sm:$0xff] %v631
        %696 = vst [vmem:[#allocation2 + $0x168] sm:$0xff] %v632
        %697 = vst [vmem:[#allocation2 + $0x170] sm:$0xff] %v633
        %698 = vst [vmem:[#allocation2 + $0x178] sm:$0xff] %v634
        %699 = vst [vmem:[#allocation2 + $0x180] sm:$0xff] %v635
        %700 = vst [vmem:[#allocation2 + $0x188] sm:$0xff] %v636
        %701 = vst [vmem:[#allocation2 + $0x190] sm:$0xff] %v637
        %702 = vst [vmem:[#allocation2 + $0x198] sm:$0xff] %v638
        %703 = vst [vmem:[#allocation2 + $0x1a0] sm:$0xff] %v639
        %704 = vst [vmem:[#allocation2 + $0x1a8] sm:$0xff] %v640
        %705 = vst [vmem:[#allocation2 + $0x1b0] sm:$0xff] %v641
        %706 = vst [vmem:[#allocation2 + $0x1b8] sm:$0xff] %v642
        %707 = vst [vmem:[#allocation2 + $0x1c0] sm:$0xff] %v643
        %708 = vst [vmem:[#allocation2 + $0x1c8] sm:$0xff] %v644
        %709 = vst [vmem:[#allocation2 + $0x1d0] sm:$0xff] %v645
        %710 = vst [vmem:[#allocation2 + $0x1d8] sm:$0xff] %v646
        %711 = vst [vmem:[#allocation2 + $0x1e0] sm:$0xff] %v647
        %712 = vst [vmem:[#allocation2 + $0x1e8] sm:$0xff] %v648
        %713 = vst [vmem:[#allocation2 + $0x1f0] sm:$0xff] %v649
        %714 = vst [vmem:[#allocation2 + $0x1f8] sm:$0xff] %v650
      $region40: #{net_forward.8} parent=35 // pred_fallthru
        _
      %s715 = sld [smem:[#allocation4 + %s33]]
      %p716 = scmp.lt.s32.totalorder %s34, %s715
      // Predicated region
      $region41: #{net_forward.8} parent=35 // pred_check
        %p717 = pneg %p716
      $region42: #{net_forward.8} parent=35 // pred_check_branch
        %719 = sbr.rel (%p717) target = $region44
      $region43: #{net_forward.8} parent=35 // pred_region
        %v720 = vld [vmem:[#allocation2] sm:$0xff]
        %v721 = vld [vmem:[#allocation2 + $0x8] sm:$0xff]
        %v722 = vld [vmem:[#allocation2 + $0x10] sm:$0xff]
        %v723 = vld [vmem:[#allocation2 + $0x18] sm:$0xff]
        %v724 = vld [vmem:[#allocation2 + $0x20] sm:$0xff]
        %v725 = vld [vmem:[#allocation2 + $0x28] sm:$0xff]
        %v726 = vld [vmem:[#allocation2 + $0x30] sm:$0xff]
        %v727 = vld [vmem:[#allocation2 + $0x38] sm:$0xff]
        %v728 = vld [vmem:[#allocation2 + $0x40] sm:$0xff]
        %v729 = vld [vmem:[#allocation2 + $0x48] sm:$0xff]
        %v730 = vld [vmem:[#allocation2 + $0x50] sm:$0xff]
        %v731 = vld [vmem:[#allocation2 + $0x58] sm:$0xff]
        %v732 = vld [vmem:[#allocation2 + $0x60] sm:$0xff]
        %v733 = vld [vmem:[#allocation2 + $0x68] sm:$0xff]
        %v734 = vld [vmem:[#allocation2 + $0x70] sm:$0xff]
        %v735 = vld [vmem:[#allocation2 + $0x78] sm:$0xff]
        %v736 = vld [vmem:[#allocation2 + $0x80] sm:$0xff]
        %v737 = vld [vmem:[#allocation2 + $0x88] sm:$0xff]
        %v738 = vld [vmem:[#allocation2 + $0x90] sm:$0xff]
        %v739 = vld [vmem:[#allocation2 + $0x98] sm:$0xff]
        %v740 = vld [vmem:[#allocation2 + $0xa0] sm:$0xff]
        %v741 = vld [vmem:[#allocation2 + $0xa8] sm:$0xff]
        %v742 = vld [vmem:[#allocation2 + $0xb0] sm:$0xff]
        %v743 = vld [vmem:[#allocation2 + $0xb8] sm:$0xff]
        %v744 = vld [vmem:[#allocation2 + $0xc0] sm:$0xff]
        %v745 = vld [vmem:[#allocation2 + $0xc8] sm:$0xff]
        %v746 = vld [vmem:[#allocation2 + $0xd0] sm:$0xff]
        %v747 = vld [vmem:[#allocation2 + $0xd8] sm:$0xff]
        %v748 = vld [vmem:[#allocation2 + $0xe0] sm:$0xff]
        %v749 = vld [vmem:[#allocation2 + $0xe8] sm:$0xff]
        %v750 = vld [vmem:[#allocation2 + $0xf0] sm:$0xff]
        %v751 = vld [vmem:[#allocation2 + $0xf8] sm:$0xff]
        %v752 = vld [vmem:[#allocation2 + $0x100] sm:$0xff]
        %v753 = vld [vmem:[#allocation2 + $0x108] sm:$0xff]
        %v754 = vld [vmem:[#allocation2 + $0x110] sm:$0xff]
        %v755 = vld [vmem:[#allocation2 + $0x118] sm:$0xff]
        %v756 = vld [vmem:[#allocation2 + $0x120] sm:$0xff]
        %v757 = vld [vmem:[#allocation2 + $0x128] sm:$0xff]
        %v758 = vld [vmem:[#allocation2 + $0x130] sm:$0xff]
        %v759 = vld [vmem:[#allocation2 + $0x138] sm:$0xff]
        %v760 = vld [vmem:[#allocation2 + $0x140] sm:$0xff]
        %v761 = vld [vmem:[#allocation2 + $0x148] sm:$0xff]
        %v762 = vld [vmem:[#allocation2 + $0x150] sm:$0xff]
        %v763 = vld [vmem:[#allocation2 + $0x158] sm:$0xff]
        %v764 = vld [vmem:[#allocation2 + $0x160] sm:$0xff]
        %v765 = vld [vmem:[#allocation2 + $0x168] sm:$0xff]
        %v766 = vld [vmem:[#allocation2 + $0x170] sm:$0xff]
        %v767 = vld [vmem:[#allocation2 + $0x178] sm:$0xff]
        %v768 = vld [vmem:[#allocation2 + $0x180] sm:$0xff]
        %v769 = vld [vmem:[#allocation2 + $0x188] sm:$0xff]
        %v770 = vld [vmem:[#allocation2 + $0x190] sm:$0xff]
        %v771 = vld [vmem:[#allocation2 + $0x198] sm:$0xff]
        %v772 = vld [vmem:[#allocation2 + $0x1a0] sm:$0xff]
        %v773 = vld [vmem:[#allocation2 + $0x1a8] sm:$0xff]
        %v774 = vld [vmem:[#allocation2 + $0x1b0] sm:$0xff]
        %v775 = vld [vmem:[#allocation2 + $0x1b8] sm:$0xff]
        %v776 = vld [vmem:[#allocation2 + $0x1c0] sm:$0xff]
        %v777 = vld [vmem:[#allocation2 + $0x1c8] sm:$0xff]
        %v778 = vld [vmem:[#allocation2 + $0x1d0] sm:$0xff]
        %v779 = vld [vmem:[#allocation2 + $0x1d8] sm:$0xff]
        %v780 = vld [vmem:[#allocation2 + $0x1e0] sm:$0xff]
        %v781 = vld [vmem:[#allocation2 + $0x1e8] sm:$0xff]
        %v782 = vld [vmem:[#allocation2 + $0x1f0] sm:$0xff]
        %v783 = vld [vmem:[#allocation2 + $0x1f8] sm:$0xff]
        %v784 = vld [vmem:[%s401] sm:$0xff]
        %v785 = vld [vmem:[%s401 + $0x8] sm:$0xff]
        %v786 = vld [vmem:[%s401 + $0x10] sm:$0xff]
        %v787 = vld [vmem:[%s401 + $0x18] sm:$0xff]
        %v788 = vld [vmem:[%s401 + $0x20] sm:$0xff]
        %v789 = vld [vmem:[%s401 + $0x28] sm:$0xff]
        %v790 = vld [vmem:[%s401 + $0x30] sm:$0xff]
        %v791 = vld [vmem:[%s401 + $0x38] sm:$0xff]
        %v792 = vld [vmem:[%s401 + $0x40] sm:$0xff]
        %v793 = vld [vmem:[%s401 + $0x48] sm:$0xff]
        %v794 = vld [vmem:[%s401 + $0x50] sm:$0xff]
        %v795 = vld [vmem:[%s401 + $0x58] sm:$0xff]
        %v796 = vld [vmem:[%s401 + $0x60] sm:$0xff]
        %v797 = vld [vmem:[%s401 + $0x68] sm:$0xff]
        %v798 = vld [vmem:[%s401 + $0x70] sm:$0xff]
        %v799 = vld [vmem:[%s401 + $0x78] sm:$0xff]
        %v800 = vld [vmem:[%s401 + $0x80] sm:$0xff]
        %v801 = vld [vmem:[%s401 + $0x88] sm:$0xff]
        %v802 = vld [vmem:[%s401 + $0x90] sm:$0xff]
        %v803 = vld [vmem:[%s401 + $0x98] sm:$0xff]
        %v804 = vld [vmem:[%s401 + $0xa0] sm:$0xff]
        %v805 = vld [vmem:[%s401 + $0xa8] sm:$0xff]
        %v806 = vld [vmem:[%s401 + $0xb0] sm:$0xff]
        %v807 = vld [vmem:[%s401 + $0xb8] sm:$0xff]
        %v808 = vld [vmem:[%s401 + $0xc0] sm:$0xff]
        %v809 = vld [vmem:[%s401 + $0xc8] sm:$0xff]
        %v810 = vld [vmem:[%s401 + $0xd0] sm:$0xff]
        %v811 = vld [vmem:[%s401 + $0xd8] sm:$0xff]
        %v812 = vld [vmem:[%s401 + $0xe0] sm:$0xff]
        %v813 = vld [vmem:[%s401 + $0xe8] sm:$0xff]
        %v814 = vld [vmem:[%s401 + $0xf0] sm:$0xff]
        %v815 = vld [vmem:[%s401 + $0xf8] sm:$0xff]
        %v816 = vld [vmem:[%s401 + $0x100] sm:$0xff]
        %v817 = vld [vmem:[%s401 + $0x108] sm:$0xff]
        %v818 = vld [vmem:[%s401 + $0x110] sm:$0xff]
        %v819 = vld [vmem:[%s401 + $0x118] sm:$0xff]
        %v820 = vld [vmem:[%s401 + $0x120] sm:$0xff]
        %v821 = vld [vmem:[%s401 + $0x128] sm:$0xff]
        %v822 = vld [vmem:[%s401 + $0x130] sm:$0xff]
        %v823 = vld [vmem:[%s401 + $0x138] sm:$0xff]
        %v824 = vld [vmem:[%s401 + $0x140] sm:$0xff]
        %v825 = vld [vmem:[%s401 + $0x148] sm:$0xff]
        %v826 = vld [vmem:[%s401 + $0x150] sm:$0xff]
        %v827 = vld [vmem:[%s401 + $0x158] sm:$0xff]
        %v828 = vld [vmem:[%s401 + $0x160] sm:$0xff]
        %v829 = vld [vmem:[%s401 + $0x168] sm:$0xff]
        %v830 = vld [vmem:[%s401 + $0x170] sm:$0xff]
        %v831 = vld [vmem:[%s401 + $0x178] sm:$0xff]
        %v832 = vld [vmem:[%s401 + $0x180] sm:$0xff]
        %v833 = vld [vmem:[%s401 + $0x188] sm:$0xff]
        %v834 = vld [vmem:[%s401 + $0x190] sm:$0xff]
        %v835 = vld [vmem:[%s401 + $0x198] sm:$0xff]
        %v836 = vld [vmem:[%s401 + $0x1a0] sm:$0xff]
        %v837 = vld [vmem:[%s401 + $0x1a8] sm:$0xff]
        %v838 = vld [vmem:[%s401 + $0x1b0] sm:$0xff]
        %v839 = vld [vmem:[%s401 + $0x1b8] sm:$0xff]
        %v840 = vld [vmem:[%s401 + $0x1c0] sm:$0xff]
        %v841 = vld [vmem:[%s401 + $0x1c8] sm:$0xff]
        %v842 = vld [vmem:[%s401 + $0x1d0] sm:$0xff]
        %v843 = vld [vmem:[%s401 + $0x1d8] sm:$0xff]
        %v844 = vld [vmem:[%s401 + $0x1e0] sm:$0xff]
        %v845 = vld [vmem:[%s401 + $0x1e8] sm:$0xff]
        %v846 = vld [vmem:[%s401 + $0x1f0] sm:$0xff]
        %v847 = vld [vmem:[%s401 + $0x1f8] sm:$0xff]
        %v848 = vld [vmem:[%s401 + $0x200] sm:$0xff]
        %v849 = vld [vmem:[%s401 + $0x208] sm:$0xff]
        %v850 = vld [vmem:[%s401 + $0x210] sm:$0xff]
        %v851 = vld [vmem:[%s401 + $0x218] sm:$0xff]
        %v852 = vld [vmem:[%s401 + $0x220] sm:$0xff]
        %v853 = vld [vmem:[%s401 + $0x228] sm:$0xff]
        %v854 = vld [vmem:[%s401 + $0x230] sm:$0xff]
        %v855 = vld [vmem:[%s401 + $0x238] sm:$0xff]
        %v856 = vld [vmem:[%s401 + $0x240] sm:$0xff]
        %v857 = vld [vmem:[%s401 + $0x248] sm:$0xff]
        %v858 = vld [vmem:[%s401 + $0x250] sm:$0xff]
        %v859 = vld [vmem:[%s401 + $0x258] sm:$0xff]
        %v860 = vld [vmem:[%s401 + $0x260] sm:$0xff]
        %v861 = vld [vmem:[%s401 + $0x268] sm:$0xff]
        %v862 = vld [vmem:[%s401 + $0x270] sm:$0xff]
        %v863 = vld [vmem:[%s401 + $0x278] sm:$0xff]
        %v864 = vld [vmem:[%s401 + $0x280] sm:$0xff]
        %v865 = vld [vmem:[%s401 + $0x288] sm:$0xff]
        %v866 = vld [vmem:[%s401 + $0x290] sm:$0xff]
        %v867 = vld [vmem:[%s401 + $0x298] sm:$0xff]
        %v868 = vld [vmem:[%s401 + $0x2a0] sm:$0xff]
        %v869 = vld [vmem:[%s401 + $0x2a8] sm:$0xff]
        %v870 = vld [vmem:[%s401 + $0x2b0] sm:$0xff]
        %v871 = vld [vmem:[%s401 + $0x2b8] sm:$0xff]
        %v872 = vld [vmem:[%s401 + $0x2c0] sm:$0xff]
        %v873 = vld [vmem:[%s401 + $0x2c8] sm:$0xff]
        %v874 = vld [vmem:[%s401 + $0x2d0] sm:$0xff]
        %v875 = vld [vmem:[%s401 + $0x2d8] sm:$0xff]
        %v876 = vld [vmem:[%s401 + $0x2e0] sm:$0xff]
        %v877 = vld [vmem:[%s401 + $0x2e8] sm:$0xff]
        %v878 = vld [vmem:[%s401 + $0x2f0] sm:$0xff]
        %v879 = vld [vmem:[%s401 + $0x2f8] sm:$0xff]
        %v880 = vld [vmem:[%s401 + $0x300] sm:$0xff]
        %v881 = vld [vmem:[%s401 + $0x308] sm:$0xff]
        %v882 = vld [vmem:[%s401 + $0x310] sm:$0xff]
        %v883 = vld [vmem:[%s401 + $0x318] sm:$0xff]
        %v884 = vld [vmem:[%s401 + $0x320] sm:$0xff]
        %v885 = vld [vmem:[%s401 + $0x328] sm:$0xff]
        %v886 = vld [vmem:[%s401 + $0x330] sm:$0xff]
        %v887 = vld [vmem:[%s401 + $0x338] sm:$0xff]
        %v888 = vld [vmem:[%s401 + $0x340] sm:$0xff]
        %v889 = vld [vmem:[%s401 + $0x348] sm:$0xff]
        %v890 = vld [vmem:[%s401 + $0x350] sm:$0xff]
        %v891 = vld [vmem:[%s401 + $0x358] sm:$0xff]
        %v892 = vld [vmem:[%s401 + $0x360] sm:$0xff]
        %v893 = vld [vmem:[%s401 + $0x368] sm:$0xff]
        %v894 = vld [vmem:[%s401 + $0x370] sm:$0xff]
        %v895 = vld [vmem:[%s401 + $0x378] sm:$0xff]
        %v896 = vld [vmem:[%s401 + $0x380] sm:$0xff]
        %v897 = vld [vmem:[%s401 + $0x388] sm:$0xff]
        %v898 = vld [vmem:[%s401 + $0x390] sm:$0xff]
        %v899 = vld [vmem:[%s401 + $0x398] sm:$0xff]
        %v900 = vld [vmem:[%s401 + $0x3a0] sm:$0xff]
        %v901 = vld [vmem:[%s401 + $0x3a8] sm:$0xff]
        %v902 = vld [vmem:[%s401 + $0x3b0] sm:$0xff]
        %v903 = vld [vmem:[%s401 + $0x3b8] sm:$0xff]
        %v904 = vld [vmem:[%s401 + $0x3c0] sm:$0xff]
        %v905 = vld [vmem:[%s401 + $0x3c8] sm:$0xff]
        %v906 = vld [vmem:[%s401 + $0x3d0] sm:$0xff]
        %v907 = vld [vmem:[%s401 + $0x3d8] sm:$0xff]
        %v908 = vld [vmem:[%s401 + $0x3e0] sm:$0xff]
        %v909 = vld [vmem:[%s401 + $0x3e8] sm:$0xff]
        %v910 = vld [vmem:[%s401 + $0x3f0] sm:$0xff]
        %v911 = vld [vmem:[%s401 + $0x3f8] sm:$0xff]
        %v912 = vld [vmem:[%s430] sm:$0xf]
        %v913 = vld [vmem:[%s430 + $0x4] sm:$0xf]
        %v914 = vld [vmem:[%s430 + $0x8] sm:$0xf]
        %v915 = vld [vmem:[%s430 + $0xc] sm:$0xf]
        %v916 = vld [vmem:[%s430 + $0x10] sm:$0xf]
        %v917 = vld [vmem:[%s430 + $0x14] sm:$0xf]
        %v918 = vld [vmem:[%s430 + $0x18] sm:$0xf]
        %v919 = vld [vmem:[%s430 + $0x1c] sm:$0xf]
        %v920 = vld [vmem:[%s430 + $0x20] sm:$0xf]
        %v921 = vld [vmem:[%s430 + $0x24] sm:$0xf]
        %v922 = vld [vmem:[%s430 + $0x28] sm:$0xf]
        %v923 = vld [vmem:[%s430 + $0x2c] sm:$0xf]
        %v924 = vld [vmem:[%s430 + $0x30] sm:$0xf]
        %v925 = vld [vmem:[%s430 + $0x34] sm:$0xf]
        %v926 = vld [vmem:[%s430 + $0x38] sm:$0xf]
        %v927 = vld [vmem:[%s430 + $0x3c] sm:$0xf]
        %v928 = vld [vmem:[%s430 + $0x40] sm:$0xf]
        %v929 = vld [vmem:[%s430 + $0x44] sm:$0xf]
        %v930 = vld [vmem:[%s430 + $0x48] sm:$0xf]
        %v931 = vld [vmem:[%s430 + $0x4c] sm:$0xf]
        %v932 = vld [vmem:[%s430 + $0x50] sm:$0xf]
        %v933 = vld [vmem:[%s430 + $0x54] sm:$0xf]
        %v934 = vld [vmem:[%s430 + $0x58] sm:$0xf]
        %v935 = vld [vmem:[%s430 + $0x5c] sm:$0xf]
        %v936 = vld [vmem:[%s430 + $0x60] sm:$0xf]
        %v937 = vld [vmem:[%s430 + $0x64] sm:$0xf]
        %v938 = vld [vmem:[%s430 + $0x68] sm:$0xf]
        %v939 = vld [vmem:[%s430 + $0x6c] sm:$0xf]
        %v940 = vld [vmem:[%s430 + $0x70] sm:$0xf]
        %v941 = vld [vmem:[%s430 + $0x74] sm:$0xf]
        %v942 = vld [vmem:[%s430 + $0x78] sm:$0xf]
        %v943 = vld [vmem:[%s430 + $0x7c] sm:$0xf]
        %v944 = vld [vmem:[%s430 + $0x80] sm:$0xf]
        %v945 = vld [vmem:[%s430 + $0x84] sm:$0xf]
        %v946 = vld [vmem:[%s430 + $0x88] sm:$0xf]
        %v947 = vld [vmem:[%s430 + $0x8c] sm:$0xf]
        %v948 = vld [vmem:[%s430 + $0x90] sm:$0xf]
        %v949 = vld [vmem:[%s430 + $0x94] sm:$0xf]
        %v950 = vld [vmem:[%s430 + $0x98] sm:$0xf]
        %v951 = vld [vmem:[%s430 + $0x9c] sm:$0xf]
        %v952 = vld [vmem:[%s430 + $0xa0] sm:$0xf]
        %v953 = vld [vmem:[%s430 + $0xa4] sm:$0xf]
        %v954 = vld [vmem:[%s430 + $0xa8] sm:$0xf]
        %v955 = vld [vmem:[%s430 + $0xac] sm:$0xf]
        %v956 = vld [vmem:[%s430 + $0xb0] sm:$0xf]
        %v957 = vld [vmem:[%s430 + $0xb4] sm:$0xf]
        %v958 = vld [vmem:[%s430 + $0xb8] sm:$0xf]
        %v959 = vld [vmem:[%s430 + $0xbc] sm:$0xf]
        %v960 = vld [vmem:[%s430 + $0xc0] sm:$0xf]
        %v961 = vld [vmem:[%s430 + $0xc4] sm:$0xf]
        %v962 = vld [vmem:[%s430 + $0xc8] sm:$0xf]
        %v963 = vld [vmem:[%s430 + $0xcc] sm:$0xf]
        %v964 = vld [vmem:[%s430 + $0xd0] sm:$0xf]
        %v965 = vld [vmem:[%s430 + $0xd4] sm:$0xf]
        %v966 = vld [vmem:[%s430 + $0xd8] sm:$0xf]
        %v967 = vld [vmem:[%s430 + $0xdc] sm:$0xf]
        %v968 = vld [vmem:[%s430 + $0xe0] sm:$0xf]
        %v969 = vld [vmem:[%s430 + $0xe4] sm:$0xf]
        %v970 = vld [vmem:[%s430 + $0xe8] sm:$0xf]
        %v971 = vld [vmem:[%s430 + $0xec] sm:$0xf]
        %v972 = vld [vmem:[%s430 + $0xf0] sm:$0xf]
        %v973 = vld [vmem:[%s430 + $0xf4] sm:$0xf]
        %v974 = vld [vmem:[%s430 + $0xf8] sm:$0xf]
        %v975 = vld [vmem:[%s430 + $0xfc] sm:$0xf]
        %v1104 = vunpack.c.l.b16 %v784
        %v1105 = vunpack.c.h.b16 %v784
        %v1106 = vunpack.c.l.b16 %v785
        %v1107 = vunpack.c.h.b16 %v785
        %v1108 = vunpack.c.l.b16 %v786
        %v1109 = vunpack.c.h.b16 %v786
        %v1110 = vunpack.c.l.b16 %v787
        %v1111 = vunpack.c.h.b16 %v787
        %v1112 = vunpack.c.l.b16 %v788
        %v1113 = vunpack.c.h.b16 %v788
        %v1114 = vunpack.c.l.b16 %v789
        %v1115 = vunpack.c.h.b16 %v789
        %v1116 = vunpack.c.l.b16 %v790
        %v1117 = vunpack.c.h.b16 %v790
        %v1118 = vunpack.c.l.b16 %v791
        %v1119 = vunpack.c.h.b16 %v791
        %v1120 = vunpack.c.l.b16 %v792
        %v1121 = vunpack.c.h.b16 %v792
        %v1122 = vunpack.c.l.b16 %v793
        %v1123 = vunpack.c.h.b16 %v793
        %v1124 = vunpack.c.l.b16 %v794
        %v1125 = vunpack.c.h.b16 %v794
        %v1126 = vunpack.c.l.b16 %v795
        %v1127 = vunpack.c.h.b16 %v795
        %v1128 = vunpack.c.l.b16 %v796
        %v1129 = vunpack.c.h.b16 %v796
        %v1130 = vunpack.c.l.b16 %v797
        %v1131 = vunpack.c.h.b16 %v797
        %v1132 = vunpack.c.l.b16 %v798
        %v1133 = vunpack.c.h.b16 %v798
        %v1134 = vunpack.c.l.b16 %v799
        %v1135 = vunpack.c.h.b16 %v799
        %v1136 = vunpack.c.l.b16 %v800
        %v1137 = vunpack.c.h.b16 %v800
        %v1138 = vunpack.c.l.b16 %v801
        %v1139 = vunpack.c.h.b16 %v801
        %v1140 = vunpack.c.l.b16 %v802
        %v1141 = vunpack.c.h.b16 %v802
        %v1142 = vunpack.c.l.b16 %v803
        %v1143 = vunpack.c.h.b16 %v803
        %v1144 = vunpack.c.l.b16 %v804
        %v1145 = vunpack.c.h.b16 %v804
        %v1146 = vunpack.c.l.b16 %v805
        %v1147 = vunpack.c.h.b16 %v805
        %v1148 = vunpack.c.l.b16 %v806
        %v1149 = vunpack.c.h.b16 %v806
        %v1150 = vunpack.c.l.b16 %v807
        %v1151 = vunpack.c.h.b16 %v807
        %v1152 = vunpack.c.l.b16 %v808
        %v1153 = vunpack.c.h.b16 %v808
        %v1154 = vunpack.c.l.b16 %v809
        %v1155 = vunpack.c.h.b16 %v809
        %v1156 = vunpack.c.l.b16 %v810
        %v1157 = vunpack.c.h.b16 %v810
        %v1158 = vunpack.c.l.b16 %v811
        %v1159 = vunpack.c.h.b16 %v811
        %v1160 = vunpack.c.l.b16 %v812
        %v1161 = vunpack.c.h.b16 %v812
        %v1162 = vunpack.c.l.b16 %v813
        %v1163 = vunpack.c.h.b16 %v813
        %v1164 = vunpack.c.l.b16 %v814
        %v1165 = vunpack.c.h.b16 %v814
        %v1166 = vunpack.c.l.b16 %v815
        %v1167 = vunpack.c.h.b16 %v815
        %v1168 = vunpack.c.l.b16 %v816
        %v1169 = vunpack.c.h.b16 %v816
        %v1170 = vunpack.c.l.b16 %v817
        %v1171 = vunpack.c.h.b16 %v817
        %v1172 = vunpack.c.l.b16 %v818
        %v1173 = vunpack.c.h.b16 %v818
        %v1174 = vunpack.c.l.b16 %v819
        %v1175 = vunpack.c.h.b16 %v819
        %v1176 = vunpack.c.l.b16 %v820
        %v1177 = vunpack.c.h.b16 %v820
        %v1178 = vunpack.c.l.b16 %v821
        %v1179 = vunpack.c.h.b16 %v821
        %v1180 = vunpack.c.l.b16 %v822
        %v1181 = vunpack.c.h.b16 %v822
        %v1182 = vunpack.c.l.b16 %v823
        %v1183 = vunpack.c.h.b16 %v823
        %v1184 = vunpack.c.l.b16 %v824
        %v1185 = vunpack.c.h.b16 %v824
        %v1186 = vunpack.c.l.b16 %v825
        %v1187 = vunpack.c.h.b16 %v825
        %v1188 = vunpack.c.l.b16 %v826
        %v1189 = vunpack.c.h.b16 %v826
        %v1190 = vunpack.c.l.b16 %v827
        %v1191 = vunpack.c.h.b16 %v827
        %v1192 = vunpack.c.l.b16 %v828
        %v1193 = vunpack.c.h.b16 %v828
        %v1194 = vunpack.c.l.b16 %v829
        %v1195 = vunpack.c.h.b16 %v829
        %v1196 = vunpack.c.l.b16 %v830
        %v1197 = vunpack.c.h.b16 %v830
        %v1198 = vunpack.c.l.b16 %v831
        %v1199 = vunpack.c.h.b16 %v831
        %v1200 = vunpack.c.l.b16 %v832
        %v1201 = vunpack.c.h.b16 %v832
        %v1202 = vunpack.c.l.b16 %v833
        %v1203 = vunpack.c.h.b16 %v833
        %v1204 = vunpack.c.l.b16 %v834
        %v1205 = vunpack.c.h.b16 %v834
        %v1206 = vunpack.c.l.b16 %v835
        %v1207 = vunpack.c.h.b16 %v835
        %v1208 = vunpack.c.l.b16 %v836
        %v1209 = vunpack.c.h.b16 %v836
        %v1210 = vunpack.c.l.b16 %v837
        %v1211 = vunpack.c.h.b16 %v837
        %v1212 = vunpack.c.l.b16 %v838
        %v1213 = vunpack.c.h.b16 %v838
        %v1214 = vunpack.c.l.b16 %v839
        %v1215 = vunpack.c.h.b16 %v839
        %v1216 = vunpack.c.l.b16 %v840
        %v1217 = vunpack.c.h.b16 %v840
        %v1218 = vunpack.c.l.b16 %v841
        %v1219 = vunpack.c.h.b16 %v841
        %v1220 = vunpack.c.l.b16 %v842
        %v1221 = vunpack.c.h.b16 %v842
        %v1222 = vunpack.c.l.b16 %v843
        %v1223 = vunpack.c.h.b16 %v843
        %v1224 = vunpack.c.l.b16 %v844
        %v1225 = vunpack.c.h.b16 %v844
        %v1226 = vunpack.c.l.b16 %v845
        %v1227 = vunpack.c.h.b16 %v845
        %v1228 = vunpack.c.l.b16 %v846
        %v1229 = vunpack.c.h.b16 %v846
        %v1230 = vunpack.c.l.b16 %v847
        %v1231 = vunpack.c.h.b16 %v847
        %v1232 = vunpack.c.l.b16 %v848
        %v1233 = vunpack.c.h.b16 %v848
        %v1234 = vunpack.c.l.b16 %v849
        %v1235 = vunpack.c.h.b16 %v849
        %v1236 = vunpack.c.l.b16 %v850
        %v1237 = vunpack.c.h.b16 %v850
        %v1238 = vunpack.c.l.b16 %v851
        %v1239 = vunpack.c.h.b16 %v851
        %v1240 = vunpack.c.l.b16 %v852
        %v1241 = vunpack.c.h.b16 %v852
        %v1242 = vunpack.c.l.b16 %v853
        %v1243 = vunpack.c.h.b16 %v853
        %v1244 = vunpack.c.l.b16 %v854
        %v1245 = vunpack.c.h.b16 %v854
        %v1246 = vunpack.c.l.b16 %v855
        %v1247 = vunpack.c.h.b16 %v855
        %v1248 = vunpack.c.l.b16 %v856
        %v1249 = vunpack.c.h.b16 %v856
        %v1250 = vunpack.c.l.b16 %v857
        %v1251 = vunpack.c.h.b16 %v857
        %v1252 = vunpack.c.l.b16 %v858
        %v1253 = vunpack.c.h.b16 %v858
        %v1254 = vunpack.c.l.b16 %v859
        %v1255 = vunpack.c.h.b16 %v859
        %v1256 = vunpack.c.l.b16 %v860
        %v1257 = vunpack.c.h.b16 %v860
        %v1258 = vunpack.c.l.b16 %v861
        %v1259 = vunpack.c.h.b16 %v861
        %v1260 = vunpack.c.l.b16 %v862
        %v1261 = vunpack.c.h.b16 %v862
        %v1262 = vunpack.c.l.b16 %v863
        %v1263 = vunpack.c.h.b16 %v863
        %v1264 = vunpack.c.l.b16 %v864
        %v1265 = vunpack.c.h.b16 %v864
        %v1266 = vunpack.c.l.b16 %v865
        %v1267 = vunpack.c.h.b16 %v865
        %v1268 = vunpack.c.l.b16 %v866
        %v1269 = vunpack.c.h.b16 %v866
        %v1270 = vunpack.c.l.b16 %v867
        %v1271 = vunpack.c.h.b16 %v867
        %v1272 = vunpack.c.l.b16 %v868
        %v1273 = vunpack.c.h.b16 %v868
        %v1274 = vunpack.c.l.b16 %v869
        %v1275 = vunpack.c.h.b16 %v869
        %v1276 = vunpack.c.l.b16 %v870
        %v1277 = vunpack.c.h.b16 %v870
        %v1278 = vunpack.c.l.b16 %v871
        %v1279 = vunpack.c.h.b16 %v871
        %v1280 = vunpack.c.l.b16 %v872
        %v1281 = vunpack.c.h.b16 %v872
        %v1282 = vunpack.c.l.b16 %v873
        %v1283 = vunpack.c.h.b16 %v873
        %v1284 = vunpack.c.l.b16 %v874
        %v1285 = vunpack.c.h.b16 %v874
        %v1286 = vunpack.c.l.b16 %v875
        %v1287 = vunpack.c.h.b16 %v875
        %v1288 = vunpack.c.l.b16 %v876
        %v1289 = vunpack.c.h.b16 %v876
        %v1290 = vunpack.c.l.b16 %v877
        %v1291 = vunpack.c.h.b16 %v877
        %v1292 = vunpack.c.l.b16 %v878
        %v1293 = vunpack.c.h.b16 %v878
        %v1294 = vunpack.c.l.b16 %v879
        %v1295 = vunpack.c.h.b16 %v879
        %v1296 = vunpack.c.l.b16 %v880
        %v1297 = vunpack.c.h.b16 %v880
        %v1298 = vunpack.c.l.b16 %v881
        %v1299 = vunpack.c.h.b16 %v881
        %v1300 = vunpack.c.l.b16 %v882
        %v1301 = vunpack.c.h.b16 %v882
        %v1302 = vunpack.c.l.b16 %v883
        %v1303 = vunpack.c.h.b16 %v883
        %v1304 = vunpack.c.l.b16 %v884
        %v1305 = vunpack.c.h.b16 %v884
        %v1306 = vunpack.c.l.b16 %v885
        %v1307 = vunpack.c.h.b16 %v885
        %v1308 = vunpack.c.l.b16 %v886
        %v1309 = vunpack.c.h.b16 %v886
        %v1310 = vunpack.c.l.b16 %v887
        %v1311 = vunpack.c.h.b16 %v887
        %v1312 = vunpack.c.l.b16 %v888
        %v1313 = vunpack.c.h.b16 %v888
        %v1314 = vunpack.c.l.b16 %v889
        %v1315 = vunpack.c.h.b16 %v889
        %v1316 = vunpack.c.l.b16 %v890
        %v1317 = vunpack.c.h.b16 %v890
        %v1318 = vunpack.c.l.b16 %v891
        %v1319 = vunpack.c.h.b16 %v891
        %v1320 = vunpack.c.l.b16 %v892
        %v1321 = vunpack.c.h.b16 %v892
        %v1322 = vunpack.c.l.b16 %v893
        %v1323 = vunpack.c.h.b16 %v893
        %v1324 = vunpack.c.l.b16 %v894
        %v1325 = vunpack.c.h.b16 %v894
        %v1326 = vunpack.c.l.b16 %v895
        %v1327 = vunpack.c.h.b16 %v895
        %v1328 = vunpack.c.l.b16 %v896
        %v1329 = vunpack.c.h.b16 %v896
        %v1330 = vunpack.c.l.b16 %v897
        %v1331 = vunpack.c.h.b16 %v897
        %v1332 = vunpack.c.l.b16 %v898
        %v1333 = vunpack.c.h.b16 %v898
        %v1334 = vunpack.c.l.b16 %v899
        %v1335 = vunpack.c.h.b16 %v899
        %v1336 = vunpack.c.l.b16 %v900
        %v1337 = vunpack.c.h.b16 %v900
        %v1338 = vunpack.c.l.b16 %v901
        %v1339 = vunpack.c.h.b16 %v901
        %v1340 = vunpack.c.l.b16 %v902
        %v1341 = vunpack.c.h.b16 %v902
        %v1342 = vunpack.c.l.b16 %v903
        %v1343 = vunpack.c.h.b16 %v903
        %v1344 = vunpack.c.l.b16 %v904
        %v1345 = vunpack.c.h.b16 %v904
        %v1346 = vunpack.c.l.b16 %v905
        %v1347 = vunpack.c.h.b16 %v905
        %v1348 = vunpack.c.l.b16 %v906
        %v1349 = vunpack.c.h.b16 %v906
        %v1350 = vunpack.c.l.b16 %v907
        %v1351 = vunpack.c.h.b16 %v907
        %v1352 = vunpack.c.l.b16 %v908
        %v1353 = vunpack.c.h.b16 %v908
        %v1354 = vunpack.c.l.b16 %v909
        %v1355 = vunpack.c.h.b16 %v909
        %v1356 = vunpack.c.l.b16 %v910
        %v1357 = vunpack.c.h.b16 %v910
        %v1358 = vunpack.c.l.b16 %v911
        %v1359 = vunpack.c.h.b16 %v911
        %v1360 = vpack.c.b16 %v1108, %v1104
        %v1361 = vpack.c.b16 %v1109, %v1105
        %v1362 = vpack.c.b16 %v1110, %v1106
        %v1363 = vpack.c.b16 %v1111, %v1107
        %v1364 = vpack.c.b16 %v1116, %v1112
        %v1365 = vpack.c.b16 %v1117, %v1113
        %v1366 = vpack.c.b16 %v1118, %v1114
        %v1367 = vpack.c.b16 %v1119, %v1115
        %v1368 = vpack.c.b16 %v1124, %v1120
        %v1369 = vpack.c.b16 %v1125, %v1121
        %v1370 = vpack.c.b16 %v1126, %v1122
        %v1371 = vpack.c.b16 %v1127, %v1123
        %v1372 = vpack.c.b16 %v1132, %v1128
        %v1373 = vpack.c.b16 %v1133, %v1129
        %v1374 = vpack.c.b16 %v1134, %v1130
        %v1375 = vpack.c.b16 %v1135, %v1131
        %v1376 = vpack.c.b16 %v1140, %v1136
        %v1377 = vpack.c.b16 %v1141, %v1137
        %v1378 = vpack.c.b16 %v1142, %v1138
        %v1379 = vpack.c.b16 %v1143, %v1139
        %v1380 = vpack.c.b16 %v1148, %v1144
        %v1381 = vpack.c.b16 %v1149, %v1145
        %v1382 = vpack.c.b16 %v1150, %v1146
        %v1383 = vpack.c.b16 %v1151, %v1147
        %v1384 = vpack.c.b16 %v1156, %v1152
        %v1385 = vpack.c.b16 %v1157, %v1153
        %v1386 = vpack.c.b16 %v1158, %v1154
        %v1387 = vpack.c.b16 %v1159, %v1155
        %v1388 = vpack.c.b16 %v1164, %v1160
        %v1389 = vpack.c.b16 %v1165, %v1161
        %v1390 = vpack.c.b16 %v1166, %v1162
        %v1391 = vpack.c.b16 %v1167, %v1163
        %v1392 = vpack.c.b16 %v1172, %v1168
        %v1393 = vpack.c.b16 %v1173, %v1169
        %v1394 = vpack.c.b16 %v1174, %v1170
        %v1395 = vpack.c.b16 %v1175, %v1171
        %v1396 = vpack.c.b16 %v1180, %v1176
        %v1397 = vpack.c.b16 %v1181, %v1177
        %v1398 = vpack.c.b16 %v1182, %v1178
        %v1399 = vpack.c.b16 %v1183, %v1179
        %v1400 = vpack.c.b16 %v1188, %v1184
        %v1401 = vpack.c.b16 %v1189, %v1185
        %v1402 = vpack.c.b16 %v1190, %v1186
        %v1403 = vpack.c.b16 %v1191, %v1187
        %v1404 = vpack.c.b16 %v1196, %v1192
        %v1405 = vpack.c.b16 %v1197, %v1193
        %v1406 = vpack.c.b16 %v1198, %v1194
        %v1407 = vpack.c.b16 %v1199, %v1195
        %v1408 = vpack.c.b16 %v1204, %v1200
        %v1409 = vpack.c.b16 %v1205, %v1201
        %v1410 = vpack.c.b16 %v1206, %v1202
        %v1411 = vpack.c.b16 %v1207, %v1203
        %v1412 = vpack.c.b16 %v1212, %v1208
        %v1413 = vpack.c.b16 %v1213, %v1209
        %v1414 = vpack.c.b16 %v1214, %v1210
        %v1415 = vpack.c.b16 %v1215, %v1211
        %v1416 = vpack.c.b16 %v1220, %v1216
        %v1417 = vpack.c.b16 %v1221, %v1217
        %v1418 = vpack.c.b16 %v1222, %v1218
        %v1419 = vpack.c.b16 %v1223, %v1219
        %v1420 = vpack.c.b16 %v1228, %v1224
        %v1421 = vpack.c.b16 %v1229, %v1225
        %v1422 = vpack.c.b16 %v1230, %v1226
        %v1423 = vpack.c.b16 %v1231, %v1227
        %v1424 = vpack.c.b16 %v1236, %v1232
        %v1425 = vpack.c.b16 %v1237, %v1233
        %v1426 = vpack.c.b16 %v1238, %v1234
        %v1427 = vpack.c.b16 %v1239, %v1235
        %v1428 = vpack.c.b16 %v1244, %v1240
        %v1429 = vpack.c.b16 %v1245, %v1241
        %v1430 = vpack.c.b16 %v1246, %v1242
        %v1431 = vpack.c.b16 %v1247, %v1243
        %v1432 = vpack.c.b16 %v1252, %v1248
        %v1433 = vpack.c.b16 %v1253, %v1249
        %v1434 = vpack.c.b16 %v1254, %v1250
        %v1435 = vpack.c.b16 %v1255, %v1251
        %v1436 = vpack.c.b16 %v1260, %v1256
        %v1437 = vpack.c.b16 %v1261, %v1257
        %v1438 = vpack.c.b16 %v1262, %v1258
        %v1439 = vpack.c.b16 %v1263, %v1259
        %v1440 = vpack.c.b16 %v1268, %v1264
        %v1441 = vpack.c.b16 %v1269, %v1265
        %v1442 = vpack.c.b16 %v1270, %v1266
        %v1443 = vpack.c.b16 %v1271, %v1267
        %v1444 = vpack.c.b16 %v1276, %v1272
        %v1445 = vpack.c.b16 %v1277, %v1273
        %v1446 = vpack.c.b16 %v1278, %v1274
        %v1447 = vpack.c.b16 %v1279, %v1275
        %v1448 = vpack.c.b16 %v1284, %v1280
        %v1449 = vpack.c.b16 %v1285, %v1281
        %v1450 = vpack.c.b16 %v1286, %v1282
        %v1451 = vpack.c.b16 %v1287, %v1283
        %v1452 = vpack.c.b16 %v1292, %v1288
        %v1453 = vpack.c.b16 %v1293, %v1289
        %v1454 = vpack.c.b16 %v1294, %v1290
        %v1455 = vpack.c.b16 %v1295, %v1291
        %v1456 = vpack.c.b16 %v1300, %v1296
        %v1457 = vpack.c.b16 %v1301, %v1297
        %v1458 = vpack.c.b16 %v1302, %v1298
        %v1459 = vpack.c.b16 %v1303, %v1299
        %v1460 = vpack.c.b16 %v1308, %v1304
        %v1461 = vpack.c.b16 %v1309, %v1305
        %v1462 = vpack.c.b16 %v1310, %v1306
        %v1463 = vpack.c.b16 %v1311, %v1307
        %v1464 = vpack.c.b16 %v1316, %v1312
        %v1465 = vpack.c.b16 %v1317, %v1313
        %v1466 = vpack.c.b16 %v1318, %v1314
        %v1467 = vpack.c.b16 %v1319, %v1315
        %v1468 = vpack.c.b16 %v1324, %v1320
        %v1469 = vpack.c.b16 %v1325, %v1321
        %v1470 = vpack.c.b16 %v1326, %v1322
        %v1471 = vpack.c.b16 %v1327, %v1323
        %v1472 = vpack.c.b16 %v1332, %v1328
        %v1473 = vpack.c.b16 %v1333, %v1329
        %v1474 = vpack.c.b16 %v1334, %v1330
        %v1475 = vpack.c.b16 %v1335, %v1331
        %v1476 = vpack.c.b16 %v1340, %v1336
        %v1477 = vpack.c.b16 %v1341, %v1337
        %v1478 = vpack.c.b16 %v1342, %v1338
        %v1479 = vpack.c.b16 %v1343, %v1339
        %v1480 = vpack.c.b16 %v1348, %v1344
        %v1481 = vpack.c.b16 %v1349, %v1345
        %v1482 = vpack.c.b16 %v1350, %v1346
        %v1483 = vpack.c.b16 %v1351, %v1347
        %v1484 = vpack.c.b16 %v1356, %v1352
        %v1485 = vpack.c.b16 %v1357, %v1353
        %v1486 = vpack.c.b16 %v1358, %v1354
        %v1487 = vpack.c.b16 %v1359, %v1355
        %v1680 = vunpack.c.l.b16 %v912
        %v1681 = vunpack.c.l.b16 %v913
        %v1682 = vunpack.c.l.b16 %v914
        %v1683 = vunpack.c.l.b16 %v915
        %v1684 = vunpack.c.l.b16 %v916
        %v1685 = vunpack.c.l.b16 %v917
        %v1686 = vunpack.c.l.b16 %v918
        %v1687 = vunpack.c.l.b16 %v919
        %v1688 = vunpack.c.l.b16 %v920
        %v1689 = vunpack.c.l.b16 %v921
        %v1690 = vunpack.c.l.b16 %v922
        %v1691 = vunpack.c.l.b16 %v923
        %v1692 = vunpack.c.l.b16 %v924
        %v1693 = vunpack.c.l.b16 %v925
        %v1694 = vunpack.c.l.b16 %v926
        %v1695 = vunpack.c.l.b16 %v927
        %v1696 = vunpack.c.l.b16 %v928
        %v1697 = vunpack.c.l.b16 %v929
        %v1698 = vunpack.c.l.b16 %v930
        %v1699 = vunpack.c.l.b16 %v931
        %v1700 = vunpack.c.l.b16 %v932
        %v1701 = vunpack.c.l.b16 %v933
        %v1702 = vunpack.c.l.b16 %v934
        %v1703 = vunpack.c.l.b16 %v935
        %v1704 = vunpack.c.l.b16 %v936
        %v1705 = vunpack.c.l.b16 %v937
        %v1706 = vunpack.c.l.b16 %v938
        %v1707 = vunpack.c.l.b16 %v939
        %v1708 = vunpack.c.l.b16 %v940
        %v1709 = vunpack.c.l.b16 %v941
        %v1710 = vunpack.c.l.b16 %v942
        %v1711 = vunpack.c.l.b16 %v943
        %v1712 = vunpack.c.l.b16 %v944
        %v1713 = vunpack.c.l.b16 %v945
        %v1714 = vunpack.c.l.b16 %v946
        %v1715 = vunpack.c.l.b16 %v947
        %v1716 = vunpack.c.l.b16 %v948
        %v1717 = vunpack.c.l.b16 %v949
        %v1718 = vunpack.c.l.b16 %v950
        %v1719 = vunpack.c.l.b16 %v951
        %v1720 = vunpack.c.l.b16 %v952
        %v1721 = vunpack.c.l.b16 %v953
        %v1722 = vunpack.c.l.b16 %v954
        %v1723 = vunpack.c.l.b16 %v955
        %v1724 = vunpack.c.l.b16 %v956
        %v1725 = vunpack.c.l.b16 %v957
        %v1726 = vunpack.c.l.b16 %v958
        %v1727 = vunpack.c.l.b16 %v959
        %v1728 = vunpack.c.l.b16 %v960
        %v1729 = vunpack.c.l.b16 %v961
        %v1730 = vunpack.c.l.b16 %v962
        %v1731 = vunpack.c.l.b16 %v963
        %v1732 = vunpack.c.l.b16 %v964
        %v1733 = vunpack.c.l.b16 %v965
        %v1734 = vunpack.c.l.b16 %v966
        %v1735 = vunpack.c.l.b16 %v967
        %v1736 = vunpack.c.l.b16 %v968
        %v1737 = vunpack.c.l.b16 %v969
        %v1738 = vunpack.c.l.b16 %v970
        %v1739 = vunpack.c.l.b16 %v971
        %v1740 = vunpack.c.l.b16 %v972
        %v1741 = vunpack.c.l.b16 %v973
        %v1742 = vunpack.c.l.b16 %v974
        %v1743 = vunpack.c.l.b16 %v975
        %v1744 = vpack.c.b16 %v1681, %v1680
        %v1745 = vpack.c.b16 %v1683, %v1682
        %v1746 = vpack.c.b16 %v1685, %v1684
        %v1747 = vpack.c.b16 %v1687, %v1686
        %v1748 = vpack.c.b16 %v1689, %v1688
        %v1749 = vpack.c.b16 %v1691, %v1690
        %v1750 = vpack.c.b16 %v1693, %v1692
        %v1751 = vpack.c.b16 %v1695, %v1694
        %v1752 = vpack.c.b16 %v1697, %v1696
        %v1753 = vpack.c.b16 %v1699, %v1698
        %v1754 = vpack.c.b16 %v1701, %v1700
        %v1755 = vpack.c.b16 %v1703, %v1702
        %v1756 = vpack.c.b16 %v1705, %v1704
        %v1757 = vpack.c.b16 %v1707, %v1706
        %v1758 = vpack.c.b16 %v1709, %v1708
        %v1759 = vpack.c.b16 %v1711, %v1710
        %v1760 = vpack.c.b16 %v1713, %v1712
        %v1761 = vpack.c.b16 %v1715, %v1714
        %v1762 = vpack.c.b16 %v1717, %v1716
        %v1763 = vpack.c.b16 %v1719, %v1718
        %v1764 = vpack.c.b16 %v1721, %v1720
        %v1765 = vpack.c.b16 %v1723, %v1722
        %v1766 = vpack.c.b16 %v1725, %v1724
        %v1767 = vpack.c.b16 %v1727, %v1726
        %v1768 = vpack.c.b16 %v1729, %v1728
        %v1769 = vpack.c.b16 %v1731, %v1730
        %v1770 = vpack.c.b16 %v1733, %v1732
        %v1771 = vpack.c.b16 %v1735, %v1734
        %v1772 = vpack.c.b16 %v1737, %v1736
        %v1773 = vpack.c.b16 %v1739, %v1738
        %v1774 = vpack.c.b16 %v1741, %v1740
        %v1775 = vpack.c.b16 %v1743, %v1742
        %1808 = vmatprep.subr.bf16.mxu0 0
        %1809 = vmatpush1.bf16.msra.mxu0 %v1744
        %1810 = vmatprep.subr.bf16.mxu0 0
        %1811 = vmatpush1.bf16.msra.mxu0 %v1745
        %1812 = vmatprep.subr.bf16.mxu0 0
        %1813 = vmatpush1.bf16.msra.mxu0 %v1746
        %1814 = vmatprep.subr.bf16.mxu0 0
        %1815 = vmatpush1.bf16.msra.mxu0 %v1747
        %1816 = vmatprep.subr.bf16.mxu0 0
        %1817 = vmatpush1.bf16.msra.mxu0 %v1748
        %1818 = vmatprep.subr.bf16.mxu0 0
        %1819 = vmatpush1.bf16.msra.mxu0 %v1749
        %1820 = vmatprep.subr.bf16.mxu0 0
        %1821 = vmatpush1.bf16.msra.mxu0 %v1750
        %1822 = vmatprep.subr.bf16.mxu0 0
        %1823 = vmatpush1.bf16.msra.mxu0 %v1751
        %1824 = vmatprep.subr.bf16.mxu0 0
        %1825 = vmatpush1.bf16.msra.mxu0 %v1752
        %1826 = vmatprep.subr.bf16.mxu0 0
        %1827 = vmatpush1.bf16.msra.mxu0 %v1753
        %1828 = vmatprep.subr.bf16.mxu0 0
        %1829 = vmatpush1.bf16.msra.mxu0 %v1754
        %1830 = vmatprep.subr.bf16.mxu0 0
        %1831 = vmatpush1.bf16.msra.mxu0 %v1755
        %1832 = vmatprep.subr.bf16.mxu0 0
        %1833 = vmatpush1.bf16.msra.mxu0 %v1756
        %1834 = vmatprep.subr.bf16.mxu0 0
        %1835 = vmatpush1.bf16.msra.mxu0 %v1757
        %1836 = vmatprep.subr.bf16.mxu0 0
        %1837 = vmatpush1.bf16.msra.mxu0 %v1758
        %1838 = vmatprep.subr.bf16.mxu0 0
        %1839 = vmatpush1.bf16.msra.mxu0 %v1759
        %1840 = vmatprep.mubr.bf16.mxu0 %v1361
        %1841 = vmatmul.mubr.bf16.gmra.mrb[0].mxu0 %v1360
        %v1842 = vpop.f32.mrb[0].mxu0
        %v1843 = vadd.f32 0.0, %v1842
        %v1844 = vpop.f32.mrb[0].mxu0
        %v1845 = vpop.f32.mrb[0].mxu0
        %v1846 = vadd.f32 0.0, %v1845
        %v1847 = vpop.f32.mrb[0].mxu0
        %1848 = vmatprep.mubr.bf16.mxu0 %v1365
        %1849 = vmatmul.mubr.bf16.gmra.mrb[0].mxu0 %v1364
        %v1850 = vpop.f32.mrb[0].mxu0
        %v1851 = vadd.f32 0.0, %v1850
        %v1852 = vpop.f32.mrb[0].mxu0
        %v1853 = vpop.f32.mrb[0].mxu0
        %v1854 = vadd.f32 0.0, %v1853
        %v1855 = vpop.f32.mrb[0].mxu0
        %1856 = vmatprep.mubr.bf16.mxu0 %v1369
        %1857 = vmatmul.mubr.bf16.gmra.mrb[0].mxu0 %v1368
        %v1858 = vpop.f32.mrb[0].mxu0
        %v1859 = vadd.f32 0.0, %v1858
        %v1860 = vpop.f32.mrb[0].mxu0
        %v1861 = vpop.f32.mrb[0].mxu0
        %v1862 = vadd.f32 0.0, %v1861
        %v1863 = vpop.f32.mrb[0].mxu0
        %1864 = vmatprep.mubr.bf16.mxu0 %v1373
        %1865 = vmatmul.mubr.bf16.gmra.mrb[0].mxu0 %v1372
        %v1866 = vpop.f32.mrb[0].mxu0
        %v1867 = vadd.f32 0.0, %v1866
        %v1868 = vpop.f32.mrb[0].mxu0
        %v1869 = vpop.f32.mrb[0].mxu0
        %v1870 = vadd.f32 0.0, %v1869
        %v1871 = vpop.f32.mrb[0].mxu0
        %1872 = vmatprep.mubr.bf16.mxu0 %v1377
        %1873 = vmatmul.mubr.bf16.gmra.mrb[0].mxu0 %v1376
        %v1874 = vpop.f32.mrb[0].mxu0
        %v1875 = vadd.f32 0.0, %v1874
        %v1876 = vpop.f32.mrb[0].mxu0
        %v1877 = vpop.f32.mrb[0].mxu0
        %v1878 = vadd.f32 0.0, %v1877
        %v1879 = vpop.f32.mrb[0].mxu0
        %1880 = vmatprep.mubr.bf16.mxu0 %v1381
        %1881 = vmatmul.mubr.bf16.gmra.mrb[0].mxu0 %v1380
        %v1882 = vpop.f32.mrb[0].mxu0
        %v1883 = vadd.f32 0.0, %v1882
        %v1884 = vpop.f32.mrb[0].mxu0
        %v1885 = vpop.f32.mrb[0].mxu0
        %v1886 = vadd.f32 0.0, %v1885
        %v1887 = vpop.f32.mrb[0].mxu0
        %1888 = vmatprep.mubr.bf16.mxu0 %v1385
        %1889 = vmatmul.mubr.bf16.gmra.mrb[0].mxu0 %v1384
        %v1890 = vpop.f32.mrb[0].mxu0
        %v1891 = vadd.f32 0.0, %v1890
        %v1892 = vpop.f32.mrb[0].mxu0
        %v1893 = vpop.f32.mrb[0].mxu0
        %v1894 = vadd.f32 0.0, %v1893
        %v1895 = vpop.f32.mrb[0].mxu0
        %1896 = vmatprep.mubr.bf16.mxu0 %v1389
        %1897 = vmatmul.mubr.bf16.gmra.mrb[0].mxu0 %v1388
        %v1898 = vpop.f32.mrb[0].mxu0
        %v1899 = vadd.f32 0.0, %v1898
        %v1900 = vpop.f32.mrb[0].mxu0
        %v1901 = vpop.f32.mrb[0].mxu0
        %v1902 = vadd.f32 0.0, %v1901
        %v1903 = vpop.f32.mrb[0].mxu0
        %1904 = vmatprep.mubr.bf16.mxu0 %v1393
        %1905 = vmatmul.mubr.bf16.gmra.mrb[0].mxu0 %v1392
        %v1906 = vpop.f32.mrb[0].mxu0
        %v1907 = vadd.f32 0.0, %v1906
        %v1908 = vpop.f32.mrb[0].mxu0
        %v1909 = vpop.f32.mrb[0].mxu0
        %v1910 = vadd.f32 0.0, %v1909
        %v1911 = vpop.f32.mrb[0].mxu0
        %1912 = vmatprep.mubr.bf16.mxu0 %v1397
        %1913 = vmatmul.mubr.bf16.gmra.mrb[0].mxu0 %v1396
        %v1914 = vpop.f32.mrb[0].mxu0
        %v1915 = vadd.f32 0.0, %v1914
        %v1916 = vpop.f32.mrb[0].mxu0
        %v1917 = vpop.f32.mrb[0].mxu0
        %v1918 = vadd.f32 0.0, %v1917
        %v1919 = vpop.f32.mrb[0].mxu0
        %1920 = vmatprep.mubr.bf16.mxu0 %v1401
        %1921 = vmatmul.mubr.bf16.gmra.mrb[0].mxu0 %v1400
        %v1922 = vpop.f32.mrb[0].mxu0
        %v1923 = vadd.f32 0.0, %v1922
        %v1924 = vpop.f32.mrb[0].mxu0
        %v1925 = vpop.f32.mrb[0].mxu0
        %v1926 = vadd.f32 0.0, %v1925
        %v1927 = vpop.f32.mrb[0].mxu0
        %1928 = vmatprep.mubr.bf16.mxu0 %v1405
        %1929 = vmatmul.mubr.bf16.gmra.mrb[0].mxu0 %v1404
        %v1930 = vpop.f32.mrb[0].mxu0
        %v1931 = vadd.f32 0.0, %v1930
        %v1932 = vpop.f32.mrb[0].mxu0
        %v1933 = vpop.f32.mrb[0].mxu0
        %v1934 = vadd.f32 0.0, %v1933
        %v1935 = vpop.f32.mrb[0].mxu0
        %1936 = vmatprep.mubr.bf16.mxu0 %v1409
        %1937 = vmatmul.mubr.bf16.gmra.mrb[0].mxu0 %v1408
        %v1938 = vpop.f32.mrb[0].mxu0
        %v1939 = vadd.f32 0.0, %v1938
        %v1940 = vpop.f32.mrb[0].mxu0
        %v1941 = vpop.f32.mrb[0].mxu0
        %v1942 = vadd.f32 0.0, %v1941
        %v1943 = vpop.f32.mrb[0].mxu0
        %1944 = vmatprep.mubr.bf16.mxu0 %v1413
        %1945 = vmatmul.mubr.bf16.gmra.mrb[0].mxu0 %v1412
        %v1946 = vpop.f32.mrb[0].mxu0
        %v1947 = vadd.f32 0.0, %v1946
        %v1948 = vpop.f32.mrb[0].mxu0
        %v1949 = vpop.f32.mrb[0].mxu0
        %v1950 = vadd.f32 0.0, %v1949
        %v1951 = vpop.f32.mrb[0].mxu0
        %1952 = vmatprep.mubr.bf16.mxu0 %v1417
        %1953 = vmatmul.mubr.bf16.gmra.mrb[0].mxu0 %v1416
        %v1954 = vpop.f32.mrb[0].mxu0
        %v1955 = vadd.f32 0.0, %v1954
        %v1956 = vpop.f32.mrb[0].mxu0
        %v1957 = vpop.f32.mrb[0].mxu0
        %v1958 = vadd.f32 0.0, %v1957
        %v1959 = vpop.f32.mrb[0].mxu0
        %1960 = vmatprep.mubr.bf16.mxu0 %v1421
        %1961 = vmatmul.mubr.bf16.gmra.mrb[0].mxu0 %v1420
        %v1962 = vpop.f32.mrb[0].mxu0
        %v1963 = vadd.f32 0.0, %v1962
        %v1964 = vpop.f32.mrb[0].mxu0
        %v1965 = vpop.f32.mrb[0].mxu0
        %v1966 = vadd.f32 0.0, %v1965
        %v1967 = vpop.f32.mrb[0].mxu0
        %1968 = vmatprep.mubr.bf16.mxu0 %v1425
        %1969 = vmatmul.mubr.bf16.gmra.mrb[0].mxu0 %v1424
        %v1970 = vpop.f32.mrb[0].mxu0
        %v1971 = vadd.f32 0.0, %v1970
        %v1972 = vpop.f32.mrb[0].mxu0
        %v1973 = vpop.f32.mrb[0].mxu0
        %v1974 = vadd.f32 0.0, %v1973
        %v1975 = vpop.f32.mrb[0].mxu0
        %1976 = vmatprep.mubr.bf16.mxu0 %v1429
        %1977 = vmatmul.mubr.bf16.gmra.mrb[0].mxu0 %v1428
        %v1978 = vpop.f32.mrb[0].mxu0
        %v1979 = vadd.f32 0.0, %v1978
        %v1980 = vpop.f32.mrb[0].mxu0
        %v1981 = vpop.f32.mrb[0].mxu0
        %v1982 = vadd.f32 0.0, %v1981
        %v1983 = vpop.f32.mrb[0].mxu0
        %1984 = vmatprep.mubr.bf16.mxu0 %v1433
        %1985 = vmatmul.mubr.bf16.gmra.mrb[0].mxu0 %v1432
        %v1986 = vpop.f32.mrb[0].mxu0
        %v1987 = vadd.f32 0.0, %v1986
        %v1988 = vpop.f32.mrb[0].mxu0
        %v1989 = vpop.f32.mrb[0].mxu0
        %v1990 = vadd.f32 0.0, %v1989
        %v1991 = vpop.f32.mrb[0].mxu0
        %1992 = vmatprep.mubr.bf16.mxu0 %v1437
        %1993 = vmatmul.mubr.bf16.gmra.mrb[0].mxu0 %v1436
        %v1994 = vpop.f32.mrb[0].mxu0
        %v1995 = vadd.f32 0.0, %v1994
        %v1996 = vpop.f32.mrb[0].mxu0
        %v1997 = vpop.f32.mrb[0].mxu0
        %v1998 = vadd.f32 0.0, %v1997
        %v1999 = vpop.f32.mrb[0].mxu0
        %2000 = vmatprep.mubr.bf16.mxu0 %v1441
        %2001 = vmatmul.mubr.bf16.gmra.mrb[0].mxu0 %v1440
        %v2002 = vpop.f32.mrb[0].mxu0
        %v2003 = vadd.f32 0.0, %v2002
        %v2004 = vpop.f32.mrb[0].mxu0
        %v2005 = vpop.f32.mrb[0].mxu0
        %v2006 = vadd.f32 0.0, %v2005
        %v2007 = vpop.f32.mrb[0].mxu0
        %2008 = vmatprep.mubr.bf16.mxu0 %v1445
        %2009 = vmatmul.mubr.bf16.gmra.mrb[0].mxu0 %v1444
        %v2010 = vpop.f32.mrb[0].mxu0
        %v2011 = vadd.f32 0.0, %v2010
        %v2012 = vpop.f32.mrb[0].mxu0
        %v2013 = vpop.f32.mrb[0].mxu0
        %v2014 = vadd.f32 0.0, %v2013
        %v2015 = vpop.f32.mrb[0].mxu0
        %2016 = vmatprep.mubr.bf16.mxu0 %v1449
        %2017 = vmatmul.mubr.bf16.gmra.mrb[0].mxu0 %v1448
        %v2018 = vpop.f32.mrb[0].mxu0
        %v2019 = vadd.f32 0.0, %v2018
        %v2020 = vpop.f32.mrb[0].mxu0
        %v2021 = vpop.f32.mrb[0].mxu0
        %v2022 = vadd.f32 0.0, %v2021
        %v2023 = vpop.f32.mrb[0].mxu0
        %2024 = vmatprep.mubr.bf16.mxu0 %v1453
        %2025 = vmatmul.mubr.bf16.gmra.mrb[0].mxu0 %v1452
        %v2026 = vpop.f32.mrb[0].mxu0
        %v2027 = vadd.f32 0.0, %v2026
        %v2028 = vpop.f32.mrb[0].mxu0
        %v2029 = vpop.f32.mrb[0].mxu0
        %v2030 = vadd.f32 0.0, %v2029
        %v2031 = vpop.f32.mrb[0].mxu0
        %2032 = vmatprep.mubr.bf16.mxu0 %v1457
        %2033 = vmatmul.mubr.bf16.gmra.mrb[0].mxu0 %v1456
        %v2034 = vpop.f32.mrb[0].mxu0
        %v2035 = vadd.f32 0.0, %v2034
        %v2036 = vpop.f32.mrb[0].mxu0
        %v2037 = vpop.f32.mrb[0].mxu0
        %v2038 = vadd.f32 0.0, %v2037
        %v2039 = vpop.f32.mrb[0].mxu0
        %2040 = vmatprep.mubr.bf16.mxu0 %v1461
        %2041 = vmatmul.mubr.bf16.gmra.mrb[0].mxu0 %v1460
        %v2042 = vpop.f32.mrb[0].mxu0
        %v2043 = vadd.f32 0.0, %v2042
        %v2044 = vpop.f32.mrb[0].mxu0
        %v2045 = vpop.f32.mrb[0].mxu0
        %v2046 = vadd.f32 0.0, %v2045
        %v2047 = vpop.f32.mrb[0].mxu0
        %2048 = vmatprep.mubr.bf16.mxu0 %v1465
        %2049 = vmatmul.mubr.bf16.gmra.mrb[0].mxu0 %v1464
        %v2050 = vpop.f32.mrb[0].mxu0
        %v2051 = vadd.f32 0.0, %v2050
        %v2052 = vpop.f32.mrb[0].mxu0
        %v2053 = vpop.f32.mrb[0].mxu0
        %v2054 = vadd.f32 0.0, %v2053
        %v2055 = vpop.f32.mrb[0].mxu0
        %2056 = vmatprep.mubr.bf16.mxu0 %v1469
        %2057 = vmatmul.mubr.bf16.gmra.mrb[0].mxu0 %v1468
        %v2058 = vpop.f32.mrb[0].mxu0
        %v2059 = vadd.f32 0.0, %v2058
        %v2060 = vpop.f32.mrb[0].mxu0
        %v2061 = vpop.f32.mrb[0].mxu0
        %v2062 = vadd.f32 0.0, %v2061
        %v2063 = vpop.f32.mrb[0].mxu0
        %2064 = vmatprep.mubr.bf16.mxu0 %v1473
        %2065 = vmatmul.mubr.bf16.gmra.mrb[0].mxu0 %v1472
        %v2066 = vpop.f32.mrb[0].mxu0
        %v2067 = vadd.f32 0.0, %v2066
        %v2068 = vpop.f32.mrb[0].mxu0
        %v2069 = vpop.f32.mrb[0].mxu0
        %v2070 = vadd.f32 0.0, %v2069
        %v2071 = vpop.f32.mrb[0].mxu0
        %2072 = vmatprep.mubr.bf16.mxu0 %v1477
        %2073 = vmatmul.mubr.bf16.gmra.mrb[0].mxu0 %v1476
        %v2074 = vpop.f32.mrb[0].mxu0
        %v2075 = vadd.f32 0.0, %v2074
        %v2076 = vpop.f32.mrb[0].mxu0
        %v2077 = vpop.f32.mrb[0].mxu0
        %v2078 = vadd.f32 0.0, %v2077
        %v2079 = vpop.f32.mrb[0].mxu0
        %2080 = vmatprep.mubr.bf16.mxu0 %v1481
        %2081 = vmatmul.mubr.bf16.gmra.mrb[0].mxu0 %v1480
        %v2082 = vpop.f32.mrb[0].mxu0
        %v2083 = vadd.f32 0.0, %v2082
        %v2084 = vpop.f32.mrb[0].mxu0
        %v2085 = vpop.f32.mrb[0].mxu0
        %v2086 = vadd.f32 0.0, %v2085
        %v2087 = vpop.f32.mrb[0].mxu0
        %2088 = vmatprep.mubr.bf16.mxu0 %v1485
        %2089 = vmatmul.mubr.bf16.gmra.mrb[0].mxu0 %v1484
        %v2090 = vpop.f32.mrb[0].mxu0
        %v2091 = vadd.f32 0.0, %v2090
        %v2092 = vpop.f32.mrb[0].mxu0
        %v2093 = vpop.f32.mrb[0].mxu0
        %v2094 = vadd.f32 0.0, %v2093
        %v2095 = vpop.f32.mrb[0].mxu0
        %2096 = vdwg.mxu0
        %2097 = vmatprep.subr.bf16.mxu0 0
        %2098 = vmatpush1.bf16.msra.mxu0 %v1760
        %2099 = vmatprep.subr.bf16.mxu0 0
        %2100 = vmatpush1.bf16.msra.mxu0 %v1761
        %2101 = vmatprep.subr.bf16.mxu0 0
        %2102 = vmatpush1.bf16.msra.mxu0 %v1762
        %2103 = vmatprep.subr.bf16.mxu0 0
        %2104 = vmatpush1.bf16.msra.mxu0 %v1763
        %2105 = vmatprep.subr.bf16.mxu0 0
        %2106 = vmatpush1.bf16.msra.mxu0 %v1764
        %2107 = vmatprep.subr.bf16.mxu0 0
        %2108 = vmatpush1.bf16.msra.mxu0 %v1765
        %2109 = vmatprep.subr.bf16.mxu0 0
        %2110 = vmatpush1.bf16.msra.mxu0 %v1766
        %2111 = vmatprep.subr.bf16.mxu0 0
        %2112 = vmatpush1.bf16.msra.mxu0 %v1767
        %2113 = vmatprep.subr.bf16.mxu0 0
        %2114 = vmatpush1.bf16.msra.mxu0 %v1768
        %2115 = vmatprep.subr.bf16.mxu0 0
        %2116 = vmatpush1.bf16.msra.mxu0 %v1769
        %2117 = vmatprep.subr.bf16.mxu0 0
        %2118 = vmatpush1.bf16.msra.mxu0 %v1770
        %2119 = vmatprep.subr.bf16.mxu0 0
        %2120 = vmatpush1.bf16.msra.mxu0 %v1771
        %2121 = vmatprep.subr.bf16.mxu0 0
        %2122 = vmatpush1.bf16.msra.mxu0 %v1772
        %2123 = vmatprep.subr.bf16.mxu0 0
        %2124 = vmatpush1.bf16.msra.mxu0 %v1773
        %2125 = vmatprep.subr.bf16.mxu0 0
        %2126 = vmatpush1.bf16.msra.mxu0 %v1774
        %2127 = vmatprep.subr.bf16.mxu0 0
        %2128 = vmatpush1.bf16.msra.mxu0 %v1775
        %2129 = vmatprep.mubr.bf16.mxu0 %v1363
        %2130 = vmatmul.mubr.bf16.gmra.mrb[0].mxu0 %v1362
        %v2131 = vpop.f32.mrb[0].mxu0
        %v2132 = vadd.f32 %v1843, %v2131
        %v2133 = vpop.f32.mrb[0].mxu0
        %v2134 = vpop.f32.mrb[0].mxu0
        %v2135 = vadd.f32 %v1846, %v2134
        %v2136 = vpop.f32.mrb[0].mxu0
        %2137 = vmatprep.mubr.bf16.mxu0 %v1367
        %2138 = vmatmul.mubr.bf16.gmra.mrb[0].mxu0 %v1366
        %v2139 = vpop.f32.mrb[0].mxu0
        %v2140 = vadd.f32 %v1851, %v2139
        %v2141 = vpop.f32.mrb[0].mxu0
        %v2142 = vpop.f32.mrb[0].mxu0
        %v2143 = vadd.f32 %v1854, %v2142
        %v2144 = vpop.f32.mrb[0].mxu0
        %2145 = vmatprep.mubr.bf16.mxu0 %v1371
        %2146 = vmatmul.mubr.bf16.gmra.mrb[0].mxu0 %v1370
        %v2147 = vpop.f32.mrb[0].mxu0
        %v2148 = vadd.f32 %v1859, %v2147
        %v2149 = vpop.f32.mrb[0].mxu0
        %v2150 = vpop.f32.mrb[0].mxu0
        %v2151 = vadd.f32 %v1862, %v2150
        %v2152 = vpop.f32.mrb[0].mxu0
        %2153 = vmatprep.mubr.bf16.mxu0 %v1375
        %2154 = vmatmul.mubr.bf16.gmra.mrb[0].mxu0 %v1374
        %v2155 = vpop.f32.mrb[0].mxu0
        %v2156 = vadd.f32 %v1867, %v2155
        %v2157 = vpop.f32.mrb[0].mxu0
        %v2158 = vpop.f32.mrb[0].mxu0
        %v2159 = vadd.f32 %v1870, %v2158
        %v2160 = vpop.f32.mrb[0].mxu0
        %2161 = vmatprep.mubr.bf16.mxu0 %v1379
        %2162 = vmatmul.mubr.bf16.gmra.mrb[0].mxu0 %v1378
        %v2163 = vpop.f32.mrb[0].mxu0
        %v2164 = vadd.f32 %v1875, %v2163
        %v2165 = vpop.f32.mrb[0].mxu0
        %v2166 = vpop.f32.mrb[0].mxu0
        %v2167 = vadd.f32 %v1878, %v2166
        %v2168 = vpop.f32.mrb[0].mxu0
        %2169 = vmatprep.mubr.bf16.mxu0 %v1383
        %2170 = vmatmul.mubr.bf16.gmra.mrb[0].mxu0 %v1382
        %v2171 = vpop.f32.mrb[0].mxu0
        %v2172 = vadd.f32 %v1883, %v2171
        %v2173 = vpop.f32.mrb[0].mxu0
        %v2174 = vpop.f32.mrb[0].mxu0
        %v2175 = vadd.f32 %v1886, %v2174
        %v2176 = vpop.f32.mrb[0].mxu0
        %2177 = vmatprep.mubr.bf16.mxu0 %v1387
        %2178 = vmatmul.mubr.bf16.gmra.mrb[0].mxu0 %v1386
        %v2179 = vpop.f32.mrb[0].mxu0
        %v2180 = vadd.f32 %v1891, %v2179
        %v2181 = vpop.f32.mrb[0].mxu0
        %v2182 = vpop.f32.mrb[0].mxu0
        %v2183 = vadd.f32 %v1894, %v2182
        %v2184 = vpop.f32.mrb[0].mxu0
        %2185 = vmatprep.mubr.bf16.mxu0 %v1391
        %2186 = vmatmul.mubr.bf16.gmra.mrb[0].mxu0 %v1390
        %v2187 = vpop.f32.mrb[0].mxu0
        %v2188 = vadd.f32 %v1899, %v2187
        %v2189 = vpop.f32.mrb[0].mxu0
        %v2190 = vpop.f32.mrb[0].mxu0
        %v2191 = vadd.f32 %v1902, %v2190
        %v2192 = vpop.f32.mrb[0].mxu0
        %2193 = vmatprep.mubr.bf16.mxu0 %v1395
        %2194 = vmatmul.mubr.bf16.gmra.mrb[0].mxu0 %v1394
        %v2195 = vpop.f32.mrb[0].mxu0
        %v2196 = vadd.f32 %v1907, %v2195
        %v2197 = vpop.f32.mrb[0].mxu0
        %v2198 = vpop.f32.mrb[0].mxu0
        %v2199 = vadd.f32 %v1910, %v2198
        %v2200 = vpop.f32.mrb[0].mxu0
        %2201 = vmatprep.mubr.bf16.mxu0 %v1399
        %2202 = vmatmul.mubr.bf16.gmra.mrb[0].mxu0 %v1398
        %v2203 = vpop.f32.mrb[0].mxu0
        %v2204 = vadd.f32 %v1915, %v2203
        %v2205 = vpop.f32.mrb[0].mxu0
        %v2206 = vpop.f32.mrb[0].mxu0
        %v2207 = vadd.f32 %v1918, %v2206
        %v2208 = vpop.f32.mrb[0].mxu0
        %2209 = vmatprep.mubr.bf16.mxu0 %v1403
        %2210 = vmatmul.mubr.bf16.gmra.mrb[0].mxu0 %v1402
        %v2211 = vpop.f32.mrb[0].mxu0
        %v2212 = vadd.f32 %v1923, %v2211
        %v2213 = vpop.f32.mrb[0].mxu0
        %v2214 = vpop.f32.mrb[0].mxu0
        %v2215 = vadd.f32 %v1926, %v2214
        %v2216 = vpop.f32.mrb[0].mxu0
        %2217 = vmatprep.mubr.bf16.mxu0 %v1407
        %2218 = vmatmul.mubr.bf16.gmra.mrb[0].mxu0 %v1406
        %v2219 = vpop.f32.mrb[0].mxu0
        %v2220 = vadd.f32 %v1931, %v2219
        %v2221 = vpop.f32.mrb[0].mxu0
        %v2222 = vpop.f32.mrb[0].mxu0
        %v2223 = vadd.f32 %v1934, %v2222
        %v2224 = vpop.f32.mrb[0].mxu0
        %2225 = vmatprep.mubr.bf16.mxu0 %v1411
        %2226 = vmatmul.mubr.bf16.gmra.mrb[0].mxu0 %v1410
        %v2227 = vpop.f32.mrb[0].mxu0
        %v2228 = vadd.f32 %v1939, %v2227
        %v2229 = vpop.f32.mrb[0].mxu0
        %v2230 = vpop.f32.mrb[0].mxu0
        %v2231 = vadd.f32 %v1942, %v2230
        %v2232 = vpop.f32.mrb[0].mxu0
        %2233 = vmatprep.mubr.bf16.mxu0 %v1415
        %2234 = vmatmul.mubr.bf16.gmra.mrb[0].mxu0 %v1414
        %v2235 = vpop.f32.mrb[0].mxu0
        %v2236 = vadd.f32 %v1947, %v2235
        %v2237 = vpop.f32.mrb[0].mxu0
        %v2238 = vpop.f32.mrb[0].mxu0
        %v2239 = vadd.f32 %v1950, %v2238
        %v2240 = vpop.f32.mrb[0].mxu0
        %2241 = vmatprep.mubr.bf16.mxu0 %v1419
        %2242 = vmatmul.mubr.bf16.gmra.mrb[0].mxu0 %v1418
        %v2243 = vpop.f32.mrb[0].mxu0
        %v2244 = vadd.f32 %v1955, %v2243
        %v2245 = vpop.f32.mrb[0].mxu0
        %v2246 = vpop.f32.mrb[0].mxu0
        %v2247 = vadd.f32 %v1958, %v2246
        %v2248 = vpop.f32.mrb[0].mxu0
        %2249 = vmatprep.mubr.bf16.mxu0 %v1423
        %2250 = vmatmul.mubr.bf16.gmra.mrb[0].mxu0 %v1422
        %v2251 = vpop.f32.mrb[0].mxu0
        %v2252 = vadd.f32 %v1963, %v2251
        %v2253 = vpop.f32.mrb[0].mxu0
        %v2254 = vpop.f32.mrb[0].mxu0
        %v2255 = vadd.f32 %v1966, %v2254
        %v2256 = vpop.f32.mrb[0].mxu0
        %2257 = vmatprep.mubr.bf16.mxu0 %v1427
        %2258 = vmatmul.mubr.bf16.gmra.mrb[0].mxu0 %v1426
        %v2259 = vpop.f32.mrb[0].mxu0
        %v2260 = vadd.f32 %v1971, %v2259
        %v2261 = vpop.f32.mrb[0].mxu0
        %v2262 = vpop.f32.mrb[0].mxu0
        %v2263 = vadd.f32 %v1974, %v2262
        %v2264 = vpop.f32.mrb[0].mxu0
        %2265 = vmatprep.mubr.bf16.mxu0 %v1431
        %2266 = vmatmul.mubr.bf16.gmra.mrb[0].mxu0 %v1430
        %v2267 = vpop.f32.mrb[0].mxu0
        %v2268 = vadd.f32 %v1979, %v2267
        %v2269 = vpop.f32.mrb[0].mxu0
        %v2270 = vpop.f32.mrb[0].mxu0
        %v2271 = vadd.f32 %v1982, %v2270
        %v2272 = vpop.f32.mrb[0].mxu0
        %2273 = vmatprep.mubr.bf16.mxu0 %v1435
        %2274 = vmatmul.mubr.bf16.gmra.mrb[0].mxu0 %v1434
        %v2275 = vpop.f32.mrb[0].mxu0
        %v2276 = vadd.f32 %v1987, %v2275
        %v2277 = vpop.f32.mrb[0].mxu0
        %v2278 = vpop.f32.mrb[0].mxu0
        %v2279 = vadd.f32 %v1990, %v2278
        %v2280 = vpop.f32.mrb[0].mxu0
        %2281 = vmatprep.mubr.bf16.mxu0 %v1439
        %2282 = vmatmul.mubr.bf16.gmra.mrb[0].mxu0 %v1438
        %v2283 = vpop.f32.mrb[0].mxu0
        %v2284 = vadd.f32 %v1995, %v2283
        %v2285 = vpop.f32.mrb[0].mxu0
        %v2286 = vpop.f32.mrb[0].mxu0
        %v2287 = vadd.f32 %v1998, %v2286
        %v2288 = vpop.f32.mrb[0].mxu0
        %2289 = vmatprep.mubr.bf16.mxu0 %v1443
        %2290 = vmatmul.mubr.bf16.gmra.mrb[0].mxu0 %v1442
        %v2291 = vpop.f32.mrb[0].mxu0
        %v2292 = vadd.f32 %v2003, %v2291
        %v2293 = vpop.f32.mrb[0].mxu0
        %v2294 = vpop.f32.mrb[0].mxu0
        %v2295 = vadd.f32 %v2006, %v2294
        %v2296 = vpop.f32.mrb[0].mxu0
        %2297 = vmatprep.mubr.bf16.mxu0 %v1447
        %2298 = vmatmul.mubr.bf16.gmra.mrb[0].mxu0 %v1446
        %v2299 = vpop.f32.mrb[0].mxu0
        %v2300 = vadd.f32 %v2011, %v2299
        %v2301 = vpop.f32.mrb[0].mxu0
        %v2302 = vpop.f32.mrb[0].mxu0
        %v2303 = vadd.f32 %v2014, %v2302
        %v2304 = vpop.f32.mrb[0].mxu0
        %2305 = vmatprep.mubr.bf16.mxu0 %v1451
        %2306 = vmatmul.mubr.bf16.gmra.mrb[0].mxu0 %v1450
        %v2307 = vpop.f32.mrb[0].mxu0
        %v2308 = vadd.f32 %v2019, %v2307
        %v2309 = vpop.f32.mrb[0].mxu0
        %v2310 = vpop.f32.mrb[0].mxu0
        %v2311 = vadd.f32 %v2022, %v2310
        %v2312 = vpop.f32.mrb[0].mxu0
        %2313 = vmatprep.mubr.bf16.mxu0 %v1455
        %2314 = vmatmul.mubr.bf16.gmra.mrb[0].mxu0 %v1454
        %v2315 = vpop.f32.mrb[0].mxu0
        %v2316 = vadd.f32 %v2027, %v2315
        %v2317 = vpop.f32.mrb[0].mxu0
        %v2318 = vpop.f32.mrb[0].mxu0
        %v2319 = vadd.f32 %v2030, %v2318
        %v2320 = vpop.f32.mrb[0].mxu0
        %2321 = vmatprep.mubr.bf16.mxu0 %v1459
        %2322 = vmatmul.mubr.bf16.gmra.mrb[0].mxu0 %v1458
        %v2323 = vpop.f32.mrb[0].mxu0
        %v2324 = vadd.f32 %v2035, %v2323
        %v2325 = vpop.f32.mrb[0].mxu0
        %v2326 = vpop.f32.mrb[0].mxu0
        %v2327 = vadd.f32 %v2038, %v2326
        %v2328 = vpop.f32.mrb[0].mxu0
        %2329 = vmatprep.mubr.bf16.mxu0 %v1463
        %2330 = vmatmul.mubr.bf16.gmra.mrb[0].mxu0 %v1462
        %v2331 = vpop.f32.mrb[0].mxu0
        %v2332 = vadd.f32 %v2043, %v2331
        %v2333 = vpop.f32.mrb[0].mxu0
        %v2334 = vpop.f32.mrb[0].mxu0
        %v2335 = vadd.f32 %v2046, %v2334
        %v2336 = vpop.f32.mrb[0].mxu0
        %2337 = vmatprep.mubr.bf16.mxu0 %v1467
        %2338 = vmatmul.mubr.bf16.gmra.mrb[0].mxu0 %v1466
        %v2339 = vpop.f32.mrb[0].mxu0
        %v2340 = vadd.f32 %v2051, %v2339
        %v2341 = vpop.f32.mrb[0].mxu0
        %v2342 = vpop.f32.mrb[0].mxu0
        %v2343 = vadd.f32 %v2054, %v2342
        %v2344 = vpop.f32.mrb[0].mxu0
        %2345 = vmatprep.mubr.bf16.mxu0 %v1471
        %2346 = vmatmul.mubr.bf16.gmra.mrb[0].mxu0 %v1470
        %v2347 = vpop.f32.mrb[0].mxu0
        %v2348 = vadd.f32 %v2059, %v2347
        %v2349 = vpop.f32.mrb[0].mxu0
        %v2350 = vpop.f32.mrb[0].mxu0
        %v2351 = vadd.f32 %v2062, %v2350
        %v2352 = vpop.f32.mrb[0].mxu0
        %2353 = vmatprep.mubr.bf16.mxu0 %v1475
        %2354 = vmatmul.mubr.bf16.gmra.mrb[0].mxu0 %v1474
        %v2355 = vpop.f32.mrb[0].mxu0
        %v2356 = vadd.f32 %v2067, %v2355
        %v2357 = vpop.f32.mrb[0].mxu0
        %v2358 = vpop.f32.mrb[0].mxu0
        %v2359 = vadd.f32 %v2070, %v2358
        %v2360 = vpop.f32.mrb[0].mxu0
        %2361 = vmatprep.mubr.bf16.mxu0 %v1479
        %2362 = vmatmul.mubr.bf16.gmra.mrb[0].mxu0 %v1478
        %v2363 = vpop.f32.mrb[0].mxu0
        %v2364 = vadd.f32 %v2075, %v2363
        %v2365 = vpop.f32.mrb[0].mxu0
        %v2366 = vpop.f32.mrb[0].mxu0
        %v2367 = vadd.f32 %v2078, %v2366
        %v2368 = vpop.f32.mrb[0].mxu0
        %2369 = vmatprep.mubr.bf16.mxu0 %v1483
        %2370 = vmatmul.mubr.bf16.gmra.mrb[0].mxu0 %v1482
        %v2371 = vpop.f32.mrb[0].mxu0
        %v2372 = vadd.f32 %v2083, %v2371
        %v2373 = vpop.f32.mrb[0].mxu0
        %v2374 = vpop.f32.mrb[0].mxu0
        %v2375 = vadd.f32 %v2086, %v2374
        %v2376 = vpop.f32.mrb[0].mxu0
        %2377 = vmatprep.mubr.bf16.mxu0 %v1487
        %2378 = vmatmul.mubr.bf16.gmra.mrb[0].mxu0 %v1486
        %v2379 = vpop.f32.mrb[0].mxu0
        %v2380 = vadd.f32 %v2091, %v2379
        %v2381 = vpop.f32.mrb[0].mxu0
        %v2382 = vpop.f32.mrb[0].mxu0
        %v2383 = vadd.f32 %v2094, %v2382
        %v2384 = vpop.f32.mrb[0].mxu0
        %2385 = vdwg.mxu0
        %v2386 = vadd.f32 %v720, %v2132
        %v2387 = vadd.f32 %v721, %v2135
        %v2388 = vadd.f32 %v722, %v2140
        %v2389 = vadd.f32 %v723, %v2143
        %v2390 = vadd.f32 %v724, %v2148
        %v2391 = vadd.f32 %v725, %v2151
        %v2392 = vadd.f32 %v726, %v2156
        %v2393 = vadd.f32 %v727, %v2159
        %v2394 = vadd.f32 %v728, %v2164
        %v2395 = vadd.f32 %v729, %v2167
        %v2396 = vadd.f32 %v730, %v2172
        %v2397 = vadd.f32 %v731, %v2175
        %v2398 = vadd.f32 %v732, %v2180
        %v2399 = vadd.f32 %v733, %v2183
        %v2400 = vadd.f32 %v734, %v2188
        %v2401 = vadd.f32 %v735, %v2191
        %v2402 = vadd.f32 %v736, %v2196
        %v2403 = vadd.f32 %v737, %v2199
        %v2404 = vadd.f32 %v738, %v2204
        %v2405 = vadd.f32 %v739, %v2207
        %v2406 = vadd.f32 %v740, %v2212
        %v2407 = vadd.f32 %v741, %v2215
        %v2408 = vadd.f32 %v742, %v2220
        %v2409 = vadd.f32 %v743, %v2223
        %v2410 = vadd.f32 %v744, %v2228
        %v2411 = vadd.f32 %v745, %v2231
        %v2412 = vadd.f32 %v746, %v2236
        %v2413 = vadd.f32 %v747, %v2239
        %v2414 = vadd.f32 %v748, %v2244
        %v2415 = vadd.f32 %v749, %v2247
        %v2416 = vadd.f32 %v750, %v2252
        %v2417 = vadd.f32 %v751, %v2255
        %v2418 = vadd.f32 %v752, %v2260
        %v2419 = vadd.f32 %v753, %v2263
        %v2420 = vadd.f32 %v754, %v2268
        %v2421 = vadd.f32 %v755, %v2271
        %v2422 = vadd.f32 %v756, %v2276
        %v2423 = vadd.f32 %v757, %v2279
        %v2424 = vadd.f32 %v758, %v2284
        %v2425 = vadd.f32 %v759, %v2287
        %v2426 = vadd.f32 %v760, %v2292
        %v2427 = vadd.f32 %v761, %v2295
        %v2428 = vadd.f32 %v762, %v2300
        %v2429 = vadd.f32 %v763, %v2303
        %v2430 = vadd.f32 %v764, %v2308
        %v2431 = vadd.f32 %v765, %v2311
        %v2432 = vadd.f32 %v766, %v2316
        %v2433 = vadd.f32 %v767, %v2319
        %v2434 = vadd.f32 %v768, %v2324
        %v2435 = vadd.f32 %v769, %v2327
        %v2436 = vadd.f32 %v770, %v2332
        %v2437 = vadd.f32 %v771, %v2335
        %v2438 = vadd.f32 %v772, %v2340
        %v2439 = vadd.f32 %v773, %v2343
        %v2440 = vadd.f32 %v774, %v2348
        %v2441 = vadd.f32 %v775, %v2351
        %v2442 = vadd.f32 %v776, %v2356
        %v2443 = vadd.f32 %v777, %v2359
        %v2444 = vadd.f32 %v778, %v2364
        %v2445 = vadd.f32 %v779, %v2367
        %v2446 = vadd.f32 %v780, %v2372
        %v2447 = vadd.f32 %v781, %v2375
        %v2448 = vadd.f32 %v782, %v2380
        %v2449 = vadd.f32 %v783, %v2383
        %2450 = vst [vmem:[#allocation2] sm:$0xff] %v2386
        %2451 = vst [vmem:[#allocation2 + $0x8] sm:$0xff] %v2387
        %2452 = vst [vmem:[#allocation2 + $0x10] sm:$0xff] %v2388
        %2453 = vst [vmem:[#allocation2 + $0x18] sm:$0xff] %v2389
        %2454 = vst [vmem:[#allocation2 + $0x20] sm:$0xff] %v2390
        %2455 = vst [vmem:[#allocation2 + $0x28] sm:$0xff] %v2391
        %2456 = vst [vmem:[#allocation2 + $0x30] sm:$0xff] %v2392
        %2457 = vst [vmem:[#allocation2 + $0x38] sm:$0xff] %v2393
        %2458 = vst [vmem:[#allocation2 + $0x40] sm:$0xff] %v2394
        %2459 = vst [vmem:[#allocation2 + $0x48] sm:$0xff] %v2395
        %2460 = vst [vmem:[#allocation2 + $0x50] sm:$0xff] %v2396
        %2461 = vst [vmem:[#allocation2 + $0x58] sm:$0xff] %v2397
        %2462 = vst [vmem:[#allocation2 + $0x60] sm:$0xff] %v2398
        %2463 = vst [vmem:[#allocation2 + $0x68] sm:$0xff] %v2399
        %2464 = vst [vmem:[#allocation2 + $0x70] sm:$0xff] %v2400
        %2465 = vst [vmem:[#allocation2 + $0x78] sm:$0xff] %v2401
        %2466 = vst [vmem:[#allocation2 + $0x80] sm:$0xff] %v2402
        %2467 = vst [vmem:[#allocation2 + $0x88] sm:$0xff] %v2403
        %2468 = vst [vmem:[#allocation2 + $0x90] sm:$0xff] %v2404
        %2469 = vst [vmem:[#allocation2 + $0x98] sm:$0xff] %v2405
        %2470 = vst [vmem:[#allocation2 + $0xa0] sm:$0xff] %v2406
        %2471 = vst [vmem:[#allocation2 + $0xa8] sm:$0xff] %v2407
        %2472 = vst [vmem:[#allocation2 + $0xb0] sm:$0xff] %v2408
        %2473 = vst [vmem:[#allocation2 + $0xb8] sm:$0xff] %v2409
        %2474 = vst [vmem:[#allocation2 + $0xc0] sm:$0xff] %v2410
        %2475 = vst [vmem:[#allocation2 + $0xc8] sm:$0xff] %v2411
        %2476 = vst [vmem:[#allocation2 + $0xd0] sm:$0xff] %v2412
        %2477 = vst [vmem:[#allocation2 + $0xd8] sm:$0xff] %v2413
        %2478 = vst [vmem:[#allocation2 + $0xe0] sm:$0xff] %v2414
        %2479 = vst [vmem:[#allocation2 + $0xe8] sm:$0xff] %v2415
        %2480 = vst [vmem:[#allocation2 + $0xf0] sm:$0xff] %v2416
        %2481 = vst [vmem:[#allocation2 + $0xf8] sm:$0xff] %v2417
        %2482 = vst [vmem:[#allocation2 + $0x100] sm:$0xff] %v2418
        %2483 = vst [vmem:[#allocation2 + $0x108] sm:$0xff] %v2419
        %2484 = vst [vmem:[#allocation2 + $0x110] sm:$0xff] %v2420
        %2485 = vst [vmem:[#allocation2 + $0x118] sm:$0xff] %v2421
        %2486 = vst [vmem:[#allocation2 + $0x120] sm:$0xff] %v2422
        %2487 = vst [vmem:[#allocation2 + $0x128] sm:$0xff] %v2423
        %2488 = vst [vmem:[#allocation2 + $0x130] sm:$0xff] %v2424
        %2489 = vst [vmem:[#allocation2 + $0x138] sm:$0xff] %v2425
        %2490 = vst [vmem:[#allocation2 + $0x140] sm:$0xff] %v2426
        %2491 = vst [vmem:[#allocation2 + $0x148] sm:$0xff] %v2427
        %2492 = vst [vmem:[#allocation2 + $0x150] sm:$0xff] %v2428
        %2493 = vst [vmem:[#allocation2 + $0x158] sm:$0xff] %v2429
        %2494 = vst [vmem:[#allocation2 + $0x160] sm:$0xff] %v2430
        %2495 = vst [vmem:[#allocation2 + $0x168] sm:$0xff] %v2431
        %2496 = vst [vmem:[#allocation2 + $0x170] sm:$0xff] %v2432
        %2497 = vst [vmem:[#allocation2 + $0x178] sm:$0xff] %v2433
        %2498 = vst [vmem:[#allocation2 + $0x180] sm:$0xff] %v2434
        %2499 = vst [vmem:[#allocation2 + $0x188] sm:$0xff] %v2435
        %2500 = vst [vmem:[#allocation2 + $0x190] sm:$0xff] %v2436
        %2501 = vst [vmem:[#allocation2 + $0x198] sm:$0xff] %v2437
        %2502 = vst [vmem:[#allocation2 + $0x1a0] sm:$0xff] %v2438
        %2503 = vst [vmem:[#allocation2 + $0x1a8] sm:$0xff] %v2439
        %2504 = vst [vmem:[#allocation2 + $0x1b0] sm:$0xff] %v2440
        %2505 = vst [vmem:[#allocation2 + $0x1b8] sm:$0xff] %v2441
        %2506 = vst [vmem:[#allocation2 + $0x1c0] sm:$0xff] %v2442
        %2507 = vst [vmem:[#allocation2 + $0x1c8] sm:$0xff] %v2443
        %2508 = vst [vmem:[#allocation2 + $0x1d0] sm:$0xff] %v2444
        %2509 = vst [vmem:[#allocation2 + $0x1d8] sm:$0xff] %v2445
        %2510 = vst [vmem:[#allocation2 + $0x1e0] sm:$0xff] %v2446
        %2511 = vst [vmem:[#allocation2 + $0x1e8] sm:$0xff] %v2447
        %2512 = vst [vmem:[#allocation2 + $0x1f0] sm:$0xff] %v2448
        %2513 = vst [vmem:[#allocation2 + $0x1f8] sm:$0xff] %v2449
      $region44: #{net_forward.8} parent=35 // pred_fallthru
        _
      %p2514 = scmp.eq.s32.totalorder %s34, 4
      // Predicated region
      $region45: #{net_forward.8} parent=35 // pred_check
        %p2515 = pneg %p2514
      $region46: #{net_forward.8} parent=35 // pred_check_branch
        %2517 = sbr.rel (%p2515) target = $region48
      $region47: #{net_forward.8} parent=35 // pred_region
        %v2518 = vld [vmem:[#allocation2] sm:$0xff]
        %v2519 = vld [vmem:[#allocation2 + $0x8] sm:$0xff]
        %v2520 = vld [vmem:[#allocation2 + $0x10] sm:$0xff]
        %v2521 = vld [vmem:[#allocation2 + $0x18] sm:$0xff]
        %v2522 = vld [vmem:[#allocation2 + $0x20] sm:$0xff]
        %v2523 = vld [vmem:[#allocation2 + $0x28] sm:$0xff]
        %v2524 = vld [vmem:[#allocation2 + $0x30] sm:$0xff]
        %v2525 = vld [vmem:[#allocation2 + $0x38] sm:$0xff]
        %v2526 = vld [vmem:[#allocation2 + $0x40] sm:$0xff]
        %v2527 = vld [vmem:[#allocation2 + $0x48] sm:$0xff]
        %v2528 = vld [vmem:[#allocation2 + $0x50] sm:$0xff]
        %v2529 = vld [vmem:[#allocation2 + $0x58] sm:$0xff]
        %v2530 = vld [vmem:[#allocation2 + $0x60] sm:$0xff]
        %v2531 = vld [vmem:[#allocation2 + $0x68] sm:$0xff]
        %v2532 = vld [vmem:[#allocation2 + $0x70] sm:$0xff]
        %v2533 = vld [vmem:[#allocation2 + $0x78] sm:$0xff]
        %v2534 = vld [vmem:[#allocation2 + $0x80] sm:$0xff]
        %v2535 = vld [vmem:[#allocation2 + $0x88] sm:$0xff]
        %v2536 = vld [vmem:[#allocation2 + $0x90] sm:$0xff]
        %v2537 = vld [vmem:[#allocation2 + $0x98] sm:$0xff]
        %v2538 = vld [vmem:[#allocation2 + $0xa0] sm:$0xff]
        %v2539 = vld [vmem:[#allocation2 + $0xa8] sm:$0xff]
        %v2540 = vld [vmem:[#allocation2 + $0xb0] sm:$0xff]
        %v2541 = vld [vmem:[#allocation2 + $0xb8] sm:$0xff]
        %v2542 = vld [vmem:[#allocation2 + $0xc0] sm:$0xff]
        %v2543 = vld [vmem:[#allocation2 + $0xc8] sm:$0xff]
        %v2544 = vld [vmem:[#allocation2 + $0xd0] sm:$0xff]
        %v2545 = vld [vmem:[#allocation2 + $0xd8] sm:$0xff]
        %v2546 = vld [vmem:[#allocation2 + $0xe0] sm:$0xff]
        %v2547 = vld [vmem:[#allocation2 + $0xe8] sm:$0xff]
        %v2548 = vld [vmem:[#allocation2 + $0xf0] sm:$0xff]
        %v2549 = vld [vmem:[#allocation2 + $0xf8] sm:$0xff]
        %v2550 = vld [vmem:[#allocation2 + $0x100] sm:$0xff]
        %v2551 = vld [vmem:[#allocation2 + $0x108] sm:$0xff]
        %v2552 = vld [vmem:[#allocation2 + $0x110] sm:$0xff]
        %v2553 = vld [vmem:[#allocation2 + $0x118] sm:$0xff]
        %v2554 = vld [vmem:[#allocation2 + $0x120] sm:$0xff]
        %v2555 = vld [vmem:[#allocation2 + $0x128] sm:$0xff]
        %v2556 = vld [vmem:[#allocation2 + $0x130] sm:$0xff]
        %v2557 = vld [vmem:[#allocation2 + $0x138] sm:$0xff]
        %v2558 = vld [vmem:[#allocation2 + $0x140] sm:$0xff]
        %v2559 = vld [vmem:[#allocation2 + $0x148] sm:$0xff]
        %v2560 = vld [vmem:[#allocation2 + $0x150] sm:$0xff]
        %v2561 = vld [vmem:[#allocation2 + $0x158] sm:$0xff]
        %v2562 = vld [vmem:[#allocation2 + $0x160] sm:$0xff]
        %v2563 = vld [vmem:[#allocation2 + $0x168] sm:$0xff]
        %v2564 = vld [vmem:[#allocation2 + $0x170] sm:$0xff]
        %v2565 = vld [vmem:[#allocation2 + $0x178] sm:$0xff]
        %v2566 = vld [vmem:[#allocation2 + $0x180] sm:$0xff]
        %v2567 = vld [vmem:[#allocation2 + $0x188] sm:$0xff]
        %v2568 = vld [vmem:[#allocation2 + $0x190] sm:$0xff]
        %v2569 = vld [vmem:[#allocation2 + $0x198] sm:$0xff]
        %v2570 = vld [vmem:[#allocation2 + $0x1a0] sm:$0xff]
        %v2571 = vld [vmem:[#allocation2 + $0x1a8] sm:$0xff]
        %v2572 = vld [vmem:[#allocation2 + $0x1b0] sm:$0xff]
        %v2573 = vld [vmem:[#allocation2 + $0x1b8] sm:$0xff]
        %v2574 = vld [vmem:[#allocation2 + $0x1c0] sm:$0xff]
        %v2575 = vld [vmem:[#allocation2 + $0x1c8] sm:$0xff]
        %v2576 = vld [vmem:[#allocation2 + $0x1d0] sm:$0xff]
        %v2577 = vld [vmem:[#allocation2 + $0x1d8] sm:$0xff]
        %v2578 = vld [vmem:[#allocation2 + $0x1e0] sm:$0xff]
        %v2579 = vld [vmem:[#allocation2 + $0x1e8] sm:$0xff]
        %v2580 = vld [vmem:[#allocation2 + $0x1f0] sm:$0xff]
        %v2581 = vld [vmem:[#allocation2 + $0x1f8] sm:$0xff]
        %v2582 = vmax.f32 %v2518, 0.0
        %v2583 = vmax.f32 %v2519, 0.0
        %v2584 = vmax.f32 %v2520, 0.0
        %v2585 = vmax.f32 %v2521, 0.0
        %v2586 = vmax.f32 %v2522, 0.0
        %v2587 = vmax.f32 %v2523, 0.0
        %v2588 = vmax.f32 %v2524, 0.0
        %v2589 = vmax.f32 %v2525, 0.0
        %v2590 = vmax.f32 %v2526, 0.0
        %v2591 = vmax.f32 %v2527, 0.0
        %v2592 = vmax.f32 %v2528, 0.0
        %v2593 = vmax.f32 %v2529, 0.0
        %v2594 = vmax.f32 %v2530, 0.0
        %v2595 = vmax.f32 %v2531, 0.0
        %v2596 = vmax.f32 %v2532, 0.0
        %v2597 = vmax.f32 %v2533, 0.0
        %v2598 = vmax.f32 %v2534, 0.0
        %v2599 = vmax.f32 %v2535, 0.0
        %v2600 = vmax.f32 %v2536, 0.0
        %v2601 = vmax.f32 %v2537, 0.0
        %v2602 = vmax.f32 %v2538, 0.0
        %v2603 = vmax.f32 %v2539, 0.0
        %v2604 = vmax.f32 %v2540, 0.0
        %v2605 = vmax.f32 %v2541, 0.0
        %v2606 = vmax.f32 %v2542, 0.0
        %v2607 = vmax.f32 %v2543, 0.0
        %v2608 = vmax.f32 %v2544, 0.0
        %v2609 = vmax.f32 %v2545, 0.0
        %v2610 = vmax.f32 %v2546, 0.0
        %v2611 = vmax.f32 %v2547, 0.0
        %v2612 = vmax.f32 %v2548, 0.0
        %v2613 = vmax.f32 %v2549, 0.0
        %v2614 = vmax.f32 %v2550, 0.0
        %v2615 = vmax.f32 %v2551, 0.0
        %v2616 = vmax.f32 %v2552, 0.0
        %v2617 = vmax.f32 %v2553, 0.0
        %v2618 = vmax.f32 %v2554, 0.0
        %v2619 = vmax.f32 %v2555, 0.0
        %v2620 = vmax.f32 %v2556, 0.0
        %v2621 = vmax.f32 %v2557, 0.0
        %v2622 = vmax.f32 %v2558, 0.0
        %v2623 = vmax.f32 %v2559, 0.0
        %v2624 = vmax.f32 %v2560, 0.0
        %v2625 = vmax.f32 %v2561, 0.0
        %v2626 = vmax.f32 %v2562, 0.0
        %v2627 = vmax.f32 %v2563, 0.0
        %v2628 = vmax.f32 %v2564, 0.0
        %v2629 = vmax.f32 %v2565, 0.0
        %v2630 = vmax.f32 %v2566, 0.0
        %v2631 = vmax.f32 %v2567, 0.0
        %v2632 = vmax.f32 %v2568, 0.0
        %v2633 = vmax.f32 %v2569, 0.0
        %v2634 = vmax.f32 %v2570, 0.0
        %v2635 = vmax.f32 %v2571, 0.0
        %v2636 = vmax.f32 %v2572, 0.0
        %v2637 = vmax.f32 %v2573, 0.0
        %v2638 = vmax.f32 %v2574, 0.0
        %v2639 = vmax.f32 %v2575, 0.0
        %v2640 = vmax.f32 %v2576, 0.0
        %v2641 = vmax.f32 %v2577, 0.0
        %v2642 = vmax.f32 %v2578, 0.0
        %v2643 = vmax.f32 %v2579, 0.0
        %v2644 = vmax.f32 %v2580, 0.0
        %v2645 = vmax.f32 %v2581, 0.0
        %v2646 = vpack.c.bf16 %v2583, %v2582
        %v2647 = vpack.c.bf16 %v2585, %v2584
        %v2648 = vpack.c.bf16 %v2587, %v2586
        %v2649 = vpack.c.bf16 %v2589, %v2588
        %v2650 = vpack.c.bf16 %v2591, %v2590
        %v2651 = vpack.c.bf16 %v2593, %v2592
        %v2652 = vpack.c.bf16 %v2595, %v2594
        %v2653 = vpack.c.bf16 %v2597, %v2596
        %v2654 = vpack.c.bf16 %v2599, %v2598
        %v2655 = vpack.c.bf16 %v2601, %v2600
        %v2656 = vpack.c.bf16 %v2603, %v2602
        %v2657 = vpack.c.bf16 %v2605, %v2604
        %v2658 = vpack.c.bf16 %v2607, %v2606
        %v2659 = vpack.c.bf16 %v2609, %v2608
        %v2660 = vpack.c.bf16 %v2611, %v2610
        %v2661 = vpack.c.bf16 %v2613, %v2612
        %v2662 = vpack.c.bf16 %v2615, %v2614
        %v2663 = vpack.c.bf16 %v2617, %v2616
        %v2664 = vpack.c.bf16 %v2619, %v2618
        %v2665 = vpack.c.bf16 %v2621, %v2620
        %v2666 = vpack.c.bf16 %v2623, %v2622
        %v2667 = vpack.c.bf16 %v2625, %v2624
        %v2668 = vpack.c.bf16 %v2627, %v2626
        %v2669 = vpack.c.bf16 %v2629, %v2628
        %v2670 = vpack.c.bf16 %v2631, %v2630
        %v2671 = vpack.c.bf16 %v2633, %v2632
        %v2672 = vpack.c.bf16 %v2635, %v2634
        %v2673 = vpack.c.bf16 %v2637, %v2636
        %v2674 = vpack.c.bf16 %v2639, %v2638
        %v2675 = vpack.c.bf16 %v2641, %v2640
        %v2676 = vpack.c.bf16 %v2643, %v2642
        %v2677 = vpack.c.bf16 %v2645, %v2644
        %v2710 = vunpack.c.l.b16 %v2646
        %v2711 = vunpack.c.h.b16 %v2646
        %v2712 = vunpack.c.l.b16 %v2647
        %v2713 = vunpack.c.h.b16 %v2647
        %v2714 = vunpack.c.l.b16 %v2648
        %v2715 = vunpack.c.h.b16 %v2648
        %v2716 = vunpack.c.l.b16 %v2649
        %v2717 = vunpack.c.h.b16 %v2649
        %v2718 = vunpack.c.l.b16 %v2650
        %v2719 = vunpack.c.h.b16 %v2650
        %v2720 = vunpack.c.l.b16 %v2651
        %v2721 = vunpack.c.h.b16 %v2651
        %v2722 = vunpack.c.l.b16 %v2652
        %v2723 = vunpack.c.h.b16 %v2652
        %v2724 = vunpack.c.l.b16 %v2653
        %v2725 = vunpack.c.h.b16 %v2653
        %v2726 = vunpack.c.l.b16 %v2654
        %v2727 = vunpack.c.h.b16 %v2654
        %v2728 = vunpack.c.l.b16 %v2655
        %v2729 = vunpack.c.h.b16 %v2655
        %v2730 = vunpack.c.l.b16 %v2656
        %v2731 = vunpack.c.h.b16 %v2656
        %v2732 = vunpack.c.l.b16 %v2657
        %v2733 = vunpack.c.h.b16 %v2657
        %v2734 = vunpack.c.l.b16 %v2658
        %v2735 = vunpack.c.h.b16 %v2658
        %v2736 = vunpack.c.l.b16 %v2659
        %v2737 = vunpack.c.h.b16 %v2659
        %v2738 = vunpack.c.l.b16 %v2660
        %v2739 = vunpack.c.h.b16 %v2660
        %v2740 = vunpack.c.l.b16 %v2661
        %v2741 = vunpack.c.h.b16 %v2661
        %v2742 = vunpack.c.l.b16 %v2662
        %v2743 = vunpack.c.h.b16 %v2662
        %v2744 = vunpack.c.l.b16 %v2663
        %v2745 = vunpack.c.h.b16 %v2663
        %v2746 = vunpack.c.l.b16 %v2664
        %v2747 = vunpack.c.h.b16 %v2664
        %v2748 = vunpack.c.l.b16 %v2665
        %v2749 = vunpack.c.h.b16 %v2665
        %v2750 = vunpack.c.l.b16 %v2666
        %v2751 = vunpack.c.h.b16 %v2666
        %v2752 = vunpack.c.l.b16 %v2667
        %v2753 = vunpack.c.h.b16 %v2667
        %v2754 = vunpack.c.l.b16 %v2668
        %v2755 = vunpack.c.h.b16 %v2668
        %v2756 = vunpack.c.l.b16 %v2669
        %v2757 = vunpack.c.h.b16 %v2669
        %v2758 = vunpack.c.l.b16 %v2670
        %v2759 = vunpack.c.h.b16 %v2670
        %v2760 = vunpack.c.l.b16 %v2671
        %v2761 = vunpack.c.h.b16 %v2671
        %v2762 = vunpack.c.l.b16 %v2672
        %v2763 = vunpack.c.h.b16 %v2672
        %v2764 = vunpack.c.l.b16 %v2673
        %v2765 = vunpack.c.h.b16 %v2673
        %v2766 = vunpack.c.l.b16 %v2674
        %v2767 = vunpack.c.h.b16 %v2674
        %v2768 = vunpack.c.l.b16 %v2675
        %v2769 = vunpack.c.h.b16 %v2675
        %v2770 = vunpack.c.l.b16 %v2676
        %v2771 = vunpack.c.h.b16 %v2676
        %v2772 = vunpack.c.l.b16 %v2677
        %v2773 = vunpack.c.h.b16 %v2677
        %v2774 = vpack.c.b16 %v2710, %v2710
        %v2775 = vpack.c.b16 %v2711, %v2711
        %v2776 = vpack.c.b16 %v2712, %v2712
        %v2777 = vpack.c.b16 %v2713, %v2713
        %v2778 = vpack.c.b16 %v2714, %v2714
        %v2779 = vpack.c.b16 %v2715, %v2715
        %v2780 = vpack.c.b16 %v2716, %v2716
        %v2781 = vpack.c.b16 %v2717, %v2717
        %v2782 = vpack.c.b16 %v2718, %v2718
        %v2783 = vpack.c.b16 %v2719, %v2719
        %v2784 = vpack.c.b16 %v2720, %v2720
        %v2785 = vpack.c.b16 %v2721, %v2721
        %v2786 = vpack.c.b16 %v2722, %v2722
        %v2787 = vpack.c.b16 %v2723, %v2723
        %v2788 = vpack.c.b16 %v2724, %v2724
        %v2789 = vpack.c.b16 %v2725, %v2725
        %v2790 = vpack.c.b16 %v2726, %v2726
        %v2791 = vpack.c.b16 %v2727, %v2727
        %v2792 = vpack.c.b16 %v2728, %v2728
        %v2793 = vpack.c.b16 %v2729, %v2729
        %v2794 = vpack.c.b16 %v2730, %v2730
        %v2795 = vpack.c.b16 %v2731, %v2731
        %v2796 = vpack.c.b16 %v2732, %v2732
        %v2797 = vpack.c.b16 %v2733, %v2733
        %v2798 = vpack.c.b16 %v2734, %v2734
        %v2799 = vpack.c.b16 %v2735, %v2735
        %v2800 = vpack.c.b16 %v2736, %v2736
        %v2801 = vpack.c.b16 %v2737, %v2737
        %v2802 = vpack.c.b16 %v2738, %v2738
        %v2803 = vpack.c.b16 %v2739, %v2739
        %v2804 = vpack.c.b16 %v2740, %v2740
        %v2805 = vpack.c.b16 %v2741, %v2741
        %v2806 = vpack.c.b16 %v2742, %v2742
        %v2807 = vpack.c.b16 %v2743, %v2743
        %v2808 = vpack.c.b16 %v2744, %v2744
        %v2809 = vpack.c.b16 %v2745, %v2745
        %v2810 = vpack.c.b16 %v2746, %v2746
        %v2811 = vpack.c.b16 %v2747, %v2747
        %v2812 = vpack.c.b16 %v2748, %v2748
        %v2813 = vpack.c.b16 %v2749, %v2749
        %v2814 = vpack.c.b16 %v2750, %v2750
        %v2815 = vpack.c.b16 %v2751, %v2751
        %v2816 = vpack.c.b16 %v2752, %v2752
        %v2817 = vpack.c.b16 %v2753, %v2753
        %v2818 = vpack.c.b16 %v2754, %v2754
        %v2819 = vpack.c.b16 %v2755, %v2755
        %v2820 = vpack.c.b16 %v2756, %v2756
        %v2821 = vpack.c.b16 %v2757, %v2757
        %v2822 = vpack.c.b16 %v2758, %v2758
        %v2823 = vpack.c.b16 %v2759, %v2759
        %v2824 = vpack.c.b16 %v2760, %v2760
        %v2825 = vpack.c.b16 %v2761, %v2761
        %v2826 = vpack.c.b16 %v2762, %v2762
        %v2827 = vpack.c.b16 %v2763, %v2763
        %v2828 = vpack.c.b16 %v2764, %v2764
        %v2829 = vpack.c.b16 %v2765, %v2765
        %v2830 = vpack.c.b16 %v2766, %v2766
        %v2831 = vpack.c.b16 %v2767, %v2767
        %v2832 = vpack.c.b16 %v2768, %v2768
        %v2833 = vpack.c.b16 %v2769, %v2769
        %v2834 = vpack.c.b16 %v2770, %v2770
        %v2835 = vpack.c.b16 %v2771, %v2771
        %v2836 = vpack.c.b16 %v2772, %v2772
        %v2837 = vpack.c.b16 %v2773, %v2773
        %2902 = vst [vmem:[%s445] sm:$0xf] %v2774
        %2903 = vst [vmem:[%s445 + $0x4] sm:$0xf] %v2775
        %2904 = vst [vmem:[%s445 + $0x8] sm:$0xf] %v2776
        %2905 = vst [vmem:[%s445 + $0xc] sm:$0xf] %v2777
        %2906 = vst [vmem:[%s445 + $0x10] sm:$0xf] %v2778
        %2907 = vst [vmem:[%s445 + $0x14] sm:$0xf] %v2779
        %2908 = vst [vmem:[%s445 + $0x18] sm:$0xf] %v2780
        %2909 = vst [vmem:[%s445 + $0x1c] sm:$0xf] %v2781
        %2910 = vst [vmem:[%s445 + $0x20] sm:$0xf] %v2782
        %2911 = vst [vmem:[%s445 + $0x24] sm:$0xf] %v2783
        %2912 = vst [vmem:[%s445 + $0x28] sm:$0xf] %v2784
        %2913 = vst [vmem:[%s445 + $0x2c] sm:$0xf] %v2785
        %2914 = vst [vmem:[%s445 + $0x30] sm:$0xf] %v2786
        %2915 = vst [vmem:[%s445 + $0x34] sm:$0xf] %v2787
        %2916 = vst [vmem:[%s445 + $0x38] sm:$0xf] %v2788
        %2917 = vst [vmem:[%s445 + $0x3c] sm:$0xf] %v2789
        %2918 = vst [vmem:[%s445 + $0x40] sm:$0xf] %v2790
        %2919 = vst [vmem:[%s445 + $0x44] sm:$0xf] %v2791
        %2920 = vst [vmem:[%s445 + $0x48] sm:$0xf] %v2792
        %2921 = vst [vmem:[%s445 + $0x4c] sm:$0xf] %v2793
        %2922 = vst [vmem:[%s445 + $0x50] sm:$0xf] %v2794
        %2923 = vst [vmem:[%s445 + $0x54] sm:$0xf] %v2795
        %2924 = vst [vmem:[%s445 + $0x58] sm:$0xf] %v2796
        %2925 = vst [vmem:[%s445 + $0x5c] sm:$0xf] %v2797
        %2926 = vst [vmem:[%s445 + $0x60] sm:$0xf] %v2798
        %2927 = vst [vmem:[%s445 + $0x64] sm:$0xf] %v2799
        %2928 = vst [vmem:[%s445 + $0x68] sm:$0xf] %v2800
        %2929 = vst [vmem:[%s445 + $0x6c] sm:$0xf] %v2801
        %2930 = vst [vmem:[%s445 + $0x70] sm:$0xf] %v2802
        %2931 = vst [vmem:[%s445 + $0x74] sm:$0xf] %v2803
        %2932 = vst [vmem:[%s445 + $0x78] sm:$0xf] %v2804
        %2933 = vst [vmem:[%s445 + $0x7c] sm:$0xf] %v2805
        %2934 = vst [vmem:[%s445 + $0x80] sm:$0xf] %v2806
        %2935 = vst [vmem:[%s445 + $0x84] sm:$0xf] %v2807
        %2936 = vst [vmem:[%s445 + $0x88] sm:$0xf] %v2808
        %2937 = vst [vmem:[%s445 + $0x8c] sm:$0xf] %v2809
        %2938 = vst [vmem:[%s445 + $0x90] sm:$0xf] %v2810
        %2939 = vst [vmem:[%s445 + $0x94] sm:$0xf] %v2811
        %2940 = vst [vmem:[%s445 + $0x98] sm:$0xf] %v2812
        %2941 = vst [vmem:[%s445 + $0x9c] sm:$0xf] %v2813
        %2942 = vst [vmem:[%s445 + $0xa0] sm:$0xf] %v2814
        %2943 = vst [vmem:[%s445 + $0xa4] sm:$0xf] %v2815
        %2944 = vst [vmem:[%s445 + $0xa8] sm:$0xf] %v2816
        %2945 = vst [vmem:[%s445 + $0xac] sm:$0xf] %v2817
        %2946 = vst [vmem:[%s445 + $0xb0] sm:$0xf] %v2818
        %2947 = vst [vmem:[%s445 + $0xb4] sm:$0xf] %v2819
        %2948 = vst [vmem:[%s445 + $0xb8] sm:$0xf] %v2820
        %2949 = vst [vmem:[%s445 + $0xbc] sm:$0xf] %v2821
        %2950 = vst [vmem:[%s445 + $0xc0] sm:$0xf] %v2822
        %2951 = vst [vmem:[%s445 + $0xc4] sm:$0xf] %v2823
        %2952 = vst [vmem:[%s445 + $0xc8] sm:$0xf] %v2824
        %2953 = vst [vmem:[%s445 + $0xcc] sm:$0xf] %v2825
        %2954 = vst [vmem:[%s445 + $0xd0] sm:$0xf] %v2826
        %2955 = vst [vmem:[%s445 + $0xd4] sm:$0xf] %v2827
        %2956 = vst [vmem:[%s445 + $0xd8] sm:$0xf] %v2828
        %2957 = vst [vmem:[%s445 + $0xdc] sm:$0xf] %v2829
        %2958 = vst [vmem:[%s445 + $0xe0] sm:$0xf] %v2830
        %2959 = vst [vmem:[%s445 + $0xe4] sm:$0xf] %v2831
        %2960 = vst [vmem:[%s445 + $0xe8] sm:$0xf] %v2832
        %2961 = vst [vmem:[%s445 + $0xec] sm:$0xf] %v2833
        %2962 = vst [vmem:[%s445 + $0xf0] sm:$0xf] %v2834
        %2963 = vst [vmem:[%s445 + $0xf4] sm:$0xf] %v2835
        %2964 = vst [vmem:[%s445 + $0xf8] sm:$0xf] %v2836
        %2965 = vst [vmem:[%s445 + $0xfc] sm:$0xf] %v2837
      $region48: #{net_forward.8} parent=35 // pred_fallthru
        _
      %s2966 = smul.u32 64, %s33
      %p2967 = scmp.lt.s32.totalorder %s2966, 63
      %s2968 = scalar_select %p2967, %s2966, 63
      %s2969 = smul.addr %s2968, 4
      %s2970 = scalar_lea.vmem %s7, %s2969
      // Predicated region
      $region49: #{net_forward.8} parent=35 // pred_check
        %p2971 = pneg %p200
      $region50: #{net_forward.8} parent=35 // pred_check_branch
        %2973 = sbr.rel (%p2971) target = $region52
      $region51: #{net_forward.8} parent=35 // pred_region
        %s2974 = smul.u32 64, %s33
      $region52: #{net_forward.8} parent=35 // pred_fallthru
        _
      // Predicated region
      $region53: #{net_forward.8} parent=35 // pred_check
        %p2975 = pneg %p200
      $region54: #{net_forward.8} parent=35 // pred_check_branch
        %2977 = sbr.rel (%p2975) target = $region56
      $region55: #{net_forward.8} parent=35 // pred_region
        %s2978 = smul.u32 64, %s33
        %p2979 = scmp.lt.s32.totalorder %s2978, 63
        %s2980 = scalar_select %p2979, %s2978, 63
        %s2981 = smul.addr %s2980, 4
        %s2982 = scalar_lea.vmem %s7, %s2981
      $region56: #{net_forward.8} parent=35 // pred_fallthru
        _
    $region36: #{net_forward.8} parent=5 // pred_fallthru
      _
    %p2983 = scmp.le.s32.totalorder 2, %s24
    // Predicated region
    $region57: #{net_forward.8} parent=5 // pred_check
      %p2984 = pneg %p2983
    $region58: #{net_forward.8} parent=5 // pred_check_branch
      %2986 = sbr.rel (%p2984) target = $region60
    $region59: #{net_forward.8} parent=5 // pred_region
      %s2987 = ssub.s32 %s24, 2
    $region60: #{net_forward.8} parent=5 // pred_fallthru
      _
  $region6: #{net_forward.8} parent=0 // loop_footer
    %s28 = sadd.s32 1, %s24
  $region7: #{net_forward.8} parent=0 // loop_footer_branch
    %23 = sbr.rel target = $region3
  $region8: #{net_forward.8} parent=0 // loop_exit
    _

// kernel: net_forward.9
$region0: #{net_forward.9}
  #allocation0 [shape = 'u32[]', space=smem, size = 0x4, offset = 0x4, fixed_abs, tag = 'smem constant byte address 0x4 - core index']
  #allocation1 [shape = 'u32[144,128]{1,0:T(1,128)}', space=vmem, size = 0x12000, scoped, tag = 'internal scratch']
  %s0 = inlined_call_operand.vmem [shape: bf16[512,128], index: 0, kind: input, shape index: {}]
  %s1 = inlined_call_operand.vmem [shape: bf16[128,128], index: 1, kind: input, shape index: {}]
  %s2 = inlined_call_operand.vmem [shape: f32[1,128], index: 2, kind: input, shape index: {}]
  %s3 = inlined_call_operand.vmem [shape: bf16[128,128], index: 3, kind: input, shape index: {}]
  %s4 = inlined_call_operand.vmem [shape: f32[1,128], index: 4, kind: input, shape index: {}]
  %s5 = inlined_call_operand.vmem [shape: f32[512,128], index: 5, kind: output, shape index: {0}]
  %s6 = inlined_call_operand.vmem [shape: f32[512,128], index: 6, kind: output, shape index: {1}]
  %7 = xla_tuple %s5, %s6
  %s8 = sld [smem:[#allocation0]]
  $region38: #{net_forward.9} parent=0
    _
  %s10 = ssub.s32 1, %s8
  %s11 = scalar_select 0, %s10, %s8
  // Predicated region
  $region2: #{net_forward.9} parent=0 // pred_check
    _
  $region3: #{net_forward.9} parent=0 // pred_check_branch
    %13 = sbr.rel (0) target = $region5
  $region4: #{net_forward.9} parent=0 // pred_region
    _
  $region5: #{net_forward.9} parent=0 // pred_fallthru
    _
  // Predicated region
  $region6: #{net_forward.9} parent=0 // pred_check
    _
  $region7: #{net_forward.9} parent=0 // pred_check_branch
    %15 = sbr.rel (0) target = $region9
  $region8: #{net_forward.9} parent=0 // pred_region
    _
  $region9: #{net_forward.9} parent=0 // pred_fallthru
    _
  // Predicated region
  $region10: #{net_forward.9} parent=0 // pred_check
    _
  $region11: #{net_forward.9} parent=0 // pred_check_branch
    %17 = sbr.rel (0) target = $region13
  $region12: #{net_forward.9} parent=0 // pred_region
    _
  $region13: #{net_forward.9} parent=0 // pred_fallthru
    _
  // Predicated region
  $region14: #{net_forward.9} parent=0 // pred_check
    _
  $region15: #{net_forward.9} parent=0 // pred_check_branch
    %19 = sbr.rel (0) target = $region17
  $region16: #{net_forward.9} parent=0 // pred_region
    _
  $region17: #{net_forward.9} parent=0 // pred_fallthru
    _
  // Predicated region
  $region18: #{net_forward.9} parent=0 // pred_check
    _
  $region19: #{net_forward.9} parent=0 // pred_check_branch
    %21 = sbr.rel (0) target = $region21
  $region20: #{net_forward.9} parent=0 // pred_region
    _
  $region21: #{net_forward.9} parent=0 // pred_fallthru
    _
  %v23 = vld [vmem:[%s0] sm:$0xf]
  %v24 = vld [vmem:[%s0 + $0x4] sm:$0xf]
  %v25 = vld [vmem:[%s0 + $0x8] sm:$0xf]
  %v26 = vld [vmem:[%s0 + $0xc] sm:$0xf]
  %v27 = vld [vmem:[%s0 + $0x10] sm:$0xf]
  %v28 = vld [vmem:[%s0 + $0x14] sm:$0xf]
  %v29 = vld [vmem:[%s0 + $0x18] sm:$0xf]
  %v30 = vld [vmem:[%s0 + $0x1c] sm:$0xf]
  %v31 = vld [vmem:[%s0 + $0x20] sm:$0xf]
  %v32 = vld [vmem:[%s0 + $0x24] sm:$0xf]
  %v33 = vld [vmem:[%s0 + $0x28] sm:$0xf]
  %v34 = vld [vmem:[%s0 + $0x2c] sm:$0xf]
  %v35 = vld [vmem:[%s0 + $0x30] sm:$0xf]
  %v36 = vld [vmem:[%s0 + $0x34] sm:$0xf]
  %v37 = vld [vmem:[%s0 + $0x38] sm:$0xf]
  %v38 = vld [vmem:[%s0 + $0x3c] sm:$0xf]
  %v39 = vld [vmem:[%s0 + $0x40] sm:$0xf]
  %v40 = vld [vmem:[%s0 + $0x44] sm:$0xf]
  %v41 = vld [vmem:[%s0 + $0x48] sm:$0xf]
  %v42 = vld [vmem:[%s0 + $0x4c] sm:$0xf]
  %v43 = vld [vmem:[%s0 + $0x50] sm:$0xf]
  %v44 = vld [vmem:[%s0 + $0x54] sm:$0xf]
  %v45 = vld [vmem:[%s0 + $0x58] sm:$0xf]
  %v46 = vld [vmem:[%s0 + $0x5c] sm:$0xf]
  %v47 = vld [vmem:[%s0 + $0x60] sm:$0xf]
  %v48 = vld [vmem:[%s0 + $0x64] sm:$0xf]
  %v49 = vld [vmem:[%s0 + $0x68] sm:$0xf]
  %v50 = vld [vmem:[%s0 + $0x6c] sm:$0xf]
  %v51 = vld [vmem:[%s0 + $0x70] sm:$0xf]
  %v52 = vld [vmem:[%s0 + $0x74] sm:$0xf]
  %v53 = vld [vmem:[%s0 + $0x78] sm:$0xf]
  %v54 = vld [vmem:[%s0 + $0x7c] sm:$0xf]
  %v55 = vld [vmem:[%s0 + $0x80] sm:$0xf]
  %v56 = vld [vmem:[%s0 + $0x84] sm:$0xf]
  %v57 = vld [vmem:[%s0 + $0x88] sm:$0xf]
  %v58 = vld [vmem:[%s0 + $0x8c] sm:$0xf]
  %v59 = vld [vmem:[%s0 + $0x90] sm:$0xf]
  %v60 = vld [vmem:[%s0 + $0x94] sm:$0xf]
  %v61 = vld [vmem:[%s0 + $0x98] sm:$0xf]
  %v62 = vld [vmem:[%s0 + $0x9c] sm:$0xf]
  %v63 = vld [vmem:[%s0 + $0xa0] sm:$0xf]
  %v64 = vld [vmem:[%s0 + $0xa4] sm:$0xf]
  %v65 = vld [vmem:[%s0 + $0xa8] sm:$0xf]
  %v66 = vld [vmem:[%s0 + $0xac] sm:$0xf]
  %v67 = vld [vmem:[%s0 + $0xb0] sm:$0xf]
  %v68 = vld [vmem:[%s0 + $0xb4] sm:$0xf]
  %v69 = vld [vmem:[%s0 + $0xb8] sm:$0xf]
  %v70 = vld [vmem:[%s0 + $0xbc] sm:$0xf]
  %v71 = vld [vmem:[%s0 + $0xc0] sm:$0xf]
  %v72 = vld [vmem:[%s0 + $0xc4] sm:$0xf]
  %v73 = vld [vmem:[%s0 + $0xc8] sm:$0xf]
  %v74 = vld [vmem:[%s0 + $0xcc] sm:$0xf]
  %v75 = vld [vmem:[%s0 + $0xd0] sm:$0xf]
  %v76 = vld [vmem:[%s0 + $0xd4] sm:$0xf]
  %v77 = vld [vmem:[%s0 + $0xd8] sm:$0xf]
  %v78 = vld [vmem:[%s0 + $0xdc] sm:$0xf]
  %v79 = vld [vmem:[%s0 + $0xe0] sm:$0xf]
  %v80 = vld [vmem:[%s0 + $0xe4] sm:$0xf]
  %v81 = vld [vmem:[%s0 + $0xe8] sm:$0xf]
  %v82 = vld [vmem:[%s0 + $0xec] sm:$0xf]
  %v83 = vld [vmem:[%s0 + $0xf0] sm:$0xf]
  %v84 = vld [vmem:[%s0 + $0xf4] sm:$0xf]
  %v85 = vld [vmem:[%s0 + $0xf8] sm:$0xf]
  %v86 = vld [vmem:[%s0 + $0xfc] sm:$0xf]
  %v87 = vld [vmem:[%s1] sm:$0xf]
  %v88 = vld [vmem:[%s1 + $0x4] sm:$0xf]
  %v89 = vld [vmem:[%s1 + $0x8] sm:$0xf]
  %v90 = vld [vmem:[%s1 + $0xc] sm:$0xf]
  %v91 = vld [vmem:[%s1 + $0x10] sm:$0xf]
  %v92 = vld [vmem:[%s1 + $0x14] sm:$0xf]
  %v93 = vld [vmem:[%s1 + $0x18] sm:$0xf]
  %v94 = vld [vmem:[%s1 + $0x1c] sm:$0xf]
  %v95 = vld [vmem:[%s1 + $0x20] sm:$0xf]
  %v96 = vld [vmem:[%s1 + $0x24] sm:$0xf]
  %v97 = vld [vmem:[%s1 + $0x28] sm:$0xf]
  %v98 = vld [vmem:[%s1 + $0x2c] sm:$0xf]
  %v99 = vld [vmem:[%s1 + $0x30] sm:$0xf]
  %v100 = vld [vmem:[%s1 + $0x34] sm:$0xf]
  %v101 = vld [vmem:[%s1 + $0x38] sm:$0xf]
  %v102 = vld [vmem:[%s1 + $0x3c] sm:$0xf]
  %v103 = vld [vmem:[%s2] sm:$0x1]
  %v105 = vlaneseq
  %v106 = vshrl.u32 %v105, 7
  %v107 = vsub.s32 0, %v106
  %v108 = vrot.slane %v103, %v107
  %v174 = vunpack.c.l.b16 %v23
  %v175 = vunpack.c.l.b16 %v24
  %v176 = vunpack.c.l.b16 %v25
  %v177 = vunpack.c.l.b16 %v26
  %v178 = vunpack.c.l.b16 %v27
  %v179 = vunpack.c.l.b16 %v28
  %v180 = vunpack.c.l.b16 %v29
  %v181 = vunpack.c.l.b16 %v30
  %v182 = vunpack.c.l.b16 %v31
  %v183 = vunpack.c.l.b16 %v32
  %v184 = vunpack.c.l.b16 %v33
  %v185 = vunpack.c.l.b16 %v34
  %v186 = vunpack.c.l.b16 %v35
  %v187 = vunpack.c.l.b16 %v36
  %v188 = vunpack.c.l.b16 %v37
  %v189 = vunpack.c.l.b16 %v38
  %v190 = vunpack.c.l.b16 %v39
  %v191 = vunpack.c.l.b16 %v40
  %v192 = vunpack.c.l.b16 %v41
  %v193 = vunpack.c.l.b16 %v42
  %v194 = vunpack.c.l.b16 %v43
  %v195 = vunpack.c.l.b16 %v44
  %v196 = vunpack.c.l.b16 %v45
  %v197 = vunpack.c.l.b16 %v46
  %v198 = vunpack.c.l.b16 %v47
  %v199 = vunpack.c.l.b16 %v48
  %v200 = vunpack.c.l.b16 %v49
  %v201 = vunpack.c.l.b16 %v50
  %v202 = vunpack.c.l.b16 %v51
  %v203 = vunpack.c.l.b16 %v52
  %v204 = vunpack.c.l.b16 %v53
  %v205 = vunpack.c.l.b16 %v54
  %v206 = vunpack.c.l.b16 %v55
  %v207 = vunpack.c.l.b16 %v56
  %v208 = vunpack.c.l.b16 %v57
  %v209 = vunpack.c.l.b16 %v58
  %v210 = vunpack.c.l.b16 %v59
  %v211 = vunpack.c.l.b16 %v60
  %v212 = vunpack.c.l.b16 %v61
  %v213 = vunpack.c.l.b16 %v62
  %v214 = vunpack.c.l.b16 %v63
  %v215 = vunpack.c.l.b16 %v64
  %v216 = vunpack.c.l.b16 %v65
  %v217 = vunpack.c.l.b16 %v66
  %v218 = vunpack.c.l.b16 %v67
  %v219 = vunpack.c.l.b16 %v68
  %v220 = vunpack.c.l.b16 %v69
  %v221 = vunpack.c.l.b16 %v70
  %v222 = vunpack.c.l.b16 %v71
  %v223 = vunpack.c.l.b16 %v72
  %v224 = vunpack.c.l.b16 %v73
  %v225 = vunpack.c.l.b16 %v74
  %v226 = vunpack.c.l.b16 %v75
  %v227 = vunpack.c.l.b16 %v76
  %v228 = vunpack.c.l.b16 %v77
  %v229 = vunpack.c.l.b16 %v78
  %v230 = vunpack.c.l.b16 %v79
  %v231 = vunpack.c.l.b16 %v80
  %v232 = vunpack.c.l.b16 %v81
  %v233 = vunpack.c.l.b16 %v82
  %v234 = vunpack.c.l.b16 %v83
  %v235 = vunpack.c.l.b16 %v84
  %v236 = vunpack.c.l.b16 %v85
  %v237 = vunpack.c.l.b16 %v86
  %v238 = vpack.c.b16 %v175, %v174
  %v239 = vpack.c.b16 %v177, %v176
  %v240 = vpack.c.b16 %v179, %v178
  %v241 = vpack.c.b16 %v181, %v180
  %v242 = vpack.c.b16 %v183, %v182
  %v243 = vpack.c.b16 %v185, %v184
  %v244 = vpack.c.b16 %v187, %v186
  %v245 = vpack.c.b16 %v189, %v188
  %v246 = vpack.c.b16 %v191, %v190
  %v247 = vpack.c.b16 %v193, %v192
  %v248 = vpack.c.b16 %v195, %v194
  %v249 = vpack.c.b16 %v197, %v196
  %v250 = vpack.c.b16 %v199, %v198
  %v251 = vpack.c.b16 %v201, %v200
  %v252 = vpack.c.b16 %v203, %v202
  %v253 = vpack.c.b16 %v205, %v204
  %v254 = vpack.c.b16 %v207, %v206
  %v255 = vpack.c.b16 %v209, %v208
  %v256 = vpack.c.b16 %v211, %v210
  %v257 = vpack.c.b16 %v213, %v212
  %v258 = vpack.c.b16 %v215, %v214
  %v259 = vpack.c.b16 %v217, %v216
  %v260 = vpack.c.b16 %v219, %v218
  %v261 = vpack.c.b16 %v221, %v220
  %v262 = vpack.c.b16 %v223, %v222
  %v263 = vpack.c.b16 %v225, %v224
  %v264 = vpack.c.b16 %v227, %v226
  %v265 = vpack.c.b16 %v229, %v228
  %v266 = vpack.c.b16 %v231, %v230
  %v267 = vpack.c.b16 %v233, %v232
  %v268 = vpack.c.b16 %v235, %v234
  %v269 = vpack.c.b16 %v237, %v236
  %v318 = vunpack.c.l.b16 %v87
  %v319 = vunpack.c.l.b16 %v88
  %v320 = vunpack.c.l.b16 %v89
  %v321 = vunpack.c.l.b16 %v90
  %v322 = vunpack.c.l.b16 %v91
  %v323 = vunpack.c.l.b16 %v92
  %v324 = vunpack.c.l.b16 %v93
  %v325 = vunpack.c.l.b16 %v94
  %v326 = vunpack.c.l.b16 %v95
  %v327 = vunpack.c.l.b16 %v96
  %v328 = vunpack.c.l.b16 %v97
  %v329 = vunpack.c.l.b16 %v98
  %v330 = vunpack.c.l.b16 %v99
  %v331 = vunpack.c.l.b16 %v100
  %v332 = vunpack.c.l.b16 %v101
  %v333 = vunpack.c.l.b16 %v102
  %v334 = vpack.c.b16 %v319, %v318
  %v335 = vpack.c.b16 %v321, %v320
  %v336 = vpack.c.b16 %v323, %v322
  %v337 = vpack.c.b16 %v325, %v324
  %v338 = vpack.c.b16 %v327, %v326
  %v339 = vpack.c.b16 %v329, %v328
  %v340 = vpack.c.b16 %v331, %v330
  %v341 = vpack.c.b16 %v333, %v332
  %350 = vmatprep.subr.bf16.mxu0 0
  %351 = vmatpush1.bf16.msra.mxu0 %v334
  %352 = vmatprep.subr.bf16.mxu0 0
  %353 = vmatpush1.bf16.msra.mxu0 %v335
  %354 = vmatprep.subr.bf16.mxu0 0
  %355 = vmatpush1.bf16.msra.mxu0 %v336
  %356 = vmatprep.subr.bf16.mxu0 0
  %357 = vmatpush1.bf16.msra.mxu0 %v337
  %358 = vmatprep.subr.bf16.mxu0 0
  %359 = vmatpush1.bf16.msra.mxu0 %v338
  %360 = vmatprep.subr.bf16.mxu0 0
  %361 = vmatpush1.bf16.msra.mxu0 %v339
  %362 = vmatprep.subr.bf16.mxu0 0
  %363 = vmatpush1.bf16.msra.mxu0 %v340
  %364 = vmatprep.subr.bf16.mxu0 0
  %365 = vmatpush1.bf16.msra.mxu0 %v341
  %366 = vmatprep.subr.bf16.mxu0 0
  %367 = vmatpush1.bf16.msra.mxu0 0
  %368 = vmatprep.subr.bf16.mxu0 0
  %369 = vmatpush1.bf16.msra.mxu0 0
  %370 = vmatprep.subr.bf16.mxu0 0
  %371 = vmatpush1.bf16.msra.mxu0 0
  %372 = vmatprep.subr.bf16.mxu0 0
  %373 = vmatpush1.bf16.msra.mxu0 0
  %374 = vmatprep.subr.bf16.mxu0 0
  %375 = vmatpush1.bf16.msra.mxu0 0
  %376 = vmatprep.subr.bf16.mxu0 0
  %377 = vmatpush1.bf16.msra.mxu0 0
  %378 = vmatprep.subr.bf16.mxu0 0
  %379 = vmatpush1.bf16.msra.mxu0 0
  %380 = vmatprep.subr.bf16.mxu0 0
  %381 = vmatpush1.bf16.msra.mxu0 0
  %382 = vmatprep.mubr.bf16.mxu0 0
  %383 = vmatmul.mubr.bf16.gmra.mrb[0].mxu0 %v238
  %v384 = vpop.f32.mrb[0].mxu0
  %v385 = vadd.f32 %v108, %v384
  %v386 = vpop.f32.mrb[0].mxu0
  %v387 = vpop.f32.mrb[0].mxu0
  %v388 = vadd.f32 %v108, %v387
  %v389 = vpop.f32.mrb[0].mxu0
  %390 = vmatprep.mubr.bf16.mxu0 0
  %391 = vmatmul.mubr.bf16.gmra.mrb[0].mxu0 %v239
  %v392 = vpop.f32.mrb[0].mxu0
  %v393 = vadd.f32 %v108, %v392
  %v394 = vpop.f32.mrb[0].mxu0
  %v395 = vpop.f32.mrb[0].mxu0
  %v396 = vadd.f32 %v108, %v395
  %v397 = vpop.f32.mrb[0].mxu0
  %398 = vmatprep.mubr.bf16.mxu0 0
  %399 = vmatmul.mubr.bf16.gmra.mrb[0].mxu0 %v240
  %v400 = vpop.f32.mrb[0].mxu0
  %v401 = vadd.f32 %v108, %v400
  %v402 = vpop.f32.mrb[0].mxu0
  %v403 = vpop.f32.mrb[0].mxu0
  %v404 = vadd.f32 %v108, %v403
  %v405 = vpop.f32.mrb[0].mxu0
  %406 = vmatprep.mubr.bf16.mxu0 0
  %407 = vmatmul.mubr.bf16.gmra.mrb[0].mxu0 %v241
  %v408 = vpop.f32.mrb[0].mxu0
  %v409 = vadd.f32 %v108, %v408
  %v410 = vpop.f32.mrb[0].mxu0
  %v411 = vpop.f32.mrb[0].mxu0
  %v412 = vadd.f32 %v108, %v411
  %v413 = vpop.f32.mrb[0].mxu0
  %414 = vmatprep.mubr.bf16.mxu0 0
  %415 = vmatmul.mubr.bf16.gmra.mrb[0].mxu0 %v242
  %v416 = vpop.f32.mrb[0].mxu0
  %v417 = vadd.f32 %v108, %v416
  %v418 = vpop.f32.mrb[0].mxu0
  %v419 = vpop.f32.mrb[0].mxu0
  %v420 = vadd.f32 %v108, %v419
  %v421 = vpop.f32.mrb[0].mxu0
  %422 = vmatprep.mubr.bf16.mxu0 0
  %423 = vmatmul.mubr.bf16.gmra.mrb[0].mxu0 %v243
  %v424 = vpop.f32.mrb[0].mxu0
  %v425 = vadd.f32 %v108, %v424
  %v426 = vpop.f32.mrb[0].mxu0
  %v427 = vpop.f32.mrb[0].mxu0
  %v428 = vadd.f32 %v108, %v427
  %v429 = vpop.f32.mrb[0].mxu0
  %430 = vmatprep.mubr.bf16.mxu0 0
  %431 = vmatmul.mubr.bf16.gmra.mrb[0].mxu0 %v244
  %v432 = vpop.f32.mrb[0].mxu0
  %v433 = vadd.f32 %v108, %v432
  %v434 = vpop.f32.mrb[0].mxu0
  %v435 = vpop.f32.mrb[0].mxu0
  %v436 = vadd.f32 %v108, %v435
  %v437 = vpop.f32.mrb[0].mxu0
  %438 = vmatprep.mubr.bf16.mxu0 0
  %439 = vmatmul.mubr.bf16.gmra.mrb[0].mxu0 %v245
  %v440 = vpop.f32.mrb[0].mxu0
  %v441 = vadd.f32 %v108, %v440
  %v442 = vpop.f32.mrb[0].mxu0
  %v443 = vpop.f32.mrb[0].mxu0
  %v444 = vadd.f32 %v108, %v443
  %v445 = vpop.f32.mrb[0].mxu0
  %446 = vmatprep.mubr.bf16.mxu0 0
  %447 = vmatmul.mubr.bf16.gmra.mrb[0].mxu0 %v246
  %v448 = vpop.f32.mrb[0].mxu0
  %v449 = vadd.f32 %v108, %v448
  %v450 = vpop.f32.mrb[0].mxu0
  %v451 = vpop.f32.mrb[0].mxu0
  %v452 = vadd.f32 %v108, %v451
  %v453 = vpop.f32.mrb[0].mxu0
  %454 = vmatprep.mubr.bf16.mxu0 0
  %455 = vmatmul.mubr.bf16.gmra.mrb[0].mxu0 %v247
  %v456 = vpop.f32.mrb[0].mxu0
  %v457 = vadd.f32 %v108, %v456
  %v458 = vpop.f32.mrb[0].mxu0
  %v459 = vpop.f32.mrb[0].mxu0
  %v460 = vadd.f32 %v108, %v459
  %v461 = vpop.f32.mrb[0].mxu0
  %462 = vmatprep.mubr.bf16.mxu0 0
  %463 = vmatmul.mubr.bf16.gmra.mrb[0].mxu0 %v248
  %v464 = vpop.f32.mrb[0].mxu0
  %v465 = vadd.f32 %v108, %v464
  %v466 = vpop.f32.mrb[0].mxu0
  %v467 = vpop.f32.mrb[0].mxu0
  %v468 = vadd.f32 %v108, %v467
  %v469 = vpop.f32.mrb[0].mxu0
  %470 = vmatprep.mubr.bf16.mxu0 0
  %471 = vmatmul.mubr.bf16.gmra.mrb[0].mxu0 %v249
  %v472 = vpop.f32.mrb[0].mxu0
  %v473 = vadd.f32 %v108, %v472
  %v474 = vpop.f32.mrb[0].mxu0
  %v475 = vpop.f32.mrb[0].mxu0
  %v476 = vadd.f32 %v108, %v475
  %v477 = vpop.f32.mrb[0].mxu0
  %478 = vmatprep.mubr.bf16.mxu0 0
  %479 = vmatmul.mubr.bf16.gmra.mrb[0].mxu0 %v250
  %v480 = vpop.f32.mrb[0].mxu0
  %v481 = vadd.f32 %v108, %v480
  %v482 = vpop.f32.mrb[0].mxu0
  %v483 = vpop.f32.mrb[0].mxu0
  %v484 = vadd.f32 %v108, %v483
  %v485 = vpop.f32.mrb[0].mxu0
  %486 = vmatprep.mubr.bf16.mxu0 0
  %487 = vmatmul.mubr.bf16.gmra.mrb[0].mxu0 %v251
  %v488 = vpop.f32.mrb[0].mxu0
  %v489 = vadd.f32 %v108, %v488
  %v490 = vpop.f32.mrb[0].mxu0
  %v491 = vpop.f32.mrb[0].mxu0
  %v492 = vadd.f32 %v108, %v491
  %v493 = vpop.f32.mrb[0].mxu0
  %494 = vmatprep.mubr.bf16.mxu0 0
  %495 = vmatmul.mubr.bf16.gmra.mrb[0].mxu0 %v252
  %v496 = vpop.f32.mrb[0].mxu0
  %v497 = vadd.f32 %v108, %v496
  %v498 = vpop.f32.mrb[0].mxu0
  %v499 = vpop.f32.mrb[0].mxu0
  %v500 = vadd.f32 %v108, %v499
  %v501 = vpop.f32.mrb[0].mxu0
  %502 = vmatprep.mubr.bf16.mxu0 0
  %503 = vmatmul.mubr.bf16.gmra.mrb[0].mxu0 %v253
  %v504 = vpop.f32.mrb[0].mxu0
  %v505 = vadd.f32 %v108, %v504
  %v506 = vpop.f32.mrb[0].mxu0
  %v507 = vpop.f32.mrb[0].mxu0
  %v508 = vadd.f32 %v108, %v507
  %v509 = vpop.f32.mrb[0].mxu0
  %510 = vmatprep.mubr.bf16.mxu0 0
  %511 = vmatmul.mubr.bf16.gmra.mrb[0].mxu0 %v254
  %v512 = vpop.f32.mrb[0].mxu0
  %v513 = vadd.f32 %v108, %v512
  %v514 = vpop.f32.mrb[0].mxu0
  %v515 = vpop.f32.mrb[0].mxu0
  %v516 = vadd.f32 %v108, %v515
  %v517 = vpop.f32.mrb[0].mxu0
  %518 = vmatprep.mubr.bf16.mxu0 0
  %519 = vmatmul.mubr.bf16.gmra.mrb[0].mxu0 %v255
  %v520 = vpop.f32.mrb[0].mxu0
  %v521 = vadd.f32 %v108, %v520
  %v522 = vpop.f32.mrb[0].mxu0
  %v523 = vpop.f32.mrb[0].mxu0
  %v524 = vadd.f32 %v108, %v523
  %v525 = vpop.f32.mrb[0].mxu0
  %526 = vmatprep.mubr.bf16.mxu0 0
  %527 = vmatmul.mubr.bf16.gmra.mrb[0].mxu0 %v256
  %v528 = vpop.f32.mrb[0].mxu0
  %v529 = vadd.f32 %v108, %v528
  %v530 = vpop.f32.mrb[0].mxu0
  %v531 = vpop.f32.mrb[0].mxu0
  %v532 = vadd.f32 %v108, %v531
  %v533 = vpop.f32.mrb[0].mxu0
  %534 = vmatprep.mubr.bf16.mxu0 0
  %535 = vmatmul.mubr.bf16.gmra.mrb[0].mxu0 %v257
  %v536 = vpop.f32.mrb[0].mxu0
  %v537 = vadd.f32 %v108, %v536
  %v538 = vpop.f32.mrb[0].mxu0
  %v539 = vpop.f32.mrb[0].mxu0
  %v540 = vadd.f32 %v108, %v539
  %v541 = vpop.f32.mrb[0].mxu0
  %542 = vmatprep.mubr.bf16.mxu0 0
  %543 = vmatmul.mubr.bf16.gmra.mrb[0].mxu0 %v258
  %v544 = vpop.f32.mrb[0].mxu0
  %v545 = vadd.f32 %v108, %v544
  %v546 = vpop.f32.mrb[0].mxu0
  %v547 = vpop.f32.mrb[0].mxu0
  %v548 = vadd.f32 %v108, %v547
  %v549 = vpop.f32.mrb[0].mxu0
  %550 = vmatprep.mubr.bf16.mxu0 0
  %551 = vmatmul.mubr.bf16.gmra.mrb[0].mxu0 %v259
  %v552 = vpop.f32.mrb[0].mxu0
  %v553 = vadd.f32 %v108, %v552
  %v554 = vpop.f32.mrb[0].mxu0
  %v555 = vpop.f32.mrb[0].mxu0
  %v556 = vadd.f32 %v108, %v555
  %v557 = vpop.f32.mrb[0].mxu0
  %558 = vmatprep.mubr.bf16.mxu0 0
  %559 = vmatmul.mubr.bf16.gmra.mrb[0].mxu0 %v260
  %v560 = vpop.f32.mrb[0].mxu0
  %v561 = vadd.f32 %v108, %v560
  %v562 = vpop.f32.mrb[0].mxu0
  %v563 = vpop.f32.mrb[0].mxu0
  %v564 = vadd.f32 %v108, %v563
  %v565 = vpop.f32.mrb[0].mxu0
  %566 = vmatprep.mubr.bf16.mxu0 0
  %567 = vmatmul.mubr.bf16.gmra.mrb[0].mxu0 %v261
  %v568 = vpop.f32.mrb[0].mxu0
  %v569 = vadd.f32 %v108, %v568
  %v570 = vpop.f32.mrb[0].mxu0
  %v571 = vpop.f32.mrb[0].mxu0
  %v572 = vadd.f32 %v108, %v571
  %v573 = vpop.f32.mrb[0].mxu0
  %574 = vmatprep.mubr.bf16.mxu0 0
  %575 = vmatmul.mubr.bf16.gmra.mrb[0].mxu0 %v262
  %v576 = vpop.f32.mrb[0].mxu0
  %v577 = vadd.f32 %v108, %v576
  %v578 = vpop.f32.mrb[0].mxu0
  %v579 = vpop.f32.mrb[0].mxu0
  %v580 = vadd.f32 %v108, %v579
  %v581 = vpop.f32.mrb[0].mxu0
  %582 = vmatprep.mubr.bf16.mxu0 0
  %583 = vmatmul.mubr.bf16.gmra.mrb[0].mxu0 %v263
  %v584 = vpop.f32.mrb[0].mxu0
  %v585 = vadd.f32 %v108, %v584
  %v586 = vpop.f32.mrb[0].mxu0
  %v587 = vpop.f32.mrb[0].mxu0
  %v588 = vadd.f32 %v108, %v587
  %v589 = vpop.f32.mrb[0].mxu0
  %590 = vmatprep.mubr.bf16.mxu0 0
  %591 = vmatmul.mubr.bf16.gmra.mrb[0].mxu0 %v264
  %v592 = vpop.f32.mrb[0].mxu0
  %v593 = vadd.f32 %v108, %v592
  %v594 = vpop.f32.mrb[0].mxu0
  %v595 = vpop.f32.mrb[0].mxu0
  %v596 = vadd.f32 %v108, %v595
  %v597 = vpop.f32.mrb[0].mxu0
  %598 = vmatprep.mubr.bf16.mxu0 0
  %599 = vmatmul.mubr.bf16.gmra.mrb[0].mxu0 %v265
  %v600 = vpop.f32.mrb[0].mxu0
  %v601 = vadd.f32 %v108, %v600
  %v602 = vpop.f32.mrb[0].mxu0
  %v603 = vpop.f32.mrb[0].mxu0
  %v604 = vadd.f32 %v108, %v603
  %v605 = vpop.f32.mrb[0].mxu0
  %606 = vmatprep.mubr.bf16.mxu0 0
  %607 = vmatmul.mubr.bf16.gmra.mrb[0].mxu0 %v266
  %v608 = vpop.f32.mrb[0].mxu0
  %v609 = vadd.f32 %v108, %v608
  %v610 = vpop.f32.mrb[0].mxu0
  %v611 = vpop.f32.mrb[0].mxu0
  %v612 = vadd.f32 %v108, %v611
  %v613 = vpop.f32.mrb[0].mxu0
  %614 = vmatprep.mubr.bf16.mxu0 0
  %615 = vmatmul.mubr.bf16.gmra.mrb[0].mxu0 %v267
  %v616 = vpop.f32.mrb[0].mxu0
  %v617 = vadd.f32 %v108, %v616
  %v618 = vpop.f32.mrb[0].mxu0
  %v619 = vpop.f32.mrb[0].mxu0
  %v620 = vadd.f32 %v108, %v619
  %v621 = vpop.f32.mrb[0].mxu0
  %622 = vmatprep.mubr.bf16.mxu0 0
  %623 = vmatmul.mubr.bf16.gmra.mrb[0].mxu0 %v268
  %v624 = vpop.f32.mrb[0].mxu0
  %v625 = vadd.f32 %v108, %v624
  %v626 = vpop.f32.mrb[0].mxu0
  %v627 = vpop.f32.mrb[0].mxu0
  %v628 = vadd.f32 %v108, %v627
  %v629 = vpop.f32.mrb[0].mxu0
  %630 = vmatprep.mubr.bf16.mxu0 0
  %631 = vmatmul.mubr.bf16.gmra.mrb[0].mxu0 %v269
  %v632 = vpop.f32.mrb[0].mxu0
  %v633 = vadd.f32 %v108, %v632
  %v634 = vpop.f32.mrb[0].mxu0
  %v635 = vpop.f32.mrb[0].mxu0
  %v636 = vadd.f32 %v108, %v635
  %v637 = vpop.f32.mrb[0].mxu0
  %638 = vdwg.mxu0
  %v639 = vmax.f32 %v385, 0.0
  %v640 = vmax.f32 %v388, 0.0
  %v641 = vmax.f32 %v393, 0.0
  %v642 = vmax.f32 %v396, 0.0
  %v643 = vmax.f32 %v401, 0.0
  %v644 = vmax.f32 %v404, 0.0
  %v645 = vmax.f32 %v409, 0.0
  %v646 = vmax.f32 %v412, 0.0
  %v647 = vmax.f32 %v417, 0.0
  %v648 = vmax.f32 %v420, 0.0
  %v649 = vmax.f32 %v425, 0.0
  %v650 = vmax.f32 %v428, 0.0
  %v651 = vmax.f32 %v433, 0.0
  %v652 = vmax.f32 %v436, 0.0
  %v653 = vmax.f32 %v441, 0.0
  %v654 = vmax.f32 %v444, 0.0
  %v655 = vmax.f32 %v449, 0.0
  %v656 = vmax.f32 %v452, 0.0
  %v657 = vmax.f32 %v457, 0.0
  %v658 = vmax.f32 %v460, 0.0
  %v659 = vmax.f32 %v465, 0.0
  %v660 = vmax.f32 %v468, 0.0
  %v661 = vmax.f32 %v473, 0.0
  %v662 = vmax.f32 %v476, 0.0
  %v663 = vmax.f32 %v481, 0.0
  %v664 = vmax.f32 %v484, 0.0
  %v665 = vmax.f32 %v489, 0.0
  %v666 = vmax.f32 %v492, 0.0
  %v667 = vmax.f32 %v497, 0.0
  %v668 = vmax.f32 %v500, 0.0
  %v669 = vmax.f32 %v505, 0.0
  %v670 = vmax.f32 %v508, 0.0
  %v671 = vmax.f32 %v513, 0.0
  %v672 = vmax.f32 %v516, 0.0
  %v673 = vmax.f32 %v521, 0.0
  %v674 = vmax.f32 %v524, 0.0
  %v675 = vmax.f32 %v529, 0.0
  %v676 = vmax.f32 %v532, 0.0
  %v677 = vmax.f32 %v537, 0.0
  %v678 = vmax.f32 %v540, 0.0
  %v679 = vmax.f32 %v545, 0.0
  %v680 = vmax.f32 %v548, 0.0
  %v681 = vmax.f32 %v553, 0.0
  %v682 = vmax.f32 %v556, 0.0
  %v683 = vmax.f32 %v561, 0.0
  %v684 = vmax.f32 %v564, 0.0
  %v685 = vmax.f32 %v569, 0.0
  %v686 = vmax.f32 %v572, 0.0
  %v687 = vmax.f32 %v577, 0.0
  %v688 = vmax.f32 %v580, 0.0
  %v689 = vmax.f32 %v585, 0.0
  %v690 = vmax.f32 %v588, 0.0
  %v691 = vmax.f32 %v593, 0.0
  %v692 = vmax.f32 %v596, 0.0
  %v693 = vmax.f32 %v601, 0.0
  %v694 = vmax.f32 %v604, 0.0
  %v695 = vmax.f32 %v609, 0.0
  %v696 = vmax.f32 %v612, 0.0
  %v697 = vmax.f32 %v617, 0.0
  %v698 = vmax.f32 %v620, 0.0
  %v699 = vmax.f32 %v625, 0.0
  %v700 = vmax.f32 %v628, 0.0
  %v701 = vmax.f32 %v633, 0.0
  %v702 = vmax.f32 %v636, 0.0
  %703 = vst [vmem:[%s6] sm:$0xff] %v639
  %704 = vst [vmem:[%s6 + $0x8] sm:$0xff] %v640
  %705 = vst [vmem:[%s6 + $0x10] sm:$0xff] %v641
  %706 = vst [vmem:[%s6 + $0x18] sm:$0xff] %v642
  %707 = vst [vmem:[%s6 + $0x20] sm:$0xff] %v643
  %708 = vst [vmem:[%s6 + $0x28] sm:$0xff] %v644
  %709 = vst [vmem:[%s6 + $0x30] sm:$0xff] %v645
  %710 = vst [vmem:[%s6 + $0x38] sm:$0xff] %v646
  %711 = vst [vmem:[%s6 + $0x40] sm:$0xff] %v647
  %712 = vst [vmem:[%s6 + $0x48] sm:$0xff] %v648
  %713 = vst [vmem:[%s6 + $0x50] sm:$0xff] %v649
  %714 = vst [vmem:[%s6 + $0x58] sm:$0xff] %v650
  %715 = vst [vmem:[%s6 + $0x60] sm:$0xff] %v651
  %716 = vst [vmem:[%s6 + $0x68] sm:$0xff] %v652
  %717 = vst [vmem:[%s6 + $0x70] sm:$0xff] %v653
  %718 = vst [vmem:[%s6 + $0x78] sm:$0xff] %v654
  %719 = vst [vmem:[%s6 + $0x80] sm:$0xff] %v655
  %720 = vst [vmem:[%s6 + $0x88] sm:$0xff] %v656
  %721 = vst [vmem:[%s6 + $0x90] sm:$0xff] %v657
  %722 = vst [vmem:[%s6 + $0x98] sm:$0xff] %v658
  %723 = vst [vmem:[%s6 + $0xa0] sm:$0xff] %v659
  %724 = vst [vmem:[%s6 + $0xa8] sm:$0xff] %v660
  %725 = vst [vmem:[%s6 + $0xb0] sm:$0xff] %v661
  %726 = vst [vmem:[%s6 + $0xb8] sm:$0xff] %v662
  %727 = vst [vmem:[%s6 + $0xc0] sm:$0xff] %v663
  %728 = vst [vmem:[%s6 + $0xc8] sm:$0xff] %v664
  %729 = vst [vmem:[%s6 + $0xd0] sm:$0xff] %v665
  %730 = vst [vmem:[%s6 + $0xd8] sm:$0xff] %v666
  %731 = vst [vmem:[%s6 + $0xe0] sm:$0xff] %v667
  %732 = vst [vmem:[%s6 + $0xe8] sm:$0xff] %v668
  %733 = vst [vmem:[%s6 + $0xf0] sm:$0xff] %v669
  %734 = vst [vmem:[%s6 + $0xf8] sm:$0xff] %v670
  %735 = vst [vmem:[%s6 + $0x100] sm:$0xff] %v671
  %736 = vst [vmem:[%s6 + $0x108] sm:$0xff] %v672
  %737 = vst [vmem:[%s6 + $0x110] sm:$0xff] %v673
  %738 = vst [vmem:[%s6 + $0x118] sm:$0xff] %v674
  %739 = vst [vmem:[%s6 + $0x120] sm:$0xff] %v675
  %740 = vst [vmem:[%s6 + $0x128] sm:$0xff] %v676
  %741 = vst [vmem:[%s6 + $0x130] sm:$0xff] %v677
  %742 = vst [vmem:[%s6 + $0x138] sm:$0xff] %v678
  %743 = vst [vmem:[%s6 + $0x140] sm:$0xff] %v679
  %744 = vst [vmem:[%s6 + $0x148] sm:$0xff] %v680
  %745 = vst [vmem:[%s6 + $0x150] sm:$0xff] %v681
  %746 = vst [vmem:[%s6 + $0x158] sm:$0xff] %v682
  %747 = vst [vmem:[%s6 + $0x160] sm:$0xff] %v683
  %748 = vst [vmem:[%s6 + $0x168] sm:$0xff] %v684
  %749 = vst [vmem:[%s6 + $0x170] sm:$0xff] %v685
  %750 = vst [vmem:[%s6 + $0x178] sm:$0xff] %v686
  %751 = vst [vmem:[%s6 + $0x180] sm:$0xff] %v687
  %752 = vst [vmem:[%s6 + $0x188] sm:$0xff] %v688
  %753 = vst [vmem:[%s6 + $0x190] sm:$0xff] %v689
  %754 = vst [vmem:[%s6 + $0x198] sm:$0xff] %v690
  %755 = vst [vmem:[%s6 + $0x1a0] sm:$0xff] %v691
  %756 = vst [vmem:[%s6 + $0x1a8] sm:$0xff] %v692
  %757 = vst [vmem:[%s6 + $0x1b0] sm:$0xff] %v693
  %758 = vst [vmem:[%s6 + $0x1b8] sm:$0xff] %v694
  %759 = vst [vmem:[%s6 + $0x1c0] sm:$0xff] %v695
  %760 = vst [vmem:[%s6 + $0x1c8] sm:$0xff] %v696
  %761 = vst [vmem:[%s6 + $0x1d0] sm:$0xff] %v697
  %762 = vst [vmem:[%s6 + $0x1d8] sm:$0xff] %v698
  %763 = vst [vmem:[%s6 + $0x1e0] sm:$0xff] %v699
  %764 = vst [vmem:[%s6 + $0x1e8] sm:$0xff] %v700
  %765 = vst [vmem:[%s6 + $0x1f0] sm:$0xff] %v701
  %766 = vst [vmem:[%s6 + $0x1f8] sm:$0xff] %v702
  %v767 = vpack.c.bf16 %v640, %v639
  %v768 = vpack.c.bf16 %v642, %v641
  %v769 = vpack.c.bf16 %v644, %v643
  %v770 = vpack.c.bf16 %v646, %v645
  %v771 = vpack.c.bf16 %v648, %v647
  %v772 = vpack.c.bf16 %v650, %v649
  %v773 = vpack.c.bf16 %v652, %v651
  %v774 = vpack.c.bf16 %v654, %v653
  %v775 = vpack.c.bf16 %v656, %v655
  %v776 = vpack.c.bf16 %v658, %v657
  %v777 = vpack.c.bf16 %v660, %v659
  %v778 = vpack.c.bf16 %v662, %v661
  %v779 = vpack.c.bf16 %v664, %v663
  %v780 = vpack.c.bf16 %v666, %v665
  %v781 = vpack.c.bf16 %v668, %v667
  %v782 = vpack.c.bf16 %v670, %v669
  %v783 = vpack.c.bf16 %v672, %v671
  %v784 = vpack.c.bf16 %v674, %v673
  %v785 = vpack.c.bf16 %v676, %v675
  %v786 = vpack.c.bf16 %v678, %v677
  %v787 = vpack.c.bf16 %v680, %v679
  %v788 = vpack.c.bf16 %v682, %v681
  %v789 = vpack.c.bf16 %v684, %v683
  %v790 = vpack.c.bf16 %v686, %v685
  %v791 = vpack.c.bf16 %v688, %v687
  %v792 = vpack.c.bf16 %v690, %v689
  %v793 = vpack.c.bf16 %v692, %v691
  %v794 = vpack.c.bf16 %v694, %v693
  %v795 = vpack.c.bf16 %v696, %v695
  %v796 = vpack.c.bf16 %v698, %v697
  %v797 = vpack.c.bf16 %v700, %v699
  %v798 = vpack.c.bf16 %v702, %v701
  %v799 = vld [vmem:[%s3] sm:$0xf]
  %v800 = vld [vmem:[%s3 + $0x4] sm:$0xf]
  %v801 = vld [vmem:[%s3 + $0x8] sm:$0xf]
  %v802 = vld [vmem:[%s3 + $0xc] sm:$0xf]
  %v803 = vld [vmem:[%s3 + $0x10] sm:$0xf]
  %v804 = vld [vmem:[%s3 + $0x14] sm:$0xf]
  %v805 = vld [vmem:[%s3 + $0x18] sm:$0xf]
  %v806 = vld [vmem:[%s3 + $0x1c] sm:$0xf]
  %v807 = vld [vmem:[%s3 + $0x20] sm:$0xf]
  %v808 = vld [vmem:[%s3 + $0x24] sm:$0xf]
  %v809 = vld [vmem:[%s3 + $0x28] sm:$0xf]
  %v810 = vld [vmem:[%s3 + $0x2c] sm:$0xf]
  %v811 = vld [vmem:[%s3 + $0x30] sm:$0xf]
  %v812 = vld [vmem:[%s3 + $0x34] sm:$0xf]
  %v813 = vld [vmem:[%s3 + $0x38] sm:$0xf]
  %v814 = vld [vmem:[%s3 + $0x3c] sm:$0xf]
  %v815 = vld [vmem:[%s4] sm:$0x1]
  %v817 = vlaneseq
  %v818 = vshrl.u32 %v817, 7
  %v819 = vsub.s32 0, %v818
  %v820 = vrot.slane %v815, %v819
  %v838 = vunpack.c.l.b16 %v799
  %v839 = vunpack.c.l.b16 %v800
  %v840 = vunpack.c.l.b16 %v801
  %v841 = vunpack.c.l.b16 %v802
  %v842 = vunpack.c.l.b16 %v803
  %v843 = vunpack.c.l.b16 %v804
  %v844 = vunpack.c.l.b16 %v805
  %v845 = vunpack.c.l.b16 %v806
  %v846 = vunpack.c.l.b16 %v807
  %v847 = vunpack.c.l.b16 %v808
  %v848 = vunpack.c.l.b16 %v809
  %v849 = vunpack.c.l.b16 %v810
  %v850 = vunpack.c.l.b16 %v811
  %v851 = vunpack.c.l.b16 %v812
  %v852 = vunpack.c.l.b16 %v813
  %v853 = vunpack.c.l.b16 %v814
  %v854 = vpack.c.b16 %v839, %v838
  %v855 = vpack.c.b16 %v841, %v840
  %v856 = vpack.c.b16 %v843, %v842
  %v857 = vpack.c.b16 %v845, %v844
  %v858 = vpack.c.b16 %v847, %v846
  %v859 = vpack.c.b16 %v849, %v848
  %v860 = vpack.c.b16 %v851, %v850
  %v861 = vpack.c.b16 %v853, %v852
  %870 = vmatprep.subr.bf16.mxu0 0
  %871 = vmatpush1.bf16.msra.mxu0 %v854
  %872 = vmatprep.subr.bf16.mxu0 0
  %873 = vmatpush1.bf16.msra.mxu0 %v855
  %874 = vmatprep.subr.bf16.mxu0 0
  %875 = vmatpush1.bf16.msra.mxu0 %v856
  %876 = vmatprep.subr.bf16.mxu0 0
  %877 = vmatpush1.bf16.msra.mxu0 %v857
  %878 = vmatprep.subr.bf16.mxu0 0
  %879 = vmatpush1.bf16.msra.mxu0 %v858
  %880 = vmatprep.subr.bf16.mxu0 0
  %881 = vmatpush1.bf16.msra.mxu0 %v859
  %882 = vmatprep.subr.bf16.mxu0 0
  %883 = vmatpush1.bf16.msra.mxu0 %v860
  %884 = vmatprep.subr.bf16.mxu0 0
  %885 = vmatpush1.bf16.msra.mxu0 %v861
  %886 = vmatprep.subr.bf16.mxu0 0
  %887 = vmatpush1.bf16.msra.mxu0 0
  %888 = vmatprep.subr.bf16.mxu0 0
  %889 = vmatpush1.bf16.msra.mxu0 0
  %890 = vmatprep.subr.bf16.mxu0 0
  %891 = vmatpush1.bf16.msra.mxu0 0
  %892 = vmatprep.subr.bf16.mxu0 0
  %893 = vmatpush1.bf16.msra.mxu0 0
  %894 = vmatprep.subr.bf16.mxu0 0
  %895 = vmatpush1.bf16.msra.mxu0 0
  %896 = vmatprep.subr.bf16.mxu0 0
  %897 = vmatpush1.bf16.msra.mxu0 0
  %898 = vmatprep.subr.bf16.mxu0 0
  %899 = vmatpush1.bf16.msra.mxu0 0
  %900 = vmatprep.subr.bf16.mxu0 0
  %901 = vmatpush1.bf16.msra.mxu0 0
  %902 = vmatprep.mubr.bf16.mxu0 0
  %903 = vmatmul.mubr.bf16.gmra.mrb[0].mxu0 %v767
  %v904 = vpop.f32.mrb[0].mxu0
  %v905 = vadd.f32 %v820, %v904
  %v906 = vpop.f32.mrb[0].mxu0
  %v907 = vpop.f32.mrb[0].mxu0
  %v908 = vadd.f32 %v820, %v907
  %v909 = vpop.f32.mrb[0].mxu0
  %910 = vmatprep.mubr.bf16.mxu0 0
  %911 = vmatmul.mubr.bf16.gmra.mrb[0].mxu0 %v768
  %v912 = vpop.f32.mrb[0].mxu0
  %v913 = vadd.f32 %v820, %v912
  %v914 = vpop.f32.mrb[0].mxu0
  %v915 = vpop.f32.mrb[0].mxu0
  %v916 = vadd.f32 %v820, %v915
  %v917 = vpop.f32.mrb[0].mxu0
  %918 = vmatprep.mubr.bf16.mxu0 0
  %919 = vmatmul.mubr.bf16.gmra.mrb[0].mxu0 %v769
  %v920 = vpop.f32.mrb[0].mxu0
  %v921 = vadd.f32 %v820, %v920
  %v922 = vpop.f32.mrb[0].mxu0
  %v923 = vpop.f32.mrb[0].mxu0
  %v924 = vadd.f32 %v820, %v923
  %v925 = vpop.f32.mrb[0].mxu0
  %926 = vmatprep.mubr.bf16.mxu0 0
  %927 = vmatmul.mubr.bf16.gmra.mrb[0].mxu0 %v770
  %v928 = vpop.f32.mrb[0].mxu0
  %v929 = vadd.f32 %v820, %v928
  %v930 = vpop.f32.mrb[0].mxu0
  %v931 = vpop.f32.mrb[0].mxu0
  %v932 = vadd.f32 %v820, %v931
  %v933 = vpop.f32.mrb[0].mxu0
  %934 = vmatprep.mubr.bf16.mxu0 0
  %935 = vmatmul.mubr.bf16.gmra.mrb[0].mxu0 %v771
  %v936 = vpop.f32.mrb[0].mxu0
  %v937 = vadd.f32 %v820, %v936
  %v938 = vpop.f32.mrb[0].mxu0
  %v939 = vpop.f32.mrb[0].mxu0
  %v940 = vadd.f32 %v820, %v939
  %v941 = vpop.f32.mrb[0].mxu0
  %942 = vmatprep.mubr.bf16.mxu0 0
  %943 = vmatmul.mubr.bf16.gmra.mrb[0].mxu0 %v772
  %v944 = vpop.f32.mrb[0].mxu0
  %v945 = vadd.f32 %v820, %v944
  %v946 = vpop.f32.mrb[0].mxu0
  %v947 = vpop.f32.mrb[0].mxu0
  %v948 = vadd.f32 %v820, %v947
  %v949 = vpop.f32.mrb[0].mxu0
  %950 = vmatprep.mubr.bf16.mxu0 0
  %951 = vmatmul.mubr.bf16.gmra.mrb[0].mxu0 %v773
  %v952 = vpop.f32.mrb[0].mxu0
  %v953 = vadd.f32 %v820, %v952
  %v954 = vpop.f32.mrb[0].mxu0
  %v955 = vpop.f32.mrb[0].mxu0
  %v956 = vadd.f32 %v820, %v955
  %v957 = vpop.f32.mrb[0].mxu0
  %958 = vmatprep.mubr.bf16.mxu0 0
  %959 = vmatmul.mubr.bf16.gmra.mrb[0].mxu0 %v774
  %v960 = vpop.f32.mrb[0].mxu0
  %v961 = vadd.f32 %v820, %v960
  %v962 = vpop.f32.mrb[0].mxu0
  %v963 = vpop.f32.mrb[0].mxu0
  %v964 = vadd.f32 %v820, %v963
  %v965 = vpop.f32.mrb[0].mxu0
  %966 = vmatprep.mubr.bf16.mxu0 0
  %967 = vmatmul.mubr.bf16.gmra.mrb[0].mxu0 %v775
  %v968 = vpop.f32.mrb[0].mxu0
  %v969 = vadd.f32 %v820, %v968
  %v970 = vpop.f32.mrb[0].mxu0
  %v971 = vpop.f32.mrb[0].mxu0
  %v972 = vadd.f32 %v820, %v971
  %v973 = vpop.f32.mrb[0].mxu0
  %974 = vmatprep.mubr.bf16.mxu0 0
  %975 = vmatmul.mubr.bf16.gmra.mrb[0].mxu0 %v776
  %v976 = vpop.f32.mrb[0].mxu0
  %v977 = vadd.f32 %v820, %v976
  %v978 = vpop.f32.mrb[0].mxu0
  %v979 = vpop.f32.mrb[0].mxu0
  %v980 = vadd.f32 %v820, %v979
  %v981 = vpop.f32.mrb[0].mxu0
  %982 = vmatprep.mubr.bf16.mxu0 0
  %983 = vmatmul.mubr.bf16.gmra.mrb[0].mxu0 %v777
  %v984 = vpop.f32.mrb[0].mxu0
  %v985 = vadd.f32 %v820, %v984
  %v986 = vpop.f32.mrb[0].mxu0
  %v987 = vpop.f32.mrb[0].mxu0
  %v988 = vadd.f32 %v820, %v987
  %v989 = vpop.f32.mrb[0].mxu0
  %990 = vmatprep.mubr.bf16.mxu0 0
  %991 = vmatmul.mubr.bf16.gmra.mrb[0].mxu0 %v778
  %v992 = vpop.f32.mrb[0].mxu0
  %v993 = vadd.f32 %v820, %v992
  %v994 = vpop.f32.mrb[0].mxu0
  %v995 = vpop.f32.mrb[0].mxu0
  %v996 = vadd.f32 %v820, %v995
  %v997 = vpop.f32.mrb[0].mxu0
  %998 = vmatprep.mubr.bf16.mxu0 0
  %999 = vmatmul.mubr.bf16.gmra.mrb[0].mxu0 %v779
  %v1000 = vpop.f32.mrb[0].mxu0
  %v1001 = vadd.f32 %v820, %v1000
  %v1002 = vpop.f32.mrb[0].mxu0
  %v1003 = vpop.f32.mrb[0].mxu0
  %v1004 = vadd.f32 %v820, %v1003
  %v1005 = vpop.f32.mrb[0].mxu0
  %1006 = vmatprep.mubr.bf16.mxu0 0
  %1007 = vmatmul.mubr.bf16.gmra.mrb[0].mxu0 %v780
  %v1008 = vpop.f32.mrb[0].mxu0
  %v1009 = vadd.f32 %v820, %v1008
  %v1010 = vpop.f32.mrb[0].mxu0
  %v1011 = vpop.f32.mrb[0].mxu0
  %v1012 = vadd.f32 %v820, %v1011
  %v1013 = vpop.f32.mrb[0].mxu0
  %1014 = vmatprep.mubr.bf16.mxu0 0
  %1015 = vmatmul.mubr.bf16.gmra.mrb[0].mxu0 %v781
  %v1016 = vpop.f32.mrb[0].mxu0
  %v1017 = vadd.f32 %v820, %v1016
  %v1018 = vpop.f32.mrb[0].mxu0
  %v1019 = vpop.f32.mrb[0].mxu0
  %v1020 = vadd.f32 %v820, %v1019
  %v1021 = vpop.f32.mrb[0].mxu0
  %1022 = vmatprep.mubr.bf16.mxu0 0
  %1023 = vmatmul.mubr.bf16.gmra.mrb[0].mxu0 %v782
  %v1024 = vpop.f32.mrb[0].mxu0
  %v1025 = vadd.f32 %v820, %v1024
  %v1026 = vpop.f32.mrb[0].mxu0
  %v1027 = vpop.f32.mrb[0].mxu0
  %v1028 = vadd.f32 %v820, %v1027
  %v1029 = vpop.f32.mrb[0].mxu0
  %1030 = vmatprep.mubr.bf16.mxu0 0
  %1031 = vmatmul.mubr.bf16.gmra.mrb[0].mxu0 %v783
  %v1032 = vpop.f32.mrb[0].mxu0
  %v1033 = vadd.f32 %v820, %v1032
  %v1034 = vpop.f32.mrb[0].mxu0
  %v1035 = vpop.f32.mrb[0].mxu0
  %v1036 = vadd.f32 %v820, %v1035
  %v1037 = vpop.f32.mrb[0].mxu0
  %1038 = vmatprep.mubr.bf16.mxu0 0
  %1039 = vmatmul.mubr.bf16.gmra.mrb[0].mxu0 %v784
  %v1040 = vpop.f32.mrb[0].mxu0
  %v1041 = vadd.f32 %v820, %v1040
  %v1042 = vpop.f32.mrb[0].mxu0
  %v1043 = vpop.f32.mrb[0].mxu0
  %v1044 = vadd.f32 %v820, %v1043
  %v1045 = vpop.f32.mrb[0].mxu0
  %1046 = vmatprep.mubr.bf16.mxu0 0
  %1047 = vmatmul.mubr.bf16.gmra.mrb[0].mxu0 %v785
  %v1048 = vpop.f32.mrb[0].mxu0
  %v1049 = vadd.f32 %v820, %v1048
  %v1050 = vpop.f32.mrb[0].mxu0
  %v1051 = vpop.f32.mrb[0].mxu0
  %v1052 = vadd.f32 %v820, %v1051
  %v1053 = vpop.f32.mrb[0].mxu0
  %1054 = vmatprep.mubr.bf16.mxu0 0
  %1055 = vmatmul.mubr.bf16.gmra.mrb[0].mxu0 %v786
  %v1056 = vpop.f32.mrb[0].mxu0
  %v1057 = vadd.f32 %v820, %v1056
  %v1058 = vpop.f32.mrb[0].mxu0
  %v1059 = vpop.f32.mrb[0].mxu0
  %v1060 = vadd.f32 %v820, %v1059
  %v1061 = vpop.f32.mrb[0].mxu0
  %1062 = vmatprep.mubr.bf16.mxu0 0
  %1063 = vmatmul.mubr.bf16.gmra.mrb[0].mxu0 %v787
  %v1064 = vpop.f32.mrb[0].mxu0
  %v1065 = vadd.f32 %v820, %v1064
  %v1066 = vpop.f32.mrb[0].mxu0
  %v1067 = vpop.f32.mrb[0].mxu0
  %v1068 = vadd.f32 %v820, %v1067
  %v1069 = vpop.f32.mrb[0].mxu0
  %1070 = vmatprep.mubr.bf16.mxu0 0
  %1071 = vmatmul.mubr.bf16.gmra.mrb[0].mxu0 %v788
  %v1072 = vpop.f32.mrb[0].mxu0
  %v1073 = vadd.f32 %v820, %v1072
  %v1074 = vpop.f32.mrb[0].mxu0
  %v1075 = vpop.f32.mrb[0].mxu0
  %v1076 = vadd.f32 %v820, %v1075
  %v1077 = vpop.f32.mrb[0].mxu0
  %1078 = vmatprep.mubr.bf16.mxu0 0
  %1079 = vmatmul.mubr.bf16.gmra.mrb[0].mxu0 %v789
  %v1080 = vpop.f32.mrb[0].mxu0
  %v1081 = vadd.f32 %v820, %v1080
  %v1082 = vpop.f32.mrb[0].mxu0
  %v1083 = vpop.f32.mrb[0].mxu0
  %v1084 = vadd.f32 %v820, %v1083
  %v1085 = vpop.f32.mrb[0].mxu0
  %1086 = vmatprep.mubr.bf16.mxu0 0
  %1087 = vmatmul.mubr.bf16.gmra.mrb[0].mxu0 %v790
  %v1088 = vpop.f32.mrb[0].mxu0
  %v1089 = vadd.f32 %v820, %v1088
  %v1090 = vpop.f32.mrb[0].mxu0
  %v1091 = vpop.f32.mrb[0].mxu0
  %v1092 = vadd.f32 %v820, %v1091
  %v1093 = vpop.f32.mrb[0].mxu0
  %1094 = vmatprep.mubr.bf16.mxu0 0
  %1095 = vmatmul.mubr.bf16.gmra.mrb[0].mxu0 %v791
  %v1096 = vpop.f32.mrb[0].mxu0
  %v1097 = vadd.f32 %v820, %v1096
  %v1098 = vpop.f32.mrb[0].mxu0
  %v1099 = vpop.f32.mrb[0].mxu0
  %v1100 = vadd.f32 %v820, %v1099
  %v1101 = vpop.f32.mrb[0].mxu0
  %1102 = vmatprep.mubr.bf16.mxu0 0
  %1103 = vmatmul.mubr.bf16.gmra.mrb[0].mxu0 %v792
  %v1104 = vpop.f32.mrb[0].mxu0
  %v1105 = vadd.f32 %v820, %v1104
  %v1106 = vpop.f32.mrb[0].mxu0
  %v1107 = vpop.f32.mrb[0].mxu0
  %v1108 = vadd.f32 %v820, %v1107
  %v1109 = vpop.f32.mrb[0].mxu0
  %1110 = vmatprep.mubr.bf16.mxu0 0
  %1111 = vmatmul.mubr.bf16.gmra.mrb[0].mxu0 %v793
  %v1112 = vpop.f32.mrb[0].mxu0
  %v1113 = vadd.f32 %v820, %v1112
  %v1114 = vpop.f32.mrb[0].mxu0
  %v1115 = vpop.f32.mrb[0].mxu0
  %v1116 = vadd.f32 %v820, %v1115
  %v1117 = vpop.f32.mrb[0].mxu0
  %1118 = vmatprep.mubr.bf16.mxu0 0
  %1119 = vmatmul.mubr.bf16.gmra.mrb[0].mxu0 %v794
  %v1120 = vpop.f32.mrb[0].mxu0
  %v1121 = vadd.f32 %v820, %v1120
  %v1122 = vpop.f32.mrb[0].mxu0
  %v1123 = vpop.f32.mrb[0].mxu0
  %v1124 = vadd.f32 %v820, %v1123
  %v1125 = vpop.f32.mrb[0].mxu0
  %1126 = vmatprep.mubr.bf16.mxu0 0
  %1127 = vmatmul.mubr.bf16.gmra.mrb[0].mxu0 %v795
  %v1128 = vpop.f32.mrb[0].mxu0
  %v1129 = vadd.f32 %v820, %v1128
  %v1130 = vpop.f32.mrb[0].mxu0
  %v1131 = vpop.f32.mrb[0].mxu0
  %v1132 = vadd.f32 %v820, %v1131
  %v1133 = vpop.f32.mrb[0].mxu0
  %1134 = vmatprep.mubr.bf16.mxu0 0
  %1135 = vmatmul.mubr.bf16.gmra.mrb[0].mxu0 %v796
  %v1136 = vpop.f32.mrb[0].mxu0
  %v1137 = vadd.f32 %v820, %v1136
  %v1138 = vpop.f32.mrb[0].mxu0
  %v1139 = vpop.f32.mrb[0].mxu0
  %v1140 = vadd.f32 %v820, %v1139
  %v1141 = vpop.f32.mrb[0].mxu0
  %1142 = vmatprep.mubr.bf16.mxu0 0
  %1143 = vmatmul.mubr.bf16.gmra.mrb[0].mxu0 %v797
  %v1144 = vpop.f32.mrb[0].mxu0
  %v1145 = vadd.f32 %v820, %v1144
  %v1146 = vpop.f32.mrb[0].mxu0
  %v1147 = vpop.f32.mrb[0].mxu0
  %v1148 = vadd.f32 %v820, %v1147
  %v1149 = vpop.f32.mrb[0].mxu0
  %1150 = vmatprep.mubr.bf16.mxu0 0
  %1151 = vmatmul.mubr.bf16.gmra.mrb[0].mxu0 %v798
  %v1152 = vpop.f32.mrb[0].mxu0
  %v1153 = vadd.f32 %v820, %v1152
  %v1154 = vpop.f32.mrb[0].mxu0
  %v1155 = vpop.f32.mrb[0].mxu0
  %v1156 = vadd.f32 %v820, %v1155
  %v1157 = vpop.f32.mrb[0].mxu0
  %1158 = vdwg.mxu0
  %1159 = vmax.xlane.f32.xlu0 %v905
  %v1160 = vpop.xlane.xlu0 %1159
  %1161 = vmax.xlane.f32.xlu0 %v908
  %v1162 = vpop.xlane.xlu0 %1161
  %1163 = vmax.xlane.f32.xlu0 %v913
  %v1164 = vpop.xlane.xlu0 %1163
  %1165 = vmax.xlane.f32.xlu0 %v916
  %v1166 = vpop.xlane.xlu0 %1165
  %1167 = vmax.xlane.f32.xlu0 %v921
  %v1168 = vpop.xlane.xlu0 %1167
  %1169 = vmax.xlane.f32.xlu0 %v924
  %v1170 = vpop.xlane.xlu0 %1169
  %1171 = vmax.xlane.f32.xlu0 %v929
  %v1172 = vpop.xlane.xlu0 %1171
  %1173 = vmax.xlane.f32.xlu0 %v932
  %v1174 = vpop.xlane.xlu0 %1173
  %1175 = vmax.xlane.f32.xlu0 %v937
  %v1176 = vpop.xlane.xlu0 %1175
  %1177 = vmax.xlane.f32.xlu0 %v940
  %v1178 = vpop.xlane.xlu0 %1177
  %1179 = vmax.xlane.f32.xlu0 %v945
  %v1180 = vpop.xlane.xlu0 %1179
  %1181 = vmax.xlane.f32.xlu0 %v948
  %v1182 = vpop.xlane.xlu0 %1181
  %1183 = vmax.xlane.f32.xlu0 %v953
  %v1184 = vpop.xlane.xlu0 %1183
  %1185 = vmax.xlane.f32.xlu0 %v956
  %v1186 = vpop.xlane.xlu0 %1185
  %1187 = vmax.xlane.f32.xlu0 %v961
  %v1188 = vpop.xlane.xlu0 %1187
  %1189 = vmax.xlane.f32.xlu0 %v964
  %v1190 = vpop.xlane.xlu0 %1189
  %1191 = vmax.xlane.f32.xlu0 %v969
  %v1192 = vpop.xlane.xlu0 %1191
  %1193 = vmax.xlane.f32.xlu0 %v972
  %v1194 = vpop.xlane.xlu0 %1193
  %1195 = vmax.xlane.f32.xlu0 %v977
  %v1196 = vpop.xlane.xlu0 %1195
  %1197 = vmax.xlane.f32.xlu0 %v980
  %v1198 = vpop.xlane.xlu0 %1197
  %1199 = vmax.xlane.f32.xlu0 %v985
  %v1200 = vpop.xlane.xlu0 %1199
  %1201 = vmax.xlane.f32.xlu0 %v988
  %v1202 = vpop.xlane.xlu0 %1201
  %1203 = vmax.xlane.f32.xlu0 %v993
  %v1204 = vpop.xlane.xlu0 %1203
  %1205 = vmax.xlane.f32.xlu0 %v996
  %v1206 = vpop.xlane.xlu0 %1205
  %1207 = vmax.xlane.f32.xlu0 %v1001
  %v1208 = vpop.xlane.xlu0 %1207
  %1209 = vmax.xlane.f32.xlu0 %v1004
  %v1210 = vpop.xlane.xlu0 %1209
  %1211 = vmax.xlane.f32.xlu0 %v1009
  %v1212 = vpop.xlane.xlu0 %1211
  %1213 = vmax.xlane.f32.xlu0 %v1012
  %v1214 = vpop.xlane.xlu0 %1213
  %1215 = vmax.xlane.f32.xlu0 %v1017
  %v1216 = vpop.xlane.xlu0 %1215
  %1217 = vmax.xlane.f32.xlu0 %v1020
  %v1218 = vpop.xlane.xlu0 %1217
  %1219 = vmax.xlane.f32.xlu0 %v1025
  %v1220 = vpop.xlane.xlu0 %1219
  %1221 = vmax.xlane.f32.xlu0 %v1028
  %v1222 = vpop.xlane.xlu0 %1221
  %1223 = vmax.xlane.f32.xlu0 %v1033
  %v1224 = vpop.xlane.xlu0 %1223
  %1225 = vmax.xlane.f32.xlu0 %v1036
  %v1226 = vpop.xlane.xlu0 %1225
  %1227 = vmax.xlane.f32.xlu0 %v1041
  %v1228 = vpop.xlane.xlu0 %1227
  %1229 = vmax.xlane.f32.xlu0 %v1044
  %v1230 = vpop.xlane.xlu0 %1229
  %1231 = vmax.xlane.f32.xlu0 %v1049
  %v1232 = vpop.xlane.xlu0 %1231
  %1233 = vmax.xlane.f32.xlu0 %v1052
  %v1234 = vpop.xlane.xlu0 %1233
  %1235 = vmax.xlane.f32.xlu0 %v1057
  %v1236 = vpop.xlane.xlu0 %1235
  %1237 = vmax.xlane.f32.xlu0 %v1060
  %v1238 = vpop.xlane.xlu0 %1237
  %1239 = vmax.xlane.f32.xlu0 %v1065
  %v1240 = vpop.xlane.xlu0 %1239
  %1241 = vmax.xlane.f32.xlu0 %v1068
  %v1242 = vpop.xlane.xlu0 %1241
  %1243 = vmax.xlane.f32.xlu0 %v1073
  %v1244 = vpop.xlane.xlu0 %1243
  %1245 = vmax.xlane.f32.xlu0 %v1076
  %v1246 = vpop.xlane.xlu0 %1245
  %1247 = vmax.xlane.f32.xlu0 %v1081
  %v1248 = vpop.xlane.xlu0 %1247
  %1249 = vmax.xlane.f32.xlu0 %v1084
  %v1250 = vpop.xlane.xlu0 %1249
  %1251 = vmax.xlane.f32.xlu0 %v1089
  %v1252 = vpop.xlane.xlu0 %1251
  %1253 = vmax.xlane.f32.xlu0 %v1092
  %v1254 = vpop.xlane.xlu0 %1253
  %1255 = vmax.xlane.f32.xlu0 %v1097
  %v1256 = vpop.xlane.xlu0 %1255
  %1257 = vmax.xlane.f32.xlu0 %v1100
  %v1258 = vpop.xlane.xlu0 %1257
  %1259 = vmax.xlane.f32.xlu0 %v1105
  %v1260 = vpop.xlane.xlu0 %1259
  %1261 = vmax.xlane.f32.xlu0 %v1108
  %v1262 = vpop.xlane.xlu0 %1261
  %1263 = vmax.xlane.f32.xlu0 %v1113
  %v1264 = vpop.xlane.xlu0 %1263
  %1265 = vmax.xlane.f32.xlu0 %v1116
  %v1266 = vpop.xlane.xlu0 %1265
  %1267 = vmax.xlane.f32.xlu0 %v1121
  %v1268 = vpop.xlane.xlu0 %1267
  %1269 = vmax.xlane.f32.xlu0 %v1124
  %v1270 = vpop.xlane.xlu0 %1269
  %1271 = vmax.xlane.f32.xlu0 %v1129
  %v1272 = vpop.xlane.xlu0 %1271
  %1273 = vmax.xlane.f32.xlu0 %v1132
  %v1274 = vpop.xlane.xlu0 %1273
  %1275 = vmax.xlane.f32.xlu0 %v1137
  %v1276 = vpop.xlane.xlu0 %1275
  %1277 = vmax.xlane.f32.xlu0 %v1140
  %v1278 = vpop.xlane.xlu0 %1277
  %1279 = vmax.xlane.f32.xlu0 %v1145
  %v1280 = vpop.xlane.xlu0 %1279
  %1281 = vmax.xlane.f32.xlu0 %v1148
  %v1282 = vpop.xlane.xlu0 %1281
  %1283 = vmax.xlane.f32.xlu0 %v1153
  %v1284 = vpop.xlane.xlu0 %1283
  %1285 = vmax.xlane.f32.xlu0 %v1156
  %v1286 = vpop.xlane.xlu0 %1285
  %v1287 = vsub.f32 %v905, %v1160
  %v1288 = vsub.f32 %v908, %v1162
  %v1289 = vsub.f32 %v913, %v1164
  %v1290 = vsub.f32 %v916, %v1166
  %v1291 = vsub.f32 %v921, %v1168
  %v1292 = vsub.f32 %v924, %v1170
  %v1293 = vsub.f32 %v929, %v1172
  %v1294 = vsub.f32 %v932, %v1174
  %v1295 = vsub.f32 %v937, %v1176
  %v1296 = vsub.f32 %v940, %v1178
  %v1297 = vsub.f32 %v945, %v1180
  %v1298 = vsub.f32 %v948, %v1182
  %v1299 = vsub.f32 %v953, %v1184
  %v1300 = vsub.f32 %v956, %v1186
  %v1301 = vsub.f32 %v961, %v1188
  %v1302 = vsub.f32 %v964, %v1190
  %v1303 = vsub.f32 %v969, %v1192
  %v1304 = vsub.f32 %v972, %v1194
  %v1305 = vsub.f32 %v977, %v1196
  %v1306 = vsub.f32 %v980, %v1198
  %v1307 = vsub.f32 %v985, %v1200
  %v1308 = vsub.f32 %v988, %v1202
  %v1309 = vsub.f32 %v993, %v1204
  %v1310 = vsub.f32 %v996, %v1206
  %v1311 = vsub.f32 %v1001, %v1208
  %v1312 = vsub.f32 %v1004, %v1210
  %v1313 = vsub.f32 %v1009, %v1212
  %v1314 = vsub.f32 %v1012, %v1214
  %v1315 = vsub.f32 %v1017, %v1216
  %v1316 = vsub.f32 %v1020, %v1218
  %v1317 = vsub.f32 %v1025, %v1220
  %v1318 = vsub.f32 %v1028, %v1222
  %v1319 = vsub.f32 %v1033, %v1224
  %v1320 = vsub.f32 %v1036, %v1226
  %v1321 = vsub.f32 %v1041, %v1228
  %v1322 = vsub.f32 %v1044, %v1230
  %v1323 = vsub.f32 %v1049, %v1232
  %v1324 = vsub.f32 %v1052, %v1234
  %v1325 = vsub.f32 %v1057, %v1236
  %v1326 = vsub.f32 %v1060, %v1238
  %v1327 = vsub.f32 %v1065, %v1240
  %v1328 = vsub.f32 %v1068, %v1242
  %v1329 = vsub.f32 %v1073, %v1244
  %v1330 = vsub.f32 %v1076, %v1246
  %v1331 = vsub.f32 %v1081, %v1248
  %v1332 = vsub.f32 %v1084, %v1250
  %v1333 = vsub.f32 %v1089, %v1252
  %v1334 = vsub.f32 %v1092, %v1254
  %v1335 = vsub.f32 %v1097, %v1256
  %v1336 = vsub.f32 %v1100, %v1258
  %v1337 = vsub.f32 %v1105, %v1260
  %v1338 = vsub.f32 %v1108, %v1262
  %v1339 = vsub.f32 %v1113, %v1264
  %v1340 = vsub.f32 %v1116, %v1266
  %v1341 = vsub.f32 %v1121, %v1268
  %v1342 = vsub.f32 %v1124, %v1270
  %v1343 = vsub.f32 %v1129, %v1272
  %v1344 = vsub.f32 %v1132, %v1274
  %v1345 = vsub.f32 %v1137, %v1276
  %v1346 = vsub.f32 %v1140, %v1278
  %v1347 = vsub.f32 %v1145, %v1280
  %v1348 = vsub.f32 %v1148, %v1282
  %v1349 = vsub.f32 %v1153, %v1284
  %v1350 = vsub.f32 %v1156, %v1286
  %v1351 = vmul.f32 %v1287, 1.442695
  %v1352 = vpow.pop %v1351
  %v1353 = vmul.f32 %v1288, 1.442695
  %v1354 = vpow.pop %v1353
  %v1355 = vmul.f32 %v1289, 1.442695
  %v1356 = vpow.pop %v1355
  %v1357 = vmul.f32 %v1290, 1.442695
  %v1358 = vpow.pop %v1357
  %v1359 = vmul.f32 %v1291, 1.442695
  %v1360 = vpow.pop %v1359
  %v1361 = vmul.f32 %v1292, 1.442695
  %v1362 = vpow.pop %v1361
  %v1363 = vmul.f32 %v1293, 1.442695
  %v1364 = vpow.pop %v1363
  %v1365 = vmul.f32 %v1294, 1.442695
  %v1366 = vpow.pop %v1365
  %v1367 = vmul.f32 %v1295, 1.442695
  %v1368 = vpow.pop %v1367
  %v1369 = vmul.f32 %v1296, 1.442695
  %v1370 = vpow.pop %v1369
  %v1371 = vmul.f32 %v1297, 1.442695
  %v1372 = vpow.pop %v1371
  %v1373 = vmul.f32 %v1298, 1.442695
  %v1374 = vpow.pop %v1373
  %v1375 = vmul.f32 %v1299, 1.442695
  %v1376 = vpow.pop %v1375
  %v1377 = vmul.f32 %v1300, 1.442695
  %v1378 = vpow.pop %v1377
  %v1379 = vmul.f32 %v1301, 1.442695
  %v1380 = vpow.pop %v1379
  %v1381 = vmul.f32 %v1302, 1.442695
  %v1382 = vpow.pop %v1381
  %v1383 = vmul.f32 %v1303, 1.442695
  %v1384 = vpow.pop %v1383
  %v1385 = vmul.f32 %v1304, 1.442695
  %v1386 = vpow.pop %v1385
  %v1387 = vmul.f32 %v1305, 1.442695
  %v1388 = vpow.pop %v1387
  %v1389 = vmul.f32 %v1306, 1.442695
  %v1390 = vpow.pop %v1389
  %v1391 = vmul.f32 %v1307, 1.442695
  %v1392 = vpow.pop %v1391
  %v1393 = vmul.f32 %v1308, 1.442695
  %v1394 = vpow.pop %v1393
  %v1395 = vmul.f32 %v1309, 1.442695
  %v1396 = vpow.pop %v1395
  %v1397 = vmul.f32 %v1310, 1.442695
  %v1398 = vpow.pop %v1397
  %v1399 = vmul.f32 %v1311, 1.442695
  %v1400 = vpow.pop %v1399
  %v1401 = vmul.f32 %v1312, 1.442695
  %v1402 = vpow.pop %v1401
  %v1403 = vmul.f32 %v1313, 1.442695
  %v1404 = vpow.pop %v1403
  %v1405 = vmul.f32 %v1314, 1.442695
  %v1406 = vpow.pop %v1405
  %v1407 = vmul.f32 %v1315, 1.442695
  %v1408 = vpow.pop %v1407
  %v1409 = vmul.f32 %v1316, 1.442695
  %v1410 = vpow.pop %v1409
  %v1411 = vmul.f32 %v1317, 1.442695
  %v1412 = vpow.pop %v1411
  %v1413 = vmul.f32 %v1318, 1.442695
  %v1414 = vpow.pop %v1413
  %v1415 = vmul.f32 %v1319, 1.442695
  %v1416 = vpow.pop %v1415
  %v1417 = vmul.f32 %v1320, 1.442695
  %v1418 = vpow.pop %v1417
  %v1419 = vmul.f32 %v1321, 1.442695
  %v1420 = vpow.pop %v1419
  %v1421 = vmul.f32 %v1322, 1.442695
  %v1422 = vpow.pop %v1421
  %v1423 = vmul.f32 %v1323, 1.442695
  %v1424 = vpow.pop %v1423
  %v1425 = vmul.f32 %v1324, 1.442695
  %v1426 = vpow.pop %v1425
  %v1427 = vmul.f32 %v1325, 1.442695
  %v1428 = vpow.pop %v1427
  %v1429 = vmul.f32 %v1326, 1.442695
  %v1430 = vpow.pop %v1429
  %v1431 = vmul.f32 %v1327, 1.442695
  %v1432 = vpow.pop %v1431
  %v1433 = vmul.f32 %v1328, 1.442695
  %v1434 = vpow.pop %v1433
  %v1435 = vmul.f32 %v1329, 1.442695
  %v1436 = vpow.pop %v1435
  %v1437 = vmul.f32 %v1330, 1.442695
  %v1438 = vpow.pop %v1437
  %v1439 = vmul.f32 %v1331, 1.442695
  %v1440 = vpow.pop %v1439
  %v1441 = vmul.f32 %v1332, 1.442695
  %v1442 = vpow.pop %v1441
  %v1443 = vmul.f32 %v1333, 1.442695
  %v1444 = vpow.pop %v1443
  %v1445 = vmul.f32 %v1334, 1.442695
  %v1446 = vpow.pop %v1445
  %v1447 = vmul.f32 %v1335, 1.442695
  %v1448 = vpow.pop %v1447
  %v1449 = vmul.f32 %v1336, 1.442695
  %v1450 = vpow.pop %v1449
  %v1451 = vmul.f32 %v1337, 1.442695
  %v1452 = vpow.pop %v1451
  %v1453 = vmul.f32 %v1338, 1.442695
  %v1454 = vpow.pop %v1453
  %v1455 = vmul.f32 %v1339, 1.442695
  %v1456 = vpow.pop %v1455
  %v1457 = vmul.f32 %v1340, 1.442695
  %v1458 = vpow.pop %v1457
  %v1459 = vmul.f32 %v1341, 1.442695
  %v1460 = vpow.pop %v1459
  %v1461 = vmul.f32 %v1342, 1.442695
  %v1462 = vpow.pop %v1461
  %v1463 = vmul.f32 %v1343, 1.442695
  %v1464 = vpow.pop %v1463
  %v1465 = vmul.f32 %v1344, 1.442695
  %v1466 = vpow.pop %v1465
  %v1467 = vmul.f32 %v1345, 1.442695
  %v1468 = vpow.pop %v1467
  %v1469 = vmul.f32 %v1346, 1.442695
  %v1470 = vpow.pop %v1469
  %v1471 = vmul.f32 %v1347, 1.442695
  %v1472 = vpow.pop %v1471
  %v1473 = vmul.f32 %v1348, 1.442695
  %v1474 = vpow.pop %v1473
  %v1475 = vmul.f32 %v1349, 1.442695
  %v1476 = vpow.pop %v1475
  %v1477 = vmul.f32 %v1350, 1.442695
  %v1478 = vpow.pop %v1477
  %1479 = vadd.xlane.f32.xlu0 %v1352
  %v1480 = vpop.xlane.xlu0 %1479
  %1481 = vadd.xlane.f32.xlu0 %v1354
  %v1482 = vpop.xlane.xlu0 %1481
  %1483 = vadd.xlane.f32.xlu0 %v1356
  %v1484 = vpop.xlane.xlu0 %1483
  %1485 = vadd.xlane.f32.xlu0 %v1358
  %v1486 = vpop.xlane.xlu0 %1485
  %1487 = vadd.xlane.f32.xlu0 %v1360
  %v1488 = vpop.xlane.xlu0 %1487
  %1489 = vadd.xlane.f32.xlu0 %v1362
  %v1490 = vpop.xlane.xlu0 %1489
  %1491 = vadd.xlane.f32.xlu0 %v1364
  %v1492 = vpop.xlane.xlu0 %1491
  %1493 = vadd.xlane.f32.xlu0 %v1366
  %v1494 = vpop.xlane.xlu0 %1493
  %1495 = vadd.xlane.f32.xlu0 %v1368
  %v1496 = vpop.xlane.xlu0 %1495
  %1497 = vadd.xlane.f32.xlu0 %v1370
  %v1498 = vpop.xlane.xlu0 %1497
  %1499 = vadd.xlane.f32.xlu0 %v1372
  %v1500 = vpop.xlane.xlu0 %1499
  %1501 = vadd.xlane.f32.xlu0 %v1374
  %v1502 = vpop.xlane.xlu0 %1501
  %1503 = vadd.xlane.f32.xlu0 %v1376
  %v1504 = vpop.xlane.xlu0 %1503
  %1505 = vadd.xlane.f32.xlu0 %v1378
  %v1506 = vpop.xlane.xlu0 %1505
  %1507 = vadd.xlane.f32.xlu0 %v1380
  %v1508 = vpop.xlane.xlu0 %1507
  %1509 = vadd.xlane.f32.xlu0 %v1382
  %v1510 = vpop.xlane.xlu0 %1509
  %1511 = vadd.xlane.f32.xlu0 %v1384
  %v1512 = vpop.xlane.xlu0 %1511
  %1513 = vadd.xlane.f32.xlu0 %v1386
  %v1514 = vpop.xlane.xlu0 %1513
  %1515 = vadd.xlane.f32.xlu0 %v1388
  %v1516 = vpop.xlane.xlu0 %1515
  %1517 = vadd.xlane.f32.xlu0 %v1390
  %v1518 = vpop.xlane.xlu0 %1517
  %1519 = vadd.xlane.f32.xlu0 %v1392
  %v1520 = vpop.xlane.xlu0 %1519
  %1521 = vadd.xlane.f32.xlu0 %v1394
  %v1522 = vpop.xlane.xlu0 %1521
  %1523 = vadd.xlane.f32.xlu0 %v1396
  %v1524 = vpop.xlane.xlu0 %1523
  %1525 = vadd.xlane.f32.xlu0 %v1398
  %v1526 = vpop.xlane.xlu0 %1525
  %1527 = vadd.xlane.f32.xlu0 %v1400
  %v1528 = vpop.xlane.xlu0 %1527
  %1529 = vadd.xlane.f32.xlu0 %v1402
  %v1530 = vpop.xlane.xlu0 %1529
  %1531 = vadd.xlane.f32.xlu0 %v1404
  %v1532 = vpop.xlane.xlu0 %1531
  %1533 = vadd.xlane.f32.xlu0 %v1406
  %v1534 = vpop.xlane.xlu0 %1533
  %1535 = vadd.xlane.f32.xlu0 %v1408
  %v1536 = vpop.xlane.xlu0 %1535
  %1537 = vadd.xlane.f32.xlu0 %v1410
  %v1538 = vpop.xlane.xlu0 %1537
  %1539 = vadd.xlane.f32.xlu0 %v1412
  %v1540 = vpop.xlane.xlu0 %1539
  %1541 = vadd.xlane.f32.xlu0 %v1414
  %v1542 = vpop.xlane.xlu0 %1541
  %1543 = vadd.xlane.f32.xlu0 %v1416
  %v1544 = vpop.xlane.xlu0 %1543
  %1545 = vadd.xlane.f32.xlu0 %v1418
  %v1546 = vpop.xlane.xlu0 %1545
  %1547 = vadd.xlane.f32.xlu0 %v1420
  %v1548 = vpop.xlane.xlu0 %1547
  %1549 = vadd.xlane.f32.xlu0 %v1422
  %v1550 = vpop.xlane.xlu0 %1549
  %1551 = vadd.xlane.f32.xlu0 %v1424
  %v1552 = vpop.xlane.xlu0 %1551
  %1553 = vadd.xlane.f32.xlu0 %v1426
  %v1554 = vpop.xlane.xlu0 %1553
  %1555 = vadd.xlane.f32.xlu0 %v1428
  %v1556 = vpop.xlane.xlu0 %1555
  %1557 = vadd.xlane.f32.xlu0 %v1430
  %v1558 = vpop.xlane.xlu0 %1557
  %1559 = vadd.xlane.f32.xlu0 %v1432
  %v1560 = vpop.xlane.xlu0 %1559
  %1561 = vadd.xlane.f32.xlu0 %v1434
  %v1562 = vpop.xlane.xlu0 %1561
  %1563 = vadd.xlane.f32.xlu0 %v1436
  %v1564 = vpop.xlane.xlu0 %1563
  %1565 = vadd.xlane.f32.xlu0 %v1438
  %v1566 = vpop.xlane.xlu0 %1565
  %1567 = vadd.xlane.f32.xlu0 %v1440
  %v1568 = vpop.xlane.xlu0 %1567
  %1569 = vadd.xlane.f32.xlu0 %v1442
  %v1570 = vpop.xlane.xlu0 %1569
  %1571 = vadd.xlane.f32.xlu0 %v1444
  %v1572 = vpop.xlane.xlu0 %1571
  %1573 = vadd.xlane.f32.xlu0 %v1446
  %v1574 = vpop.xlane.xlu0 %1573
  %1575 = vadd.xlane.f32.xlu0 %v1448
  %v1576 = vpop.xlane.xlu0 %1575
  %1577 = vadd.xlane.f32.xlu0 %v1450
  %v1578 = vpop.xlane.xlu0 %1577
  %1579 = vadd.xlane.f32.xlu0 %v1452
  %v1580 = vpop.xlane.xlu0 %1579
  %1581 = vadd.xlane.f32.xlu0 %v1454
  %v1582 = vpop.xlane.xlu0 %1581
  %1583 = vadd.xlane.f32.xlu0 %v1456
  %v1584 = vpop.xlane.xlu0 %1583
  %1585 = vadd.xlane.f32.xlu0 %v1458
  %v1586 = vpop.xlane.xlu0 %1585
  %1587 = vadd.xlane.f32.xlu0 %v1460
  %v1588 = vpop.xlane.xlu0 %1587
  %1589 = vadd.xlane.f32.xlu0 %v1462
  %v1590 = vpop.xlane.xlu0 %1589
  %1591 = vadd.xlane.f32.xlu0 %v1464
  %v1592 = vpop.xlane.xlu0 %1591
  %1593 = vadd.xlane.f32.xlu0 %v1466
  %v1594 = vpop.xlane.xlu0 %1593
  %1595 = vadd.xlane.f32.xlu0 %v1468
  %v1596 = vpop.xlane.xlu0 %1595
  %1597 = vadd.xlane.f32.xlu0 %v1470
  %v1598 = vpop.xlane.xlu0 %1597
  %1599 = vadd.xlane.f32.xlu0 %v1472
  %v1600 = vpop.xlane.xlu0 %1599
  %1601 = vadd.xlane.f32.xlu0 %v1474
  %v1602 = vpop.xlane.xlu0 %1601
  %1603 = vadd.xlane.f32.xlu0 %v1476
  %v1604 = vpop.xlane.xlu0 %1603
  %1605 = vadd.xlane.f32.xlu0 %v1478
  %v1606 = vpop.xlane.xlu0 %1605
  %v1607 = vlog2.pop %v1480
  %v1608 = vmul.f32 %v1607, 0.6931472
  %v1609 = vlog2.pop %v1482
  %v1610 = vmul.f32 %v1609, 0.6931472
  %v1611 = vlog2.pop %v1484
  %v1612 = vmul.f32 %v1611, 0.6931472
  %v1613 = vlog2.pop %v1486
  %v1614 = vmul.f32 %v1613, 0.6931472
  %v1615 = vlog2.pop %v1488
  %v1616 = vmul.f32 %v1615, 0.6931472
  %v1617 = vlog2.pop %v1490
  %v1618 = vmul.f32 %v1617, 0.6931472
  %v1619 = vlog2.pop %v1492
  %v1620 = vmul.f32 %v1619, 0.6931472
  %v1621 = vlog2.pop %v1494
  %v1622 = vmul.f32 %v1621, 0.6931472
  %v1623 = vlog2.pop %v1496
  %v1624 = vmul.f32 %v1623, 0.6931472
  %v1625 = vlog2.pop %v1498
  %v1626 = vmul.f32 %v1625, 0.6931472
  %v1627 = vlog2.pop %v1500
  %v1628 = vmul.f32 %v1627, 0.6931472
  %v1629 = vlog2.pop %v1502
  %v1630 = vmul.f32 %v1629, 0.6931472
  %v1631 = vlog2.pop %v1504
  %v1632 = vmul.f32 %v1631, 0.6931472
  %v1633 = vlog2.pop %v1506
  %v1634 = vmul.f32 %v1633, 0.6931472
  %v1635 = vlog2.pop %v1508
  %v1636 = vmul.f32 %v1635, 0.6931472
  %v1637 = vlog2.pop %v1510
  %v1638 = vmul.f32 %v1637, 0.6931472
  %v1639 = vlog2.pop %v1512
  %v1640 = vmul.f32 %v1639, 0.6931472
  %v1641 = vlog2.pop %v1514
  %v1642 = vmul.f32 %v1641, 0.6931472
  %v1643 = vlog2.pop %v1516
  %v1644 = vmul.f32 %v1643, 0.6931472
  %v1645 = vlog2.pop %v1518
  %v1646 = vmul.f32 %v1645, 0.6931472
  %v1647 = vlog2.pop %v1520
  %v1648 = vmul.f32 %v1647, 0.6931472
  %v1649 = vlog2.pop %v1522
  %v1650 = vmul.f32 %v1649, 0.6931472
  %v1651 = vlog2.pop %v1524
  %v1652 = vmul.f32 %v1651, 0.6931472
  %v1653 = vlog2.pop %v1526
  %v1654 = vmul.f32 %v1653, 0.6931472
  %v1655 = vlog2.pop %v1528
  %v1656 = vmul.f32 %v1655, 0.6931472
  %v1657 = vlog2.pop %v1530
  %v1658 = vmul.f32 %v1657, 0.6931472
  %v1659 = vlog2.pop %v1532
  %v1660 = vmul.f32 %v1659, 0.6931472
  %v1661 = vlog2.pop %v1534
  %v1662 = vmul.f32 %v1661, 0.6931472
  %v1663 = vlog2.pop %v1536
  %v1664 = vmul.f32 %v1663, 0.6931472
  %v1665 = vlog2.pop %v1538
  %v1666 = vmul.f32 %v1665, 0.6931472
  %v1667 = vlog2.pop %v1540
  %v1668 = vmul.f32 %v1667, 0.6931472
  %v1669 = vlog2.pop %v1542
  %v1670 = vmul.f32 %v1669, 0.6931472
  %v1671 = vlog2.pop %v1544
  %v1672 = vmul.f32 %v1671, 0.6931472
  %v1673 = vlog2.pop %v1546
  %v1674 = vmul.f32 %v1673, 0.6931472
  %v1675 = vlog2.pop %v1548
  %v1676 = vmul.f32 %v1675, 0.6931472
  %v1677 = vlog2.pop %v1550
  %v1678 = vmul.f32 %v1677, 0.6931472
  %v1679 = vlog2.pop %v1552
  %v1680 = vmul.f32 %v1679, 0.6931472
  %v1681 = vlog2.pop %v1554
  %v1682 = vmul.f32 %v1681, 0.6931472
  %v1683 = vlog2.pop %v1556
  %v1684 = vmul.f32 %v1683, 0.6931472
  %v1685 = vlog2.pop %v1558
  %v1686 = vmul.f32 %v1685, 0.6931472
  %v1687 = vlog2.pop %v1560
  %v1688 = vmul.f32 %v1687, 0.6931472
  %v1689 = vlog2.pop %v1562
  %v1690 = vmul.f32 %v1689, 0.6931472
  %v1691 = vlog2.pop %v1564
  %v1692 = vmul.f32 %v1691, 0.6931472
  %v1693 = vlog2.pop %v1566
  %v1694 = vmul.f32 %v1693, 0.6931472
  %v1695 = vlog2.pop %v1568
  %v1696 = vmul.f32 %v1695, 0.6931472
  %v1697 = vlog2.pop %v1570
  %v1698 = vmul.f32 %v1697, 0.6931472
  %v1699 = vlog2.pop %v1572
  %v1700 = vmul.f32 %v1699, 0.6931472
  %v1701 = vlog2.pop %v1574
  %v1702 = vmul.f32 %v1701, 0.6931472
  %v1703 = vlog2.pop %v1576
  %v1704 = vmul.f32 %v1703, 0.6931472
  %v1705 = vlog2.pop %v1578
  %v1706 = vmul.f32 %v1705, 0.6931472
  %v1707 = vlog2.pop %v1580
  %v1708 = vmul.f32 %v1707, 0.6931472
  %v1709 = vlog2.pop %v1582
  %v1710 = vmul.f32 %v1709, 0.6931472
  %v1711 = vlog2.pop %v1584
  %v1712 = vmul.f32 %v1711, 0.6931472
  %v1713 = vlog2.pop %v1586
  %v1714 = vmul.f32 %v1713, 0.6931472
  %v1715 = vlog2.pop %v1588
  %v1716 = vmul.f32 %v1715, 0.6931472
  %v1717 = vlog2.pop %v1590
  %v1718 = vmul.f32 %v1717, 0.6931472
  %v1719 = vlog2.pop %v1592
  %v1720 = vmul.f32 %v1719, 0.6931472
  %v1721 = vlog2.pop %v1594
  %v1722 = vmul.f32 %v1721, 0.6931472
  %v1723 = vlog2.pop %v1596
  %v1724 = vmul.f32 %v1723, 0.6931472
  %v1725 = vlog2.pop %v1598
  %v1726 = vmul.f32 %v1725, 0.6931472
  %v1727 = vlog2.pop %v1600
  %v1728 = vmul.f32 %v1727, 0.6931472
  %v1729 = vlog2.pop %v1602
  %v1730 = vmul.f32 %v1729, 0.6931472
  %v1731 = vlog2.pop %v1604
  %v1732 = vmul.f32 %v1731, 0.6931472
  %v1733 = vlog2.pop %v1606
  %v1734 = vmul.f32 %v1733, 0.6931472
  %v1735 = vsub.f32 %v1287, %v1608
  %v1736 = vsub.f32 %v1288, %v1610
  %v1737 = vsub.f32 %v1289, %v1612
  %v1738 = vsub.f32 %v1290, %v1614
  %v1739 = vsub.f32 %v1291, %v1616
  %v1740 = vsub.f32 %v1292, %v1618
  %v1741 = vsub.f32 %v1293, %v1620
  %v1742 = vsub.f32 %v1294, %v1622
  %v1743 = vsub.f32 %v1295, %v1624
  %v1744 = vsub.f32 %v1296, %v1626
  %v1745 = vsub.f32 %v1297, %v1628
  %v1746 = vsub.f32 %v1298, %v1630
  %v1747 = vsub.f32 %v1299, %v1632
  %v1748 = vsub.f32 %v1300, %v1634
  %v1749 = vsub.f32 %v1301, %v1636
  %v1750 = vsub.f32 %v1302, %v1638
  %v1751 = vsub.f32 %v1303, %v1640
  %v1752 = vsub.f32 %v1304, %v1642
  %v1753 = vsub.f32 %v1305, %v1644
  %v1754 = vsub.f32 %v1306, %v1646
  %v1755 = vsub.f32 %v1307, %v1648
  %v1756 = vsub.f32 %v1308, %v1650
  %v1757 = vsub.f32 %v1309, %v1652
  %v1758 = vsub.f32 %v1310, %v1654
  %v1759 = vsub.f32 %v1311, %v1656
  %v1760 = vsub.f32 %v1312, %v1658
  %v1761 = vsub.f32 %v1313, %v1660
  %v1762 = vsub.f32 %v1314, %v1662
  %v1763 = vsub.f32 %v1315, %v1664
  %v1764 = vsub.f32 %v1316, %v1666
  %v1765 = vsub.f32 %v1317, %v1668
  %v1766 = vsub.f32 %v1318, %v1670
  %v1767 = vsub.f32 %v1319, %v1672
  %v1768 = vsub.f32 %v1320, %v1674
  %v1769 = vsub.f32 %v1321, %v1676
  %v1770 = vsub.f32 %v1322, %v1678
  %v1771 = vsub.f32 %v1323, %v1680
  %v1772 = vsub.f32 %v1324, %v1682
  %v1773 = vsub.f32 %v1325, %v1684
  %v1774 = vsub.f32 %v1326, %v1686
  %v1775 = vsub.f32 %v1327, %v1688
  %v1776 = vsub.f32 %v1328, %v1690
  %v1777 = vsub.f32 %v1329, %v1692
  %v1778 = vsub.f32 %v1330, %v1694
  %v1779 = vsub.f32 %v1331, %v1696
  %v1780 = vsub.f32 %v1332, %v1698
  %v1781 = vsub.f32 %v1333, %v1700
  %v1782 = vsub.f32 %v1334, %v1702
  %v1783 = vsub.f32 %v1335, %v1704
  %v1784 = vsub.f32 %v1336, %v1706
  %v1785 = vsub.f32 %v1337, %v1708
  %v1786 = vsub.f32 %v1338, %v1710
  %v1787 = vsub.f32 %v1339, %v1712
  %v1788 = vsub.f32 %v1340, %v1714
  %v1789 = vsub.f32 %v1341, %v1716
  %v1790 = vsub.f32 %v1342, %v1718
  %v1791 = vsub.f32 %v1343, %v1720
  %v1792 = vsub.f32 %v1344, %v1722
  %v1793 = vsub.f32 %v1345, %v1724
  %v1794 = vsub.f32 %v1346, %v1726
  %v1795 = vsub.f32 %v1347, %v1728
  %v1796 = vsub.f32 %v1348, %v1730
  %v1797 = vsub.f32 %v1349, %v1732
  %v1798 = vsub.f32 %v1350, %v1734
  %1799 = vst [vmem:[%s5] sm:$0xff] %v1735
  %1800 = vst [vmem:[%s5 + $0x8] sm:$0xff] %v1736
  %1801 = vst [vmem:[%s5 + $0x10] sm:$0xff] %v1737
  %1802 = vst [vmem:[%s5 + $0x18] sm:$0xff] %v1738
  %1803 = vst [vmem:[%s5 + $0x20] sm:$0xff] %v1739
  %1804 = vst [vmem:[%s5 + $0x28] sm:$0xff] %v1740
  %1805 = vst [vmem:[%s5 + $0x30] sm:$0xff] %v1741
  %1806 = vst [vmem:[%s5 + $0x38] sm:$0xff] %v1742
  %1807 = vst [vmem:[%s5 + $0x40] sm:$0xff] %v1743
  %1808 = vst [vmem:[%s5 + $0x48] sm:$0xff] %v1744
  %1809 = vst [vmem:[%s5 + $0x50] sm:$0xff] %v1745
  %1810 = vst [vmem:[%s5 + $0x58] sm:$0xff] %v1746
  %1811 = vst [vmem:[%s5 + $0x60] sm:$0xff] %v1747
  %1812 = vst [vmem:[%s5 + $0x68] sm:$0xff] %v1748
  %1813 = vst [vmem:[%s5 + $0x70] sm:$0xff] %v1749
  %1814 = vst [vmem:[%s5 + $0x78] sm:$0xff] %v1750
  %1815 = vst [vmem:[%s5 + $0x80] sm:$0xff] %v1751
  %1816 = vst [vmem:[%s5 + $0x88] sm:$0xff] %v1752
  %1817 = vst [vmem:[%s5 + $0x90] sm:$0xff] %v1753
  %1818 = vst [vmem:[%s5 + $0x98] sm:$0xff] %v1754
  %1819 = vst [vmem:[%s5 + $0xa0] sm:$0xff] %v1755
  %1820 = vst [vmem:[%s5 + $0xa8] sm:$0xff] %v1756
  %1821 = vst [vmem:[%s5 + $0xb0] sm:$0xff] %v1757
  %1822 = vst [vmem:[%s5 + $0xb8] sm:$0xff] %v1758
  %1823 = vst [vmem:[%s5 + $0xc0] sm:$0xff] %v1759
  %1824 = vst [vmem:[%s5 + $0xc8] sm:$0xff] %v1760
  %1825 = vst [vmem:[%s5 + $0xd0] sm:$0xff] %v1761
  %1826 = vst [vmem:[%s5 + $0xd8] sm:$0xff] %v1762
  %1827 = vst [vmem:[%s5 + $0xe0] sm:$0xff] %v1763
  %1828 = vst [vmem:[%s5 + $0xe8] sm:$0xff] %v1764
  %1829 = vst [vmem:[%s5 + $0xf0] sm:$0xff] %v1765
  %1830 = vst [vmem:[%s5 + $0xf8] sm:$0xff] %v1766
  %1831 = vst [vmem:[%s5 + $0x100] sm:$0xff] %v1767
  %1832 = vst [vmem:[%s5 + $0x108] sm:$0xff] %v1768
  %1833 = vst [vmem:[%s5 + $0x110] sm:$0xff] %v1769
  %1834 = vst [vmem:[%s5 + $0x118] sm:$0xff] %v1770
  %1835 = vst [vmem:[%s5 + $0x120] sm:$0xff] %v1771
  %1836 = vst [vmem:[%s5 + $0x128] sm:$0xff] %v1772
  %1837 = vst [vmem:[%s5 + $0x130] sm:$0xff] %v1773
  %1838 = vst [vmem:[%s5 + $0x138] sm:$0xff] %v1774
  %1839 = vst [vmem:[%s5 + $0x140] sm:$0xff] %v1775
  %1840 = vst [vmem:[%s5 + $0x148] sm:$0xff] %v1776
  %1841 = vst [vmem:[%s5 + $0x150] sm:$0xff] %v1777
  %1842 = vst [vmem:[%s5 + $0x158] sm:$0xff] %v1778
  %1843 = vst [vmem:[%s5 + $0x160] sm:$0xff] %v1779
  %1844 = vst [vmem:[%s5 + $0x168] sm:$0xff] %v1780
  %1845 = vst [vmem:[%s5 + $0x170] sm:$0xff] %v1781
  %1846 = vst [vmem:[%s5 + $0x178] sm:$0xff] %v1782
  %1847 = vst [vmem:[%s5 + $0x180] sm:$0xff] %v1783
  %1848 = vst [vmem:[%s5 + $0x188] sm:$0xff] %v1784
  %1849 = vst [vmem:[%s5 + $0x190] sm:$0xff] %v1785
  %1850 = vst [vmem:[%s5 + $0x198] sm:$0xff] %v1786
  %1851 = vst [vmem:[%s5 + $0x1a0] sm:$0xff] %v1787
  %1852 = vst [vmem:[%s5 + $0x1a8] sm:$0xff] %v1788
  %1853 = vst [vmem:[%s5 + $0x1b0] sm:$0xff] %v1789
  %1854 = vst [vmem:[%s5 + $0x1b8] sm:$0xff] %v1790
  %1855 = vst [vmem:[%s5 + $0x1c0] sm:$0xff] %v1791
  %1856 = vst [vmem:[%s5 + $0x1c8] sm:$0xff] %v1792
  %1857 = vst [vmem:[%s5 + $0x1d0] sm:$0xff] %v1793
  %1858 = vst [vmem:[%s5 + $0x1d8] sm:$0xff] %v1794
  %1859 = vst [vmem:[%s5 + $0x1e0] sm:$0xff] %v1795
  %1860 = vst [vmem:[%s5 + $0x1e8] sm:$0xff] %v1796
  %1861 = vst [vmem:[%s5 + $0x1f0] sm:$0xff] %v1797
  %1862 = vst [vmem:[%s5 + $0x1f8] sm:$0xff] %v1798
  // Predicated region
  $region22: #{net_forward.9} parent=0 // pred_check
    _
  $region23: #{net_forward.9} parent=0 // pred_check_branch
    %1864 = sbr.rel (0) target = $region25
  $region24: #{net_forward.9} parent=0 // pred_region
    _
  $region25: #{net_forward.9} parent=0 // pred_fallthru
    _
  // Predicated region
  $region26: #{net_forward.9} parent=0 // pred_check
    _
  $region27: #{net_forward.9} parent=0 // pred_check_branch
    %1866 = sbr.rel (0) target = $region29
  $region28: #{net_forward.9} parent=0 // pred_region
    _
  $region29: #{net_forward.9} parent=0 // pred_fallthru
    _
  // Predicated region
  $region30: #{net_forward.9} parent=0 // pred_check
    _
  $region31: #{net_forward.9} parent=0 // pred_check_branch
    %1868 = sbr.rel (0) target = $region33
  $region32: #{net_forward.9} parent=0 // pred_region
    _
  $region33: #{net_forward.9} parent=0 // pred_fallthru
    _
  // Predicated region
  $region34: #{net_forward.9} parent=0 // pred_check
    _
  $region35: #{net_forward.9} parent=0 // pred_check_branch
    %1870 = sbr.rel (0) target = $region37
  $region36: #{net_forward.9} parent=0 // pred_region
    _
  $region37: #{net_forward.9} parent=0 // pred_fallthru
    _

</llo_original>
